<compile_context>
chip_gen: v5e
topology: v5e:2x2
jax: 0.10.0
libtpu: 0.0.40
codegen_flags: <defaults>
</compile_context>

<pallas_src>
import jax
import jax.numpy as jnp
from jax import lax
from jax.experimental import pallas as pl
from jax.experimental.pallas import tpu as pltpu

_EPS = 1e-5                 # nn.BatchNorm2d default eps
_NEG_SLOPE = 0.01           # nn.LeakyReLU default negative_slope
_COMPUTE_DTYPE = jnp.bfloat16


def _round_up(x, m):
    return (x + m - 1) // m * m


def _vmem_limit_bytes():
    """Scoped-VMEM cap derived from the chip (64 MiB v7x, 128 MiB v5e/v6e),
    with 50% headroom for kernel-internal temporaries / double-buffered blocks."""
    try:
        cap = int(pltpu.get_tpu_info().vmem_capacity_bytes)
    except Exception:  # interpret mode / CPU AOT: assume the smallest generation
        cap = 64 * 1024 * 1024
    return cap // 2


# --------------------------------------------------------------------------- #
# Pass 1: Conv2d(Cin, Cout, 3x3, pad=1, bias=False) + partial BN1 statistics.  #
# --------------------------------------------------------------------------- #
def _conv3x3_stats_kernel(x_ref, w1_ref, y1_ref, stat_ref, slab_ref, acc_ref):
    # x_ref   : (1, H, W, Cin)        one image (any float dtype)
    # w1_ref  : (9, Cin, Cout)        conv taps, k = ky*3 + kx (bf16)
    # y1_ref  : (1, H, W, Cout)       conv output (bf16)
    # stat_ref: (1, 2, Cout)          per-image partial [sum, sumsq] (f32)
    # slab_ref: VMEM ((H+3)*Wp, Cin)  flat zero-halo image slab (bf16)
    # acc_ref : VMEM (H*Wp, Cout)     f32 conv accumulator
    _, H, W, Cin = x_ref.shape
    Cout = w1_ref.shape[2]
    Wp = slab_ref.shape[0] // (H + 3)   # padded row pitch, multiple of 8
    HWp = H * Wp

    # ---- build the zero-padded image in the flat VMEM slab -------------------
    # Halo-only zeroing: two halo rows here, the left/right halo columns are
    # folded into the per-row data store below.  Columns >= W+2 and the spare
    # row H+2 are deliberately left uninitialized: they only ever feed outputs
    # at padded column positions, which are sliced away before stats/writeback.
    zrow = jnp.zeros((Wp, Cin), slab_ref.dtype)
    slab_ref[pl.ds(0, Wp), :] = zrow                       # top halo row
    slab_ref[pl.ds((H + 1) * Wp, Wp), :] = zrow            # bottom halo row
    zcol = jnp.zeros((1, Cin), slab_ref.dtype)
    for h in range(H):                                     # static unroll (small H)
        row = x_ref[0, h].astype(slab_ref.dtype)           # (W, Cin)
        padded_row = jnp.concatenate([zcol, row, zcol], axis=0)   # (W+2, Cin)
        slab_ref[pl.ds((h + 1) * Wp, W + 2), :] = padded_row      # aligned start

    # ---- 9 taps: Ref-sliced contiguous windows -> MXU, f32 scratch accumulate
    for k in range(9):
        ky, kx = divmod(k, 3)
        off = ky * Wp + kx                                 # static offset
        t = jnp.dot(slab_ref[pl.ds(off, HWp), :], w1_ref[k],
                    preferred_element_type=jnp.float32)    # (HWp, Cout) f32
        if k == 0:
            acc_ref[...] = t
        else:
            acc_ref[...] += t

    # Cast to bf16 BEFORE dropping the padded columns (halves the slice copy);
    # compute BN statistics on the rounded values pass 2 will actually read.
    y = acc_ref[...].astype(y1_ref.dtype).reshape(H, Wp, Cout)[:, :W, :]
    y1_ref[0] = y
    yf = y.astype(jnp.float32)
    stat_ref[0, 0:1, :] = jnp.sum(yf, axis=(0, 1), keepdims=True)[0]
    stat_ref[0, 1:2, :] = jnp.sum(yf * yf, axis=(0, 1), keepdims=True)[0]


# --------------------------------------------------------------------------- #
# Pass 2: folded BN1 affine -> LeakyReLU -> 1x1 conv + partial BN2 statistics. #
# --------------------------------------------------------------------------- #
def _bn1_lrelu_1x1_stats_kernel(y1_ref, w2_ref, s1_ref, b1_ref, y2_ref, stat_ref):
    # y1_ref : (1, H, W, C) bf16      conv1 output
    # w2_ref : (C, Cout) bf16         1x1 conv weight (Cin-major)
    # s1_ref : (1, C) bf16            gamma1 * rsqrt(var1 + eps)
    # b1_ref : (1, C) bf16            beta1 - mu1 * s1
    # y2_ref : (1, H, W, Cout) bf16   1x1 conv output
    # stat_ref:(1, 2, Cout) f32       per-image partial [sum, sumsq]
    _, H, W, C = y1_ref.shape
    Cout = w2_ref.shape[1]

    # BN1 affine + LeakyReLU in bf16 (result feeds a bf16 MXU matmul anyway).
    h = y1_ref[0] * s1_ref[...] + b1_ref[...]
    h = jnp.where(h >= 0, h, _NEG_SLOPE * h)

    y2 = jnp.dot(h.reshape(H * W, C), w2_ref[...],
                 preferred_element_type=jnp.float32).reshape(H, W, Cout)
    y2b = y2.astype(y2_ref.dtype)          # rounded values = what pass 3 consumes
    y2_ref[0] = y2b
    yf = y2b.astype(jnp.float32)
    stat_ref[0, 0:1, :] = jnp.sum(yf, axis=(0, 1), keepdims=True)[0]
    stat_ref[0, 1:2, :] = jnp.sum(yf * yf, axis=(0, 1), keepdims=True)[0]


# --------------------------------------------------------------------------- #
# Pass 3: folded BN2 affine + residual add (f32, against the original input).  #
# --------------------------------------------------------------------------- #
def _bn2_residual_kernel(x_ref, y2_ref, s2_ref, b2_ref, o_ref):
    res = y2_ref[0].astype(jnp.float32) * s2_ref[...] + b2_ref[...]
    o_ref[0] = (x_ref[0].astype(jnp.float32) + res).astype(o_ref.dtype)


# --------------------------------------------------------------------------- #
# Wrappers                                                                     #
# --------------------------------------------------------------------------- #
def _affine_from_stats(stats, gamma, beta, count):
    """(N, 2, C) per-image partial [sum, sumsq] -> fused BN scale/shift (f32)."""
    s = jnp.sum(stats[:, 0, :], axis=0)
    ss = jnp.sum(stats[:, 1, :], axis=0)
    mu = s / count
    var = jnp.maximum(ss / count - mu * mu, 0.0)   # single-pass, biased (training BN)
    scale = gamma * lax.rsqrt(var + _EPS)
    shift = beta - mu * scale
    return scale.astype(jnp.float32), shift.astype(jnp.float32)


def residual_layer_nhwc(x, params):
    """ResidualLayer.forward on NHWC input. x: (N, H, W, C); returns same shape."""
    N, H, W, C = x.shape
    w1 = params["w1"]                       # (Cout, Cin, 3, 3), PyTorch OIHW
    w2 = params["w2"]                       # (Cout, Cout, 1, 1)
    Cout = w1.shape[0]
    assert w1.shape[1] == C and Cout == C, "residual add requires Cin == Cout"

    w1_k = jnp.transpose(w1, (2, 3, 1, 0)).reshape(9, C, Cout).astype(_COMPUTE_DTYPE)
    w2_m = jnp.transpose(w2[:, :, 0, 0], (1, 0)).astype(_COMPUTE_DTYPE)   # (Cin, Cout)

    Wp = _round_up(W + 2, 8)
    cparams = pltpu.CompilerParams(dimension_semantics=("parallel",),
                                   vmem_limit_bytes=_vmem_limit_bytes())

    # ---- pass 1: 3x3 conv + partial BN1 stats --------------------------------
    y1, st1 = pl.pallas_call(
        _conv3x3_stats_kernel,
        grid=(N,),
        in_specs=[
            pl.BlockSpec((1, H, W, C), lambda n: (n, 0, 0, 0)),
            pl.BlockSpec((9, C, Cout), lambda n: (0, 0, 0)),
        ],
        out_specs=[
            pl.BlockSpec((1, H, W, Cout), lambda n: (n, 0, 0, 0)),
            pl.BlockSpec((1, 2, Cout), lambda n: (n, 0, 0)),
        ],
        out_shape=[
            jax.ShapeDtypeStruct((N, H, W, Cout), _COMPUTE_DTYPE),
            jax.ShapeDtypeStruct((N, 2, Cout), jnp.float32),
        ],
        scratch_shapes=[
            pltpu.VMEM(((H + 3) * Wp, C), _COMPUTE_DTYPE),   # flat halo slab (+spare row)
            pltpu.VMEM((H * Wp, Cout), jnp.float32),         # f32 conv accumulator
        ],
        compiler_params=cparams,
    )(x, w1_k)

    count = jnp.asarray(N * H * W, jnp.float32)
    s1, b1 = _affine_from_stats(st1, params["gamma1"].astype(jnp.float32),
                                params["beta1"].astype(jnp.float32), count)

    # ---- pass 2: BN1 affine + LeakyReLU + 1x1 conv + partial BN2 stats -------
    y2, st2 = pl.pallas_call(
        _bn1_lrelu_1x1_stats_kernel,
        grid=(N,),
        in_specs=[
            pl.BlockSpec((1, H, W, Cout), lambda n: (n, 0, 0, 0)),
            pl.BlockSpec((Cout, Cout), lambda n: (0, 0)),
            pl.BlockSpec((1, Cout), lambda n: (0, 0)),
            pl.BlockSpec((1, Cout), lambda n: (0, 0)),
        ],
        out_specs=[
            pl.BlockSpec((1, H, W, Cout), lambda n: (n, 0, 0, 0)),
            pl.BlockSpec((1, 2, Cout), lambda n: (n, 0, 0)),
        ],
        out_shape=[
            jax.ShapeDtypeStruct((N, H, W, Cout), _COMPUTE_DTYPE),
            jax.ShapeDtypeStruct((N, 2, Cout), jnp.float32),
        ],
        compiler_params=cparams,
    )(y1, w2_m,
      s1.reshape(1, Cout).astype(_COMPUTE_DTYPE),
      b1.reshape(1, Cout).astype(_COMPUTE_DTYPE))

    s2, b2 = _affine_from_stats(st2, params["gamma2"].astype(jnp.float32),
                                params["beta2"].astype(jnp.float32), count)

    # ---- pass 3: BN2 affine + residual add ------------------------------------
    out = pl.pallas_call(
        _bn2_residual_kernel,
        grid=(N,),
        in_specs=[
            pl.BlockSpec((1, H, W, C), lambda n: (n, 0, 0, 0)),
            pl.BlockSpec((1, H, W, Cout), lambda n: (n, 0, 0, 0)),
            pl.BlockSpec((1, Cout), lambda n: (0, 0)),
            pl.BlockSpec((1, Cout), lambda n: (0, 0)),
        ],
        out_specs=pl.BlockSpec((1, H, W, Cout), lambda n: (n, 0, 0, 0)),
        out_shape=jax.ShapeDtypeStruct((N, H, W, Cout), x.dtype),
        compiler_params=cparams,
    )(x, y2, s2.reshape(1, Cout), b2.reshape(1, Cout))

    return out


def residual_layer(x_nchw, params):
    """PyTorch-compatible interface: NCHW in / NCHW out (prefer the NHWC path)."""
    out = residual_layer_nhwc(jnp.transpose(x_nchw, (0, 2, 3, 1)), params)
    return jnp.transpose(out, (0, 3, 1, 2))


# --------------------------------------------------------------------------- #
# Reference + test                                                             #
# --------------------------------------------------------------------------- #
def _reference(x_nchw, params):
    """Pure-JAX f32 reference reproducing the PyTorch forward (training-mode BN)."""
    def bn(y, gamma, beta):
        mu = jnp.mean(y, axis=(0, 2, 3), keepdims=True)
        var = jnp.mean((y - mu) ** 2, axis=(0, 2, 3), keepdims=True)
        return ((y - mu) * lax.rsqrt(var + _EPS)
                * gamma[None, :, None, None] + beta[None, :, None, None])

    dn = ("NCHW", "OIHW", "NCHW")
    y = lax.conv_general_dilated(x_nchw, params["w1"], (1, 1), ((1, 1), (1, 1)),
                                 dimension_numbers=dn)
    y = bn(y, params["gamma1"], params["beta1"])
    y = jnp.where(y >= 0, y, _NEG_SLOPE * y)
    y = lax.conv_general_dilated(y, params["w2"], (1, 1), ((0, 0), (0, 0)),
                                 dimension_numbers=dn)
    y = bn(y, params["gamma2"], params["beta2"])
    return x_nchw + y


if __name__ == "__main__":
    key = jax.random.PRNGKey(0)
    kx, k1, k2, kg1, kb1, kg2, kb2 = jax.random.split(key, 7)

    N, C, H, W = 2, 4, 16, 16
    x_nchw = jax.random.normal(kx, (N, C, H, W), jnp.float32)

    params = dict(
        w1=0.2 * jax.random.normal(k1, (C, C, 3, 3), jnp.float32),
        w2=0.2 * jax.random.normal(k2, (C, C, 1, 1), jnp.float32),
        gamma1=1.0 + 0.1 * jax.random.normal(kg1, (C,), jnp.float32),
        beta1=0.1 * jax.random.normal(kb1, (C,), jnp.float32),
        gamma2=1.0 + 0.1 * jax.random.normal(kg2, (C,), jnp.float32),
        beta2=0.1 * jax.random.normal(kb2, (C,), jnp.float32),
    )

    # Keep the model-side layout NHWC (no per-layer NCHW<->NHWC HBM round trips);
    # the transpose here is just test harness plumbing.
    x_nhwc = jnp.transpose(x_nchw, (0, 2, 3, 1))

    out = jax.block_until_ready(jax.jit(residual_layer_nhwc)(x_nhwc, params))
    ref = jax.block_until_ready(
        jnp.transpose(_reference(x_nchw, params), (0, 2, 3, 1)))

    assert out.shape == (N, H, W, C)
    # bf16 MXU feed + bf16 intermediates with f32 accumulation/statistics, and
    # two BatchNorm normalizations that amplify element-wise rounding noise.
    assert jnp.allclose(out, ref, atol=4e-2, rtol=4e-2), "mismatch vs reference"
    print("KERNEL_OK")
</pallas_src>

<mosaic_0001>
module attributes {stable_mosaic.version = 11 : i64} {
  func.func @_bn1_lrelu_1x1_stats_kernel(%arg0: i32, %arg1: memref<1x16x16x4xbf16, #tpu.memory_space<vmem>>, %arg2: memref<4x4xbf16, #tpu.memory_space<vmem>>, %arg3: memref<1x4xbf16, #tpu.memory_space<vmem>>, %arg4: memref<1x4xbf16, #tpu.memory_space<vmem>>, %arg5: memref<1x16x16x4xbf16, #tpu.memory_space<vmem>>, %arg6: memref<1x2x4xf32, #tpu.memory_space<vmem>>) attributes {dimension_semantics = [#tpu.dimension_semantics<parallel>], iteration_bounds = array<i64: 2>, scalar_prefetch = 0 : i64, scratch_operands = 0 : i64, tpu.core_type = #tpu.core_type<tc>, window_params = [{transform_indices = @transform_0, window_bounds = array<i64: 1, 16, 16, 4>}, {pipeline_mode = #tpu.pipeline_mode<synchronous>, transform_indices = @transform_1, window_bounds = array<i64: 4, 4>}, {pipeline_mode = #tpu.pipeline_mode<synchronous>, transform_indices = @transform_2, window_bounds = array<i64: 1, 4>}, {pipeline_mode = #tpu.pipeline_mode<synchronous>, transform_indices = @transform_3, window_bounds = array<i64: 1, 4>}, {transform_indices = @transform_4, window_bounds = array<i64: 1, 16, 16, 4>}, {transform_indices = @transform_5, window_bounds = array<i64: 1, 2, 4>}]} {
    %c0 = arith.constant 0 : index
    %c0_0 = arith.constant 0 : index
    %c0_1 = arith.constant 0 : index
    %c0_2 = arith.constant 0 : index
    %0 = vector.load %arg1[%c0, %c0_0, %c0_1, %c0_2] : memref<1x16x16x4xbf16, #tpu.memory_space<vmem>>, vector<1x16x16x4xbf16>
    %1 = vector.shape_cast %0 : vector<1x16x16x4xbf16> to vector<16x16x4xbf16>
    %c0_3 = arith.constant 0 : index
    %c0_4 = arith.constant 0 : index
    %2 = vector.load %arg3[%c0_3, %c0_4] : memref<1x4xbf16, #tpu.memory_space<vmem>>, vector<1x4xbf16>
    %3 = vector.shape_cast %2 : vector<1x4xbf16> to vector<1x1x4xbf16>
    %4 = vector.broadcast %3 : vector<1x1x4xbf16> to vector<16x16x4xbf16>
    %5 = arith.mulf %1, %4 : vector<16x16x4xbf16>
    %c0_5 = arith.constant 0 : index
    %c0_6 = arith.constant 0 : index
    %6 = vector.load %arg4[%c0_5, %c0_6] : memref<1x4xbf16, #tpu.memory_space<vmem>>, vector<1x4xbf16>
    %7 = vector.shape_cast %6 : vector<1x4xbf16> to vector<1x1x4xbf16>
    %8 = vector.broadcast %7 : vector<1x1x4xbf16> to vector<16x16x4xbf16>
    %9 = arith.addf %5, %8 : vector<16x16x4xbf16>
    %cst = arith.constant 0.000000e+00 : bf16
    %10 = vector.broadcast %cst : bf16 to vector<16x16x4xbf16>
    %11 = arith.cmpf oge, %9, %10 : vector<16x16x4xbf16>
    %cst_7 = arith.constant 1.000980e-02 : bf16
    %12 = vector.broadcast %cst_7 : bf16 to vector<16x16x4xbf16>
    %13 = arith.mulf %12, %9 : vector<16x16x4xbf16>
    %14 = arith.select %11, %9, %13 : vector<16x16x4xi1>, vector<16x16x4xbf16>
    %15 = vector.shape_cast %14 : vector<16x16x4xbf16> to vector<256x4xbf16>
    %c0_8 = arith.constant 0 : index
    %c0_9 = arith.constant 0 : index
    %16 = vector.load %arg2[%c0_8, %c0_9] : memref<4x4xbf16, #tpu.memory_space<vmem>>, vector<4x4xbf16>
    %cst_10 = arith.constant dense<0.000000e+00> : vector<256x4xf32>
    %17 = tpu.matmul %15, %16, %cst_10 {dimension_numbers = #tpu.dot_dimension_numbers<[1], [0], [0], [1], [0, 0, 1, 1], [], []>} : vector<256x4xbf16>, vector<4x4xbf16>, vector<256x4xf32> -> vector<256x4xf32>
    %18 = vector.shape_cast %17 : vector<256x4xf32> to vector<16x16x4xf32>
    %19 = arith.truncf %18 : vector<16x16x4xf32> to vector<16x16x4xbf16>
    %c0_11 = arith.constant 0 : index
    %c0_12 = arith.constant 0 : index
    %c0_13 = arith.constant 0 : index
    %c0_14 = arith.constant 0 : index
    %20 = vector.load %arg5[%c0_11, %c0_12, %c0_13, %c0_14] : memref<1x16x16x4xbf16, #tpu.memory_space<vmem>>, vector<1x16x16x4xbf16>
    %21 = vector.shape_cast %20 : vector<1x16x16x4xbf16> to vector<16x16x4xbf16>
    %22 = vector.shape_cast %19 : vector<16x16x4xbf16> to vector<1x16x16x4xbf16>
    tpu.vector_store %arg5[%c0_11, %c0_12, %c0_13, %c0_14], %22 {strides = array<i32>} : memref<1x16x16x4xbf16, #tpu.memory_space<vmem>>, vector<1x16x16x4xbf16>,
    %23 = arith.extf %19 : vector<16x16x4xbf16> to vector<16x16x4xf32>
    %cst_15 = arith.constant dense<0.000000e+00> : vector<4xf32>
    %24 = vector.multi_reduction <add>, %23, %cst_15 [0, 1] : vector<16x16x4xf32> to vector<4xf32>
    %25 = vector.shape_cast %24 : vector<4xf32> to vector<1x1x4xf32>
    %26 = vector.shape_cast %25 : vector<1x1x4xf32> to vector<1x4xf32>
    %c0_16 = arith.constant 0 : index
    %c0_17 = arith.constant 0 : index
    %c0_18 = arith.constant 0 : index
    %27 = vector.load %arg6[%c0_16, %c0_17, %c0_18] : memref<1x2x4xf32, #tpu.memory_space<vmem>>, vector<1x1x4xf32>
    %28 = vector.shape_cast %27 : vector<1x1x4xf32> to vector<1x4xf32>
    %29 = vector.shape_cast %26 : vector<1x4xf32> to vector<1x1x4xf32>
    tpu.vector_store %arg6[%c0_16, %c0_17, %c0_18], %29 {strides = array<i32>} : memref<1x2x4xf32, #tpu.memory_space<vmem>>, vector<1x1x4xf32>,
    %30 = arith.mulf %23, %23 : vector<16x16x4xf32>
    %cst_19 = arith.constant dense<0.000000e+00> : vector<4xf32>
    %31 = vector.multi_reduction <add>, %30, %cst_19 [0, 1] : vector<16x16x4xf32> to vector<4xf32>
    %32 = vector.shape_cast %31 : vector<4xf32> to vector<1x1x4xf32>
    %33 = vector.shape_cast %32 : vector<1x1x4xf32> to vector<1x4xf32>
    %c0_20 = arith.constant 0 : index
    %c1 = arith.constant 1 : index
    %c0_21 = arith.constant 0 : index
    %34 = vector.load %arg6[%c0_20, %c1, %c0_21] : memref<1x2x4xf32, #tpu.memory_space<vmem>>, vector<1x1x4xf32>
    %35 = vector.shape_cast %34 : vector<1x1x4xf32> to vector<1x4xf32>
    %36 = vector.shape_cast %33 : vector<1x4xf32> to vector<1x1x4xf32>
    tpu.vector_store %arg6[%c0_20, %c1, %c0_21], %36 {strides = array<i32>} : memref<1x2x4xf32, #tpu.memory_space<vmem>>, vector<1x1x4xf32>,
    return
  }
  func.func @transform_0(%arg0: i32) -> (i32, i32, i32, i32) {
    %c0_i32 = arith.constant 0 : i32
    %c0_i32_0 = arith.constant 0 : i32
    %c0_i32_1 = arith.constant 0 : i32
    %c0_i32_2 = arith.constant 0 : i32
    return %arg0, %c0_i32, %c0_i32_0, %c0_i32_1 : i32, i32, i32, i32
  }
  func.func @transform_1(%arg0: i32) -> (i32, i32) {
    %c0_i32 = arith.constant 0 : i32
    %c0_i32_0 = arith.constant 0 : i32
    %c0_i32_1 = arith.constant 0 : i32
    return %c0_i32, %c0_i32_0 : i32, i32
  }
  func.func @transform_2(%arg0: i32) -> (i32, i32) {
    %c0_i32 = arith.constant 0 : i32
    %c0_i32_0 = arith.constant 0 : i32
    %c0_i32_1 = arith.constant 0 : i32
    return %c0_i32, %c0_i32_0 : i32, i32
  }
  func.func @transform_3(%arg0: i32) -> (i32, i32) {
    %c0_i32 = arith.constant 0 : i32
    %c0_i32_0 = arith.constant 0 : i32
    %c0_i32_1 = arith.constant 0 : i32
    return %c0_i32, %c0_i32_0 : i32, i32
  }
  func.func @transform_4(%arg0: i32) -> (i32, i32, i32, i32) {
    %c0_i32 = arith.constant 0 : i32
    %c0_i32_0 = arith.constant 0 : i32
    %c0_i32_1 = arith.constant 0 : i32
    %c0_i32_2 = arith.constant 0 : i32
    return %arg0, %c0_i32, %c0_i32_0, %c0_i32_1 : i32, i32, i32, i32
  }
  func.func @transform_5(%arg0: i32) -> (i32, i32, i32) {
    %c0_i32 = arith.constant 0 : i32
    %c0_i32_0 = arith.constant 0 : i32
    %c0_i32_1 = arith.constant 0 : i32
    return %arg0, %c0_i32, %c0_i32_0 : i32, i32, i32
  }
}

module attributes {stable_mosaic.version = 11 : i64} {
  func.func @_bn2_residual_kernel(%arg0: i32, %arg1: memref<1x16x16x4xf32, #tpu.memory_space<vmem>>, %arg2: memref<1x16x16x4xbf16, #tpu.memory_space<vmem>>, %arg3: memref<1x4xf32, #tpu.memory_space<vmem>>, %arg4: memref<1x4xf32, #tpu.memory_space<vmem>>, %arg5: memref<1x16x16x4xf32, #tpu.memory_space<vmem>>) attributes {dimension_semantics = [#tpu.dimension_semantics<parallel>], iteration_bounds = array<i64: 2>, scalar_prefetch = 0 : i64, scratch_operands = 0 : i64, tpu.core_type = #tpu.core_type<tc>, window_params = [{transform_indices = @transform_0, window_bounds = array<i64: 1, 16, 16, 4>}, {transform_indices = @transform_1, window_bounds = array<i64: 1, 16, 16, 4>}, {pipeline_mode = #tpu.pipeline_mode<synchronous>, transform_indices = @transform_2, window_bounds = array<i64: 1, 4>}, {pipeline_mode = #tpu.pipeline_mode<synchronous>, transform_indices = @transform_3, window_bounds = array<i64: 1, 4>}, {transform_indices = @transform_4, window_bounds = array<i64: 1, 16, 16, 4>}]} {
    %c0 = arith.constant 0 : index
    %c0_0 = arith.constant 0 : index
    %c0_1 = arith.constant 0 : index
    %c0_2 = arith.constant 0 : index
    %0 = vector.load %arg2[%c0, %c0_0, %c0_1, %c0_2] : memref<1x16x16x4xbf16, #tpu.memory_space<vmem>>, vector<1x16x16x4xbf16>
    %1 = vector.shape_cast %0 : vector<1x16x16x4xbf16> to vector<16x16x4xbf16>
    %2 = arith.extf %1 : vector<16x16x4xbf16> to vector<16x16x4xf32>
    %c0_3 = arith.constant 0 : index
    %c0_4 = arith.constant 0 : index
    %3 = vector.load %arg3[%c0_3, %c0_4] : memref<1x4xf32, #tpu.memory_space<vmem>>, vector<1x4xf32>
    %4 = vector.shape_cast %3 : vector<1x4xf32> to vector<1x1x4xf32>
    %5 = vector.broadcast %4 : vector<1x1x4xf32> to vector<16x16x4xf32>
    %6 = arith.mulf %2, %5 : vector<16x16x4xf32>
    %c0_5 = arith.constant 0 : index
    %c0_6 = arith.constant 0 : index
    %7 = vector.load %arg4[%c0_5, %c0_6] : memref<1x4xf32, #tpu.memory_space<vmem>>, vector<1x4xf32>
    %8 = vector.shape_cast %7 : vector<1x4xf32> to vector<1x1x4xf32>
    %9 = vector.broadcast %8 : vector<1x1x4xf32> to vector<16x16x4xf32>
    %10 = arith.addf %6, %9 : vector<16x16x4xf32>
    %c0_7 = arith.constant 0 : index
    %c0_8 = arith.constant 0 : index
    %c0_9 = arith.constant 0 : index
    %c0_10 = arith.constant 0 : index
    %11 = vector.load %arg1[%c0_7, %c0_8, %c0_9, %c0_10] : memref<1x16x16x4xf32, #tpu.memory_space<vmem>>, vector<1x16x16x4xf32>
    %12 = vector.shape_cast %11 : vector<1x16x16x4xf32> to vector<16x16x4xf32>
    %13 = arith.addf %12, %10 : vector<16x16x4xf32>
    %c0_11 = arith.constant 0 : index
    %c0_12 = arith.constant 0 : index
    %c0_13 = arith.constant 0 : index
    %c0_14 = arith.constant 0 : index
    %14 = vector.load %arg5[%c0_11, %c0_12, %c0_13, %c0_14] : memref<1x16x16x4xf32, #tpu.memory_space<vmem>>, vector<1x16x16x4xf32>
    %15 = vector.shape_cast %14 : vector<1x16x16x4xf32> to vector<16x16x4xf32>
    %16 = vector.shape_cast %13 : vector<16x16x4xf32> to vector<1x16x16x4xf32>
    tpu.vector_store %arg5[%c0_11, %c0_12, %c0_13, %c0_14], %16 {strides = array<i32>} : memref<1x16x16x4xf32, #tpu.memory_space<vmem>>, vector<1x16x16x4xf32>,
    return
  }
  func.func @transform_0(%arg0: i32) -> (i32, i32, i32, i32) {
    %c0_i32 = arith.constant 0 : i32
    %c0_i32_0 = arith.constant 0 : i32
    %c0_i32_1 = arith.constant 0 : i32
    %c0_i32_2 = arith.constant 0 : i32
    return %arg0, %c0_i32, %c0_i32_0, %c0_i32_1 : i32, i32, i32, i32
  }
  func.func @transform_1(%arg0: i32) -> (i32, i32, i32, i32) {
    %c0_i32 = arith.constant 0 : i32
    %c0_i32_0 = arith.constant 0 : i32
    %c0_i32_1 = arith.constant 0 : i32
    %c0_i32_2 = arith.constant 0 : i32
    return %arg0, %c0_i32, %c0_i32_0, %c0_i32_1 : i32, i32, i32, i32
  }
  func.func @transform_2(%arg0: i32) -> (i32, i32) {
    %c0_i32 = arith.constant 0 : i32
    %c0_i32_0 = arith.constant 0 : i32
    %c0_i32_1 = arith.constant 0 : i32
    return %c0_i32, %c0_i32_0 : i32, i32
  }
  func.func @transform_3(%arg0: i32) -> (i32, i32) {
    %c0_i32 = arith.constant 0 : i32
    %c0_i32_0 = arith.constant 0 : i32
    %c0_i32_1 = arith.constant 0 : i32
    return %c0_i32, %c0_i32_0 : i32, i32
  }
  func.func @transform_4(%arg0: i32) -> (i32, i32, i32, i32) {
    %c0_i32 = arith.constant 0 : i32
    %c0_i32_0 = arith.constant 0 : i32
    %c0_i32_1 = arith.constant 0 : i32
    %c0_i32_2 = arith.constant 0 : i32
    return %arg0, %c0_i32, %c0_i32_0, %c0_i32_1 : i32, i32, i32, i32
  }
}

module attributes {stable_mosaic.version = 11 : i64} {
  func.func @_conv3x3_stats_kernel(%arg0: i32, %arg1: memref<1x16x16x4xf32, #tpu.memory_space<vmem>>, %arg2: memref<9x4x4xbf16, #tpu.memory_space<vmem>>, %arg3: memref<1x16x16x4xbf16, #tpu.memory_space<vmem>>, %arg4: memref<1x2x4xf32, #tpu.memory_space<vmem>>, %arg5: memref<456x4xbf16, #tpu.memory_space<vmem>>, %arg6: memref<384x4xf32, #tpu.memory_space<vmem>>) attributes {dimension_semantics = [#tpu.dimension_semantics<parallel>], iteration_bounds = array<i64: 2>, scalar_prefetch = 0 : i64, scratch_operands = 2 : i64, tpu.core_type = #tpu.core_type<tc>, window_params = [{transform_indices = @transform_0, window_bounds = array<i64: 1, 16, 16, 4>}, {pipeline_mode = #tpu.pipeline_mode<synchronous>, transform_indices = @transform_1, window_bounds = array<i64: 9, 4, 4>}, {transform_indices = @transform_2, window_bounds = array<i64: 1, 16, 16, 4>}, {transform_indices = @transform_3, window_bounds = array<i64: 1, 2, 4>}]} {
    %cst = arith.constant 0.000000e+00 : bf16
    %0 = vector.broadcast %cst : bf16 to vector<24x4xbf16>
    %c0 = arith.constant 0 : index
    %c0_0 = arith.constant 0 : index
    %1 = vector.load %arg5[%c0, %c0_0] : memref<456x4xbf16, #tpu.memory_space<vmem>>, vector<24x4xbf16>
    tpu.vector_store %arg5[%c0, %c0_0], %0 {strides = array<i32>} : memref<456x4xbf16, #tpu.memory_space<vmem>>, vector<24x4xbf16>,
    %c408 = arith.constant 408 : index
    %c0_1 = arith.constant 0 : index
    %2 = vector.load %arg5[%c408, %c0_1] : memref<456x4xbf16, #tpu.memory_space<vmem>>, vector<24x4xbf16>
    tpu.vector_store %arg5[%c408, %c0_1], %0 {strides = array<i32>} : memref<456x4xbf16, #tpu.memory_space<vmem>>, vector<24x4xbf16>,
    %cst_2 = arith.constant 0.000000e+00 : bf16
    %3 = vector.broadcast %cst_2 : bf16 to vector<1x4xbf16>
    %c0_3 = arith.constant 0 : index
    %c0_4 = arith.constant 0 : index
    %c0_5 = arith.constant 0 : index
    %c0_6 = arith.constant 0 : index
    %4 = vector.load %arg1[%c0_3, %c0_4, %c0_5, %c0_6] : memref<1x16x16x4xf32, #tpu.memory_space<vmem>>, vector<1x1x16x4xf32>
    %5 = vector.shape_cast %4 : vector<1x1x16x4xf32> to vector<16x4xf32>
    %6 = arith.truncf %5 : vector<16x4xf32> to vector<16x4xbf16>
    %7 = tpu.concatenate %3, %6, %3 in 0 : vector<1x4xbf16>, vector<16x4xbf16>, vector<1x4xbf16> -> vector<18x4xbf16>
    %c24 = arith.constant 24 : index
    %c0_7 = arith.constant 0 : index
    %8 = vector.load %arg5[%c24, %c0_7] : memref<456x4xbf16, #tpu.memory_space<vmem>>, vector<18x4xbf16>
    tpu.vector_store %arg5[%c24, %c0_7], %7 {strides = array<i32>} : memref<456x4xbf16, #tpu.memory_space<vmem>>, vector<18x4xbf16>,
    %c0_8 = arith.constant 0 : index
    %c1 = arith.constant 1 : index
    %c0_9 = arith.constant 0 : index
    %c0_10 = arith.constant 0 : index
    %9 = vector.load %arg1[%c0_8, %c1, %c0_9, %c0_10] : memref<1x16x16x4xf32, #tpu.memory_space<vmem>>, vector<1x1x16x4xf32>
    %10 = vector.shape_cast %9 : vector<1x1x16x4xf32> to vector<16x4xf32>
    %11 = arith.truncf %10 : vector<16x4xf32> to vector<16x4xbf16>
    %12 = tpu.concatenate %3, %11, %3 in 0 : vector<1x4xbf16>, vector<16x4xbf16>, vector<1x4xbf16> -> vector<18x4xbf16>
    %c48 = arith.constant 48 : index
    %c0_11 = arith.constant 0 : index
    %13 = vector.load %arg5[%c48, %c0_11] : memref<456x4xbf16, #tpu.memory_space<vmem>>, vector<18x4xbf16>
    tpu.vector_store %arg5[%c48, %c0_11], %12 {strides = array<i32>} : memref<456x4xbf16, #tpu.memory_space<vmem>>, vector<18x4xbf16>,
    %c0_12 = arith.constant 0 : index
    %c2 = arith.constant 2 : index
    %c0_13 = arith.constant 0 : index
    %c0_14 = arith.constant 0 : index
    %14 = vector.load %arg1[%c0_12, %c2, %c0_13, %c0_14] : memref<1x16x16x4xf32, #tpu.memory_space<vmem>>, vector<1x1x16x4xf32>
    %15 = vector.shape_cast %14 : vector<1x1x16x4xf32> to vector<16x4xf32>
    %16 = arith.truncf %15 : vector<16x4xf32> to vector<16x4xbf16>
    %17 = tpu.concatenate %3, %16, %3 in 0 : vector<1x4xbf16>, vector<16x4xbf16>, vector<1x4xbf16> -> vector<18x4xbf16>
    %c72 = arith.constant 72 : index
    %c0_15 = arith.constant 0 : index
    %18 = vector.load %arg5[%c72, %c0_15] : memref<456x4xbf16, #tpu.memory_space<vmem>>, vector<18x4xbf16>
    tpu.vector_store %arg5[%c72, %c0_15], %17 {strides = array<i32>} : memref<456x4xbf16, #tpu.memory_space<vmem>>, vector<18x4xbf16>,
    %c0_16 = arith.constant 0 : index
    %c3 = arith.constant 3 : index
    %c0_17 = arith.constant 0 : index
    %c0_18 = arith.constant 0 : index
    %19 = vector.load %arg1[%c0_16, %c3, %c0_17, %c0_18] : memref<1x16x16x4xf32, #tpu.memory_space<vmem>>, vector<1x1x16x4xf32>
    %20 = vector.shape_cast %19 : vector<1x1x16x4xf32> to vector<16x4xf32>
    %21 = arith.truncf %20 : vector<16x4xf32> to vector<16x4xbf16>
    %22 = tpu.concatenate %3, %21, %3 in 0 : vector<1x4xbf16>, vector<16x4xbf16>, vector<1x4xbf16> -> vector<18x4xbf16>
    %c96 = arith.constant 96 : index
    %c0_19 = arith.constant 0 : index
    %23 = vector.load %arg5[%c96, %c0_19] : memref<456x4xbf16, #tpu.memory_space<vmem>>, vector<18x4xbf16>
    tpu.vector_store %arg5[%c96, %c0_19], %22 {strides = array<i32>} : memref<456x4xbf16, #tpu.memory_space<vmem>>, vector<18x4xbf16>,
    %c0_20 = arith.constant 0 : index
    %c4 = arith.constant 4 : index
    %c0_21 = arith.constant 0 : index
    %c0_22 = arith.constant 0 : index
    %24 = vector.load %arg1[%c0_20, %c4, %c0_21, %c0_22] : memref<1x16x16x4xf32, #tpu.memory_space<vmem>>, vector<1x1x16x4xf32>
    %25 = vector.shape_cast %24 : vector<1x1x16x4xf32> to vector<16x4xf32>
    %26 = arith.truncf %25 : vector<16x4xf32> to vector<16x4xbf16>
    %27 = tpu.concatenate %3, %26, %3 in 0 : vector<1x4xbf16>, vector<16x4xbf16>, vector<1x4xbf16> -> vector<18x4xbf16>
    %c120 = arith.constant 120 : index
    %c0_23 = arith.constant 0 : index
    %28 = vector.load %arg5[%c120, %c0_23] : memref<456x4xbf16, #tpu.memory_space<vmem>>, vector<18x4xbf16>
    tpu.vector_store %arg5[%c120, %c0_23], %27 {strides = array<i32>} : memref<456x4xbf16, #tpu.memory_space<vmem>>, vector<18x4xbf16>,
    %c0_24 = arith.constant 0 : index
    %c5 = arith.constant 5 : index
    %c0_25 = arith.constant 0 : index
    %c0_26 = arith.constant 0 : index
    %29 = vector.load %arg1[%c0_24, %c5, %c0_25, %c0_26] : memref<1x16x16x4xf32, #tpu.memory_space<vmem>>, vector<1x1x16x4xf32>
    %30 = vector.shape_cast %29 : vector<1x1x16x4xf32> to vector<16x4xf32>
    %31 = arith.truncf %30 : vector<16x4xf32> to vector<16x4xbf16>
    %32 = tpu.concatenate %3, %31, %3 in 0 : vector<1x4xbf16>, vector<16x4xbf16>, vector<1x4xbf16> -> vector<18x4xbf16>
    %c144 = arith.constant 144 : index
    %c0_27 = arith.constant 0 : index
    %33 = vector.load %arg5[%c144, %c0_27] : memref<456x4xbf16, #tpu.memory_space<vmem>>, vector<18x4xbf16>
    tpu.vector_store %arg5[%c144, %c0_27], %32 {strides = array<i32>} : memref<456x4xbf16, #tpu.memory_space<vmem>>, vector<18x4xbf16>,
    %c0_28 = arith.constant 0 : index
    %c6 = arith.constant 6 : index
    %c0_29 = arith.constant 0 : index
    %c0_30 = arith.constant 0 : index
    %34 = vector.load %arg1[%c0_28, %c6, %c0_29, %c0_30] : memref<1x16x16x4xf32, #tpu.memory_space<vmem>>, vector<1x1x16x4xf32>
    %35 = vector.shape_cast %34 : vector<1x1x16x4xf32> to vector<16x4xf32>
    %36 = arith.truncf %35 : vector<16x4xf32> to vector<16x4xbf16>
    %37 = tpu.concatenate %3, %36, %3 in 0 : vector<1x4xbf16>, vector<16x4xbf16>, vector<1x4xbf16> -> vector<18x4xbf16>
    %c168 = arith.constant 168 : index
    %c0_31 = arith.constant 0 : index
    %38 = vector.load %arg5[%c168, %c0_31] : memref<456x4xbf16, #tpu.memory_space<vmem>>, vector<18x4xbf16>
    tpu.vector_store %arg5[%c168, %c0_31], %37 {strides = array<i32>} : memref<456x4xbf16, #tpu.memory_space<vmem>>, vector<18x4xbf16>,
    %c0_32 = arith.constant 0 : index
    %c7 = arith.constant 7 : index
    %c0_33 = arith.constant 0 : index
    %c0_34 = arith.constant 0 : index
    %39 = vector.load %arg1[%c0_32, %c7, %c0_33, %c0_34] : memref<1x16x16x4xf32, #tpu.memory_space<vmem>>, vector<1x1x16x4xf32>
    %40 = vector.shape_cast %39 : vector<1x1x16x4xf32> to vector<16x4xf32>
    %41 = arith.truncf %40 : vector<16x4xf32> to vector<16x4xbf16>
    %42 = tpu.concatenate %3, %41, %3 in 0 : vector<1x4xbf16>, vector<16x4xbf16>, vector<1x4xbf16> -> vector<18x4xbf16>
    %c192 = arith.constant 192 : index
    %c0_35 = arith.constant 0 : index
    %43 = vector.load %arg5[%c192, %c0_35] : memref<456x4xbf16, #tpu.memory_space<vmem>>, vector<18x4xbf16>
    tpu.vector_store %arg5[%c192, %c0_35], %42 {strides = array<i32>} : memref<456x4xbf16, #tpu.memory_space<vmem>>, vector<18x4xbf16>,
    %c0_36 = arith.constant 0 : index
    %c8 = arith.constant 8 : index
    %c0_37 = arith.constant 0 : index
    %c0_38 = arith.constant 0 : index
    %44 = vector.load %arg1[%c0_36, %c8, %c0_37, %c0_38] : memref<1x16x16x4xf32, #tpu.memory_space<vmem>>, vector<1x1x16x4xf32>
    %45 = vector.shape_cast %44 : vector<1x1x16x4xf32> to vector<16x4xf32>
    %46 = arith.truncf %45 : vector<16x4xf32> to vector<16x4xbf16>
    %47 = tpu.concatenate %3, %46, %3 in 0 : vector<1x4xbf16>, vector<16x4xbf16>, vector<1x4xbf16> -> vector<18x4xbf16>
    %c216 = arith.constant 216 : index
    %c0_39 = arith.constant 0 : index
    %48 = vector.load %arg5[%c216, %c0_39] : memref<456x4xbf16, #tpu.memory_space<vmem>>, vector<18x4xbf16>
    tpu.vector_store %arg5[%c216, %c0_39], %47 {strides = array<i32>} : memref<456x4xbf16, #tpu.memory_space<vmem>>, vector<18x4xbf16>,
    %c0_40 = arith.constant 0 : index
    %c9 = arith.constant 9 : index
    %c0_41 = arith.constant 0 : index
    %c0_42 = arith.constant 0 : index
    %49 = vector.load %arg1[%c0_40, %c9, %c0_41, %c0_42] : memref<1x16x16x4xf32, #tpu.memory_space<vmem>>, vector<1x1x16x4xf32>
    %50 = vector.shape_cast %49 : vector<1x1x16x4xf32> to vector<16x4xf32>
    %51 = arith.truncf %50 : vector<16x4xf32> to vector<16x4xbf16>
    %52 = tpu.concatenate %3, %51, %3 in 0 : vector<1x4xbf16>, vector<16x4xbf16>, vector<1x4xbf16> -> vector<18x4xbf16>
    %c240 = arith.constant 240 : index
    %c0_43 = arith.constant 0 : index
    %53 = vector.load %arg5[%c240, %c0_43] : memref<456x4xbf16, #tpu.memory_space<vmem>>, vector<18x4xbf16>
    tpu.vector_store %arg5[%c240, %c0_43], %52 {strides = array<i32>} : memref<456x4xbf16, #tpu.memory_space<vmem>>, vector<18x4xbf16>,
    %c0_44 = arith.constant 0 : index
    %c10 = arith.constant 10 : index
    %c0_45 = arith.constant 0 : index
    %c0_46 = arith.constant 0 : index
    %54 = vector.load %arg1[%c0_44, %c10, %c0_45, %c0_46] : memref<1x16x16x4xf32, #tpu.memory_space<vmem>>, vector<1x1x16x4xf32>
    %55 = vector.shape_cast %54 : vector<1x1x16x4xf32> to vector<16x4xf32>
    %56 = arith.truncf %55 : vector<16x4xf32> to vector<16x4xbf16>
    %57 = tpu.concatenate %3, %56, %3 in 0 : vector<1x4xbf16>, vector<16x4xbf16>, vector<1x4xbf16> -> vector<18x4xbf16>
    %c264 = arith.constant 264 : index
    %c0_47 = arith.constant 0 : index
    %58 = vector.load %arg5[%c264, %c0_47] : memref<456x4xbf16, #tpu.memory_space<vmem>>, vector<18x4xbf16>
    tpu.vector_store %arg5[%c264, %c0_47], %57 {strides = array<i32>} : memref<456x4xbf16, #tpu.memory_space<vmem>>, vector<18x4xbf16>,
    %c0_48 = arith.constant 0 : index
    %c11 = arith.constant 11 : index
    %c0_49 = arith.constant 0 : index
    %c0_50 = arith.constant 0 : index
    %59 = vector.load %arg1[%c0_48, %c11, %c0_49, %c0_50] : memref<1x16x16x4xf32, #tpu.memory_space<vmem>>, vector<1x1x16x4xf32>
    %60 = vector.shape_cast %59 : vector<1x1x16x4xf32> to vector<16x4xf32>
    %61 = arith.truncf %60 : vector<16x4xf32> to vector<16x4xbf16>
    %62 = tpu.concatenate %3, %61, %3 in 0 : vector<1x4xbf16>, vector<16x4xbf16>, vector<1x4xbf16> -> vector<18x4xbf16>
    %c288 = arith.constant 288 : index
    %c0_51 = arith.constant 0 : index
    %63 = vector.load %arg5[%c288, %c0_51] : memref<456x4xbf16, #tpu.memory_space<vmem>>, vector<18x4xbf16>
    tpu.vector_store %arg5[%c288, %c0_51], %62 {strides = array<i32>} : memref<456x4xbf16, #tpu.memory_space<vmem>>, vector<18x4xbf16>,
    %c0_52 = arith.constant 0 : index
    %c12 = arith.constant 12 : index
    %c0_53 = arith.constant 0 : index
    %c0_54 = arith.constant 0 : index
    %64 = vector.load %arg1[%c0_52, %c12, %c0_53, %c0_54] : memref<1x16x16x4xf32, #tpu.memory_space<vmem>>, vector<1x1x16x4xf32>
    %65 = vector.shape_cast %64 : vector<1x1x16x4xf32> to vector<16x4xf32>
    %66 = arith.truncf %65 : vector<16x4xf32> to vector<16x4xbf16>
    %67 = tpu.concatenate %3, %66, %3 in 0 : vector<1x4xbf16>, vector<16x4xbf16>, vector<1x4xbf16> -> vector<18x4xbf16>
    %c312 = arith.constant 312 : index
    %c0_55 = arith.constant 0 : index
    %68 = vector.load %arg5[%c312, %c0_55] : memref<456x4xbf16, #tpu.memory_space<vmem>>, vector<18x4xbf16>
    tpu.vector_store %arg5[%c312, %c0_55], %67 {strides = array<i32>} : memref<456x4xbf16, #tpu.memory_space<vmem>>, vector<18x4xbf16>,
    %c0_56 = arith.constant 0 : index
    %c13 = arith.constant 13 : index
    %c0_57 = arith.constant 0 : index
    %c0_58 = arith.constant 0 : index
    %69 = vector.load %arg1[%c0_56, %c13, %c0_57, %c0_58] : memref<1x16x16x4xf32, #tpu.memory_space<vmem>>, vector<1x1x16x4xf32>
    %70 = vector.shape_cast %69 : vector<1x1x16x4xf32> to vector<16x4xf32>
    %71 = arith.truncf %70 : vector<16x4xf32> to vector<16x4xbf16>
    %72 = tpu.concatenate %3, %71, %3 in 0 : vector<1x4xbf16>, vector<16x4xbf16>, vector<1x4xbf16> -> vector<18x4xbf16>
    %c336 = arith.constant 336 : index
    %c0_59 = arith.constant 0 : index
    %73 = vector.load %arg5[%c336, %c0_59] : memref<456x4xbf16, #tpu.memory_space<vmem>>, vector<18x4xbf16>
    tpu.vector_store %arg5[%c336, %c0_59], %72 {strides = array<i32>} : memref<456x4xbf16, #tpu.memory_space<vmem>>, vector<18x4xbf16>,
    %c0_60 = arith.constant 0 : index
    %c14 = arith.constant 14 : index
    %c0_61 = arith.constant 0 : index
    %c0_62 = arith.constant 0 : index
    %74 = vector.load %arg1[%c0_60, %c14, %c0_61, %c0_62] : memref<1x16x16x4xf32, #tpu.memory_space<vmem>>, vector<1x1x16x4xf32>
    %75 = vector.shape_cast %74 : vector<1x1x16x4xf32> to vector<16x4xf32>
    %76 = arith.truncf %75 : vector<16x4xf32> to vector<16x4xbf16>
    %77 = tpu.concatenate %3, %76, %3 in 0 : vector<1x4xbf16>, vector<16x4xbf16>, vector<1x4xbf16> -> vector<18x4xbf16>
    %c360 = arith.constant 360 : index
    %c0_63 = arith.constant 0 : index
    %78 = vector.load %arg5[%c360, %c0_63] : memref<456x4xbf16, #tpu.memory_space<vmem>>, vector<18x4xbf16>
    tpu.vector_store %arg5[%c360, %c0_63], %77 {strides = array<i32>} : memref<456x4xbf16, #tpu.memory_space<vmem>>, vector<18x4xbf16>,
    %c0_64 = arith.constant 0 : index
    %c15 = arith.constant 15 : index
    %c0_65 = arith.constant 0 : index
    %c0_66 = arith.constant 0 : index
    %79 = vector.load %arg1[%c0_64, %c15, %c0_65, %c0_66] : memref<1x16x16x4xf32, #tpu.memory_space<vmem>>, vector<1x1x16x4xf32>
    %80 = vector.shape_cast %79 : vector<1x1x16x4xf32> to vector<16x4xf32>
    %81 = arith.truncf %80 : vector<16x4xf32> to vector<16x4xbf16>
    %82 = tpu.concatenate %3, %81, %3 in 0 : vector<1x4xbf16>, vector<16x4xbf16>, vector<1x4xbf16> -> vector<18x4xbf16>
    %c384 = arith.constant 384 : index
    %c0_67 = arith.constant 0 : index
    %83 = vector.load %arg5[%c384, %c0_67] : memref<456x4xbf16, #tpu.memory_space<vmem>>, vector<18x4xbf16>
    tpu.vector_store %arg5[%c384, %c0_67], %82 {strides = array<i32>} : memref<456x4xbf16, #tpu.memory_space<vmem>>, vector<18x4xbf16>,
    %c0_68 = arith.constant 0 : index
    %c0_69 = arith.constant 0 : index
    %84 = vector.load %arg5[%c0_68, %c0_69] : memref<456x4xbf16, #tpu.memory_space<vmem>>, vector<384x4xbf16>
    %c0_70 = arith.constant 0 : index
    %c0_71 = arith.constant 0 : index
    %c0_72 = arith.constant 0 : index
    %85 = vector.load %arg2[%c0_70, %c0_71, %c0_72] : memref<9x4x4xbf16, #tpu.memory_space<vmem>>, vector<1x4x4xbf16>
    %86 = vector.shape_cast %85 : vector<1x4x4xbf16> to vector<4x4xbf16>
    %cst_73 = arith.constant dense<0.000000e+00> : vector<384x4xf32>
    %87 = tpu.matmul %84, %86, %cst_73 {dimension_numbers = #tpu.dot_dimension_numbers<[1], [0], [0], [1], [0, 0, 1, 1], [], []>} : vector<384x4xbf16>, vector<4x4xbf16>, vector<384x4xf32> -> vector<384x4xf32>
    %c0_74 = arith.constant 0 : index
    %c0_75 = arith.constant 0 : index
    %88 = vector.load %arg6[%c0_74, %c0_75] : memref<384x4xf32, #tpu.memory_space<vmem>>, vector<384x4xf32>
    tpu.vector_store %arg6[%c0_74, %c0_75], %87 {strides = array<i32>} : memref<384x4xf32, #tpu.memory_space<vmem>>, vector<384x4xf32>,
    %c1_76 = arith.constant 1 : index
    %c0_77 = arith.constant 0 : index
    %89 = vector.load %arg5[%c1_76, %c0_77] : memref<456x4xbf16, #tpu.memory_space<vmem>>, vector<384x4xbf16>
    %c1_78 = arith.constant 1 : index
    %c0_79 = arith.constant 0 : index
    %c0_80 = arith.constant 0 : index
    %90 = vector.load %arg2[%c1_78, %c0_79, %c0_80] : memref<9x4x4xbf16, #tpu.memory_space<vmem>>, vector<1x4x4xbf16>
    %91 = vector.shape_cast %90 : vector<1x4x4xbf16> to vector<4x4xbf16>
    %cst_81 = arith.constant dense<0.000000e+00> : vector<384x4xf32>
    %92 = tpu.matmul %89, %91, %cst_81 {dimension_numbers = #tpu.dot_dimension_numbers<[1], [0], [0], [1], [0, 0, 1, 1], [], []>} : vector<384x4xbf16>, vector<4x4xbf16>, vector<384x4xf32> -> vector<384x4xf32>
    %c0_82 = arith.constant 0 : index
    %c0_83 = arith.constant 0 : index
    %93 = vector.load %arg6[%c0_82, %c0_83] : memref<384x4xf32, #tpu.memory_space<vmem>>, vector<384x4xf32>
    %94 = arith.addf %93, %92 : vector<384x4xf32>
    %c0_84 = arith.constant 0 : index
    %c0_85 = arith.constant 0 : index
    %95 = vector.load %arg6[%c0_84, %c0_85] : memref<384x4xf32, #tpu.memory_space<vmem>>, vector<384x4xf32>
    tpu.vector_store %arg6[%c0_84, %c0_85], %94 {strides = array<i32>} : memref<384x4xf32, #tpu.memory_space<vmem>>, vector<384x4xf32>,
    %c2_86 = arith.constant 2 : index
    %c0_87 = arith.constant 0 : index
    %96 = vector.load %arg5[%c2_86, %c0_87] : memref<456x4xbf16, #tpu.memory_space<vmem>>, vector<384x4xbf16>
    %c2_88 = arith.constant 2 : index
    %c0_89 = arith.constant 0 : index
    %c0_90 = arith.constant 0 : index
    %97 = vector.load %arg2[%c2_88, %c0_89, %c0_90] : memref<9x4x4xbf16, #tpu.memory_space<vmem>>, vector<1x4x4xbf16>
    %98 = vector.shape_cast %97 : vector<1x4x4xbf16> to vector<4x4xbf16>
    %cst_91 = arith.constant dense<0.000000e+00> : vector<384x4xf32>
    %99 = tpu.matmul %96, %98, %cst_91 {dimension_numbers = #tpu.dot_dimension_numbers<[1], [0], [0], [1], [0, 0, 1, 1], [], []>} : vector<384x4xbf16>, vector<4x4xbf16>, vector<384x4xf32> -> vector<384x4xf32>
    %c0_92 = arith.constant 0 : index
    %c0_93 = arith.constant 0 : index
    %100 = vector.load %arg6[%c0_92, %c0_93] : memref<384x4xf32, #tpu.memory_space<vmem>>, vector<384x4xf32>
    %101 = arith.addf %100, %99 : vector<384x4xf32>
    %c0_94 = arith.constant 0 : index
    %c0_95 = arith.constant 0 : index
    %102 = vector.load %arg6[%c0_94, %c0_95] : memref<384x4xf32, #tpu.memory_space<vmem>>, vector<384x4xf32>
    tpu.vector_store %arg6[%c0_94, %c0_95], %101 {strides = array<i32>} : memref<384x4xf32, #tpu.memory_space<vmem>>, vector<384x4xf32>,
    %c24_96 = arith.constant 24 : index
    %c0_97 = arith.constant 0 : index
    %103 = vector.load %arg5[%c24_96, %c0_97] : memref<456x4xbf16, #tpu.memory_space<vmem>>, vector<384x4xbf16>
    %c3_98 = arith.constant 3 : index
    %c0_99 = arith.constant 0 : index
    %c0_100 = arith.constant 0 : index
    %104 = vector.load %arg2[%c3_98, %c0_99, %c0_100] : memref<9x4x4xbf16, #tpu.memory_space<vmem>>, vector<1x4x4xbf16>
    %105 = vector.shape_cast %104 : vector<1x4x4xbf16> to vector<4x4xbf16>
    %cst_101 = arith.constant dense<0.000000e+00> : vector<384x4xf32>
    %106 = tpu.matmul %103, %105, %cst_101 {dimension_numbers = #tpu.dot_dimension_numbers<[1], [0], [0], [1], [0, 0, 1, 1], [], []>} : vector<384x4xbf16>, vector<4x4xbf16>, vector<384x4xf32> -> vector<384x4xf32>
    %c0_102 = arith.constant 0 : index
    %c0_103 = arith.constant 0 : index
    %107 = vector.load %arg6[%c0_102, %c0_103] : memref<384x4xf32, #tpu.memory_space<vmem>>, vector<384x4xf32>
    %108 = arith.addf %107, %106 : vector<384x4xf32>
    %c0_104 = arith.constant 0 : index
    %c0_105 = arith.constant 0 : index
    %109 = vector.load %arg6[%c0_104, %c0_105] : memref<384x4xf32, #tpu.memory_space<vmem>>, vector<384x4xf32>
    tpu.vector_store %arg6[%c0_104, %c0_105], %108 {strides = array<i32>} : memref<384x4xf32, #tpu.memory_space<vmem>>, vector<384x4xf32>,
    %c25 = arith.constant 25 : index
    %c0_106 = arith.constant 0 : index
    %110 = vector.load %arg5[%c25, %c0_106] : memref<456x4xbf16, #tpu.memory_space<vmem>>, vector<384x4xbf16>
    %c4_107 = arith.constant 4 : index
    %c0_108 = arith.constant 0 : index
    %c0_109 = arith.constant 0 : index
    %111 = vector.load %arg2[%c4_107, %c0_108, %c0_109] : memref<9x4x4xbf16, #tpu.memory_space<vmem>>, vector<1x4x4xbf16>
    %112 = vector.shape_cast %111 : vector<1x4x4xbf16> to vector<4x4xbf16>
    %cst_110 = arith.constant dense<0.000000e+00> : vector<384x4xf32>
    %113 = tpu.matmul %110, %112, %cst_110 {dimension_numbers = #tpu.dot_dimension_numbers<[1], [0], [0], [1], [0, 0, 1, 1], [], []>} : vector<384x4xbf16>, vector<4x4xbf16>, vector<384x4xf32> -> vector<384x4xf32>
    %c0_111 = arith.constant 0 : index
    %c0_112 = arith.constant 0 : index
    %114 = vector.load %arg6[%c0_111, %c0_112] : memref<384x4xf32, #tpu.memory_space<vmem>>, vector<384x4xf32>
    %115 = arith.addf %114, %113 : vector<384x4xf32>
    %c0_113 = arith.constant 0 : index
    %c0_114 = arith.constant 0 : index
    %116 = vector.load %arg6[%c0_113, %c0_114] : memref<384x4xf32, #tpu.memory_space<vmem>>, vector<384x4xf32>
    tpu.vector_store %arg6[%c0_113, %c0_114], %115 {strides = array<i32>} : memref<384x4xf32, #tpu.memory_space<vmem>>, vector<384x4xf32>,
    %c26 = arith.constant 26 : index
    %c0_115 = arith.constant 0 : index
    %117 = vector.load %arg5[%c26, %c0_115] : memref<456x4xbf16, #tpu.memory_space<vmem>>, vector<384x4xbf16>
    %c5_116 = arith.constant 5 : index
    %c0_117 = arith.constant 0 : index
    %c0_118 = arith.constant 0 : index
    %118 = vector.load %arg2[%c5_116, %c0_117, %c0_118] : memref<9x4x4xbf16, #tpu.memory_space<vmem>>, vector<1x4x4xbf16>
    %119 = vector.shape_cast %118 : vector<1x4x4xbf16> to vector<4x4xbf16>
    %cst_119 = arith.constant dense<0.000000e+00> : vector<384x4xf32>
    %120 = tpu.matmul %117, %119, %cst_119 {dimension_numbers = #tpu.dot_dimension_numbers<[1], [0], [0], [1], [0, 0, 1, 1], [], []>} : vector<384x4xbf16>, vector<4x4xbf16>, vector<384x4xf32> -> vector<384x4xf32>
    %c0_120 = arith.constant 0 : index
    %c0_121 = arith.constant 0 : index
    %121 = vector.load %arg6[%c0_120, %c0_121] : memref<384x4xf32, #tpu.memory_space<vmem>>, vector<384x4xf32>
    %122 = arith.addf %121, %120 : vector<384x4xf32>
    %c0_122 = arith.constant 0 : index
    %c0_123 = arith.constant 0 : index
    %123 = vector.load %arg6[%c0_122, %c0_123] : memref<384x4xf32, #tpu.memory_space<vmem>>, vector<384x4xf32>
    tpu.vector_store %arg6[%c0_122, %c0_123], %122 {strides = array<i32>} : memref<384x4xf32, #tpu.memory_space<vmem>>, vector<384x4xf32>,
    %c48_124 = arith.constant 48 : index
    %c0_125 = arith.constant 0 : index
    %124 = vector.load %arg5[%c48_124, %c0_125] : memref<456x4xbf16, #tpu.memory_space<vmem>>, vector<384x4xbf16>
    %c6_126 = arith.constant 6 : index
    %c0_127 = arith.constant 0 : index
    %c0_128 = arith.constant 0 : index
    %125 = vector.load %arg2[%c6_126, %c0_127, %c0_128] : memref<9x4x4xbf16, #tpu.memory_space<vmem>>, vector<1x4x4xbf16>
    %126 = vector.shape_cast %125 : vector<1x4x4xbf16> to vector<4x4xbf16>
    %cst_129 = arith.constant dense<0.000000e+00> : vector<384x4xf32>
    %127 = tpu.matmul %124, %126, %cst_129 {dimension_numbers = #tpu.dot_dimension_numbers<[1], [0], [0], [1], [0, 0, 1, 1], [], []>} : vector<384x4xbf16>, vector<4x4xbf16>, vector<384x4xf32> -> vector<384x4xf32>
    %c0_130 = arith.constant 0 : index
    %c0_131 = arith.constant 0 : index
    %128 = vector.load %arg6[%c0_130, %c0_131] : memref<384x4xf32, #tpu.memory_space<vmem>>, vector<384x4xf32>
    %129 = arith.addf %128, %127 : vector<384x4xf32>
    %c0_132 = arith.constant 0 : index
    %c0_133 = arith.constant 0 : index
    %130 = vector.load %arg6[%c0_132, %c0_133] : memref<384x4xf32, #tpu.memory_space<vmem>>, vector<384x4xf32>
    tpu.vector_store %arg6[%c0_132, %c0_133], %129 {strides = array<i32>} : memref<384x4xf32, #tpu.memory_space<vmem>>, vector<384x4xf32>,
    %c49 = arith.constant 49 : index
    %c0_134 = arith.constant 0 : index
    %131 = vector.load %arg5[%c49, %c0_134] : memref<456x4xbf16, #tpu.memory_space<vmem>>, vector<384x4xbf16>
    %c7_135 = arith.constant 7 : index
    %c0_136 = arith.constant 0 : index
    %c0_137 = arith.constant 0 : index
    %132 = vector.load %arg2[%c7_135, %c0_136, %c0_137] : memref<9x4x4xbf16, #tpu.memory_space<vmem>>, vector<1x4x4xbf16>
    %133 = vector.shape_cast %132 : vector<1x4x4xbf16> to vector<4x4xbf16>
    %cst_138 = arith.constant dense<0.000000e+00> : vector<384x4xf32>
    %134 = tpu.matmul %131, %133, %cst_138 {dimension_numbers = #tpu.dot_dimension_numbers<[1], [0], [0], [1], [0, 0, 1, 1], [], []>} : vector<384x4xbf16>, vector<4x4xbf16>, vector<384x4xf32> -> vector<384x4xf32>
    %c0_139 = arith.constant 0 : index
    %c0_140 = arith.constant 0 : index
    %135 = vector.load %arg6[%c0_139, %c0_140] : memref<384x4xf32, #tpu.memory_space<vmem>>, vector<384x4xf32>
    %136 = arith.addf %135, %134 : vector<384x4xf32>
    %c0_141 = arith.constant 0 : index
    %c0_142 = arith.constant 0 : index
    %137 = vector.load %arg6[%c0_141, %c0_142] : memref<384x4xf32, #tpu.memory_space<vmem>>, vector<384x4xf32>
    tpu.vector_store %arg6[%c0_141, %c0_142], %136 {strides = array<i32>} : memref<384x4xf32, #tpu.memory_space<vmem>>, vector<384x4xf32>,
    %c50 = arith.constant 50 : index
    %c0_143 = arith.constant 0 : index
    %138 = vector.load %arg5[%c50, %c0_143] : memref<456x4xbf16, #tpu.memory_space<vmem>>, vector<384x4xbf16>
    %c8_144 = arith.constant 8 : index
    %c0_145 = arith.constant 0 : index
    %c0_146 = arith.constant 0 : index
    %139 = vector.load %arg2[%c8_144, %c0_145, %c0_146] : memref<9x4x4xbf16, #tpu.memory_space<vmem>>, vector<1x4x4xbf16>
    %140 = vector.shape_cast %139 : vector<1x4x4xbf16> to vector<4x4xbf16>
    %cst_147 = arith.constant dense<0.000000e+00> : vector<384x4xf32>
    %141 = tpu.matmul %138, %140, %cst_147 {dimension_numbers = #tpu.dot_dimension_numbers<[1], [0], [0], [1], [0, 0, 1, 1], [], []>} : vector<384x4xbf16>, vector<4x4xbf16>, vector<384x4xf32> -> vector<384x4xf32>
    %c0_148 = arith.constant 0 : index
    %c0_149 = arith.constant 0 : index
    %142 = vector.load %arg6[%c0_148, %c0_149] : memref<384x4xf32, #tpu.memory_space<vmem>>, vector<384x4xf32>
    %143 = arith.addf %142, %141 : vector<384x4xf32>
    %c0_150 = arith.constant 0 : index
    %c0_151 = arith.constant 0 : index
    %144 = vector.load %arg6[%c0_150, %c0_151] : memref<384x4xf32, #tpu.memory_space<vmem>>, vector<384x4xf32>
    tpu.vector_store %arg6[%c0_150, %c0_151], %143 {strides = array<i32>} : memref<384x4xf32, #tpu.memory_space<vmem>>, vector<384x4xf32>,
    %c0_152 = arith.constant 0 : index
    %c0_153 = arith.constant 0 : index
    %145 = vector.load %arg6[%c0_152, %c0_153] : memref<384x4xf32, #tpu.memory_space<vmem>>, vector<384x4xf32>
    %146 = arith.truncf %145 : vector<384x4xf32> to vector<384x4xbf16>
    %147 = vector.shape_cast %146 : vector<384x4xbf16> to vector<16x24x4xbf16>
    %148 = vector.extract_strided_slice %147 {offsets = [0, 0, 0], sizes = [16, 16, 4], strides = [1, 1, 1]} : vector<16x24x4xbf16> to vector<16x16x4xbf16>
    %c0_154 = arith.constant 0 : index
    %c0_155 = arith.constant 0 : index
    %c0_156 = arith.constant 0 : index
    %c0_157 = arith.constant 0 : index
    %149 = vector.load %arg3[%c0_154, %c0_155, %c0_156, %c0_157] : memref<1x16x16x4xbf16, #tpu.memory_space<vmem>>, vector<1x16x16x4xbf16>
    %150 = vector.shape_cast %149 : vector<1x16x16x4xbf16> to vector<16x16x4xbf16>
    %151 = vector.shape_cast %148 : vector<16x16x4xbf16> to vector<1x16x16x4xbf16>
    tpu.vector_store %arg3[%c0_154, %c0_155, %c0_156, %c0_157], %151 {strides = array<i32>} : memref<1x16x16x4xbf16, #tpu.memory_space<vmem>>, vector<1x16x16x4xbf16>,
    %152 = arith.extf %148 : vector<16x16x4xbf16> to vector<16x16x4xf32>
    %cst_158 = arith.constant dense<0.000000e+00> : vector<4xf32>
    %153 = vector.multi_reduction <add>, %152, %cst_158 [0, 1] : vector<16x16x4xf32> to vector<4xf32>
    %154 = vector.shape_cast %153 : vector<4xf32> to vector<1x1x4xf32>
    %155 = vector.shape_cast %154 : vector<1x1x4xf32> to vector<1x4xf32>
    %c0_159 = arith.constant 0 : index
    %c0_160 = arith.constant 0 : index
    %c0_161 = arith.constant 0 : index
    %156 = vector.load %arg4[%c0_159, %c0_160, %c0_161] : memref<1x2x4xf32, #tpu.memory_space<vmem>>, vector<1x1x4xf32>
    %157 = vector.shape_cast %156 : vector<1x1x4xf32> to vector<1x4xf32>
    %158 = vector.shape_cast %155 : vector<1x4xf32> to vector<1x1x4xf32>
    tpu.vector_store %arg4[%c0_159, %c0_160, %c0_161], %158 {strides = array<i32>} : memref<1x2x4xf32, #tpu.memory_space<vmem>>, vector<1x1x4xf32>,
    %159 = arith.mulf %152, %152 : vector<16x16x4xf32>
    %cst_162 = arith.constant dense<0.000000e+00> : vector<4xf32>
    %160 = vector.multi_reduction <add>, %159, %cst_162 [0, 1] : vector<16x16x4xf32> to vector<4xf32>
    %161 = vector.shape_cast %160 : vector<4xf32> to vector<1x1x4xf32>
    %162 = vector.shape_cast %161 : vector<1x1x4xf32> to vector<1x4xf32>
    %c0_163 = arith.constant 0 : index
    %c1_164 = arith.constant 1 : index
    %c0_165 = arith.constant 0 : index
    %163 = vector.load %arg4[%c0_163, %c1_164, %c0_165] : memref<1x2x4xf32, #tpu.memory_space<vmem>>, vector<1x1x4xf32>
    %164 = vector.shape_cast %163 : vector<1x1x4xf32> to vector<1x4xf32>
    %165 = vector.shape_cast %162 : vector<1x4xf32> to vector<1x1x4xf32>
    tpu.vector_store %arg4[%c0_163, %c1_164, %c0_165], %165 {strides = array<i32>} : memref<1x2x4xf32, #tpu.memory_space<vmem>>, vector<1x1x4xf32>,
    return
  }
  func.func @transform_0(%arg0: i32) -> (i32, i32, i32, i32) {
    %c0_i32 = arith.constant 0 : i32
    %c0_i32_0 = arith.constant 0 : i32
    %c0_i32_1 = arith.constant 0 : i32
    %c0_i32_2 = arith.constant 0 : i32
    return %arg0, %c0_i32, %c0_i32_0, %c0_i32_1 : i32, i32, i32, i32
  }
  func.func @transform_1(%arg0: i32) -> (i32, i32, i32) {
    %c0_i32 = arith.constant 0 : i32
    %c0_i32_0 = arith.constant 0 : i32
    %c0_i32_1 = arith.constant 0 : i32
    %c0_i32_2 = arith.constant 0 : i32
    return %c0_i32, %c0_i32_0, %c0_i32_1 : i32, i32, i32
  }
  func.func @transform_2(%arg0: i32) -> (i32, i32, i32, i32) {
    %c0_i32 = arith.constant 0 : i32
    %c0_i32_0 = arith.constant 0 : i32
    %c0_i32_1 = arith.constant 0 : i32
    %c0_i32_2 = arith.constant 0 : i32
    return %arg0, %c0_i32, %c0_i32_0, %c0_i32_1 : i32, i32, i32, i32
  }
  func.func @transform_3(%arg0: i32) -> (i32, i32, i32) {
    %c0_i32 = arith.constant 0 : i32
    %c0_i32_0 = arith.constant 0 : i32
    %c0_i32_1 = arith.constant 0 : i32
    return %arg0, %c0_i32, %c0_i32_0 : i32, i32, i32
  }
}

</mosaic_0001>

<llo_original>
// kernel: residual_layer_nhwc.5
$region0: #{residual_layer_nhwc.5}
  #allocation0 [shape = 'u32[]', space=smem, size = 0x4, offset = 0x4, fixed_abs, tag = 'smem constant byte address 0x4 - core index']
  #allocation1 [shape = 'u32[72,128]{1,0:T(1,128)}', space=vmem, size = 0x9000, scoped, tag = 'internal scratch']
  %s0 = inlined_call_operand.vmem [shape: f32[2,16,16,4], index: 0, kind: input, shape index: {}]
  %s1 = inlined_call_operand.vmem [shape: bf16[2,16,16,4], index: 1, kind: input, shape index: {}]
  %s2 = inlined_call_operand.vmem [shape: f32[1,4], index: 2, kind: input, shape index: {}]
  %s3 = inlined_call_operand.vmem [shape: f32[1,4], index: 3, kind: input, shape index: {}]
  %s4 = inlined_call_operand.vmem [shape: f32[2,16,16,4], index: 4, kind: output, shape index: {}]
  %s5 = sld [smem:[#allocation0]]
  $region49: #{residual_layer_nhwc.5} parent=0
    _
  %s7 = ssub.s32 1, %s5
  %s8 = scalar_select 0, %s7, %s5
  loop: start=0, step=1, limit=4
  $region2: #{residual_layer_nhwc.5} parent=0 // loop_pre_header
    _
  $region3: #{residual_layer_nhwc.5} parent=0 // loop_header
    %s10 = sphi 0, %s14
    %p11 = scmp.ge.s32.totalorder %s10, 4
    %s20 = sphi 0, %s22
    %s23 = sphi 0, %s20
    %s24 = sphi 0, %s23
    %s40 = sphi 0, %s24
    %s46 = sphi 0, %s48
    %s49 = sphi 0, %s46
    %s50 = sphi 0, %s49
    %s66 = sphi 0, %s50
    %s70 = sphi 0, %s70
    %s72 = sphi 0, %s70
    %s73 = sphi 0, %s72
    %s87 = sphi 0, %s73
    %s91 = sphi 0, %s91
    %s93 = sphi 0, %s91
    %s94 = sphi 0, %s93
    %s108 = sphi 0, %s94
    %s114 = sphi 0, %s116
    %s117 = sphi 0, %s114
    %s118 = sphi 0, %s117
    %s134 = sphi 0, %s118
  $region4: #{residual_layer_nhwc.5} parent=0 // loop_header_branch
    %13 = sbr.rel (%p11) target = $region8
  $region5: #{residual_layer_nhwc.5} parent=0 // loop_body
    %s15 = ssub.s32 %s10, 1
    %s16 = ssub.s32 %s10, 2
    %s17 = sadd.s32 %s10, 1
    %s18 = ssub.s32 %s10, %s17
    %p19 = scmp.eq.s32.totalorder %s18, 0
    %s21 = sadd.s32 %s20, 1
    %s22 = scalar_select %p19, %s20, %s21
    %p25 = pneg %p19
    %p26 = scmp.eq.s32.totalorder %s10, 1
    %p27 = por %p25, %p26
    %p28 = scmp.ne.s32.totalorder %s20, %s23
    %p29 = scmp.eq.s32.totalorder %s10, 0
    %p30 = por %p28, %p29
    %p31 = scmp.ne.s32.totalorder %s20, %s23
    %p32 = scmp.eq.s32.totalorder %s15, 1
    %p33 = por %p31, %p32
    %p34 = scmp.ne.s32.totalorder %s23, %s24
    %p35 = scmp.eq.s32.totalorder %s15, 0
    %p36 = por %p34, %p35
    %p37 = scmp.ne.s32.totalorder %s23, %s24
    %p38 = scmp.eq.s32.totalorder %s16, 1
    %p39 = por %p37, %p38
    %p41 = scmp.ne.s32.totalorder %s24, %s40
    %p42 = scmp.eq.s32.totalorder %s16, 0
    %p43 = por %p41, %p42
    %s44 = ssub.s32 %s10, %s17
    %p45 = scmp.eq.s32.totalorder %s44, 0
    %s47 = sadd.s32 %s46, 1
    %s48 = scalar_select %p45, %s46, %s47
    %p51 = pneg %p45
    %p52 = scmp.eq.s32.totalorder %s10, 1
    %p53 = por %p51, %p52
    %p54 = scmp.ne.s32.totalorder %s46, %s49
    %p55 = scmp.eq.s32.totalorder %s10, 0
    %p56 = por %p54, %p55
    %p57 = scmp.ne.s32.totalorder %s46, %s49
    %p58 = scmp.eq.s32.totalorder %s15, 1
    %p59 = por %p57, %p58
    %p60 = scmp.ne.s32.totalorder %s49, %s50
    %p61 = scmp.eq.s32.totalorder %s15, 0
    %p62 = por %p60, %p61
    %p63 = scmp.ne.s32.totalorder %s49, %s50
    %p64 = scmp.eq.s32.totalorder %s16, 1
    %p65 = por %p63, %p64
    %p67 = scmp.ne.s32.totalorder %s50, %s66
    %p68 = scmp.eq.s32.totalorder %s16, 0
    %p69 = por %p67, %p68
    %s71 = sadd.s32 %s70, 1
    %p74 = scmp.eq.s32.totalorder %s10, 1
    %p75 = scmp.ne.s32.totalorder %s70, %s72
    %p76 = scmp.eq.s32.totalorder %s10, 0
    %p77 = por %p75, %p76
    %p78 = scmp.ne.s32.totalorder %s70, %s72
    %p79 = scmp.eq.s32.totalorder %s15, 1
    %p80 = por %p78, %p79
    %p81 = scmp.ne.s32.totalorder %s72, %s73
    %p82 = scmp.eq.s32.totalorder %s15, 0
    %p83 = por %p81, %p82
    %p84 = scmp.ne.s32.totalorder %s72, %s73
    %p85 = scmp.eq.s32.totalorder %s16, 1
    %p86 = por %p84, %p85
    %p88 = scmp.ne.s32.totalorder %s73, %s87
    %p89 = scmp.eq.s32.totalorder %s16, 0
    %p90 = por %p88, %p89
    %s92 = sadd.s32 %s91, 1
    %p95 = scmp.eq.s32.totalorder %s10, 1
    %p96 = scmp.ne.s32.totalorder %s91, %s93
    %p97 = scmp.eq.s32.totalorder %s10, 0
    %p98 = por %p96, %p97
    %p99 = scmp.ne.s32.totalorder %s91, %s93
    %p100 = scmp.eq.s32.totalorder %s15, 1
    %p101 = por %p99, %p100
    %p102 = scmp.ne.s32.totalorder %s93, %s94
    %p103 = scmp.eq.s32.totalorder %s15, 0
    %p104 = por %p102, %p103
    %p105 = scmp.ne.s32.totalorder %s93, %s94
    %p106 = scmp.eq.s32.totalorder %s16, 1
    %p107 = por %p105, %p106
    %p109 = scmp.ne.s32.totalorder %s94, %s108
    %p110 = scmp.eq.s32.totalorder %s16, 0
    %p111 = por %p109, %p110
    %s112 = ssub.s32 %s10, %s17
    %p113 = scmp.eq.s32.totalorder %s112, 0
    %s115 = sadd.s32 %s114, 1
    %s116 = scalar_select %p113, %s114, %s115
    %p119 = pneg %p113
    %p120 = scmp.eq.s32.totalorder %s10, 1
    %p121 = por %p119, %p120
    %p122 = scmp.ne.s32.totalorder %s114, %s117
    %p123 = scmp.eq.s32.totalorder %s10, 0
    %p124 = por %p122, %p123
    %p125 = scmp.ne.s32.totalorder %s114, %s117
    %p126 = scmp.eq.s32.totalorder %s15, 1
    %p127 = por %p125, %p126
    %p128 = scmp.ne.s32.totalorder %s117, %s118
    %p129 = scmp.eq.s32.totalorder %s15, 0
    %p130 = por %p128, %p129
    %p131 = scmp.ne.s32.totalorder %s117, %s118
    %p132 = scmp.eq.s32.totalorder %s16, 1
    %p133 = por %p131, %p132
    %p135 = scmp.ne.s32.totalorder %s118, %s134
    %p136 = scmp.eq.s32.totalorder %s16, 0
    %p137 = por %p135, %p136
    %p138 = scmp.le.s32.totalorder 1, %s10
    %p139 = scmp.lt.s32.totalorder %s10, 3
    %p140 = pnand %p138, %p139
    %p141 = pneg %p140
    // Predicated region
    $region9: #{residual_layer_nhwc.5} parent=5 // pred_check
      _
    $region10: #{residual_layer_nhwc.5} parent=5 // pred_check_branch
      %143 = sbr.rel (%p140) target = $region12
    $region11: #{residual_layer_nhwc.5} parent=5 // pred_region
      %s144 = ssub.s32 %s10, 1
      // Predicated region
      $region13: #{residual_layer_nhwc.5} parent=11 // pred_check
        %p145 = pneg %p83
      $region14: #{residual_layer_nhwc.5} parent=11 // pred_check_branch
        %147 = sbr.rel (%p145) target = $region16
      $region15: #{residual_layer_nhwc.5} parent=11 // pred_region
        _
      $region16: #{residual_layer_nhwc.5} parent=11 // pred_fallthru
        _
      // Predicated region
      $region17: #{residual_layer_nhwc.5} parent=11 // pred_check
        %p148 = pneg %p104
      $region18: #{residual_layer_nhwc.5} parent=11 // pred_check_branch
        %150 = sbr.rel (%p148) target = $region20
      $region19: #{residual_layer_nhwc.5} parent=11 // pred_region
        _
      $region20: #{residual_layer_nhwc.5} parent=11 // pred_fallthru
        _
    $region12: #{residual_layer_nhwc.5} parent=5 // pred_fallthru
      _
    %p151 = scmp.lt.s32.totalorder %s10, 2
    // Predicated region
    $region21: #{residual_layer_nhwc.5} parent=5 // pred_check
      %p152 = pneg %p151
    $region22: #{residual_layer_nhwc.5} parent=5 // pred_check_branch
      %154 = sbr.rel (%p152) target = $region24
    $region23: #{residual_layer_nhwc.5} parent=5 // pred_region
      // Predicated region
      $region25: #{residual_layer_nhwc.5} parent=23 // pred_check
        %p155 = pneg %p30
      $region26: #{residual_layer_nhwc.5} parent=23 // pred_check_branch
        %157 = sbr.rel (%p155) target = $region28
      $region27: #{residual_layer_nhwc.5} parent=23 // pred_region
        %p158 = scmp.lt.s32.totalorder %s10, 1
        %s159 = scalar_select %p158, %s10, 1
        %s160 = smul.addr %s159, 32
        %s161 = smul.addr %s160, 8
        %s162 = scalar_lea.vmem %s0, %s161
      $region28: #{residual_layer_nhwc.5} parent=23 // pred_fallthru
        _
      // Predicated region
      $region29: #{residual_layer_nhwc.5} parent=23 // pred_check
        %p163 = pneg %p56
      $region30: #{residual_layer_nhwc.5} parent=23 // pred_check_branch
        %165 = sbr.rel (%p163) target = $region32
      $region31: #{residual_layer_nhwc.5} parent=23 // pred_region
        %p166 = scmp.lt.s32.totalorder %s10, 1
        %s167 = scalar_select %p166, %s10, 1
        %s168 = smul.addr %s167, 32
        %s169 = smul.addr %s168, 4
        %s170 = scalar_lea.vmem %s1, %s169
      $region32: #{residual_layer_nhwc.5} parent=23 // pred_fallthru
        _
    $region24: #{residual_layer_nhwc.5} parent=5 // pred_fallthru
      _
    %p171 = scmp.le.s32.totalorder 1, %s10
    %p172 = scmp.lt.s32.totalorder %s10, 3
    %p173 = pnand %p171, %p172
    %p174 = pneg %p173
    // Predicated region
    $region33: #{residual_layer_nhwc.5} parent=5 // pred_check
      _
    $region34: #{residual_layer_nhwc.5} parent=5 // pred_check_branch
      %176 = sbr.rel (%p173) target = $region36
    $region35: #{residual_layer_nhwc.5} parent=5 // pred_region
      %s177 = ssub.s32 %s10, 1
      %p178 = scmp.lt.s32.totalorder %s15, 1
      %s179 = scalar_select %p178, %s15, 1
      %s180 = smul.addr %s179, 32
      %s181 = smul.addr %s180, 8
      %s182 = scalar_lea.vmem %s0, %s181
      %p183 = pneg %p36
      %p184 = pneg %p33
      %p185 = scmp.lt.s32.totalorder %s15, 1
      %s186 = scalar_select %p185, %s15, 1
      %s187 = smul.addr %s186, 32
      %s188 = smul.addr %s187, 4
      %s189 = scalar_lea.vmem %s1, %s188
      %p190 = pneg %p62
      %p191 = pneg %p59
      %p192 = pneg %p83
      %p193 = pneg %p80
      %p194 = pneg %p104
      %p195 = pneg %p101
      %p196 = pneg %p130
      %p197 = pneg %p127
      %p198 = scmp.lt.s32.totalorder %s15, 1
      %s199 = scalar_select %p198, %s15, 1
      %s200 = smul.addr %s199, 32
      %s201 = smul.addr %s200, 8
      %s202 = scalar_lea.vmem %s4, %s201
      %p203 = scmp.lt.s32.totalorder %s15, 1
      %s204 = scalar_select %p203, %s15, 1
      %s205 = smul.addr %s204, 32
      %s206 = smul.addr %s205, 8
      %s207 = scalar_lea.vmem %s0, %s206
      %p208 = scmp.lt.s32.totalorder %s15, 1
      %s209 = scalar_select %p208, %s15, 1
      %s210 = smul.addr %s209, 32
      %s211 = smul.addr %s210, 4
      %s212 = scalar_lea.vmem %s1, %s211
      %p213 = scmp.lt.s32.totalorder %s15, 1
      %s214 = scalar_select %p213, %s15, 1
      %s215 = smul.addr %s214, 32
      %s216 = smul.addr %s215, 8
      %s217 = scalar_lea.vmem %s4, %s216
      %v218 = vld [vmem:[%s212] sm:$0xf]
      %v219 = vld [vmem:[%s212 + $0x4] sm:$0xf]
      %v220 = vld [vmem:[%s212 + $0x8] sm:$0xf]
      %v221 = vld [vmem:[%s212 + $0xc] sm:$0xf]
      %v222 = vld [vmem:[%s212 + $0x10] sm:$0xf]
      %v223 = vld [vmem:[%s212 + $0x14] sm:$0xf]
      %v224 = vld [vmem:[%s212 + $0x18] sm:$0xf]
      %v225 = vld [vmem:[%s212 + $0x1c] sm:$0xf]
      %v226 = vld [vmem:[%s212 + $0x20] sm:$0xf]
      %v227 = vld [vmem:[%s212 + $0x24] sm:$0xf]
      %v228 = vld [vmem:[%s212 + $0x28] sm:$0xf]
      %v229 = vld [vmem:[%s212 + $0x2c] sm:$0xf]
      %v230 = vld [vmem:[%s212 + $0x30] sm:$0xf]
      %v231 = vld [vmem:[%s212 + $0x34] sm:$0xf]
      %v232 = vld [vmem:[%s212 + $0x38] sm:$0xf]
      %v233 = vld [vmem:[%s212 + $0x3c] sm:$0xf]
      %v234 = vld [vmem:[%s212 + $0x40] sm:$0xf]
      %v235 = vld [vmem:[%s212 + $0x44] sm:$0xf]
      %v236 = vld [vmem:[%s212 + $0x48] sm:$0xf]
      %v237 = vld [vmem:[%s212 + $0x4c] sm:$0xf]
      %v238 = vld [vmem:[%s212 + $0x50] sm:$0xf]
      %v239 = vld [vmem:[%s212 + $0x54] sm:$0xf]
      %v240 = vld [vmem:[%s212 + $0x58] sm:$0xf]
      %v241 = vld [vmem:[%s212 + $0x5c] sm:$0xf]
      %v242 = vld [vmem:[%s212 + $0x60] sm:$0xf]
      %v243 = vld [vmem:[%s212 + $0x64] sm:$0xf]
      %v244 = vld [vmem:[%s212 + $0x68] sm:$0xf]
      %v245 = vld [vmem:[%s212 + $0x6c] sm:$0xf]
      %v246 = vld [vmem:[%s212 + $0x70] sm:$0xf]
      %v247 = vld [vmem:[%s212 + $0x74] sm:$0xf]
      %v248 = vld [vmem:[%s212 + $0x78] sm:$0xf]
      %v249 = vld [vmem:[%s212 + $0x7c] sm:$0xf]
      %v250 = vunpack.c.l.bf16 %v218
      %v251 = vunpack.c.l.bf16 %v219
      %v252 = vunpack.c.l.bf16 %v220
      %v253 = vunpack.c.l.bf16 %v221
      %v254 = vunpack.c.l.bf16 %v222
      %v255 = vunpack.c.l.bf16 %v223
      %v256 = vunpack.c.l.bf16 %v224
      %v257 = vunpack.c.l.bf16 %v225
      %v258 = vunpack.c.l.bf16 %v226
      %v259 = vunpack.c.l.bf16 %v227
      %v260 = vunpack.c.l.bf16 %v228
      %v261 = vunpack.c.l.bf16 %v229
      %v262 = vunpack.c.l.bf16 %v230
      %v263 = vunpack.c.l.bf16 %v231
      %v264 = vunpack.c.l.bf16 %v232
      %v265 = vunpack.c.l.bf16 %v233
      %v266 = vunpack.c.l.bf16 %v234
      %v267 = vunpack.c.l.bf16 %v235
      %v268 = vunpack.c.l.bf16 %v236
      %v269 = vunpack.c.l.bf16 %v237
      %v270 = vunpack.c.l.bf16 %v238
      %v271 = vunpack.c.l.bf16 %v239
      %v272 = vunpack.c.l.bf16 %v240
      %v273 = vunpack.c.l.bf16 %v241
      %v274 = vunpack.c.l.bf16 %v242
      %v275 = vunpack.c.l.bf16 %v243
      %v276 = vunpack.c.l.bf16 %v244
      %v277 = vunpack.c.l.bf16 %v245
      %v278 = vunpack.c.l.bf16 %v246
      %v279 = vunpack.c.l.bf16 %v247
      %v280 = vunpack.c.l.bf16 %v248
      %v281 = vunpack.c.l.bf16 %v249
      %v282 = vld [vmem:[%s2] sm:$0x1]
      %v284 = vperm.slane %v282, 0
      %v286 = vmul.f32 %v250, %v284
      %v287 = vmul.f32 %v251, %v284
      %v288 = vmul.f32 %v252, %v284
      %v289 = vmul.f32 %v253, %v284
      %v290 = vmul.f32 %v254, %v284
      %v291 = vmul.f32 %v255, %v284
      %v292 = vmul.f32 %v256, %v284
      %v293 = vmul.f32 %v257, %v284
      %v294 = vmul.f32 %v258, %v284
      %v295 = vmul.f32 %v259, %v284
      %v296 = vmul.f32 %v260, %v284
      %v297 = vmul.f32 %v261, %v284
      %v298 = vmul.f32 %v262, %v284
      %v299 = vmul.f32 %v263, %v284
      %v300 = vmul.f32 %v264, %v284
      %v301 = vmul.f32 %v265, %v284
      %v302 = vmul.f32 %v266, %v284
      %v303 = vmul.f32 %v267, %v284
      %v304 = vmul.f32 %v268, %v284
      %v305 = vmul.f32 %v269, %v284
      %v306 = vmul.f32 %v270, %v284
      %v307 = vmul.f32 %v271, %v284
      %v308 = vmul.f32 %v272, %v284
      %v309 = vmul.f32 %v273, %v284
      %v310 = vmul.f32 %v274, %v284
      %v311 = vmul.f32 %v275, %v284
      %v312 = vmul.f32 %v276, %v284
      %v313 = vmul.f32 %v277, %v284
      %v314 = vmul.f32 %v278, %v284
      %v315 = vmul.f32 %v279, %v284
      %v316 = vmul.f32 %v280, %v284
      %v317 = vmul.f32 %v281, %v284
      %v318 = vld [vmem:[%s3] sm:$0x1]
      %v320 = vperm.slane %v318, 0
      %v322 = vadd.f32 %v286, %v320
      %v323 = vadd.f32 %v287, %v320
      %v324 = vadd.f32 %v288, %v320
      %v325 = vadd.f32 %v289, %v320
      %v326 = vadd.f32 %v290, %v320
      %v327 = vadd.f32 %v291, %v320
      %v328 = vadd.f32 %v292, %v320
      %v329 = vadd.f32 %v293, %v320
      %v330 = vadd.f32 %v294, %v320
      %v331 = vadd.f32 %v295, %v320
      %v332 = vadd.f32 %v296, %v320
      %v333 = vadd.f32 %v297, %v320
      %v334 = vadd.f32 %v298, %v320
      %v335 = vadd.f32 %v299, %v320
      %v336 = vadd.f32 %v300, %v320
      %v337 = vadd.f32 %v301, %v320
      %v338 = vadd.f32 %v302, %v320
      %v339 = vadd.f32 %v303, %v320
      %v340 = vadd.f32 %v304, %v320
      %v341 = vadd.f32 %v305, %v320
      %v342 = vadd.f32 %v306, %v320
      %v343 = vadd.f32 %v307, %v320
      %v344 = vadd.f32 %v308, %v320
      %v345 = vadd.f32 %v309, %v320
      %v346 = vadd.f32 %v310, %v320
      %v347 = vadd.f32 %v311, %v320
      %v348 = vadd.f32 %v312, %v320
      %v349 = vadd.f32 %v313, %v320
      %v350 = vadd.f32 %v314, %v320
      %v351 = vadd.f32 %v315, %v320
      %v352 = vadd.f32 %v316, %v320
      %v353 = vadd.f32 %v317, %v320
      %v354 = vld [vmem:[%s207] sm:$0xff]
      %v355 = vld [vmem:[%s207 + $0x8] sm:$0xff]
      %v356 = vld [vmem:[%s207 + $0x10] sm:$0xff]
      %v357 = vld [vmem:[%s207 + $0x18] sm:$0xff]
      %v358 = vld [vmem:[%s207 + $0x20] sm:$0xff]
      %v359 = vld [vmem:[%s207 + $0x28] sm:$0xff]
      %v360 = vld [vmem:[%s207 + $0x30] sm:$0xff]
      %v361 = vld [vmem:[%s207 + $0x38] sm:$0xff]
      %v362 = vld [vmem:[%s207 + $0x40] sm:$0xff]
      %v363 = vld [vmem:[%s207 + $0x48] sm:$0xff]
      %v364 = vld [vmem:[%s207 + $0x50] sm:$0xff]
      %v365 = vld [vmem:[%s207 + $0x58] sm:$0xff]
      %v366 = vld [vmem:[%s207 + $0x60] sm:$0xff]
      %v367 = vld [vmem:[%s207 + $0x68] sm:$0xff]
      %v368 = vld [vmem:[%s207 + $0x70] sm:$0xff]
      %v369 = vld [vmem:[%s207 + $0x78] sm:$0xff]
      %v370 = vld [vmem:[%s207 + $0x80] sm:$0xff]
      %v371 = vld [vmem:[%s207 + $0x88] sm:$0xff]
      %v372 = vld [vmem:[%s207 + $0x90] sm:$0xff]
      %v373 = vld [vmem:[%s207 + $0x98] sm:$0xff]
      %v374 = vld [vmem:[%s207 + $0xa0] sm:$0xff]
      %v375 = vld [vmem:[%s207 + $0xa8] sm:$0xff]
      %v376 = vld [vmem:[%s207 + $0xb0] sm:$0xff]
      %v377 = vld [vmem:[%s207 + $0xb8] sm:$0xff]
      %v378 = vld [vmem:[%s207 + $0xc0] sm:$0xff]
      %v379 = vld [vmem:[%s207 + $0xc8] sm:$0xff]
      %v380 = vld [vmem:[%s207 + $0xd0] sm:$0xff]
      %v381 = vld [vmem:[%s207 + $0xd8] sm:$0xff]
      %v382 = vld [vmem:[%s207 + $0xe0] sm:$0xff]
      %v383 = vld [vmem:[%s207 + $0xe8] sm:$0xff]
      %v384 = vld [vmem:[%s207 + $0xf0] sm:$0xff]
      %v385 = vld [vmem:[%s207 + $0xf8] sm:$0xff]
      %v386 = vadd.f32 %v354, %v322
      %v387 = vadd.f32 %v355, %v323
      %v388 = vadd.f32 %v356, %v324
      %v389 = vadd.f32 %v357, %v325
      %v390 = vadd.f32 %v358, %v326
      %v391 = vadd.f32 %v359, %v327
      %v392 = vadd.f32 %v360, %v328
      %v393 = vadd.f32 %v361, %v329
      %v394 = vadd.f32 %v362, %v330
      %v395 = vadd.f32 %v363, %v331
      %v396 = vadd.f32 %v364, %v332
      %v397 = vadd.f32 %v365, %v333
      %v398 = vadd.f32 %v366, %v334
      %v399 = vadd.f32 %v367, %v335
      %v400 = vadd.f32 %v368, %v336
      %v401 = vadd.f32 %v369, %v337
      %v402 = vadd.f32 %v370, %v338
      %v403 = vadd.f32 %v371, %v339
      %v404 = vadd.f32 %v372, %v340
      %v405 = vadd.f32 %v373, %v341
      %v406 = vadd.f32 %v374, %v342
      %v407 = vadd.f32 %v375, %v343
      %v408 = vadd.f32 %v376, %v344
      %v409 = vadd.f32 %v377, %v345
      %v410 = vadd.f32 %v378, %v346
      %v411 = vadd.f32 %v379, %v347
      %v412 = vadd.f32 %v380, %v348
      %v413 = vadd.f32 %v381, %v349
      %v414 = vadd.f32 %v382, %v350
      %v415 = vadd.f32 %v383, %v351
      %v416 = vadd.f32 %v384, %v352
      %v417 = vadd.f32 %v385, %v353
      %vm418 = vcmask 31744
      %419 = vst.msk [vmem:[%s217] sm:$0xff] %vm418, %v386
      %420 = vst.msk [vmem:[%s217 + $0x8] sm:$0xff] %vm418, %v387
      %421 = vst.msk [vmem:[%s217 + $0x10] sm:$0xff] %vm418, %v388
      %422 = vst.msk [vmem:[%s217 + $0x18] sm:$0xff] %vm418, %v389
      %423 = vst.msk [vmem:[%s217 + $0x20] sm:$0xff] %vm418, %v390
      %424 = vst.msk [vmem:[%s217 + $0x28] sm:$0xff] %vm418, %v391
      %425 = vst.msk [vmem:[%s217 + $0x30] sm:$0xff] %vm418, %v392
      %426 = vst.msk [vmem:[%s217 + $0x38] sm:$0xff] %vm418, %v393
      %427 = vst.msk [vmem:[%s217 + $0x40] sm:$0xff] %vm418, %v394
      %428 = vst.msk [vmem:[%s217 + $0x48] sm:$0xff] %vm418, %v395
      %429 = vst.msk [vmem:[%s217 + $0x50] sm:$0xff] %vm418, %v396
      %430 = vst.msk [vmem:[%s217 + $0x58] sm:$0xff] %vm418, %v397
      %431 = vst.msk [vmem:[%s217 + $0x60] sm:$0xff] %vm418, %v398
      %432 = vst.msk [vmem:[%s217 + $0x68] sm:$0xff] %vm418, %v399
      %433 = vst.msk [vmem:[%s217 + $0x70] sm:$0xff] %vm418, %v400
      %434 = vst.msk [vmem:[%s217 + $0x78] sm:$0xff] %vm418, %v401
      %435 = vst.msk [vmem:[%s217 + $0x80] sm:$0xff] %vm418, %v402
      %436 = vst.msk [vmem:[%s217 + $0x88] sm:$0xff] %vm418, %v403
      %437 = vst.msk [vmem:[%s217 + $0x90] sm:$0xff] %vm418, %v404
      %438 = vst.msk [vmem:[%s217 + $0x98] sm:$0xff] %vm418, %v405
      %439 = vst.msk [vmem:[%s217 + $0xa0] sm:$0xff] %vm418, %v406
      %440 = vst.msk [vmem:[%s217 + $0xa8] sm:$0xff] %vm418, %v407
      %441 = vst.msk [vmem:[%s217 + $0xb0] sm:$0xff] %vm418, %v408
      %442 = vst.msk [vmem:[%s217 + $0xb8] sm:$0xff] %vm418, %v409
      %443 = vst.msk [vmem:[%s217 + $0xc0] sm:$0xff] %vm418, %v410
      %444 = vst.msk [vmem:[%s217 + $0xc8] sm:$0xff] %vm418, %v411
      %445 = vst.msk [vmem:[%s217 + $0xd0] sm:$0xff] %vm418, %v412
      %446 = vst.msk [vmem:[%s217 + $0xd8] sm:$0xff] %vm418, %v413
      %447 = vst.msk [vmem:[%s217 + $0xe0] sm:$0xff] %vm418, %v414
      %448 = vst.msk [vmem:[%s217 + $0xe8] sm:$0xff] %vm418, %v415
      %449 = vst.msk [vmem:[%s217 + $0xf0] sm:$0xff] %vm418, %v416
      %450 = vst.msk [vmem:[%s217 + $0xf8] sm:$0xff] %vm418, %v417
      %p451 = scmp.lt.s32.totalorder %s15, 1
      %s452 = scalar_select %p451, %s15, 1
      %s453 = smul.addr %s452, 32
      %s454 = smul.addr %s453, 8
      %s455 = scalar_lea.vmem %s4, %s454
      // Predicated region
      $region37: #{residual_layer_nhwc.5} parent=35 // pred_check
        %p456 = pneg %p127
      $region38: #{residual_layer_nhwc.5} parent=35 // pred_check_branch
        %458 = sbr.rel (%p456) target = $region40
      $region39: #{residual_layer_nhwc.5} parent=35 // pred_region
        _
      $region40: #{residual_layer_nhwc.5} parent=35 // pred_fallthru
        _
    $region36: #{residual_layer_nhwc.5} parent=5 // pred_fallthru
      _
    %p459 = scmp.le.s32.totalorder 2, %s10
    // Predicated region
    $region41: #{residual_layer_nhwc.5} parent=5 // pred_check
      %p460 = pneg %p459
    $region42: #{residual_layer_nhwc.5} parent=5 // pred_check_branch
      %462 = sbr.rel (%p460) target = $region44
    $region43: #{residual_layer_nhwc.5} parent=5 // pred_region
      %s463 = ssub.s32 %s10, 2
      // Predicated region
      $region45: #{residual_layer_nhwc.5} parent=43 // pred_check
        %p464 = pneg %p133
      $region46: #{residual_layer_nhwc.5} parent=43 // pred_check_branch
        %466 = sbr.rel (%p464) target = $region48
      $region47: #{residual_layer_nhwc.5} parent=43 // pred_region
        %p467 = scmp.lt.s32.totalorder %s16, 1
        %s468 = scalar_select %p467, %s16, 1
        %s469 = smul.addr %s468, 32
        %s470 = smul.addr %s469, 8
        %s471 = scalar_lea.vmem %s4, %s470
      $region48: #{residual_layer_nhwc.5} parent=43 // pred_fallthru
        _
    $region44: #{residual_layer_nhwc.5} parent=5 // pred_fallthru
      _
  $region6: #{residual_layer_nhwc.5} parent=0 // loop_footer
    %s14 = sadd.s32 1, %s10
  $region7: #{residual_layer_nhwc.5} parent=0 // loop_footer_branch
    %9 = sbr.rel target = $region3
  $region8: #{residual_layer_nhwc.5} parent=0 // loop_exit
    _

// kernel: residual_layer_nhwc.4
$region0: #{residual_layer_nhwc.4}
  #allocation0 [shape = 'u32[]', space=smem, size = 0x4, offset = 0x4, fixed_abs, tag = 'smem constant byte address 0x4 - core index']
  #allocation1 [shape = 'u32[72,128]{1,0:T(1,128)}', space=vmem, size = 0x9000, scoped, tag = 'internal scratch']
  %s0 = inlined_call_operand.vmem [shape: bf16[2,16,16,4], index: 0, kind: input, shape index: {}]
  %s1 = inlined_call_operand.vmem [shape: bf16[4,4], index: 1, kind: input, shape index: {}]
  %s2 = inlined_call_operand.vmem [shape: bf16[1,4], index: 2, kind: input, shape index: {}]
  %s3 = inlined_call_operand.vmem [shape: bf16[1,4], index: 3, kind: input, shape index: {}]
  %s4 = inlined_call_operand.vmem [shape: bf16[2,16,16,4], index: 4, kind: output, shape index: {0}]
  %s5 = inlined_call_operand.vmem [shape: f32[2,2,4], index: 5, kind: output, shape index: {1}]
  %6 = xla_tuple %s4, %s5
  %s7 = sld [smem:[#allocation0]]
  $region57: #{residual_layer_nhwc.4} parent=0
    _
  %s9 = ssub.s32 1, %s7
  %s10 = scalar_select 0, %s9, %s7
  loop: start=0, step=1, limit=4
  $region2: #{residual_layer_nhwc.4} parent=0 // loop_pre_header
    _
  $region3: #{residual_layer_nhwc.4} parent=0 // loop_header
    %s12 = sphi 0, %s16
    %p13 = scmp.ge.s32.totalorder %s12, 4
    %s22 = sphi 0, %s24
    %s25 = sphi 0, %s22
    %s26 = sphi 0, %s25
    %s42 = sphi 0, %s26
    %s46 = sphi 0, %s46
    %s48 = sphi 0, %s46
    %s49 = sphi 0, %s48
    %s63 = sphi 0, %s49
    %s67 = sphi 0, %s67
    %s69 = sphi 0, %s67
    %s70 = sphi 0, %s69
    %s84 = sphi 0, %s70
    %s88 = sphi 0, %s88
    %s90 = sphi 0, %s88
    %s91 = sphi 0, %s90
    %s105 = sphi 0, %s91
    %s111 = sphi 0, %s113
    %s114 = sphi 0, %s111
    %s115 = sphi 0, %s114
    %s131 = sphi 0, %s115
    %s137 = sphi 0, %s139
    %s140 = sphi 0, %s137
    %s141 = sphi 0, %s140
    %s157 = sphi 0, %s141
  $region4: #{residual_layer_nhwc.4} parent=0 // loop_header_branch
    %15 = sbr.rel (%p13) target = $region8
  $region5: #{residual_layer_nhwc.4} parent=0 // loop_body
    %s17 = ssub.s32 %s12, 1
    %s18 = ssub.s32 %s12, 2
    %s19 = sadd.s32 %s12, 1
    %s20 = ssub.s32 %s12, %s19
    %p21 = scmp.eq.s32.totalorder %s20, 0
    %s23 = sadd.s32 %s22, 1
    %s24 = scalar_select %p21, %s22, %s23
    %p27 = pneg %p21
    %p28 = scmp.eq.s32.totalorder %s12, 1
    %p29 = por %p27, %p28
    %p30 = scmp.ne.s32.totalorder %s22, %s25
    %p31 = scmp.eq.s32.totalorder %s12, 0
    %p32 = por %p30, %p31
    %p33 = scmp.ne.s32.totalorder %s22, %s25
    %p34 = scmp.eq.s32.totalorder %s17, 1
    %p35 = por %p33, %p34
    %p36 = scmp.ne.s32.totalorder %s25, %s26
    %p37 = scmp.eq.s32.totalorder %s17, 0
    %p38 = por %p36, %p37
    %p39 = scmp.ne.s32.totalorder %s25, %s26
    %p40 = scmp.eq.s32.totalorder %s18, 1
    %p41 = por %p39, %p40
    %p43 = scmp.ne.s32.totalorder %s26, %s42
    %p44 = scmp.eq.s32.totalorder %s18, 0
    %p45 = por %p43, %p44
    %s47 = sadd.s32 %s46, 1
    %p50 = scmp.eq.s32.totalorder %s12, 1
    %p51 = scmp.ne.s32.totalorder %s46, %s48
    %p52 = scmp.eq.s32.totalorder %s12, 0
    %p53 = por %p51, %p52
    %p54 = scmp.ne.s32.totalorder %s46, %s48
    %p55 = scmp.eq.s32.totalorder %s17, 1
    %p56 = por %p54, %p55
    %p57 = scmp.ne.s32.totalorder %s48, %s49
    %p58 = scmp.eq.s32.totalorder %s17, 0
    %p59 = por %p57, %p58
    %p60 = scmp.ne.s32.totalorder %s48, %s49
    %p61 = scmp.eq.s32.totalorder %s18, 1
    %p62 = por %p60, %p61
    %p64 = scmp.ne.s32.totalorder %s49, %s63
    %p65 = scmp.eq.s32.totalorder %s18, 0
    %p66 = por %p64, %p65
    %s68 = sadd.s32 %s67, 1
    %p71 = scmp.eq.s32.totalorder %s12, 1
    %p72 = scmp.ne.s32.totalorder %s67, %s69
    %p73 = scmp.eq.s32.totalorder %s12, 0
    %p74 = por %p72, %p73
    %p75 = scmp.ne.s32.totalorder %s67, %s69
    %p76 = scmp.eq.s32.totalorder %s17, 1
    %p77 = por %p75, %p76
    %p78 = scmp.ne.s32.totalorder %s69, %s70
    %p79 = scmp.eq.s32.totalorder %s17, 0
    %p80 = por %p78, %p79
    %p81 = scmp.ne.s32.totalorder %s69, %s70
    %p82 = scmp.eq.s32.totalorder %s18, 1
    %p83 = por %p81, %p82
    %p85 = scmp.ne.s32.totalorder %s70, %s84
    %p86 = scmp.eq.s32.totalorder %s18, 0
    %p87 = por %p85, %p86
    %s89 = sadd.s32 %s88, 1
    %p92 = scmp.eq.s32.totalorder %s12, 1
    %p93 = scmp.ne.s32.totalorder %s88, %s90
    %p94 = scmp.eq.s32.totalorder %s12, 0
    %p95 = por %p93, %p94
    %p96 = scmp.ne.s32.totalorder %s88, %s90
    %p97 = scmp.eq.s32.totalorder %s17, 1
    %p98 = por %p96, %p97
    %p99 = scmp.ne.s32.totalorder %s90, %s91
    %p100 = scmp.eq.s32.totalorder %s17, 0
    %p101 = por %p99, %p100
    %p102 = scmp.ne.s32.totalorder %s90, %s91
    %p103 = scmp.eq.s32.totalorder %s18, 1
    %p104 = por %p102, %p103
    %p106 = scmp.ne.s32.totalorder %s91, %s105
    %p107 = scmp.eq.s32.totalorder %s18, 0
    %p108 = por %p106, %p107
    %s109 = ssub.s32 %s12, %s19
    %p110 = scmp.eq.s32.totalorder %s109, 0
    %s112 = sadd.s32 %s111, 1
    %s113 = scalar_select %p110, %s111, %s112
    %p116 = pneg %p110
    %p117 = scmp.eq.s32.totalorder %s12, 1
    %p118 = por %p116, %p117
    %p119 = scmp.ne.s32.totalorder %s111, %s114
    %p120 = scmp.eq.s32.totalorder %s12, 0
    %p121 = por %p119, %p120
    %p122 = scmp.ne.s32.totalorder %s111, %s114
    %p123 = scmp.eq.s32.totalorder %s17, 1
    %p124 = por %p122, %p123
    %p125 = scmp.ne.s32.totalorder %s114, %s115
    %p126 = scmp.eq.s32.totalorder %s17, 0
    %p127 = por %p125, %p126
    %p128 = scmp.ne.s32.totalorder %s114, %s115
    %p129 = scmp.eq.s32.totalorder %s18, 1
    %p130 = por %p128, %p129
    %p132 = scmp.ne.s32.totalorder %s115, %s131
    %p133 = scmp.eq.s32.totalorder %s18, 0
    %p134 = por %p132, %p133
    %s135 = ssub.s32 %s12, %s19
    %p136 = scmp.eq.s32.totalorder %s135, 0
    %s138 = sadd.s32 %s137, 1
    %s139 = scalar_select %p136, %s137, %s138
    %p142 = pneg %p136
    %p143 = scmp.eq.s32.totalorder %s12, 1
    %p144 = por %p142, %p143
    %p145 = scmp.ne.s32.totalorder %s137, %s140
    %p146 = scmp.eq.s32.totalorder %s12, 0
    %p147 = por %p145, %p146
    %p148 = scmp.ne.s32.totalorder %s137, %s140
    %p149 = scmp.eq.s32.totalorder %s17, 1
    %p150 = por %p148, %p149
    %p151 = scmp.ne.s32.totalorder %s140, %s141
    %p152 = scmp.eq.s32.totalorder %s17, 0
    %p153 = por %p151, %p152
    %p154 = scmp.ne.s32.totalorder %s140, %s141
    %p155 = scmp.eq.s32.totalorder %s18, 1
    %p156 = por %p154, %p155
    %p158 = scmp.ne.s32.totalorder %s141, %s157
    %p159 = scmp.eq.s32.totalorder %s18, 0
    %p160 = por %p158, %p159
    %p161 = scmp.le.s32.totalorder 1, %s12
    %p162 = scmp.lt.s32.totalorder %s12, 3
    %p163 = pnand %p161, %p162
    %p164 = pneg %p163
    // Predicated region
    $region9: #{residual_layer_nhwc.4} parent=5 // pred_check
      _
    $region10: #{residual_layer_nhwc.4} parent=5 // pred_check_branch
      %166 = sbr.rel (%p163) target = $region12
    $region11: #{residual_layer_nhwc.4} parent=5 // pred_region
      %s167 = ssub.s32 %s12, 1
      // Predicated region
      $region13: #{residual_layer_nhwc.4} parent=11 // pred_check
        %p168 = pneg %p59
      $region14: #{residual_layer_nhwc.4} parent=11 // pred_check_branch
        %170 = sbr.rel (%p168) target = $region16
      $region15: #{residual_layer_nhwc.4} parent=11 // pred_region
        _
      $region16: #{residual_layer_nhwc.4} parent=11 // pred_fallthru
        _
      // Predicated region
      $region17: #{residual_layer_nhwc.4} parent=11 // pred_check
        %p171 = pneg %p80
      $region18: #{residual_layer_nhwc.4} parent=11 // pred_check_branch
        %173 = sbr.rel (%p171) target = $region20
      $region19: #{residual_layer_nhwc.4} parent=11 // pred_region
        _
      $region20: #{residual_layer_nhwc.4} parent=11 // pred_fallthru
        _
      // Predicated region
      $region21: #{residual_layer_nhwc.4} parent=11 // pred_check
        %p174 = pneg %p101
      $region22: #{residual_layer_nhwc.4} parent=11 // pred_check_branch
        %176 = sbr.rel (%p174) target = $region24
      $region23: #{residual_layer_nhwc.4} parent=11 // pred_region
        _
      $region24: #{residual_layer_nhwc.4} parent=11 // pred_fallthru
        _
    $region12: #{residual_layer_nhwc.4} parent=5 // pred_fallthru
      _
    %p177 = scmp.lt.s32.totalorder %s12, 2
    // Predicated region
    $region25: #{residual_layer_nhwc.4} parent=5 // pred_check
      %p178 = pneg %p177
    $region26: #{residual_layer_nhwc.4} parent=5 // pred_check_branch
      %180 = sbr.rel (%p178) target = $region28
    $region27: #{residual_layer_nhwc.4} parent=5 // pred_region
      // Predicated region
      $region29: #{residual_layer_nhwc.4} parent=27 // pred_check
        %p181 = pneg %p32
      $region30: #{residual_layer_nhwc.4} parent=27 // pred_check_branch
        %183 = sbr.rel (%p181) target = $region32
      $region31: #{residual_layer_nhwc.4} parent=27 // pred_region
        %p184 = scmp.lt.s32.totalorder %s12, 1
        %s185 = scalar_select %p184, %s12, 1
        %s186 = smul.addr %s185, 32
        %s187 = smul.addr %s186, 4
        %s188 = scalar_lea.vmem %s0, %s187
      $region32: #{residual_layer_nhwc.4} parent=27 // pred_fallthru
        _
    $region28: #{residual_layer_nhwc.4} parent=5 // pred_fallthru
      _
    %p189 = scmp.le.s32.totalorder 1, %s12
    %p190 = scmp.lt.s32.totalorder %s12, 3
    %p191 = pnand %p189, %p190
    %p192 = pneg %p191
    // Predicated region
    $region33: #{residual_layer_nhwc.4} parent=5 // pred_check
      _
    $region34: #{residual_layer_nhwc.4} parent=5 // pred_check_branch
      %194 = sbr.rel (%p191) target = $region36
    $region35: #{residual_layer_nhwc.4} parent=5 // pred_region
      %s195 = ssub.s32 %s12, 1
      %p196 = scmp.lt.s32.totalorder %s17, 1
      %s197 = scalar_select %p196, %s17, 1
      %s198 = smul.addr %s197, 32
      %s199 = smul.addr %s198, 4
      %s200 = scalar_lea.vmem %s0, %s199
      %p201 = pneg %p38
      %p202 = pneg %p35
      %p203 = pneg %p59
      %p204 = pneg %p56
      %p205 = pneg %p80
      %p206 = pneg %p77
      %p207 = pneg %p101
      %p208 = pneg %p98
      %p209 = pneg %p127
      %p210 = pneg %p124
      %p211 = scmp.lt.s32.totalorder %s17, 1
      %s212 = scalar_select %p211, %s17, 1
      %s213 = smul.addr %s212, 32
      %s214 = smul.addr %s213, 4
      %s215 = scalar_lea.vmem %s4, %s214
      %p216 = pneg %p153
      %p217 = pneg %p150
      %p218 = scmp.lt.s32.totalorder %s17, 1
      %s219 = scalar_select %p218, %s17, 1
      %s220 = smul.addr %s219, 2
      %s221 = scalar_lea.vmem %s5, %s220
      %p222 = scmp.lt.s32.totalorder %s17, 1
      %s223 = scalar_select %p222, %s17, 1
      %s224 = smul.addr %s223, 32
      %s225 = smul.addr %s224, 4
      %s226 = scalar_lea.vmem %s0, %s225
      %p227 = scmp.lt.s32.totalorder %s17, 1
      %s228 = scalar_select %p227, %s17, 1
      %s229 = smul.addr %s228, 32
      %s230 = smul.addr %s229, 4
      %s231 = scalar_lea.vmem %s4, %s230
      %p232 = scmp.lt.s32.totalorder %s17, 1
      %s233 = scalar_select %p232, %s17, 1
      %s234 = smul.addr %s233, 2
      %s235 = scalar_lea.vmem %s5, %s234
      %v237 = vld [vmem:[%s226] sm:$0xf]
      %v238 = vld [vmem:[%s226 + $0x4] sm:$0xf]
      %v239 = vld [vmem:[%s226 + $0x8] sm:$0xf]
      %v240 = vld [vmem:[%s226 + $0xc] sm:$0xf]
      %v241 = vld [vmem:[%s226 + $0x10] sm:$0xf]
      %v242 = vld [vmem:[%s226 + $0x14] sm:$0xf]
      %v243 = vld [vmem:[%s226 + $0x18] sm:$0xf]
      %v244 = vld [vmem:[%s226 + $0x1c] sm:$0xf]
      %v245 = vld [vmem:[%s226 + $0x20] sm:$0xf]
      %v246 = vld [vmem:[%s226 + $0x24] sm:$0xf]
      %v247 = vld [vmem:[%s226 + $0x28] sm:$0xf]
      %v248 = vld [vmem:[%s226 + $0x2c] sm:$0xf]
      %v249 = vld [vmem:[%s226 + $0x30] sm:$0xf]
      %v250 = vld [vmem:[%s226 + $0x34] sm:$0xf]
      %v251 = vld [vmem:[%s226 + $0x38] sm:$0xf]
      %v252 = vld [vmem:[%s226 + $0x3c] sm:$0xf]
      %v253 = vld [vmem:[%s226 + $0x40] sm:$0xf]
      %v254 = vld [vmem:[%s226 + $0x44] sm:$0xf]
      %v255 = vld [vmem:[%s226 + $0x48] sm:$0xf]
      %v256 = vld [vmem:[%s226 + $0x4c] sm:$0xf]
      %v257 = vld [vmem:[%s226 + $0x50] sm:$0xf]
      %v258 = vld [vmem:[%s226 + $0x54] sm:$0xf]
      %v259 = vld [vmem:[%s226 + $0x58] sm:$0xf]
      %v260 = vld [vmem:[%s226 + $0x5c] sm:$0xf]
      %v261 = vld [vmem:[%s226 + $0x60] sm:$0xf]
      %v262 = vld [vmem:[%s226 + $0x64] sm:$0xf]
      %v263 = vld [vmem:[%s226 + $0x68] sm:$0xf]
      %v264 = vld [vmem:[%s226 + $0x6c] sm:$0xf]
      %v265 = vld [vmem:[%s226 + $0x70] sm:$0xf]
      %v266 = vld [vmem:[%s226 + $0x74] sm:$0xf]
      %v267 = vld [vmem:[%s226 + $0x78] sm:$0xf]
      %v268 = vld [vmem:[%s226 + $0x7c] sm:$0xf]
      %v269 = vld [vmem:[%s2] sm:$0x1]
      %v271 = vpack.i.b16 %v269, %v269
      %v273 = vperm.slane %v271, 0
      %v274 = vunpack.c.l.bf16 %v237
      %v275 = vunpack.c.l.bf16 %v238
      %v276 = vunpack.c.l.bf16 %v239
      %v277 = vunpack.c.l.bf16 %v240
      %v278 = vunpack.c.l.bf16 %v241
      %v279 = vunpack.c.l.bf16 %v242
      %v280 = vunpack.c.l.bf16 %v243
      %v281 = vunpack.c.l.bf16 %v244
      %v282 = vunpack.c.l.bf16 %v245
      %v283 = vunpack.c.l.bf16 %v246
      %v284 = vunpack.c.l.bf16 %v247
      %v285 = vunpack.c.l.bf16 %v248
      %v286 = vunpack.c.l.bf16 %v249
      %v287 = vunpack.c.l.bf16 %v250
      %v288 = vunpack.c.l.bf16 %v251
      %v289 = vunpack.c.l.bf16 %v252
      %v290 = vunpack.c.l.bf16 %v253
      %v291 = vunpack.c.l.bf16 %v254
      %v292 = vunpack.c.l.bf16 %v255
      %v293 = vunpack.c.l.bf16 %v256
      %v294 = vunpack.c.l.bf16 %v257
      %v295 = vunpack.c.l.bf16 %v258
      %v296 = vunpack.c.l.bf16 %v259
      %v297 = vunpack.c.l.bf16 %v260
      %v298 = vunpack.c.l.bf16 %v261
      %v299 = vunpack.c.l.bf16 %v262
      %v300 = vunpack.c.l.bf16 %v263
      %v301 = vunpack.c.l.bf16 %v264
      %v302 = vunpack.c.l.bf16 %v265
      %v303 = vunpack.c.l.bf16 %v266
      %v304 = vunpack.c.l.bf16 %v267
      %v305 = vunpack.c.l.bf16 %v268
      %v306 = vunpack.c.l.bf16 %v273
      %v307 = vmul.f32 %v274, %v306
      %v308 = vmul.f32 %v275, %v306
      %v309 = vmul.f32 %v276, %v306
      %v310 = vmul.f32 %v277, %v306
      %v311 = vmul.f32 %v278, %v306
      %v312 = vmul.f32 %v279, %v306
      %v313 = vmul.f32 %v280, %v306
      %v314 = vmul.f32 %v281, %v306
      %v315 = vmul.f32 %v282, %v306
      %v316 = vmul.f32 %v283, %v306
      %v317 = vmul.f32 %v284, %v306
      %v318 = vmul.f32 %v285, %v306
      %v319 = vmul.f32 %v286, %v306
      %v320 = vmul.f32 %v287, %v306
      %v321 = vmul.f32 %v288, %v306
      %v322 = vmul.f32 %v289, %v306
      %v323 = vmul.f32 %v290, %v306
      %v324 = vmul.f32 %v291, %v306
      %v325 = vmul.f32 %v292, %v306
      %v326 = vmul.f32 %v293, %v306
      %v327 = vmul.f32 %v294, %v306
      %v328 = vmul.f32 %v295, %v306
      %v329 = vmul.f32 %v296, %v306
      %v330 = vmul.f32 %v297, %v306
      %v331 = vmul.f32 %v298, %v306
      %v332 = vmul.f32 %v299, %v306
      %v333 = vmul.f32 %v300, %v306
      %v334 = vmul.f32 %v301, %v306
      %v335 = vmul.f32 %v302, %v306
      %v336 = vmul.f32 %v303, %v306
      %v337 = vmul.f32 %v304, %v306
      %v338 = vmul.f32 %v305, %v306
      %v339 = vpack.c.bf16 %v307, %v307
      %v340 = vpack.c.bf16 %v308, %v308
      %v341 = vpack.c.bf16 %v309, %v309
      %v342 = vpack.c.bf16 %v310, %v310
      %v343 = vpack.c.bf16 %v311, %v311
      %v344 = vpack.c.bf16 %v312, %v312
      %v345 = vpack.c.bf16 %v313, %v313
      %v346 = vpack.c.bf16 %v314, %v314
      %v347 = vpack.c.bf16 %v315, %v315
      %v348 = vpack.c.bf16 %v316, %v316
      %v349 = vpack.c.bf16 %v317, %v317
      %v350 = vpack.c.bf16 %v318, %v318
      %v351 = vpack.c.bf16 %v319, %v319
      %v352 = vpack.c.bf16 %v320, %v320
      %v353 = vpack.c.bf16 %v321, %v321
      %v354 = vpack.c.bf16 %v322, %v322
      %v355 = vpack.c.bf16 %v323, %v323
      %v356 = vpack.c.bf16 %v324, %v324
      %v357 = vpack.c.bf16 %v325, %v325
      %v358 = vpack.c.bf16 %v326, %v326
      %v359 = vpack.c.bf16 %v327, %v327
      %v360 = vpack.c.bf16 %v328, %v328
      %v361 = vpack.c.bf16 %v329, %v329
      %v362 = vpack.c.bf16 %v330, %v330
      %v363 = vpack.c.bf16 %v331, %v331
      %v364 = vpack.c.bf16 %v332, %v332
      %v365 = vpack.c.bf16 %v333, %v333
      %v366 = vpack.c.bf16 %v334, %v334
      %v367 = vpack.c.bf16 %v335, %v335
      %v368 = vpack.c.bf16 %v336, %v336
      %v369 = vpack.c.bf16 %v337, %v337
      %v370 = vpack.c.bf16 %v338, %v338
      %v371 = vld [vmem:[%s3] sm:$0x1]
      %v373 = vpack.i.b16 %v371, %v371
      %v375 = vperm.slane %v373, 0
      %v376 = vunpack.c.l.bf16 %v339
      %v377 = vunpack.c.l.bf16 %v340
      %v378 = vunpack.c.l.bf16 %v341
      %v379 = vunpack.c.l.bf16 %v342
      %v380 = vunpack.c.l.bf16 %v343
      %v381 = vunpack.c.l.bf16 %v344
      %v382 = vunpack.c.l.bf16 %v345
      %v383 = vunpack.c.l.bf16 %v346
      %v384 = vunpack.c.l.bf16 %v347
      %v385 = vunpack.c.l.bf16 %v348
      %v386 = vunpack.c.l.bf16 %v349
      %v387 = vunpack.c.l.bf16 %v350
      %v388 = vunpack.c.l.bf16 %v351
      %v389 = vunpack.c.l.bf16 %v352
      %v390 = vunpack.c.l.bf16 %v353
      %v391 = vunpack.c.l.bf16 %v354
      %v392 = vunpack.c.l.bf16 %v355
      %v393 = vunpack.c.l.bf16 %v356
      %v394 = vunpack.c.l.bf16 %v357
      %v395 = vunpack.c.l.bf16 %v358
      %v396 = vunpack.c.l.bf16 %v359
      %v397 = vunpack.c.l.bf16 %v360
      %v398 = vunpack.c.l.bf16 %v361
      %v399 = vunpack.c.l.bf16 %v362
      %v400 = vunpack.c.l.bf16 %v363
      %v401 = vunpack.c.l.bf16 %v364
      %v402 = vunpack.c.l.bf16 %v365
      %v403 = vunpack.c.l.bf16 %v366
      %v404 = vunpack.c.l.bf16 %v367
      %v405 = vunpack.c.l.bf16 %v368
      %v406 = vunpack.c.l.bf16 %v369
      %v407 = vunpack.c.l.bf16 %v370
      %v408 = vunpack.c.l.bf16 %v375
      %v409 = vadd.f32 %v376, %v408
      %v410 = vadd.f32 %v377, %v408
      %v411 = vadd.f32 %v378, %v408
      %v412 = vadd.f32 %v379, %v408
      %v413 = vadd.f32 %v380, %v408
      %v414 = vadd.f32 %v381, %v408
      %v415 = vadd.f32 %v382, %v408
      %v416 = vadd.f32 %v383, %v408
      %v417 = vadd.f32 %v384, %v408
      %v418 = vadd.f32 %v385, %v408
      %v419 = vadd.f32 %v386, %v408
      %v420 = vadd.f32 %v387, %v408
      %v421 = vadd.f32 %v388, %v408
      %v422 = vadd.f32 %v389, %v408
      %v423 = vadd.f32 %v390, %v408
      %v424 = vadd.f32 %v391, %v408
      %v425 = vadd.f32 %v392, %v408
      %v426 = vadd.f32 %v393, %v408
      %v427 = vadd.f32 %v394, %v408
      %v428 = vadd.f32 %v395, %v408
      %v429 = vadd.f32 %v396, %v408
      %v430 = vadd.f32 %v397, %v408
      %v431 = vadd.f32 %v398, %v408
      %v432 = vadd.f32 %v399, %v408
      %v433 = vadd.f32 %v400, %v408
      %v434 = vadd.f32 %v401, %v408
      %v435 = vadd.f32 %v402, %v408
      %v436 = vadd.f32 %v403, %v408
      %v437 = vadd.f32 %v404, %v408
      %v438 = vadd.f32 %v405, %v408
      %v439 = vadd.f32 %v406, %v408
      %v440 = vadd.f32 %v407, %v408
      %v441 = vpack.c.bf16 %v409, %v409
      %v442 = vpack.c.bf16 %v410, %v410
      %v443 = vpack.c.bf16 %v411, %v411
      %v444 = vpack.c.bf16 %v412, %v412
      %v445 = vpack.c.bf16 %v413, %v413
      %v446 = vpack.c.bf16 %v414, %v414
      %v447 = vpack.c.bf16 %v415, %v415
      %v448 = vpack.c.bf16 %v416, %v416
      %v449 = vpack.c.bf16 %v417, %v417
      %v450 = vpack.c.bf16 %v418, %v418
      %v451 = vpack.c.bf16 %v419, %v419
      %v452 = vpack.c.bf16 %v420, %v420
      %v453 = vpack.c.bf16 %v421, %v421
      %v454 = vpack.c.bf16 %v422, %v422
      %v455 = vpack.c.bf16 %v423, %v423
      %v456 = vpack.c.bf16 %v424, %v424
      %v457 = vpack.c.bf16 %v425, %v425
      %v458 = vpack.c.bf16 %v426, %v426
      %v459 = vpack.c.bf16 %v427, %v427
      %v460 = vpack.c.bf16 %v428, %v428
      %v461 = vpack.c.bf16 %v429, %v429
      %v462 = vpack.c.bf16 %v430, %v430
      %v463 = vpack.c.bf16 %v431, %v431
      %v464 = vpack.c.bf16 %v432, %v432
      %v465 = vpack.c.bf16 %v433, %v433
      %v466 = vpack.c.bf16 %v434, %v434
      %v467 = vpack.c.bf16 %v435, %v435
      %v468 = vpack.c.bf16 %v436, %v436
      %v469 = vpack.c.bf16 %v437, %v437
      %v470 = vpack.c.bf16 %v438, %v438
      %v471 = vpack.c.bf16 %v439, %v439
      %v472 = vpack.c.bf16 %v440, %v440
      %v473 = vunpack.c.l.bf16 %v441
      %v474 = vunpack.c.l.bf16 %v442
      %v475 = vunpack.c.l.bf16 %v443
      %v476 = vunpack.c.l.bf16 %v444
      %v477 = vunpack.c.l.bf16 %v445
      %v478 = vunpack.c.l.bf16 %v446
      %v479 = vunpack.c.l.bf16 %v447
      %v480 = vunpack.c.l.bf16 %v448
      %v481 = vunpack.c.l.bf16 %v449
      %v482 = vunpack.c.l.bf16 %v450
      %v483 = vunpack.c.l.bf16 %v451
      %v484 = vunpack.c.l.bf16 %v452
      %v485 = vunpack.c.l.bf16 %v453
      %v486 = vunpack.c.l.bf16 %v454
      %v487 = vunpack.c.l.bf16 %v455
      %v488 = vunpack.c.l.bf16 %v456
      %v489 = vunpack.c.l.bf16 %v457
      %v490 = vunpack.c.l.bf16 %v458
      %v491 = vunpack.c.l.bf16 %v459
      %v492 = vunpack.c.l.bf16 %v460
      %v493 = vunpack.c.l.bf16 %v461
      %v494 = vunpack.c.l.bf16 %v462
      %v495 = vunpack.c.l.bf16 %v463
      %v496 = vunpack.c.l.bf16 %v464
      %v497 = vunpack.c.l.bf16 %v465
      %v498 = vunpack.c.l.bf16 %v466
      %v499 = vunpack.c.l.bf16 %v467
      %v500 = vunpack.c.l.bf16 %v468
      %v501 = vunpack.c.l.bf16 %v469
      %v502 = vunpack.c.l.bf16 %v470
      %v503 = vunpack.c.l.bf16 %v471
      %v504 = vunpack.c.l.bf16 %v472
      %vm505 = vcmp.ge.f32.partialorder %v473, 0.0
      %vm506 = vcmp.ge.f32.partialorder %v474, 0.0
      %vm507 = vcmp.ge.f32.partialorder %v475, 0.0
      %vm508 = vcmp.ge.f32.partialorder %v476, 0.0
      %vm509 = vcmp.ge.f32.partialorder %v477, 0.0
      %vm510 = vcmp.ge.f32.partialorder %v478, 0.0
      %vm511 = vcmp.ge.f32.partialorder %v479, 0.0
      %vm512 = vcmp.ge.f32.partialorder %v480, 0.0
      %vm513 = vcmp.ge.f32.partialorder %v481, 0.0
      %vm514 = vcmp.ge.f32.partialorder %v482, 0.0
      %vm515 = vcmp.ge.f32.partialorder %v483, 0.0
      %vm516 = vcmp.ge.f32.partialorder %v484, 0.0
      %vm517 = vcmp.ge.f32.partialorder %v485, 0.0
      %vm518 = vcmp.ge.f32.partialorder %v486, 0.0
      %vm519 = vcmp.ge.f32.partialorder %v487, 0.0
      %vm520 = vcmp.ge.f32.partialorder %v488, 0.0
      %vm521 = vcmp.ge.f32.partialorder %v489, 0.0
      %vm522 = vcmp.ge.f32.partialorder %v490, 0.0
      %vm523 = vcmp.ge.f32.partialorder %v491, 0.0
      %vm524 = vcmp.ge.f32.partialorder %v492, 0.0
      %vm525 = vcmp.ge.f32.partialorder %v493, 0.0
      %vm526 = vcmp.ge.f32.partialorder %v494, 0.0
      %vm527 = vcmp.ge.f32.partialorder %v495, 0.0
      %vm528 = vcmp.ge.f32.partialorder %v496, 0.0
      %vm529 = vcmp.ge.f32.partialorder %v497, 0.0
      %vm530 = vcmp.ge.f32.partialorder %v498, 0.0
      %vm531 = vcmp.ge.f32.partialorder %v499, 0.0
      %vm532 = vcmp.ge.f32.partialorder %v500, 0.0
      %vm533 = vcmp.ge.f32.partialorder %v501, 0.0
      %vm534 = vcmp.ge.f32.partialorder %v502, 0.0
      %vm535 = vcmp.ge.f32.partialorder %v503, 0.0
      %vm536 = vcmp.ge.f32.partialorder %v504, 0.0
      %v537 = vmul.f32 %v473, 0.010009766
      %v538 = vmul.f32 %v474, 0.010009766
      %v539 = vmul.f32 %v475, 0.010009766
      %v540 = vmul.f32 %v476, 0.010009766
      %v541 = vmul.f32 %v477, 0.010009766
      %v542 = vmul.f32 %v478, 0.010009766
      %v543 = vmul.f32 %v479, 0.010009766
      %v544 = vmul.f32 %v480, 0.010009766
      %v545 = vmul.f32 %v481, 0.010009766
      %v546 = vmul.f32 %v482, 0.010009766
      %v547 = vmul.f32 %v483, 0.010009766
      %v548 = vmul.f32 %v484, 0.010009766
      %v549 = vmul.f32 %v485, 0.010009766
      %v550 = vmul.f32 %v486, 0.010009766
      %v551 = vmul.f32 %v487, 0.010009766
      %v552 = vmul.f32 %v488, 0.010009766
      %v553 = vmul.f32 %v489, 0.010009766
      %v554 = vmul.f32 %v490, 0.010009766
      %v555 = vmul.f32 %v491, 0.010009766
      %v556 = vmul.f32 %v492, 0.010009766
      %v557 = vmul.f32 %v493, 0.010009766
      %v558 = vmul.f32 %v494, 0.010009766
      %v559 = vmul.f32 %v495, 0.010009766
      %v560 = vmul.f32 %v496, 0.010009766
      %v561 = vmul.f32 %v497, 0.010009766
      %v562 = vmul.f32 %v498, 0.010009766
      %v563 = vmul.f32 %v499, 0.010009766
      %v564 = vmul.f32 %v500, 0.010009766
      %v565 = vmul.f32 %v501, 0.010009766
      %v566 = vmul.f32 %v502, 0.010009766
      %v567 = vmul.f32 %v503, 0.010009766
      %v568 = vmul.f32 %v504, 0.010009766
      %v569 = vpack.c.bf16 %v537, %v537
      %v570 = vpack.c.bf16 %v538, %v538
      %v571 = vpack.c.bf16 %v539, %v539
      %v572 = vpack.c.bf16 %v540, %v540
      %v573 = vpack.c.bf16 %v541, %v541
      %v574 = vpack.c.bf16 %v542, %v542
      %v575 = vpack.c.bf16 %v543, %v543
      %v576 = vpack.c.bf16 %v544, %v544
      %v577 = vpack.c.bf16 %v545, %v545
      %v578 = vpack.c.bf16 %v546, %v546
      %v579 = vpack.c.bf16 %v547, %v547
      %v580 = vpack.c.bf16 %v548, %v548
      %v581 = vpack.c.bf16 %v549, %v549
      %v582 = vpack.c.bf16 %v550, %v550
      %v583 = vpack.c.bf16 %v551, %v551
      %v584 = vpack.c.bf16 %v552, %v552
      %v585 = vpack.c.bf16 %v553, %v553
      %v586 = vpack.c.bf16 %v554, %v554
      %v587 = vpack.c.bf16 %v555, %v555
      %v588 = vpack.c.bf16 %v556, %v556
      %v589 = vpack.c.bf16 %v557, %v557
      %v590 = vpack.c.bf16 %v558, %v558
      %v591 = vpack.c.bf16 %v559, %v559
      %v592 = vpack.c.bf16 %v560, %v560
      %v593 = vpack.c.bf16 %v561, %v561
      %v594 = vpack.c.bf16 %v562, %v562
      %v595 = vpack.c.bf16 %v563, %v563
      %v596 = vpack.c.bf16 %v564, %v564
      %v597 = vpack.c.bf16 %v565, %v565
      %v598 = vpack.c.bf16 %v566, %v566
      %v599 = vpack.c.bf16 %v567, %v567
      %v600 = vpack.c.bf16 %v568, %v568
      %vm601 = vmpackc.low %vm505, %vm505
      %vm602 = vmpackc.low %vm506, %vm506
      %vm603 = vmpackc.low %vm507, %vm507
      %vm604 = vmpackc.low %vm508, %vm508
      %vm605 = vmpackc.low %vm509, %vm509
      %vm606 = vmpackc.low %vm510, %vm510
      %vm607 = vmpackc.low %vm511, %vm511
      %vm608 = vmpackc.low %vm512, %vm512
      %vm609 = vmpackc.low %vm513, %vm513
      %vm610 = vmpackc.low %vm514, %vm514
      %vm611 = vmpackc.low %vm515, %vm515
      %vm612 = vmpackc.low %vm516, %vm516
      %vm613 = vmpackc.low %vm517, %vm517
      %vm614 = vmpackc.low %vm518, %vm518
      %vm615 = vmpackc.low %vm519, %vm519
      %vm616 = vmpackc.low %vm520, %vm520
      %vm617 = vmpackc.low %vm521, %vm521
      %vm618 = vmpackc.low %vm522, %vm522
      %vm619 = vmpackc.low %vm523, %vm523
      %vm620 = vmpackc.low %vm524, %vm524
      %vm621 = vmpackc.low %vm525, %vm525
      %vm622 = vmpackc.low %vm526, %vm526
      %vm623 = vmpackc.low %vm527, %vm527
      %vm624 = vmpackc.low %vm528, %vm528
      %vm625 = vmpackc.low %vm529, %vm529
      %vm626 = vmpackc.low %vm530, %vm530
      %vm627 = vmpackc.low %vm531, %vm531
      %vm628 = vmpackc.low %vm532, %vm532
      %vm629 = vmpackc.low %vm533, %vm533
      %vm630 = vmpackc.low %vm534, %vm534
      %vm631 = vmpackc.low %vm535, %vm535
      %vm632 = vmpackc.low %vm536, %vm536
      %v633 = vsel %vm601, %v441, %v569
      %v634 = vsel %vm602, %v442, %v570
      %v635 = vsel %vm603, %v443, %v571
      %v636 = vsel %vm604, %v444, %v572
      %v637 = vsel %vm605, %v445, %v573
      %v638 = vsel %vm606, %v446, %v574
      %v639 = vsel %vm607, %v447, %v575
      %v640 = vsel %vm608, %v448, %v576
      %v641 = vsel %vm609, %v449, %v577
      %v642 = vsel %vm610, %v450, %v578
      %v643 = vsel %vm611, %v451, %v579
      %v644 = vsel %vm612, %v452, %v580
      %v645 = vsel %vm613, %v453, %v581
      %v646 = vsel %vm614, %v454, %v582
      %v647 = vsel %vm615, %v455, %v583
      %v648 = vsel %vm616, %v456, %v584
      %v649 = vsel %vm617, %v457, %v585
      %v650 = vsel %vm618, %v458, %v586
      %v651 = vsel %vm619, %v459, %v587
      %v652 = vsel %vm620, %v460, %v588
      %v653 = vsel %vm621, %v461, %v589
      %v654 = vsel %vm622, %v462, %v590
      %v655 = vsel %vm623, %v463, %v591
      %v656 = vsel %vm624, %v464, %v592
      %v657 = vsel %vm625, %v465, %v593
      %v658 = vsel %vm626, %v466, %v594
      %v659 = vsel %vm627, %v467, %v595
      %v660 = vsel %vm628, %v468, %v596
      %v661 = vsel %vm629, %v469, %v597
      %v662 = vsel %vm630, %v470, %v598
      %v663 = vsel %vm631, %v471, %v599
      %v664 = vsel %vm632, %v472, %v600
      %v665 = vld [vmem:[%s1] sm:$0x3]
      %v698 = vunpack.c.l.b16 %v633
      %v699 = vunpack.c.l.b16 %v634
      %v700 = vunpack.c.l.b16 %v635
      %v701 = vunpack.c.l.b16 %v636
      %v702 = vunpack.c.l.b16 %v637
      %v703 = vunpack.c.l.b16 %v638
      %v704 = vunpack.c.l.b16 %v639
      %v705 = vunpack.c.l.b16 %v640
      %v706 = vunpack.c.l.b16 %v641
      %v707 = vunpack.c.l.b16 %v642
      %v708 = vunpack.c.l.b16 %v643
      %v709 = vunpack.c.l.b16 %v644
      %v710 = vunpack.c.l.b16 %v645
      %v711 = vunpack.c.l.b16 %v646
      %v712 = vunpack.c.l.b16 %v647
      %v713 = vunpack.c.l.b16 %v648
      %v714 = vunpack.c.l.b16 %v649
      %v715 = vunpack.c.l.b16 %v650
      %v716 = vunpack.c.l.b16 %v651
      %v717 = vunpack.c.l.b16 %v652
      %v718 = vunpack.c.l.b16 %v653
      %v719 = vunpack.c.l.b16 %v654
      %v720 = vunpack.c.l.b16 %v655
      %v721 = vunpack.c.l.b16 %v656
      %v722 = vunpack.c.l.b16 %v657
      %v723 = vunpack.c.l.b16 %v658
      %v724 = vunpack.c.l.b16 %v659
      %v725 = vunpack.c.l.b16 %v660
      %v726 = vunpack.c.l.b16 %v661
      %v727 = vunpack.c.l.b16 %v662
      %v728 = vunpack.c.l.b16 %v663
      %v729 = vunpack.c.l.b16 %v664
      %v730 = vpack.c.b16 %v699, %v698
      %v731 = vpack.c.b16 %v701, %v700
      %v732 = vpack.c.b16 %v703, %v702
      %v733 = vpack.c.b16 %v705, %v704
      %v734 = vpack.c.b16 %v707, %v706
      %v735 = vpack.c.b16 %v709, %v708
      %v736 = vpack.c.b16 %v711, %v710
      %v737 = vpack.c.b16 %v713, %v712
      %v738 = vpack.c.b16 %v715, %v714
      %v739 = vpack.c.b16 %v717, %v716
      %v740 = vpack.c.b16 %v719, %v718
      %v741 = vpack.c.b16 %v721, %v720
      %v742 = vpack.c.b16 %v723, %v722
      %v743 = vpack.c.b16 %v725, %v724
      %v744 = vpack.c.b16 %v727, %v726
      %v745 = vpack.c.b16 %v729, %v728
      %vm746 = vcmask 31744
      %v748 = vsel %vm746, %v730, 0
      %v751 = vsel %vm746, %v731, 0
      %v754 = vsel %vm746, %v732, 0
      %v757 = vsel %vm746, %v733, 0
      %v760 = vsel %vm746, %v734, 0
      %v763 = vsel %vm746, %v735, 0
      %v766 = vsel %vm746, %v736, 0
      %v769 = vsel %vm746, %v737, 0
      %v772 = vsel %vm746, %v738, 0
      %v775 = vsel %vm746, %v739, 0
      %v778 = vsel %vm746, %v740, 0
      %v781 = vsel %vm746, %v741, 0
      %v784 = vsel %vm746, %v742, 0
      %v787 = vsel %vm746, %v743, 0
      %v790 = vsel %vm746, %v744, 0
      %v793 = vsel %vm746, %v745, 0
      %vm795 = vcmask 1041408
      %v797 = vsel %vm795, %v665, 0
      %799 = vmatpush.bf16.msra.mxu0 0
      %800 = vmatpush.bf16.msra.mxu0 0
      %801 = vmatpush.bf16.msra.mxu0 0
      %802 = vmatpush.bf16.msra.mxu0 0
      %803 = vmatpush.bf16.msra.mxu0 0
      %804 = vmatpush.bf16.msra.mxu0 0
      %805 = vmatpush.bf16.msra.mxu0 0
      %806 = vmatpush.bf16.msra.mxu0 %v797
      %807 = vmatmul.bf16.gmra.mxu0 %v748
      %v808 = vpop.f32.mrf.mxu0
      %v809 = vadd.f32 0.0, %v808
      %v810 = vpop.f32.mrf.mxu0
      %v811 = vadd.f32 0.0, %v810
      %812 = vmatmul.bf16.gmra.mxu0 %v751
      %v813 = vpop.f32.mrf.mxu0
      %v814 = vadd.f32 0.0, %v813
      %v815 = vpop.f32.mrf.mxu0
      %v816 = vadd.f32 0.0, %v815
      %817 = vmatmul.bf16.gmra.mxu0 %v754
      %v818 = vpop.f32.mrf.mxu0
      %v819 = vadd.f32 0.0, %v818
      %v820 = vpop.f32.mrf.mxu0
      %v821 = vadd.f32 0.0, %v820
      %822 = vmatmul.bf16.gmra.mxu0 %v757
      %v823 = vpop.f32.mrf.mxu0
      %v824 = vadd.f32 0.0, %v823
      %v825 = vpop.f32.mrf.mxu0
      %v826 = vadd.f32 0.0, %v825
      %827 = vmatmul.bf16.gmra.mxu0 %v760
      %v828 = vpop.f32.mrf.mxu0
      %v829 = vadd.f32 0.0, %v828
      %v830 = vpop.f32.mrf.mxu0
      %v831 = vadd.f32 0.0, %v830
      %832 = vmatmul.bf16.gmra.mxu0 %v763
      %v833 = vpop.f32.mrf.mxu0
      %v834 = vadd.f32 0.0, %v833
      %v835 = vpop.f32.mrf.mxu0
      %v836 = vadd.f32 0.0, %v835
      %837 = vmatmul.bf16.gmra.mxu0 %v766
      %v838 = vpop.f32.mrf.mxu0
      %v839 = vadd.f32 0.0, %v838
      %v840 = vpop.f32.mrf.mxu0
      %v841 = vadd.f32 0.0, %v840
      %842 = vmatmul.bf16.gmra.mxu0 %v769
      %v843 = vpop.f32.mrf.mxu0
      %v844 = vadd.f32 0.0, %v843
      %v845 = vpop.f32.mrf.mxu0
      %v846 = vadd.f32 0.0, %v845
      %847 = vmatmul.bf16.gmra.mxu0 %v772
      %v848 = vpop.f32.mrf.mxu0
      %v849 = vadd.f32 0.0, %v848
      %v850 = vpop.f32.mrf.mxu0
      %v851 = vadd.f32 0.0, %v850
      %852 = vmatmul.bf16.gmra.mxu0 %v775
      %v853 = vpop.f32.mrf.mxu0
      %v854 = vadd.f32 0.0, %v853
      %v855 = vpop.f32.mrf.mxu0
      %v856 = vadd.f32 0.0, %v855
      %857 = vmatmul.bf16.gmra.mxu0 %v778
      %v858 = vpop.f32.mrf.mxu0
      %v859 = vadd.f32 0.0, %v858
      %v860 = vpop.f32.mrf.mxu0
      %v861 = vadd.f32 0.0, %v860
      %862 = vmatmul.bf16.gmra.mxu0 %v781
      %v863 = vpop.f32.mrf.mxu0
      %v864 = vadd.f32 0.0, %v863
      %v865 = vpop.f32.mrf.mxu0
      %v866 = vadd.f32 0.0, %v865
      %867 = vmatmul.bf16.gmra.mxu0 %v784
      %v868 = vpop.f32.mrf.mxu0
      %v869 = vadd.f32 0.0, %v868
      %v870 = vpop.f32.mrf.mxu0
      %v871 = vadd.f32 0.0, %v870
      %872 = vmatmul.bf16.gmra.mxu0 %v787
      %v873 = vpop.f32.mrf.mxu0
      %v874 = vadd.f32 0.0, %v873
      %v875 = vpop.f32.mrf.mxu0
      %v876 = vadd.f32 0.0, %v875
      %877 = vmatmul.bf16.gmra.mxu0 %v790
      %v878 = vpop.f32.mrf.mxu0
      %v879 = vadd.f32 0.0, %v878
      %v880 = vpop.f32.mrf.mxu0
      %v881 = vadd.f32 0.0, %v880
      %882 = vmatmul.bf16.gmra.mxu0 %v793
      %v883 = vpop.f32.mrf.mxu0
      %v884 = vadd.f32 0.0, %v883
      %v885 = vpop.f32.mrf.mxu0
      %v886 = vadd.f32 0.0, %v885
      %887 = vdwg.mxu0
      %v888 = vpack.c.bf16 %v809, %v809
      %v889 = vpack.c.bf16 %v811, %v811
      %v890 = vpack.c.bf16 %v814, %v814
      %v891 = vpack.c.bf16 %v816, %v816
      %v892 = vpack.c.bf16 %v819, %v819
      %v893 = vpack.c.bf16 %v821, %v821
      %v894 = vpack.c.bf16 %v824, %v824
      %v895 = vpack.c.bf16 %v826, %v826
      %v896 = vpack.c.bf16 %v829, %v829
      %v897 = vpack.c.bf16 %v831, %v831
      %v898 = vpack.c.bf16 %v834, %v834
      %v899 = vpack.c.bf16 %v836, %v836
      %v900 = vpack.c.bf16 %v839, %v839
      %v901 = vpack.c.bf16 %v841, %v841
      %v902 = vpack.c.bf16 %v844, %v844
      %v903 = vpack.c.bf16 %v846, %v846
      %v904 = vpack.c.bf16 %v849, %v849
      %v905 = vpack.c.bf16 %v851, %v851
      %v906 = vpack.c.bf16 %v854, %v854
      %v907 = vpack.c.bf16 %v856, %v856
      %v908 = vpack.c.bf16 %v859, %v859
      %v909 = vpack.c.bf16 %v861, %v861
      %v910 = vpack.c.bf16 %v864, %v864
      %v911 = vpack.c.bf16 %v866, %v866
      %v912 = vpack.c.bf16 %v869, %v869
      %v913 = vpack.c.bf16 %v871, %v871
      %v914 = vpack.c.bf16 %v874, %v874
      %v915 = vpack.c.bf16 %v876, %v876
      %v916 = vpack.c.bf16 %v879, %v879
      %v917 = vpack.c.bf16 %v881, %v881
      %v918 = vpack.c.bf16 %v884, %v884
      %v919 = vpack.c.bf16 %v886, %v886
      %vm920 = vcmask 27648
      %921 = vst.msk [vmem:[%s231] sm:$0xf] %vm920, %v888
      %922 = vst.msk [vmem:[%s231 + $0x4] sm:$0xf] %vm920, %v889
      %923 = vst.msk [vmem:[%s231 + $0x8] sm:$0xf] %vm920, %v890
      %924 = vst.msk [vmem:[%s231 + $0xc] sm:$0xf] %vm920, %v891
      %925 = vst.msk [vmem:[%s231 + $0x10] sm:$0xf] %vm920, %v892
      %926 = vst.msk [vmem:[%s231 + $0x14] sm:$0xf] %vm920, %v893
      %927 = vst.msk [vmem:[%s231 + $0x18] sm:$0xf] %vm920, %v894
      %928 = vst.msk [vmem:[%s231 + $0x1c] sm:$0xf] %vm920, %v895
      %929 = vst.msk [vmem:[%s231 + $0x20] sm:$0xf] %vm920, %v896
      %930 = vst.msk [vmem:[%s231 + $0x24] sm:$0xf] %vm920, %v897
      %931 = vst.msk [vmem:[%s231 + $0x28] sm:$0xf] %vm920, %v898
      %932 = vst.msk [vmem:[%s231 + $0x2c] sm:$0xf] %vm920, %v899
      %933 = vst.msk [vmem:[%s231 + $0x30] sm:$0xf] %vm920, %v900
      %934 = vst.msk [vmem:[%s231 + $0x34] sm:$0xf] %vm920, %v901
      %935 = vst.msk [vmem:[%s231 + $0x38] sm:$0xf] %vm920, %v902
      %936 = vst.msk [vmem:[%s231 + $0x3c] sm:$0xf] %vm920, %v903
      %937 = vst.msk [vmem:[%s231 + $0x40] sm:$0xf] %vm920, %v904
      %938 = vst.msk [vmem:[%s231 + $0x44] sm:$0xf] %vm920, %v905
      %939 = vst.msk [vmem:[%s231 + $0x48] sm:$0xf] %vm920, %v906
      %940 = vst.msk [vmem:[%s231 + $0x4c] sm:$0xf] %vm920, %v907
      %941 = vst.msk [vmem:[%s231 + $0x50] sm:$0xf] %vm920, %v908
      %942 = vst.msk [vmem:[%s231 + $0x54] sm:$0xf] %vm920, %v909
      %943 = vst.msk [vmem:[%s231 + $0x58] sm:$0xf] %vm920, %v910
      %944 = vst.msk [vmem:[%s231 + $0x5c] sm:$0xf] %vm920, %v911
      %945 = vst.msk [vmem:[%s231 + $0x60] sm:$0xf] %vm920, %v912
      %946 = vst.msk [vmem:[%s231 + $0x64] sm:$0xf] %vm920, %v913
      %947 = vst.msk [vmem:[%s231 + $0x68] sm:$0xf] %vm920, %v914
      %948 = vst.msk [vmem:[%s231 + $0x6c] sm:$0xf] %vm920, %v915
      %949 = vst.msk [vmem:[%s231 + $0x70] sm:$0xf] %vm920, %v916
      %950 = vst.msk [vmem:[%s231 + $0x74] sm:$0xf] %vm920, %v917
      %951 = vst.msk [vmem:[%s231 + $0x78] sm:$0xf] %vm920, %v918
      %952 = vst.msk [vmem:[%s231 + $0x7c] sm:$0xf] %vm920, %v919
      %v953 = vunpack.c.l.bf16 %v888
      %v954 = vunpack.c.l.bf16 %v889
      %v955 = vunpack.c.l.bf16 %v890
      %v956 = vunpack.c.l.bf16 %v891
      %v957 = vunpack.c.l.bf16 %v892
      %v958 = vunpack.c.l.bf16 %v893
      %v959 = vunpack.c.l.bf16 %v894
      %v960 = vunpack.c.l.bf16 %v895
      %v961 = vunpack.c.l.bf16 %v896
      %v962 = vunpack.c.l.bf16 %v897
      %v963 = vunpack.c.l.bf16 %v898
      %v964 = vunpack.c.l.bf16 %v899
      %v965 = vunpack.c.l.bf16 %v900
      %v966 = vunpack.c.l.bf16 %v901
      %v967 = vunpack.c.l.bf16 %v902
      %v968 = vunpack.c.l.bf16 %v903
      %v969 = vunpack.c.l.bf16 %v904
      %v970 = vunpack.c.l.bf16 %v905
      %v971 = vunpack.c.l.bf16 %v906
      %v972 = vunpack.c.l.bf16 %v907
      %v973 = vunpack.c.l.bf16 %v908
      %v974 = vunpack.c.l.bf16 %v909
      %v975 = vunpack.c.l.bf16 %v910
      %v976 = vunpack.c.l.bf16 %v911
      %v977 = vunpack.c.l.bf16 %v912
      %v978 = vunpack.c.l.bf16 %v913
      %v979 = vunpack.c.l.bf16 %v914
      %v980 = vunpack.c.l.bf16 %v915
      %v981 = vunpack.c.l.bf16 %v916
      %v982 = vunpack.c.l.bf16 %v917
      %v983 = vunpack.c.l.bf16 %v918
      %v984 = vunpack.c.l.bf16 %v919
      %v985 = vsel %vm746, %v953, 0.0
      %v986 = vsel %vm746, %v954, 0.0
      %v987 = vadd.f32 %v985, %v986
      %v988 = vsel %vm746, %v955, 0.0
      %v989 = vadd.f32 %v987, %v988
      %v990 = vsel %vm746, %v956, 0.0
      %v991 = vadd.f32 %v989, %v990
      %v992 = vsel %vm746, %v957, 0.0
      %v993 = vadd.f32 %v991, %v992
      %v994 = vsel %vm746, %v958, 0.0
      %v995 = vadd.f32 %v993, %v994
      %v996 = vsel %vm746, %v959, 0.0
      %v997 = vadd.f32 %v995, %v996
      %v998 = vsel %vm746, %v960, 0.0
      %v999 = vadd.f32 %v997, %v998
      %v1000 = vsel %vm746, %v961, 0.0
      %v1001 = vadd.f32 %v999, %v1000
      %v1002 = vsel %vm746, %v962, 0.0
      %v1003 = vadd.f32 %v1001, %v1002
      %v1004 = vsel %vm746, %v963, 0.0
      %v1005 = vadd.f32 %v1003, %v1004
      %v1006 = vsel %vm746, %v964, 0.0
      %v1007 = vadd.f32 %v1005, %v1006
      %v1008 = vsel %vm746, %v965, 0.0
      %v1009 = vadd.f32 %v1007, %v1008
      %v1010 = vsel %vm746, %v966, 0.0
      %v1011 = vadd.f32 %v1009, %v1010
      %v1012 = vsel %vm746, %v967, 0.0
      %v1013 = vadd.f32 %v1011, %v1012
      %v1014 = vsel %vm746, %v968, 0.0
      %v1015 = vadd.f32 %v1013, %v1014
      %v1016 = vsel %vm746, %v969, 0.0
      %v1017 = vadd.f32 %v1015, %v1016
      %v1018 = vsel %vm746, %v970, 0.0
      %v1019 = vadd.f32 %v1017, %v1018
      %v1020 = vsel %vm746, %v971, 0.0
      %v1021 = vadd.f32 %v1019, %v1020
      %v1022 = vsel %vm746, %v972, 0.0
      %v1023 = vadd.f32 %v1021, %v1022
      %v1024 = vsel %vm746, %v973, 0.0
      %v1025 = vadd.f32 %v1023, %v1024
      %v1026 = vsel %vm746, %v974, 0.0
      %v1027 = vadd.f32 %v1025, %v1026
      %v1028 = vsel %vm746, %v975, 0.0
      %v1029 = vadd.f32 %v1027, %v1028
      %v1030 = vsel %vm746, %v976, 0.0
      %v1031 = vadd.f32 %v1029, %v1030
      %v1032 = vsel %vm746, %v977, 0.0
      %v1033 = vadd.f32 %v1031, %v1032
      %v1034 = vsel %vm746, %v978, 0.0
      %v1035 = vadd.f32 %v1033, %v1034
      %v1036 = vsel %vm746, %v979, 0.0
      %v1037 = vadd.f32 %v1035, %v1036
      %v1038 = vsel %vm746, %v980, 0.0
      %v1039 = vadd.f32 %v1037, %v1038
      %v1040 = vsel %vm746, %v981, 0.0
      %v1041 = vadd.f32 %v1039, %v1040
      %v1042 = vsel %vm746, %v982, 0.0
      %v1043 = vadd.f32 %v1041, %v1042
      %v1044 = vsel %vm746, %v983, 0.0
      %v1045 = vadd.f32 %v1043, %v1044
      %v1046 = vsel %vm746, %v984, 0.0
      %v1047 = vadd.f32 %v1045, %v1046
      %v1048 = vrot.slane %v1047, 4
      %v1049 = vadd.f32 %v1047, %v1048
      %v1050 = vrot.slane %v1049, 2
      %v1051 = vadd.f32 %v1049, %v1050
      %v1052 = vrot.slane %v1051, 1
      %v1053 = vadd.f32 %v1051, %v1052
      %vm1054 = vcmask 24576
      %1055 = vst.msk [vmem:[%s235] sm:$0x1] %vm1054, %v1053
      %v1056 = vmul.f32 %v953, %v953
      %v1057 = vmul.f32 %v954, %v954
      %v1058 = vmul.f32 %v955, %v955
      %v1059 = vmul.f32 %v956, %v956
      %v1060 = vmul.f32 %v957, %v957
      %v1061 = vmul.f32 %v958, %v958
      %v1062 = vmul.f32 %v959, %v959
      %v1063 = vmul.f32 %v960, %v960
      %v1064 = vmul.f32 %v961, %v961
      %v1065 = vmul.f32 %v962, %v962
      %v1066 = vmul.f32 %v963, %v963
      %v1067 = vmul.f32 %v964, %v964
      %v1068 = vmul.f32 %v965, %v965
      %v1069 = vmul.f32 %v966, %v966
      %v1070 = vmul.f32 %v967, %v967
      %v1071 = vmul.f32 %v968, %v968
      %v1072 = vmul.f32 %v969, %v969
      %v1073 = vmul.f32 %v970, %v970
      %v1074 = vmul.f32 %v971, %v971
      %v1075 = vmul.f32 %v972, %v972
      %v1076 = vmul.f32 %v973, %v973
      %v1077 = vmul.f32 %v974, %v974
      %v1078 = vmul.f32 %v975, %v975
      %v1079 = vmul.f32 %v976, %v976
      %v1080 = vmul.f32 %v977, %v977
      %v1081 = vmul.f32 %v978, %v978
      %v1082 = vmul.f32 %v979, %v979
      %v1083 = vmul.f32 %v980, %v980
      %v1084 = vmul.f32 %v981, %v981
      %v1085 = vmul.f32 %v982, %v982
      %v1086 = vmul.f32 %v983, %v983
      %v1087 = vmul.f32 %v984, %v984
      %v1088 = vsel %vm746, %v1056, 0.0
      %v1089 = vsel %vm746, %v1057, 0.0
      %v1090 = vadd.f32 %v1088, %v1089
      %v1091 = vsel %vm746, %v1058, 0.0
      %v1092 = vadd.f32 %v1090, %v1091
      %v1093 = vsel %vm746, %v1059, 0.0
      %v1094 = vadd.f32 %v1092, %v1093
      %v1095 = vsel %vm746, %v1060, 0.0
      %v1096 = vadd.f32 %v1094, %v1095
      %v1097 = vsel %vm746, %v1061, 0.0
      %v1098 = vadd.f32 %v1096, %v1097
      %v1099 = vsel %vm746, %v1062, 0.0
      %v1100 = vadd.f32 %v1098, %v1099
      %v1101 = vsel %vm746, %v1063, 0.0
      %v1102 = vadd.f32 %v1100, %v1101
      %v1103 = vsel %vm746, %v1064, 0.0
      %v1104 = vadd.f32 %v1102, %v1103
      %v1105 = vsel %vm746, %v1065, 0.0
      %v1106 = vadd.f32 %v1104, %v1105
      %v1107 = vsel %vm746, %v1066, 0.0
      %v1108 = vadd.f32 %v1106, %v1107
      %v1109 = vsel %vm746, %v1067, 0.0
      %v1110 = vadd.f32 %v1108, %v1109
      %v1111 = vsel %vm746, %v1068, 0.0
      %v1112 = vadd.f32 %v1110, %v1111
      %v1113 = vsel %vm746, %v1069, 0.0
      %v1114 = vadd.f32 %v1112, %v1113
      %v1115 = vsel %vm746, %v1070, 0.0
      %v1116 = vadd.f32 %v1114, %v1115
      %v1117 = vsel %vm746, %v1071, 0.0
      %v1118 = vadd.f32 %v1116, %v1117
      %v1119 = vsel %vm746, %v1072, 0.0
      %v1120 = vadd.f32 %v1118, %v1119
      %v1121 = vsel %vm746, %v1073, 0.0
      %v1122 = vadd.f32 %v1120, %v1121
      %v1123 = vsel %vm746, %v1074, 0.0
      %v1124 = vadd.f32 %v1122, %v1123
      %v1125 = vsel %vm746, %v1075, 0.0
      %v1126 = vadd.f32 %v1124, %v1125
      %v1127 = vsel %vm746, %v1076, 0.0
      %v1128 = vadd.f32 %v1126, %v1127
      %v1129 = vsel %vm746, %v1077, 0.0
      %v1130 = vadd.f32 %v1128, %v1129
      %v1131 = vsel %vm746, %v1078, 0.0
      %v1132 = vadd.f32 %v1130, %v1131
      %v1133 = vsel %vm746, %v1079, 0.0
      %v1134 = vadd.f32 %v1132, %v1133
      %v1135 = vsel %vm746, %v1080, 0.0
      %v1136 = vadd.f32 %v1134, %v1135
      %v1137 = vsel %vm746, %v1081, 0.0
      %v1138 = vadd.f32 %v1136, %v1137
      %v1139 = vsel %vm746, %v1082, 0.0
      %v1140 = vadd.f32 %v1138, %v1139
      %v1141 = vsel %vm746, %v1083, 0.0
      %v1142 = vadd.f32 %v1140, %v1141
      %v1143 = vsel %vm746, %v1084, 0.0
      %v1144 = vadd.f32 %v1142, %v1143
      %v1145 = vsel %vm746, %v1085, 0.0
      %v1146 = vadd.f32 %v1144, %v1145
      %v1147 = vsel %vm746, %v1086, 0.0
      %v1148 = vadd.f32 %v1146, %v1147
      %v1149 = vsel %vm746, %v1087, 0.0
      %v1150 = vadd.f32 %v1148, %v1149
      %v1151 = vrot.slane %v1150, 4
      %v1152 = vadd.f32 %v1150, %v1151
      %v1153 = vrot.slane %v1152, 2
      %v1154 = vadd.f32 %v1152, %v1153
      %v1155 = vrot.slane %v1154, 1
      %v1156 = vadd.f32 %v1154, %v1155
      %1157 = vst.msk [vmem:[%s235 + $0x1] sm:$0x1] %vm1054, %v1156
      %p1158 = scmp.lt.s32.totalorder %s17, 1
      %s1159 = scalar_select %p1158, %s17, 1
      %s1160 = smul.addr %s1159, 32
      %s1161 = smul.addr %s1160, 4
      %s1162 = scalar_lea.vmem %s4, %s1161
      %p1163 = scmp.lt.s32.totalorder %s17, 1
      %s1164 = scalar_select %p1163, %s17, 1
      %s1165 = smul.addr %s1164, 2
      %s1166 = scalar_lea.vmem %s5, %s1165
      // Predicated region
      $region37: #{residual_layer_nhwc.4} parent=35 // pred_check
        %p1167 = pneg %p124
      $region38: #{residual_layer_nhwc.4} parent=35 // pred_check_branch
        %1169 = sbr.rel (%p1167) target = $region40
      $region39: #{residual_layer_nhwc.4} parent=35 // pred_region
        _
      $region40: #{residual_layer_nhwc.4} parent=35 // pred_fallthru
        _
      // Predicated region
      $region41: #{residual_layer_nhwc.4} parent=35 // pred_check
        %p1170 = pneg %p150
      $region42: #{residual_layer_nhwc.4} parent=35 // pred_check_branch
        %1172 = sbr.rel (%p1170) target = $region44
      $region43: #{residual_layer_nhwc.4} parent=35 // pred_region
        _
      $region44: #{residual_layer_nhwc.4} parent=35 // pred_fallthru
        _
    $region36: #{residual_layer_nhwc.4} parent=5 // pred_fallthru
      _
    %p1173 = scmp.le.s32.totalorder 2, %s12
    // Predicated region
    $region45: #{residual_layer_nhwc.4} parent=5 // pred_check
      %p1174 = pneg %p1173
    $region46: #{residual_layer_nhwc.4} parent=5 // pred_check_branch
      %1176 = sbr.rel (%p1174) target = $region48
    $region47: #{residual_layer_nhwc.4} parent=5 // pred_region
      %s1177 = ssub.s32 %s12, 2
      // Predicated region
      $region49: #{residual_layer_nhwc.4} parent=47 // pred_check
        %p1178 = pneg %p130
      $region50: #{residual_layer_nhwc.4} parent=47 // pred_check_branch
        %1180 = sbr.rel (%p1178) target = $region52
      $region51: #{residual_layer_nhwc.4} parent=47 // pred_region
        %p1181 = scmp.lt.s32.totalorder %s18, 1
        %s1182 = scalar_select %p1181, %s18, 1
        %s1183 = smul.addr %s1182, 32
        %s1184 = smul.addr %s1183, 4
        %s1185 = scalar_lea.vmem %s4, %s1184
      $region52: #{residual_layer_nhwc.4} parent=47 // pred_fallthru
        _
      // Predicated region
      $region53: #{residual_layer_nhwc.4} parent=47 // pred_check
        %p1186 = pneg %p156
      $region54: #{residual_layer_nhwc.4} parent=47 // pred_check_branch
        %1188 = sbr.rel (%p1186) target = $region56
      $region55: #{residual_layer_nhwc.4} parent=47 // pred_region
        %p1189 = scmp.lt.s32.totalorder %s18, 1
        %s1190 = scalar_select %p1189, %s18, 1
        %s1191 = smul.addr %s1190, 2
        %s1192 = scalar_lea.vmem %s5, %s1191
      $region56: #{residual_layer_nhwc.4} parent=47 // pred_fallthru
        _
    $region48: #{residual_layer_nhwc.4} parent=5 // pred_fallthru
      _
  $region6: #{residual_layer_nhwc.4} parent=0 // loop_footer
    %s16 = sadd.s32 1, %s12
  $region7: #{residual_layer_nhwc.4} parent=0 // loop_footer_branch
    %11 = sbr.rel target = $region3
  $region8: #{residual_layer_nhwc.4} parent=0 // loop_exit
    _

// kernel: residual_layer_nhwc.3
$region0: #{residual_layer_nhwc.3}
  #allocation0 [shape = 'u32[]', space=smem, size = 0x4, offset = 0x4, fixed_abs, tag = 'smem constant byte address 0x4 - core index']
  #allocation1 [shape = 'u32[72,128]{1,0:T(1,128)}', space=vmem, size = 0x9000, scoped, tag = 'internal scratch']
  #allocation2 [shape = 'bf16[456,4]{1,0:T(8,128)(2,1)}', space=vmem, size = 0x1c800, scoped, tag = 'scratch operand']
  #allocation3 [shape = 'f32[384,4]{1,0:T(8,128)}', space=vmem, size = 0x30000, scoped, tag = 'scratch operand']
  %s0 = inlined_call_operand.vmem [shape: f32[2,16,16,4], index: 0, kind: input, shape index: {}]
  %s1 = inlined_call_operand.vmem [shape: bf16[9,4,4], index: 1, kind: input, shape index: {}]
  %s2 = inlined_call_operand.vmem [shape: bf16[2,16,16,4], index: 2, kind: output, shape index: {0}]
  %s3 = inlined_call_operand.vmem [shape: f32[2,2,4], index: 3, kind: output, shape index: {1}]
  %4 = xla_tuple %s2, %s3
  %s5 = sld [smem:[#allocation0]]
  $region49: #{residual_layer_nhwc.3} parent=0
    _
  %s7 = ssub.s32 1, %s5
  %s8 = scalar_select 0, %s7, %s5
  loop: start=0, step=1, limit=4
  $region2: #{residual_layer_nhwc.3} parent=0 // loop_pre_header
    _
  $region3: #{residual_layer_nhwc.3} parent=0 // loop_header
    %s10 = sphi 0, %s14
    %p11 = scmp.ge.s32.totalorder %s10, 4
    %s20 = sphi 0, %s22
    %s23 = sphi 0, %s20
    %s24 = sphi 0, %s23
    %s40 = sphi 0, %s24
    %s44 = sphi 0, %s44
    %s46 = sphi 0, %s44
    %s47 = sphi 0, %s46
    %s61 = sphi 0, %s47
    %s67 = sphi 0, %s69
    %s70 = sphi 0, %s67
    %s71 = sphi 0, %s70
    %s87 = sphi 0, %s71
    %s93 = sphi 0, %s95
    %s96 = sphi 0, %s93
    %s97 = sphi 0, %s96
    %s113 = sphi 0, %s97
  $region4: #{residual_layer_nhwc.3} parent=0 // loop_header_branch
    %13 = sbr.rel (%p11) target = $region8
  $region5: #{residual_layer_nhwc.3} parent=0 // loop_body
    %s15 = ssub.s32 %s10, 1
    %s16 = ssub.s32 %s10, 2
    %s17 = sadd.s32 %s10, 1
    %s18 = ssub.s32 %s10, %s17
    %p19 = scmp.eq.s32.totalorder %s18, 0
    %s21 = sadd.s32 %s20, 1
    %s22 = scalar_select %p19, %s20, %s21
    %p25 = pneg %p19
    %p26 = scmp.eq.s32.totalorder %s10, 1
    %p27 = por %p25, %p26
    %p28 = scmp.ne.s32.totalorder %s20, %s23
    %p29 = scmp.eq.s32.totalorder %s10, 0
    %p30 = por %p28, %p29
    %p31 = scmp.ne.s32.totalorder %s20, %s23
    %p32 = scmp.eq.s32.totalorder %s15, 1
    %p33 = por %p31, %p32
    %p34 = scmp.ne.s32.totalorder %s23, %s24
    %p35 = scmp.eq.s32.totalorder %s15, 0
    %p36 = por %p34, %p35
    %p37 = scmp.ne.s32.totalorder %s23, %s24
    %p38 = scmp.eq.s32.totalorder %s16, 1
    %p39 = por %p37, %p38
    %p41 = scmp.ne.s32.totalorder %s24, %s40
    %p42 = scmp.eq.s32.totalorder %s16, 0
    %p43 = por %p41, %p42
    %s45 = sadd.s32 %s44, 1
    %p48 = scmp.eq.s32.totalorder %s10, 1
    %p49 = scmp.ne.s32.totalorder %s44, %s46
    %p50 = scmp.eq.s32.totalorder %s10, 0
    %p51 = por %p49, %p50
    %p52 = scmp.ne.s32.totalorder %s44, %s46
    %p53 = scmp.eq.s32.totalorder %s15, 1
    %p54 = por %p52, %p53
    %p55 = scmp.ne.s32.totalorder %s46, %s47
    %p56 = scmp.eq.s32.totalorder %s15, 0
    %p57 = por %p55, %p56
    %p58 = scmp.ne.s32.totalorder %s46, %s47
    %p59 = scmp.eq.s32.totalorder %s16, 1
    %p60 = por %p58, %p59
    %p62 = scmp.ne.s32.totalorder %s47, %s61
    %p63 = scmp.eq.s32.totalorder %s16, 0
    %p64 = por %p62, %p63
    %s65 = ssub.s32 %s10, %s17
    %p66 = scmp.eq.s32.totalorder %s65, 0
    %s68 = sadd.s32 %s67, 1
    %s69 = scalar_select %p66, %s67, %s68
    %p72 = pneg %p66
    %p73 = scmp.eq.s32.totalorder %s10, 1
    %p74 = por %p72, %p73
    %p75 = scmp.ne.s32.totalorder %s67, %s70
    %p76 = scmp.eq.s32.totalorder %s10, 0
    %p77 = por %p75, %p76
    %p78 = scmp.ne.s32.totalorder %s67, %s70
    %p79 = scmp.eq.s32.totalorder %s15, 1
    %p80 = por %p78, %p79
    %p81 = scmp.ne.s32.totalorder %s70, %s71
    %p82 = scmp.eq.s32.totalorder %s15, 0
    %p83 = por %p81, %p82
    %p84 = scmp.ne.s32.totalorder %s70, %s71
    %p85 = scmp.eq.s32.totalorder %s16, 1
    %p86 = por %p84, %p85
    %p88 = scmp.ne.s32.totalorder %s71, %s87
    %p89 = scmp.eq.s32.totalorder %s16, 0
    %p90 = por %p88, %p89
    %s91 = ssub.s32 %s10, %s17
    %p92 = scmp.eq.s32.totalorder %s91, 0
    %s94 = sadd.s32 %s93, 1
    %s95 = scalar_select %p92, %s93, %s94
    %p98 = pneg %p92
    %p99 = scmp.eq.s32.totalorder %s10, 1
    %p100 = por %p98, %p99
    %p101 = scmp.ne.s32.totalorder %s93, %s96
    %p102 = scmp.eq.s32.totalorder %s10, 0
    %p103 = por %p101, %p102
    %p104 = scmp.ne.s32.totalorder %s93, %s96
    %p105 = scmp.eq.s32.totalorder %s15, 1
    %p106 = por %p104, %p105
    %p107 = scmp.ne.s32.totalorder %s96, %s97
    %p108 = scmp.eq.s32.totalorder %s15, 0
    %p109 = por %p107, %p108
    %p110 = scmp.ne.s32.totalorder %s96, %s97
    %p111 = scmp.eq.s32.totalorder %s16, 1
    %p112 = por %p110, %p111
    %p114 = scmp.ne.s32.totalorder %s97, %s113
    %p115 = scmp.eq.s32.totalorder %s16, 0
    %p116 = por %p114, %p115
    %p117 = scmp.le.s32.totalorder 1, %s10
    %p118 = scmp.lt.s32.totalorder %s10, 3
    %p119 = pnand %p117, %p118
    %p120 = pneg %p119
    // Predicated region
    $region9: #{residual_layer_nhwc.3} parent=5 // pred_check
      _
    $region10: #{residual_layer_nhwc.3} parent=5 // pred_check_branch
      %122 = sbr.rel (%p119) target = $region12
    $region11: #{residual_layer_nhwc.3} parent=5 // pred_region
      %s123 = ssub.s32 %s10, 1
      // Predicated region
      $region13: #{residual_layer_nhwc.3} parent=11 // pred_check
        %p124 = pneg %p57
      $region14: #{residual_layer_nhwc.3} parent=11 // pred_check_branch
        %126 = sbr.rel (%p124) target = $region16
      $region15: #{residual_layer_nhwc.3} parent=11 // pred_region
        _
      $region16: #{residual_layer_nhwc.3} parent=11 // pred_fallthru
        _
    $region12: #{residual_layer_nhwc.3} parent=5 // pred_fallthru
      _
    %p127 = scmp.lt.s32.totalorder %s10, 2
    // Predicated region
    $region17: #{residual_layer_nhwc.3} parent=5 // pred_check
      %p128 = pneg %p127
    $region18: #{residual_layer_nhwc.3} parent=5 // pred_check_branch
      %130 = sbr.rel (%p128) target = $region20
    $region19: #{residual_layer_nhwc.3} parent=5 // pred_region
      // Predicated region
      $region21: #{residual_layer_nhwc.3} parent=19 // pred_check
        %p131 = pneg %p30
      $region22: #{residual_layer_nhwc.3} parent=19 // pred_check_branch
        %133 = sbr.rel (%p131) target = $region24
      $region23: #{residual_layer_nhwc.3} parent=19 // pred_region
        %p134 = scmp.lt.s32.totalorder %s10, 1
        %s135 = scalar_select %p134, %s10, 1
        %s136 = smul.addr %s135, 32
        %s137 = smul.addr %s136, 8
        %s138 = scalar_lea.vmem %s0, %s137
      $region24: #{residual_layer_nhwc.3} parent=19 // pred_fallthru
        _
    $region20: #{residual_layer_nhwc.3} parent=5 // pred_fallthru
      _
    %p139 = scmp.le.s32.totalorder 1, %s10
    %p140 = scmp.lt.s32.totalorder %s10, 3
    %p141 = pnand %p139, %p140
    %p142 = pneg %p141
    // Predicated region
    $region25: #{residual_layer_nhwc.3} parent=5 // pred_check
      _
    $region26: #{residual_layer_nhwc.3} parent=5 // pred_check_branch
      %144 = sbr.rel (%p141) target = $region28
    $region27: #{residual_layer_nhwc.3} parent=5 // pred_region
      %s145 = ssub.s32 %s10, 1
      %p146 = scmp.lt.s32.totalorder %s15, 1
      %s147 = scalar_select %p146, %s15, 1
      %s148 = smul.addr %s147, 32
      %s149 = smul.addr %s148, 8
      %s150 = scalar_lea.vmem %s0, %s149
      %p151 = pneg %p36
      %p152 = pneg %p33
      %p153 = pneg %p57
      %p154 = pneg %p54
      %p155 = pneg %p83
      %p156 = pneg %p80
      %p157 = scmp.lt.s32.totalorder %s15, 1
      %s158 = scalar_select %p157, %s15, 1
      %s159 = smul.addr %s158, 32
      %s160 = smul.addr %s159, 4
      %s161 = scalar_lea.vmem %s2, %s160
      %p162 = pneg %p109
      %p163 = pneg %p106
      %p164 = scmp.lt.s32.totalorder %s15, 1
      %s165 = scalar_select %p164, %s15, 1
      %s166 = smul.addr %s165, 2
      %s167 = scalar_lea.vmem %s3, %s166
      %p168 = scmp.lt.s32.totalorder %s15, 1
      %s169 = scalar_select %p168, %s15, 1
      %s170 = smul.addr %s169, 32
      %s171 = smul.addr %s170, 8
      %s172 = scalar_lea.vmem %s0, %s171
      %p173 = scmp.lt.s32.totalorder %s15, 1
      %s174 = scalar_select %p173, %s15, 1
      %s175 = smul.addr %s174, 32
      %s176 = smul.addr %s175, 4
      %s177 = scalar_lea.vmem %s2, %s176
      %p178 = scmp.lt.s32.totalorder %s15, 1
      %s179 = scalar_select %p178, %s15, 1
      %s180 = smul.addr %s179, 2
      %s181 = scalar_lea.vmem %s3, %s180
      %vm183 = vcmask 27648
      %184 = vst.msk [vmem:[#allocation2] sm:$0xf] %vm183, 0
      %185 = vst.msk [vmem:[#allocation2 + $0x4] sm:$0xf] %vm183, 0
      %186 = vst.msk [vmem:[#allocation2 + $0x8] sm:$0xf] %vm183, 0
      %187 = vst.msk [vmem:[#allocation2 + $0xcc] sm:$0xf] %vm183, 0
      %188 = vst.msk [vmem:[#allocation2 + $0xd0] sm:$0xf] %vm183, 0
      %189 = vst.msk [vmem:[#allocation2 + $0xd4] sm:$0xf] %vm183, 0
      %v190 = vld [vmem:[%s172] sm:$0xff]
      %v191 = vld [vmem:[%s172 + $0x8] sm:$0xff]
      %v192 = vpack.c.bf16 %v190, %v190
      %v193 = vpack.c.bf16 %v191, %v191
      %v196 = vunpack.c.l.b16 %v192
      %v197 = vunpack.c.l.b16 %v193
      %v198 = vpack.c.b16 %v197, %v196
      %v200 = vshrl.u32 %v198, 16
      %v202 = vrot.slane %v200, 7
      %v203 = vshll.u32 %v198, 16
      %v205 = vor.u32 %v202, %v203
      %vm208 = vcmask 1040384
      %vm209 = vsmask.f32 256
      %vm210 = vmand %vm208, %vm209
      %v211 = vsel %vm210, 0, %v205
      %v212 = vsel %vm210, %v202, 0
      %v215 = vunpack.c.l.b16 %v211
      %v216 = vunpack.c.h.b16 %v211
      %v217 = vunpack.c.l.b16 %v212
      %v218 = vpack.c.b16 %v215, %v215
      %v219 = vpack.c.b16 %v216, %v216
      %v220 = vpack.c.b16 %v217, %v217
      %224 = vst.msk [vmem:[#allocation2 + $0xc] sm:$0xf] %vm183, %v218
      %225 = vst.msk [vmem:[#allocation2 + $0x10] sm:$0xf] %vm183, %v219
      %vm226 = vcmask 24576
      %227 = vst.msk [vmem:[#allocation2 + $0x14] sm:$0x1] %vm226, %v220
      %s228 = scalar_lea.vmem %s172, 16
      %v229 = vld [vmem:[%s228] sm:$0xff]
      %v230 = vld [vmem:[%s228 + $0x8] sm:$0xff]
      %v231 = vpack.c.bf16 %v229, %v229
      %v232 = vpack.c.bf16 %v230, %v230
      %v235 = vunpack.c.l.b16 %v231
      %v236 = vunpack.c.l.b16 %v232
      %v237 = vpack.c.b16 %v236, %v235
      %v239 = vshrl.u32 %v237, 16
      %v241 = vrot.slane %v239, 7
      %v242 = vshll.u32 %v237, 16
      %v244 = vor.u32 %v241, %v242
      %v247 = vsel %vm210, 0, %v244
      %v248 = vsel %vm210, %v241, 0
      %v251 = vunpack.c.l.b16 %v247
      %v252 = vunpack.c.h.b16 %v247
      %v253 = vunpack.c.l.b16 %v248
      %v254 = vpack.c.b16 %v251, %v251
      %v255 = vpack.c.b16 %v252, %v252
      %v256 = vpack.c.b16 %v253, %v253
      %260 = vst.msk [vmem:[#allocation2 + $0x18] sm:$0xf] %vm183, %v254
      %261 = vst.msk [vmem:[#allocation2 + $0x1c] sm:$0xf] %vm183, %v255
      %262 = vst.msk [vmem:[#allocation2 + $0x20] sm:$0x1] %vm226, %v256
      %s263 = scalar_lea.vmem %s172, 32
      %v264 = vld [vmem:[%s263] sm:$0xff]
      %v265 = vld [vmem:[%s263 + $0x8] sm:$0xff]
      %v266 = vpack.c.bf16 %v264, %v264
      %v267 = vpack.c.bf16 %v265, %v265
      %v270 = vunpack.c.l.b16 %v266
      %v271 = vunpack.c.l.b16 %v267
      %v272 = vpack.c.b16 %v271, %v270
      %v274 = vshrl.u32 %v272, 16
      %v276 = vrot.slane %v274, 7
      %v277 = vshll.u32 %v272, 16
      %v279 = vor.u32 %v276, %v277
      %v282 = vsel %vm210, 0, %v279
      %v283 = vsel %vm210, %v276, 0
      %v286 = vunpack.c.l.b16 %v282
      %v287 = vunpack.c.h.b16 %v282
      %v288 = vunpack.c.l.b16 %v283
      %v289 = vpack.c.b16 %v286, %v286
      %v290 = vpack.c.b16 %v287, %v287
      %v291 = vpack.c.b16 %v288, %v288
      %295 = vst.msk [vmem:[#allocation2 + $0x24] sm:$0xf] %vm183, %v289
      %296 = vst.msk [vmem:[#allocation2 + $0x28] sm:$0xf] %vm183, %v290
      %297 = vst.msk [vmem:[#allocation2 + $0x2c] sm:$0x1] %vm226, %v291
      %s298 = scalar_lea.vmem %s172, 48
      %v299 = vld [vmem:[%s298] sm:$0xff]
      %v300 = vld [vmem:[%s298 + $0x8] sm:$0xff]
      %v301 = vpack.c.bf16 %v299, %v299
      %v302 = vpack.c.bf16 %v300, %v300
      %v305 = vunpack.c.l.b16 %v301
      %v306 = vunpack.c.l.b16 %v302
      %v307 = vpack.c.b16 %v306, %v305
      %v309 = vshrl.u32 %v307, 16
      %v311 = vrot.slane %v309, 7
      %v312 = vshll.u32 %v307, 16
      %v314 = vor.u32 %v311, %v312
      %v317 = vsel %vm210, 0, %v314
      %v318 = vsel %vm210, %v311, 0
      %v321 = vunpack.c.l.b16 %v317
      %v322 = vunpack.c.h.b16 %v317
      %v323 = vunpack.c.l.b16 %v318
      %v324 = vpack.c.b16 %v321, %v321
      %v325 = vpack.c.b16 %v322, %v322
      %v326 = vpack.c.b16 %v323, %v323
      %330 = vst.msk [vmem:[#allocation2 + $0x30] sm:$0xf] %vm183, %v324
      %331 = vst.msk [vmem:[#allocation2 + $0x34] sm:$0xf] %vm183, %v325
      %332 = vst.msk [vmem:[#allocation2 + $0x38] sm:$0x1] %vm226, %v326
      %s333 = scalar_lea.vmem %s172, 64
      %v334 = vld [vmem:[%s333] sm:$0xff]
      %v335 = vld [vmem:[%s333 + $0x8] sm:$0xff]
      %v336 = vpack.c.bf16 %v334, %v334
      %v337 = vpack.c.bf16 %v335, %v335
      %v340 = vunpack.c.l.b16 %v336
      %v341 = vunpack.c.l.b16 %v337
      %v342 = vpack.c.b16 %v341, %v340
      %v344 = vshrl.u32 %v342, 16
      %v346 = vrot.slane %v344, 7
      %v347 = vshll.u32 %v342, 16
      %v349 = vor.u32 %v346, %v347
      %v352 = vsel %vm210, 0, %v349
      %v353 = vsel %vm210, %v346, 0
      %v356 = vunpack.c.l.b16 %v352
      %v357 = vunpack.c.h.b16 %v352
      %v358 = vunpack.c.l.b16 %v353
      %v359 = vpack.c.b16 %v356, %v356
      %v360 = vpack.c.b16 %v357, %v357
      %v361 = vpack.c.b16 %v358, %v358
      %365 = vst.msk [vmem:[#allocation2 + $0x3c] sm:$0xf] %vm183, %v359
      %366 = vst.msk [vmem:[#allocation2 + $0x40] sm:$0xf] %vm183, %v360
      %367 = vst.msk [vmem:[#allocation2 + $0x44] sm:$0x1] %vm226, %v361
      %s368 = scalar_lea.vmem %s172, 80
      %v369 = vld [vmem:[%s368] sm:$0xff]
      %v370 = vld [vmem:[%s368 + $0x8] sm:$0xff]
      %v371 = vpack.c.bf16 %v369, %v369
      %v372 = vpack.c.bf16 %v370, %v370
      %v375 = vunpack.c.l.b16 %v371
      %v376 = vunpack.c.l.b16 %v372
      %v377 = vpack.c.b16 %v376, %v375
      %v379 = vshrl.u32 %v377, 16
      %v381 = vrot.slane %v379, 7
      %v382 = vshll.u32 %v377, 16
      %v384 = vor.u32 %v381, %v382
      %v387 = vsel %vm210, 0, %v384
      %v388 = vsel %vm210, %v381, 0
      %v391 = vunpack.c.l.b16 %v387
      %v392 = vunpack.c.h.b16 %v387
      %v393 = vunpack.c.l.b16 %v388
      %v394 = vpack.c.b16 %v391, %v391
      %v395 = vpack.c.b16 %v392, %v392
      %v396 = vpack.c.b16 %v393, %v393
      %400 = vst.msk [vmem:[#allocation2 + $0x48] sm:$0xf] %vm183, %v394
      %401 = vst.msk [vmem:[#allocation2 + $0x4c] sm:$0xf] %vm183, %v395
      %402 = vst.msk [vmem:[#allocation2 + $0x50] sm:$0x1] %vm226, %v396
      %s403 = scalar_lea.vmem %s172, 96
      %v404 = vld [vmem:[%s403] sm:$0xff]
      %v405 = vld [vmem:[%s403 + $0x8] sm:$0xff]
      %v406 = vpack.c.bf16 %v404, %v404
      %v407 = vpack.c.bf16 %v405, %v405
      %v410 = vunpack.c.l.b16 %v406
      %v411 = vunpack.c.l.b16 %v407
      %v412 = vpack.c.b16 %v411, %v410
      %v414 = vshrl.u32 %v412, 16
      %v416 = vrot.slane %v414, 7
      %v417 = vshll.u32 %v412, 16
      %v419 = vor.u32 %v416, %v417
      %v422 = vsel %vm210, 0, %v419
      %v423 = vsel %vm210, %v416, 0
      %v426 = vunpack.c.l.b16 %v422
      %v427 = vunpack.c.h.b16 %v422
      %v428 = vunpack.c.l.b16 %v423
      %v429 = vpack.c.b16 %v426, %v426
      %v430 = vpack.c.b16 %v427, %v427
      %v431 = vpack.c.b16 %v428, %v428
      %435 = vst.msk [vmem:[#allocation2 + $0x54] sm:$0xf] %vm183, %v429
      %436 = vst.msk [vmem:[#allocation2 + $0x58] sm:$0xf] %vm183, %v430
      %437 = vst.msk [vmem:[#allocation2 + $0x5c] sm:$0x1] %vm226, %v431
      %s438 = scalar_lea.vmem %s172, 112
      %v439 = vld [vmem:[%s438] sm:$0xff]
      %v440 = vld [vmem:[%s438 + $0x8] sm:$0xff]
      %v441 = vpack.c.bf16 %v439, %v439
      %v442 = vpack.c.bf16 %v440, %v440
      %v445 = vunpack.c.l.b16 %v441
      %v446 = vunpack.c.l.b16 %v442
      %v447 = vpack.c.b16 %v446, %v445
      %v449 = vshrl.u32 %v447, 16
      %v451 = vrot.slane %v449, 7
      %v452 = vshll.u32 %v447, 16
      %v454 = vor.u32 %v451, %v452
      %v457 = vsel %vm210, 0, %v454
      %v458 = vsel %vm210, %v451, 0
      %v461 = vunpack.c.l.b16 %v457
      %v462 = vunpack.c.h.b16 %v457
      %v463 = vunpack.c.l.b16 %v458
      %v464 = vpack.c.b16 %v461, %v461
      %v465 = vpack.c.b16 %v462, %v462
      %v466 = vpack.c.b16 %v463, %v463
      %470 = vst.msk [vmem:[#allocation2 + $0x60] sm:$0xf] %vm183, %v464
      %471 = vst.msk [vmem:[#allocation2 + $0x64] sm:$0xf] %vm183, %v465
      %472 = vst.msk [vmem:[#allocation2 + $0x68] sm:$0x1] %vm226, %v466
      %s473 = scalar_lea.vmem %s172, 128
      %v474 = vld [vmem:[%s473] sm:$0xff]
      %v475 = vld [vmem:[%s473 + $0x8] sm:$0xff]
      %v476 = vpack.c.bf16 %v474, %v474
      %v477 = vpack.c.bf16 %v475, %v475
      %v480 = vunpack.c.l.b16 %v476
      %v481 = vunpack.c.l.b16 %v477
      %v482 = vpack.c.b16 %v481, %v480
      %v484 = vshrl.u32 %v482, 16
      %v486 = vrot.slane %v484, 7
      %v487 = vshll.u32 %v482, 16
      %v489 = vor.u32 %v486, %v487
      %v492 = vsel %vm210, 0, %v489
      %v493 = vsel %vm210, %v486, 0
      %v496 = vunpack.c.l.b16 %v492
      %v497 = vunpack.c.h.b16 %v492
      %v498 = vunpack.c.l.b16 %v493
      %v499 = vpack.c.b16 %v496, %v496
      %v500 = vpack.c.b16 %v497, %v497
      %v501 = vpack.c.b16 %v498, %v498
      %505 = vst.msk [vmem:[#allocation2 + $0x6c] sm:$0xf] %vm183, %v499
      %506 = vst.msk [vmem:[#allocation2 + $0x70] sm:$0xf] %vm183, %v500
      %507 = vst.msk [vmem:[#allocation2 + $0x74] sm:$0x1] %vm226, %v501
      %s508 = scalar_lea.vmem %s172, 144
      %v509 = vld [vmem:[%s508] sm:$0xff]
      %v510 = vld [vmem:[%s508 + $0x8] sm:$0xff]
      %v511 = vpack.c.bf16 %v509, %v509
      %v512 = vpack.c.bf16 %v510, %v510
      %v515 = vunpack.c.l.b16 %v511
      %v516 = vunpack.c.l.b16 %v512
      %v517 = vpack.c.b16 %v516, %v515
      %v519 = vshrl.u32 %v517, 16
      %v521 = vrot.slane %v519, 7
      %v522 = vshll.u32 %v517, 16
      %v524 = vor.u32 %v521, %v522
      %v527 = vsel %vm210, 0, %v524
      %v528 = vsel %vm210, %v521, 0
      %v531 = vunpack.c.l.b16 %v527
      %v532 = vunpack.c.h.b16 %v527
      %v533 = vunpack.c.l.b16 %v528
      %v534 = vpack.c.b16 %v531, %v531
      %v535 = vpack.c.b16 %v532, %v532
      %v536 = vpack.c.b16 %v533, %v533
      %540 = vst.msk [vmem:[#allocation2 + $0x78] sm:$0xf] %vm183, %v534
      %541 = vst.msk [vmem:[#allocation2 + $0x7c] sm:$0xf] %vm183, %v535
      %542 = vst.msk [vmem:[#allocation2 + $0x80] sm:$0x1] %vm226, %v536
      %s543 = scalar_lea.vmem %s172, 160
      %v544 = vld [vmem:[%s543] sm:$0xff]
      %v545 = vld [vmem:[%s543 + $0x8] sm:$0xff]
      %v546 = vpack.c.bf16 %v544, %v544
      %v547 = vpack.c.bf16 %v545, %v545
      %v550 = vunpack.c.l.b16 %v546
      %v551 = vunpack.c.l.b16 %v547
      %v552 = vpack.c.b16 %v551, %v550
      %v554 = vshrl.u32 %v552, 16
      %v556 = vrot.slane %v554, 7
      %v557 = vshll.u32 %v552, 16
      %v559 = vor.u32 %v556, %v557
      %v562 = vsel %vm210, 0, %v559
      %v563 = vsel %vm210, %v556, 0
      %v566 = vunpack.c.l.b16 %v562
      %v567 = vunpack.c.h.b16 %v562
      %v568 = vunpack.c.l.b16 %v563
      %v569 = vpack.c.b16 %v566, %v566
      %v570 = vpack.c.b16 %v567, %v567
      %v571 = vpack.c.b16 %v568, %v568
      %575 = vst.msk [vmem:[#allocation2 + $0x84] sm:$0xf] %vm183, %v569
      %576 = vst.msk [vmem:[#allocation2 + $0x88] sm:$0xf] %vm183, %v570
      %577 = vst.msk [vmem:[#allocation2 + $0x8c] sm:$0x1] %vm226, %v571
      %s578 = scalar_lea.vmem %s172, 176
      %v579 = vld [vmem:[%s578] sm:$0xff]
      %v580 = vld [vmem:[%s578 + $0x8] sm:$0xff]
      %v581 = vpack.c.bf16 %v579, %v579
      %v582 = vpack.c.bf16 %v580, %v580
      %v585 = vunpack.c.l.b16 %v581
      %v586 = vunpack.c.l.b16 %v582
      %v587 = vpack.c.b16 %v586, %v585
      %v589 = vshrl.u32 %v587, 16
      %v591 = vrot.slane %v589, 7
      %v592 = vshll.u32 %v587, 16
      %v594 = vor.u32 %v591, %v592
      %v597 = vsel %vm210, 0, %v594
      %v598 = vsel %vm210, %v591, 0
      %v601 = vunpack.c.l.b16 %v597
      %v602 = vunpack.c.h.b16 %v597
      %v603 = vunpack.c.l.b16 %v598
      %v604 = vpack.c.b16 %v601, %v601
      %v605 = vpack.c.b16 %v602, %v602
      %v606 = vpack.c.b16 %v603, %v603
      %610 = vst.msk [vmem:[#allocation2 + $0x90] sm:$0xf] %vm183, %v604
      %611 = vst.msk [vmem:[#allocation2 + $0x94] sm:$0xf] %vm183, %v605
      %612 = vst.msk [vmem:[#allocation2 + $0x98] sm:$0x1] %vm226, %v606
      %s613 = scalar_lea.vmem %s172, 192
      %v614 = vld [vmem:[%s613] sm:$0xff]
      %v615 = vld [vmem:[%s613 + $0x8] sm:$0xff]
      %v616 = vpack.c.bf16 %v614, %v614
      %v617 = vpack.c.bf16 %v615, %v615
      %v620 = vunpack.c.l.b16 %v616
      %v621 = vunpack.c.l.b16 %v617
      %v622 = vpack.c.b16 %v621, %v620
      %v624 = vshrl.u32 %v622, 16
      %v626 = vrot.slane %v624, 7
      %v627 = vshll.u32 %v622, 16
      %v629 = vor.u32 %v626, %v627
      %v632 = vsel %vm210, 0, %v629
      %v633 = vsel %vm210, %v626, 0
      %v636 = vunpack.c.l.b16 %v632
      %v637 = vunpack.c.h.b16 %v632
      %v638 = vunpack.c.l.b16 %v633
      %v639 = vpack.c.b16 %v636, %v636
      %v640 = vpack.c.b16 %v637, %v637
      %v641 = vpack.c.b16 %v638, %v638
      %645 = vst.msk [vmem:[#allocation2 + $0x9c] sm:$0xf] %vm183, %v639
      %646 = vst.msk [vmem:[#allocation2 + $0xa0] sm:$0xf] %vm183, %v640
      %647 = vst.msk [vmem:[#allocation2 + $0xa4] sm:$0x1] %vm226, %v641
      %s648 = scalar_lea.vmem %s172, 208
      %v649 = vld [vmem:[%s648] sm:$0xff]
      %v650 = vld [vmem:[%s648 + $0x8] sm:$0xff]
      %v651 = vpack.c.bf16 %v649, %v649
      %v652 = vpack.c.bf16 %v650, %v650
      %v655 = vunpack.c.l.b16 %v651
      %v656 = vunpack.c.l.b16 %v652
      %v657 = vpack.c.b16 %v656, %v655
      %v659 = vshrl.u32 %v657, 16
      %v661 = vrot.slane %v659, 7
      %v662 = vshll.u32 %v657, 16
      %v664 = vor.u32 %v661, %v662
      %v667 = vsel %vm210, 0, %v664
      %v668 = vsel %vm210, %v661, 0
      %v671 = vunpack.c.l.b16 %v667
      %v672 = vunpack.c.h.b16 %v667
      %v673 = vunpack.c.l.b16 %v668
      %v674 = vpack.c.b16 %v671, %v671
      %v675 = vpack.c.b16 %v672, %v672
      %v676 = vpack.c.b16 %v673, %v673
      %680 = vst.msk [vmem:[#allocation2 + $0xa8] sm:$0xf] %vm183, %v674
      %681 = vst.msk [vmem:[#allocation2 + $0xac] sm:$0xf] %vm183, %v675
      %682 = vst.msk [vmem:[#allocation2 + $0xb0] sm:$0x1] %vm226, %v676
      %s683 = scalar_lea.vmem %s172, 224
      %v684 = vld [vmem:[%s683] sm:$0xff]
      %v685 = vld [vmem:[%s683 + $0x8] sm:$0xff]
      %v686 = vpack.c.bf16 %v684, %v684
      %v687 = vpack.c.bf16 %v685, %v685
      %v690 = vunpack.c.l.b16 %v686
      %v691 = vunpack.c.l.b16 %v687
      %v692 = vpack.c.b16 %v691, %v690
      %v694 = vshrl.u32 %v692, 16
      %v696 = vrot.slane %v694, 7
      %v697 = vshll.u32 %v692, 16
      %v699 = vor.u32 %v696, %v697
      %v702 = vsel %vm210, 0, %v699
      %v703 = vsel %vm210, %v696, 0
      %v706 = vunpack.c.l.b16 %v702
      %v707 = vunpack.c.h.b16 %v702
      %v708 = vunpack.c.l.b16 %v703
      %v709 = vpack.c.b16 %v706, %v706
      %v710 = vpack.c.b16 %v707, %v707
      %v711 = vpack.c.b16 %v708, %v708
      %715 = vst.msk [vmem:[#allocation2 + $0xb4] sm:$0xf] %vm183, %v709
      %716 = vst.msk [vmem:[#allocation2 + $0xb8] sm:$0xf] %vm183, %v710
      %717 = vst.msk [vmem:[#allocation2 + $0xbc] sm:$0x1] %vm226, %v711
      %s718 = scalar_lea.vmem %s172, 240
      %v719 = vld [vmem:[%s718] sm:$0xff]
      %v720 = vld [vmem:[%s718 + $0x8] sm:$0xff]
      %v721 = vpack.c.bf16 %v719, %v719
      %v722 = vpack.c.bf16 %v720, %v720
      %v725 = vunpack.c.l.b16 %v721
      %v726 = vunpack.c.l.b16 %v722
      %v727 = vpack.c.b16 %v726, %v725
      %v729 = vshrl.u32 %v727, 16
      %v731 = vrot.slane %v729, 7
      %v732 = vshll.u32 %v727, 16
      %v734 = vor.u32 %v731, %v732
      %v737 = vsel %vm210, 0, %v734
      %v738 = vsel %vm210, %v731, 0
      %v741 = vunpack.c.l.b16 %v737
      %v742 = vunpack.c.h.b16 %v737
      %v743 = vunpack.c.l.b16 %v738
      %v744 = vpack.c.b16 %v741, %v741
      %v745 = vpack.c.b16 %v742, %v742
      %v746 = vpack.c.b16 %v743, %v743
      %750 = vst.msk [vmem:[#allocation2 + $0xc0] sm:$0xf] %vm183, %v744
      %751 = vst.msk [vmem:[#allocation2 + $0xc4] sm:$0xf] %vm183, %v745
      %752 = vst.msk [vmem:[#allocation2 + $0xc8] sm:$0x1] %vm226, %v746
      %v753 = vld [vmem:[#allocation2] sm:$0xf]
      %v754 = vld [vmem:[#allocation2 + $0x4] sm:$0xf]
      %v755 = vld [vmem:[#allocation2 + $0x8] sm:$0xf]
      %v756 = vld [vmem:[#allocation2 + $0xc] sm:$0xf]
      %v757 = vld [vmem:[#allocation2 + $0x10] sm:$0xf]
      %v758 = vld [vmem:[#allocation2 + $0x14] sm:$0xf]
      %v759 = vld [vmem:[#allocation2 + $0x18] sm:$0xf]
      %v760 = vld [vmem:[#allocation2 + $0x1c] sm:$0xf]
      %v761 = vld [vmem:[#allocation2 + $0x20] sm:$0xf]
      %v762 = vld [vmem:[#allocation2 + $0x24] sm:$0xf]
      %v763 = vld [vmem:[#allocation2 + $0x28] sm:$0xf]
      %v764 = vld [vmem:[#allocation2 + $0x2c] sm:$0xf]
      %v765 = vld [vmem:[#allocation2 + $0x30] sm:$0xf]
      %v766 = vld [vmem:[#allocation2 + $0x34] sm:$0xf]
      %v767 = vld [vmem:[#allocation2 + $0x38] sm:$0xf]
      %v768 = vld [vmem:[#allocation2 + $0x3c] sm:$0xf]
      %v769 = vld [vmem:[#allocation2 + $0x40] sm:$0xf]
      %v770 = vld [vmem:[#allocation2 + $0x44] sm:$0xf]
      %v771 = vld [vmem:[#allocation2 + $0x48] sm:$0xf]
      %v772 = vld [vmem:[#allocation2 + $0x4c] sm:$0xf]
      %v773 = vld [vmem:[#allocation2 + $0x50] sm:$0xf]
      %v774 = vld [vmem:[#allocation2 + $0x54] sm:$0xf]
      %v775 = vld [vmem:[#allocation2 + $0x58] sm:$0xf]
      %v776 = vld [vmem:[#allocation2 + $0x5c] sm:$0xf]
      %v777 = vld [vmem:[#allocation2 + $0x60] sm:$0xf]
      %v778 = vld [vmem:[#allocation2 + $0x64] sm:$0xf]
      %v779 = vld [vmem:[#allocation2 + $0x68] sm:$0xf]
      %v780 = vld [vmem:[#allocation2 + $0x6c] sm:$0xf]
      %v781 = vld [vmem:[#allocation2 + $0x70] sm:$0xf]
      %v782 = vld [vmem:[#allocation2 + $0x74] sm:$0xf]
      %v783 = vld [vmem:[#allocation2 + $0x78] sm:$0xf]
      %v784 = vld [vmem:[#allocation2 + $0x7c] sm:$0xf]
      %v785 = vld [vmem:[#allocation2 + $0x80] sm:$0xf]
      %v786 = vld [vmem:[#allocation2 + $0x84] sm:$0xf]
      %v787 = vld [vmem:[#allocation2 + $0x88] sm:$0xf]
      %v788 = vld [vmem:[#allocation2 + $0x8c] sm:$0xf]
      %v789 = vld [vmem:[#allocation2 + $0x90] sm:$0xf]
      %v790 = vld [vmem:[#allocation2 + $0x94] sm:$0xf]
      %v791 = vld [vmem:[#allocation2 + $0x98] sm:$0xf]
      %v792 = vld [vmem:[#allocation2 + $0x9c] sm:$0xf]
      %v793 = vld [vmem:[#allocation2 + $0xa0] sm:$0xf]
      %v794 = vld [vmem:[#allocation2 + $0xa4] sm:$0xf]
      %v795 = vld [vmem:[#allocation2 + $0xa8] sm:$0xf]
      %v796 = vld [vmem:[#allocation2 + $0xac] sm:$0xf]
      %v797 = vld [vmem:[#allocation2 + $0xb0] sm:$0xf]
      %v798 = vld [vmem:[#allocation2 + $0xb4] sm:$0xf]
      %v799 = vld [vmem:[#allocation2 + $0xb8] sm:$0xf]
      %v800 = vld [vmem:[#allocation2 + $0xbc] sm:$0xf]
      %v801 = vld [vmem:[%s1] sm:$0x3]
      %v850 = vunpack.c.l.b16 %v753
      %v851 = vunpack.c.l.b16 %v754
      %v852 = vunpack.c.l.b16 %v755
      %v853 = vunpack.c.l.b16 %v756
      %v854 = vunpack.c.l.b16 %v757
      %v855 = vunpack.c.l.b16 %v758
      %v856 = vunpack.c.l.b16 %v759
      %v857 = vunpack.c.l.b16 %v760
      %v858 = vunpack.c.l.b16 %v761
      %v859 = vunpack.c.l.b16 %v762
      %v860 = vunpack.c.l.b16 %v763
      %v861 = vunpack.c.l.b16 %v764
      %v862 = vunpack.c.l.b16 %v765
      %v863 = vunpack.c.l.b16 %v766
      %v864 = vunpack.c.l.b16 %v767
      %v865 = vunpack.c.l.b16 %v768
      %v866 = vunpack.c.l.b16 %v769
      %v867 = vunpack.c.l.b16 %v770
      %v868 = vunpack.c.l.b16 %v771
      %v869 = vunpack.c.l.b16 %v772
      %v870 = vunpack.c.l.b16 %v773
      %v871 = vunpack.c.l.b16 %v774
      %v872 = vunpack.c.l.b16 %v775
      %v873 = vunpack.c.l.b16 %v776
      %v874 = vunpack.c.l.b16 %v777
      %v875 = vunpack.c.l.b16 %v778
      %v876 = vunpack.c.l.b16 %v779
      %v877 = vunpack.c.l.b16 %v780
      %v878 = vunpack.c.l.b16 %v781
      %v879 = vunpack.c.l.b16 %v782
      %v880 = vunpack.c.l.b16 %v783
      %v881 = vunpack.c.l.b16 %v784
      %v882 = vunpack.c.l.b16 %v785
      %v883 = vunpack.c.l.b16 %v786
      %v884 = vunpack.c.l.b16 %v787
      %v885 = vunpack.c.l.b16 %v788
      %v886 = vunpack.c.l.b16 %v789
      %v887 = vunpack.c.l.b16 %v790
      %v888 = vunpack.c.l.b16 %v791
      %v889 = vunpack.c.l.b16 %v792
      %v890 = vunpack.c.l.b16 %v793
      %v891 = vunpack.c.l.b16 %v794
      %v892 = vunpack.c.l.b16 %v795
      %v893 = vunpack.c.l.b16 %v796
      %v894 = vunpack.c.l.b16 %v797
      %v895 = vunpack.c.l.b16 %v798
      %v896 = vunpack.c.l.b16 %v799
      %v897 = vunpack.c.l.b16 %v800
      %v898 = vpack.c.b16 %v851, %v850
      %v899 = vpack.c.b16 %v853, %v852
      %v900 = vpack.c.b16 %v855, %v854
      %v901 = vpack.c.b16 %v857, %v856
      %v902 = vpack.c.b16 %v859, %v858
      %v903 = vpack.c.b16 %v861, %v860
      %v904 = vpack.c.b16 %v863, %v862
      %v905 = vpack.c.b16 %v865, %v864
      %v906 = vpack.c.b16 %v867, %v866
      %v907 = vpack.c.b16 %v869, %v868
      %v908 = vpack.c.b16 %v871, %v870
      %v909 = vpack.c.b16 %v873, %v872
      %v910 = vpack.c.b16 %v875, %v874
      %v911 = vpack.c.b16 %v877, %v876
      %v912 = vpack.c.b16 %v879, %v878
      %v913 = vpack.c.b16 %v881, %v880
      %v914 = vpack.c.b16 %v883, %v882
      %v915 = vpack.c.b16 %v885, %v884
      %v916 = vpack.c.b16 %v887, %v886
      %v917 = vpack.c.b16 %v889, %v888
      %v918 = vpack.c.b16 %v891, %v890
      %v919 = vpack.c.b16 %v893, %v892
      %v920 = vpack.c.b16 %v895, %v894
      %v921 = vpack.c.b16 %v897, %v896
      %vm922 = vcmask 31744
      %v924 = vsel %vm922, %v898, 0
      %v927 = vsel %vm922, %v899, 0
      %v930 = vsel %vm922, %v900, 0
      %v933 = vsel %vm922, %v901, 0
      %v936 = vsel %vm922, %v902, 0
      %v939 = vsel %vm922, %v903, 0
      %v942 = vsel %vm922, %v904, 0
      %v945 = vsel %vm922, %v905, 0
      %v948 = vsel %vm922, %v906, 0
      %v951 = vsel %vm922, %v907, 0
      %v954 = vsel %vm922, %v908, 0
      %v957 = vsel %vm922, %v909, 0
      %v960 = vsel %vm922, %v910, 0
      %v963 = vsel %vm922, %v911, 0
      %v966 = vsel %vm922, %v912, 0
      %v969 = vsel %vm922, %v913, 0
      %v972 = vsel %vm922, %v914, 0
      %v975 = vsel %vm922, %v915, 0
      %v978 = vsel %vm922, %v916, 0
      %v981 = vsel %vm922, %v917, 0
      %v984 = vsel %vm922, %v918, 0
      %v987 = vsel %vm922, %v919, 0
      %v990 = vsel %vm922, %v920, 0
      %v993 = vsel %vm922, %v921, 0
      %vm995 = vcmask 1041408
      %v997 = vsel %vm995, %v801, 0
      %999 = vmatpush.bf16.msra.mxu0 0
      %1000 = vmatpush.bf16.msra.mxu0 0
      %1001 = vmatpush.bf16.msra.mxu0 0
      %1002 = vmatpush.bf16.msra.mxu0 0
      %1003 = vmatpush.bf16.msra.mxu0 0
      %1004 = vmatpush.bf16.msra.mxu0 0
      %1005 = vmatpush.bf16.msra.mxu0 0
      %1006 = vmatpush.bf16.msra.mxu0 %v997
      %1007 = vmatmul.bf16.gmra.mxu0 %v924
      %v1008 = vpop.f32.mrf.mxu0
      %v1009 = vadd.f32 0.0, %v1008
      %v1010 = vpop.f32.mrf.mxu0
      %v1011 = vadd.f32 0.0, %v1010
      %1012 = vmatmul.bf16.gmra.mxu0 %v927
      %v1013 = vpop.f32.mrf.mxu0
      %v1014 = vadd.f32 0.0, %v1013
      %v1015 = vpop.f32.mrf.mxu0
      %v1016 = vadd.f32 0.0, %v1015
      %1017 = vmatmul.bf16.gmra.mxu0 %v930
      %v1018 = vpop.f32.mrf.mxu0
      %v1019 = vadd.f32 0.0, %v1018
      %v1020 = vpop.f32.mrf.mxu0
      %v1021 = vadd.f32 0.0, %v1020
      %1022 = vmatmul.bf16.gmra.mxu0 %v933
      %v1023 = vpop.f32.mrf.mxu0
      %v1024 = vadd.f32 0.0, %v1023
      %v1025 = vpop.f32.mrf.mxu0
      %v1026 = vadd.f32 0.0, %v1025
      %1027 = vmatmul.bf16.gmra.mxu0 %v936
      %v1028 = vpop.f32.mrf.mxu0
      %v1029 = vadd.f32 0.0, %v1028
      %v1030 = vpop.f32.mrf.mxu0
      %v1031 = vadd.f32 0.0, %v1030
      %1032 = vmatmul.bf16.gmra.mxu0 %v939
      %v1033 = vpop.f32.mrf.mxu0
      %v1034 = vadd.f32 0.0, %v1033
      %v1035 = vpop.f32.mrf.mxu0
      %v1036 = vadd.f32 0.0, %v1035
      %1037 = vmatmul.bf16.gmra.mxu0 %v942
      %v1038 = vpop.f32.mrf.mxu0
      %v1039 = vadd.f32 0.0, %v1038
      %v1040 = vpop.f32.mrf.mxu0
      %v1041 = vadd.f32 0.0, %v1040
      %1042 = vmatmul.bf16.gmra.mxu0 %v945
      %v1043 = vpop.f32.mrf.mxu0
      %v1044 = vadd.f32 0.0, %v1043
      %v1045 = vpop.f32.mrf.mxu0
      %v1046 = vadd.f32 0.0, %v1045
      %1047 = vmatmul.bf16.gmra.mxu0 %v948
      %v1048 = vpop.f32.mrf.mxu0
      %v1049 = vadd.f32 0.0, %v1048
      %v1050 = vpop.f32.mrf.mxu0
      %v1051 = vadd.f32 0.0, %v1050
      %1052 = vmatmul.bf16.gmra.mxu0 %v951
      %v1053 = vpop.f32.mrf.mxu0
      %v1054 = vadd.f32 0.0, %v1053
      %v1055 = vpop.f32.mrf.mxu0
      %v1056 = vadd.f32 0.0, %v1055
      %1057 = vmatmul.bf16.gmra.mxu0 %v954
      %v1058 = vpop.f32.mrf.mxu0
      %v1059 = vadd.f32 0.0, %v1058
      %v1060 = vpop.f32.mrf.mxu0
      %v1061 = vadd.f32 0.0, %v1060
      %1062 = vmatmul.bf16.gmra.mxu0 %v957
      %v1063 = vpop.f32.mrf.mxu0
      %v1064 = vadd.f32 0.0, %v1063
      %v1065 = vpop.f32.mrf.mxu0
      %v1066 = vadd.f32 0.0, %v1065
      %1067 = vmatmul.bf16.gmra.mxu0 %v960
      %v1068 = vpop.f32.mrf.mxu0
      %v1069 = vadd.f32 0.0, %v1068
      %v1070 = vpop.f32.mrf.mxu0
      %v1071 = vadd.f32 0.0, %v1070
      %1072 = vmatmul.bf16.gmra.mxu0 %v963
      %v1073 = vpop.f32.mrf.mxu0
      %v1074 = vadd.f32 0.0, %v1073
      %v1075 = vpop.f32.mrf.mxu0
      %v1076 = vadd.f32 0.0, %v1075
      %1077 = vmatmul.bf16.gmra.mxu0 %v966
      %v1078 = vpop.f32.mrf.mxu0
      %v1079 = vadd.f32 0.0, %v1078
      %v1080 = vpop.f32.mrf.mxu0
      %v1081 = vadd.f32 0.0, %v1080
      %1082 = vmatmul.bf16.gmra.mxu0 %v969
      %v1083 = vpop.f32.mrf.mxu0
      %v1084 = vadd.f32 0.0, %v1083
      %v1085 = vpop.f32.mrf.mxu0
      %v1086 = vadd.f32 0.0, %v1085
      %1087 = vmatmul.bf16.gmra.mxu0 %v972
      %v1088 = vpop.f32.mrf.mxu0
      %v1089 = vadd.f32 0.0, %v1088
      %v1090 = vpop.f32.mrf.mxu0
      %v1091 = vadd.f32 0.0, %v1090
      %1092 = vmatmul.bf16.gmra.mxu0 %v975
      %v1093 = vpop.f32.mrf.mxu0
      %v1094 = vadd.f32 0.0, %v1093
      %v1095 = vpop.f32.mrf.mxu0
      %v1096 = vadd.f32 0.0, %v1095
      %1097 = vmatmul.bf16.gmra.mxu0 %v978
      %v1098 = vpop.f32.mrf.mxu0
      %v1099 = vadd.f32 0.0, %v1098
      %v1100 = vpop.f32.mrf.mxu0
      %v1101 = vadd.f32 0.0, %v1100
      %1102 = vmatmul.bf16.gmra.mxu0 %v981
      %v1103 = vpop.f32.mrf.mxu0
      %v1104 = vadd.f32 0.0, %v1103
      %v1105 = vpop.f32.mrf.mxu0
      %v1106 = vadd.f32 0.0, %v1105
      %1107 = vmatmul.bf16.gmra.mxu0 %v984
      %v1108 = vpop.f32.mrf.mxu0
      %v1109 = vadd.f32 0.0, %v1108
      %v1110 = vpop.f32.mrf.mxu0
      %v1111 = vadd.f32 0.0, %v1110
      %1112 = vmatmul.bf16.gmra.mxu0 %v987
      %v1113 = vpop.f32.mrf.mxu0
      %v1114 = vadd.f32 0.0, %v1113
      %v1115 = vpop.f32.mrf.mxu0
      %v1116 = vadd.f32 0.0, %v1115
      %1117 = vmatmul.bf16.gmra.mxu0 %v990
      %v1118 = vpop.f32.mrf.mxu0
      %v1119 = vadd.f32 0.0, %v1118
      %v1120 = vpop.f32.mrf.mxu0
      %v1121 = vadd.f32 0.0, %v1120
      %1122 = vmatmul.bf16.gmra.mxu0 %v993
      %v1123 = vpop.f32.mrf.mxu0
      %v1124 = vadd.f32 0.0, %v1123
      %v1125 = vpop.f32.mrf.mxu0
      %v1126 = vadd.f32 0.0, %v1125
      %1127 = vdwg.mxu0
      %1128 = vst.msk [vmem:[#allocation3] sm:$0xff] %vm922, %v1009
      %1129 = vst.msk [vmem:[#allocation3 + $0x8] sm:$0xff] %vm922, %v1011
      %1130 = vst.msk [vmem:[#allocation3 + $0x10] sm:$0xff] %vm922, %v1014
      %1131 = vst.msk [vmem:[#allocation3 + $0x18] sm:$0xff] %vm922, %v1016
      %1132 = vst.msk [vmem:[#allocation3 + $0x20] sm:$0xff] %vm922, %v1019
      %1133 = vst.msk [vmem:[#allocation3 + $0x28] sm:$0xff] %vm922, %v1021
      %1134 = vst.msk [vmem:[#allocation3 + $0x30] sm:$0xff] %vm922, %v1024
      %1135 = vst.msk [vmem:[#allocation3 + $0x38] sm:$0xff] %vm922, %v1026
      %1136 = vst.msk [vmem:[#allocation3 + $0x40] sm:$0xff] %vm922, %v1029
      %1137 = vst.msk [vmem:[#allocation3 + $0x48] sm:$0xff] %vm922, %v1031
      %1138 = vst.msk [vmem:[#allocation3 + $0x50] sm:$0xff] %vm922, %v1034
      %1139 = vst.msk [vmem:[#allocation3 + $0x58] sm:$0xff] %vm922, %v1036
      %1140 = vst.msk [vmem:[#allocation3 + $0x60] sm:$0xff] %vm922, %v1039
      %1141 = vst.msk [vmem:[#allocation3 + $0x68] sm:$0xff] %vm922, %v1041
      %1142 = vst.msk [vmem:[#allocation3 + $0x70] sm:$0xff] %vm922, %v1044
      %1143 = vst.msk [vmem:[#allocation3 + $0x78] sm:$0xff] %vm922, %v1046
      %1144 = vst.msk [vmem:[#allocation3 + $0x80] sm:$0xff] %vm922, %v1049
      %1145 = vst.msk [vmem:[#allocation3 + $0x88] sm:$0xff] %vm922, %v1051
      %1146 = vst.msk [vmem:[#allocation3 + $0x90] sm:$0xff] %vm922, %v1054
      %1147 = vst.msk [vmem:[#allocation3 + $0x98] sm:$0xff] %vm922, %v1056
      %1148 = vst.msk [vmem:[#allocation3 + $0xa0] sm:$0xff] %vm922, %v1059
      %1149 = vst.msk [vmem:[#allocation3 + $0xa8] sm:$0xff] %vm922, %v1061
      %1150 = vst.msk [vmem:[#allocation3 + $0xb0] sm:$0xff] %vm922, %v1064
      %1151 = vst.msk [vmem:[#allocation3 + $0xb8] sm:$0xff] %vm922, %v1066
      %1152 = vst.msk [vmem:[#allocation3 + $0xc0] sm:$0xff] %vm922, %v1069
      %1153 = vst.msk [vmem:[#allocation3 + $0xc8] sm:$0xff] %vm922, %v1071
      %1154 = vst.msk [vmem:[#allocation3 + $0xd0] sm:$0xff] %vm922, %v1074
      %1155 = vst.msk [vmem:[#allocation3 + $0xd8] sm:$0xff] %vm922, %v1076
      %1156 = vst.msk [vmem:[#allocation3 + $0xe0] sm:$0xff] %vm922, %v1079
      %1157 = vst.msk [vmem:[#allocation3 + $0xe8] sm:$0xff] %vm922, %v1081
      %1158 = vst.msk [vmem:[#allocation3 + $0xf0] sm:$0xff] %vm922, %v1084
      %1159 = vst.msk [vmem:[#allocation3 + $0xf8] sm:$0xff] %vm922, %v1086
      %1160 = vst.msk [vmem:[#allocation3 + $0x100] sm:$0xff] %vm922, %v1089
      %1161 = vst.msk [vmem:[#allocation3 + $0x108] sm:$0xff] %vm922, %v1091
      %1162 = vst.msk [vmem:[#allocation3 + $0x110] sm:$0xff] %vm922, %v1094
      %1163 = vst.msk [vmem:[#allocation3 + $0x118] sm:$0xff] %vm922, %v1096
      %1164 = vst.msk [vmem:[#allocation3 + $0x120] sm:$0xff] %vm922, %v1099
      %1165 = vst.msk [vmem:[#allocation3 + $0x128] sm:$0xff] %vm922, %v1101
      %1166 = vst.msk [vmem:[#allocation3 + $0x130] sm:$0xff] %vm922, %v1104
      %1167 = vst.msk [vmem:[#allocation3 + $0x138] sm:$0xff] %vm922, %v1106
      %1168 = vst.msk [vmem:[#allocation3 + $0x140] sm:$0xff] %vm922, %v1109
      %1169 = vst.msk [vmem:[#allocation3 + $0x148] sm:$0xff] %vm922, %v1111
      %1170 = vst.msk [vmem:[#allocation3 + $0x150] sm:$0xff] %vm922, %v1114
      %1171 = vst.msk [vmem:[#allocation3 + $0x158] sm:$0xff] %vm922, %v1116
      %1172 = vst.msk [vmem:[#allocation3 + $0x160] sm:$0xff] %vm922, %v1119
      %1173 = vst.msk [vmem:[#allocation3 + $0x168] sm:$0xff] %vm922, %v1121
      %1174 = vst.msk [vmem:[#allocation3 + $0x170] sm:$0xff] %vm922, %v1124
      %1175 = vst.msk [vmem:[#allocation3 + $0x178] sm:$0xff] %vm922, %v1126
      %v1176 = vld [vmem:[#allocation2] sm:$0xf]
      %v1177 = vld [vmem:[#allocation2 + $0x4] sm:$0xf]
      %v1178 = vld [vmem:[#allocation2 + $0x8] sm:$0xf]
      %v1179 = vld [vmem:[#allocation2 + $0xc] sm:$0xf]
      %v1180 = vld [vmem:[#allocation2 + $0x10] sm:$0xf]
      %v1181 = vld [vmem:[#allocation2 + $0x14] sm:$0xf]
      %v1182 = vld [vmem:[#allocation2 + $0x18] sm:$0xf]
      %v1183 = vld [vmem:[#allocation2 + $0x1c] sm:$0xf]
      %v1184 = vld [vmem:[#allocation2 + $0x20] sm:$0xf]
      %v1185 = vld [vmem:[#allocation2 + $0x24] sm:$0xf]
      %v1186 = vld [vmem:[#allocation2 + $0x28] sm:$0xf]
      %v1187 = vld [vmem:[#allocation2 + $0x2c] sm:$0xf]
      %v1188 = vld [vmem:[#allocation2 + $0x30] sm:$0xf]
      %v1189 = vld [vmem:[#allocation2 + $0x34] sm:$0xf]
      %v1190 = vld [vmem:[#allocation2 + $0x38] sm:$0xf]
      %v1191 = vld [vmem:[#allocation2 + $0x3c] sm:$0xf]
      %v1192 = vld [vmem:[#allocation2 + $0x40] sm:$0xf]
      %v1193 = vld [vmem:[#allocation2 + $0x44] sm:$0xf]
      %v1194 = vld [vmem:[#allocation2 + $0x48] sm:$0xf]
      %v1195 = vld [vmem:[#allocation2 + $0x4c] sm:$0xf]
      %v1196 = vld [vmem:[#allocation2 + $0x50] sm:$0xf]
      %v1197 = vld [vmem:[#allocation2 + $0x54] sm:$0xf]
      %v1198 = vld [vmem:[#allocation2 + $0x58] sm:$0xf]
      %v1199 = vld [vmem:[#allocation2 + $0x5c] sm:$0xf]
      %v1200 = vld [vmem:[#allocation2 + $0x60] sm:$0xf]
      %v1201 = vld [vmem:[#allocation2 + $0x64] sm:$0xf]
      %v1202 = vld [vmem:[#allocation2 + $0x68] sm:$0xf]
      %v1203 = vld [vmem:[#allocation2 + $0x6c] sm:$0xf]
      %v1204 = vld [vmem:[#allocation2 + $0x70] sm:$0xf]
      %v1205 = vld [vmem:[#allocation2 + $0x74] sm:$0xf]
      %v1206 = vld [vmem:[#allocation2 + $0x78] sm:$0xf]
      %v1207 = vld [vmem:[#allocation2 + $0x7c] sm:$0xf]
      %v1208 = vld [vmem:[#allocation2 + $0x80] sm:$0xf]
      %v1209 = vld [vmem:[#allocation2 + $0x84] sm:$0xf]
      %v1210 = vld [vmem:[#allocation2 + $0x88] sm:$0xf]
      %v1211 = vld [vmem:[#allocation2 + $0x8c] sm:$0xf]
      %v1212 = vld [vmem:[#allocation2 + $0x90] sm:$0xf]
      %v1213 = vld [vmem:[#allocation2 + $0x94] sm:$0xf]
      %v1214 = vld [vmem:[#allocation2 + $0x98] sm:$0xf]
      %v1215 = vld [vmem:[#allocation2 + $0x9c] sm:$0xf]
      %v1216 = vld [vmem:[#allocation2 + $0xa0] sm:$0xf]
      %v1217 = vld [vmem:[#allocation2 + $0xa4] sm:$0xf]
      %v1218 = vld [vmem:[#allocation2 + $0xa8] sm:$0xf]
      %v1219 = vld [vmem:[#allocation2 + $0xac] sm:$0xf]
      %v1220 = vld [vmem:[#allocation2 + $0xb0] sm:$0xf]
      %v1221 = vld [vmem:[#allocation2 + $0xb4] sm:$0xf]
      %v1222 = vld [vmem:[#allocation2 + $0xb8] sm:$0xf]
      %v1223 = vld [vmem:[#allocation2 + $0xbc] sm:$0xf]
      %v1224 = vld [vmem:[#allocation2 + $0xc0] sm:$0x1]
      %s1225 = scalar_lea.vmem %s1, 2
      %v1226 = vld [vmem:[%s1225] sm:$0x3]
      %v1276 = vunpack.c.l.b16 %v1176
      %v1277 = vunpack.c.l.b16 %v1177
      %v1278 = vunpack.c.l.b16 %v1178
      %v1279 = vunpack.c.l.b16 %v1179
      %v1280 = vunpack.c.l.b16 %v1180
      %v1281 = vunpack.c.l.b16 %v1181
      %v1282 = vunpack.c.l.b16 %v1182
      %v1283 = vunpack.c.l.b16 %v1183
      %v1284 = vunpack.c.l.b16 %v1184
      %v1285 = vunpack.c.l.b16 %v1185
      %v1286 = vunpack.c.l.b16 %v1186
      %v1287 = vunpack.c.l.b16 %v1187
      %v1288 = vunpack.c.l.b16 %v1188
      %v1289 = vunpack.c.l.b16 %v1189
      %v1290 = vunpack.c.l.b16 %v1190
      %v1291 = vunpack.c.l.b16 %v1191
      %v1292 = vunpack.c.l.b16 %v1192
      %v1293 = vunpack.c.l.b16 %v1193
      %v1294 = vunpack.c.l.b16 %v1194
      %v1295 = vunpack.c.l.b16 %v1195
      %v1296 = vunpack.c.l.b16 %v1196
      %v1297 = vunpack.c.l.b16 %v1197
      %v1298 = vunpack.c.l.b16 %v1198
      %v1299 = vunpack.c.l.b16 %v1199
      %v1300 = vunpack.c.l.b16 %v1200
      %v1301 = vunpack.c.l.b16 %v1201
      %v1302 = vunpack.c.l.b16 %v1202
      %v1303 = vunpack.c.l.b16 %v1203
      %v1304 = vunpack.c.l.b16 %v1204
      %v1305 = vunpack.c.l.b16 %v1205
      %v1306 = vunpack.c.l.b16 %v1206
      %v1307 = vunpack.c.l.b16 %v1207
      %v1308 = vunpack.c.l.b16 %v1208
      %v1309 = vunpack.c.l.b16 %v1209
      %v1310 = vunpack.c.l.b16 %v1210
      %v1311 = vunpack.c.l.b16 %v1211
      %v1312 = vunpack.c.l.b16 %v1212
      %v1313 = vunpack.c.l.b16 %v1213
      %v1314 = vunpack.c.l.b16 %v1214
      %v1315 = vunpack.c.l.b16 %v1215
      %v1316 = vunpack.c.l.b16 %v1216
      %v1317 = vunpack.c.l.b16 %v1217
      %v1318 = vunpack.c.l.b16 %v1218
      %v1319 = vunpack.c.l.b16 %v1219
      %v1320 = vunpack.c.l.b16 %v1220
      %v1321 = vunpack.c.l.b16 %v1221
      %v1322 = vunpack.c.l.b16 %v1222
      %v1323 = vunpack.c.l.b16 %v1223
      %v1324 = vunpack.c.l.b16 %v1224
      %v1325 = vpack.c.b16 %v1277, %v1276
      %v1326 = vpack.c.b16 %v1279, %v1278
      %v1327 = vpack.c.b16 %v1281, %v1280
      %v1328 = vpack.c.b16 %v1283, %v1282
      %v1329 = vpack.c.b16 %v1285, %v1284
      %v1330 = vpack.c.b16 %v1287, %v1286
      %v1331 = vpack.c.b16 %v1289, %v1288
      %v1332 = vpack.c.b16 %v1291, %v1290
      %v1333 = vpack.c.b16 %v1293, %v1292
      %v1334 = vpack.c.b16 %v1295, %v1294
      %v1335 = vpack.c.b16 %v1297, %v1296
      %v1336 = vpack.c.b16 %v1299, %v1298
      %v1337 = vpack.c.b16 %v1301, %v1300
      %v1338 = vpack.c.b16 %v1303, %v1302
      %v1339 = vpack.c.b16 %v1305, %v1304
      %v1340 = vpack.c.b16 %v1307, %v1306
      %v1341 = vpack.c.b16 %v1309, %v1308
      %v1342 = vpack.c.b16 %v1311, %v1310
      %v1343 = vpack.c.b16 %v1313, %v1312
      %v1344 = vpack.c.b16 %v1315, %v1314
      %v1345 = vpack.c.b16 %v1317, %v1316
      %v1346 = vpack.c.b16 %v1319, %v1318
      %v1347 = vpack.c.b16 %v1321, %v1320
      %v1348 = vpack.c.b16 %v1323, %v1322
      %v1349 = vpack.c.b16 %v1324, %v1324
      %vm1350 = vsmask.f32 7424
      %v1352 = vshrl.u32 %v1325, 16
      %v1354 = vshll.u32 %v1325, 16
      %v1356 = vrot.slane %v1354, 1
      %v1357 = vor.u32 %v1352, %v1356
      %v1359 = vshll.u32 %v1326, 16
      %v1361 = vrot.slane %v1359, 1
      %v1362 = vsel %vm1350, %v1357, %v1361
      %v1363 = vshrl.u32 %v1326, 16
      %v1365 = vor.u32 %v1363, %v1361
      %v1367 = vshll.u32 %v1327, 16
      %v1369 = vrot.slane %v1367, 1
      %v1370 = vsel %vm1350, %v1365, %v1369
      %v1371 = vshrl.u32 %v1327, 16
      %v1373 = vor.u32 %v1371, %v1369
      %v1375 = vshll.u32 %v1328, 16
      %v1377 = vrot.slane %v1375, 1
      %v1378 = vsel %vm1350, %v1373, %v1377
      %v1379 = vshrl.u32 %v1328, 16
      %v1381 = vor.u32 %v1379, %v1377
      %v1383 = vshll.u32 %v1329, 16
      %v1385 = vrot.slane %v1383, 1
      %v1386 = vsel %vm1350, %v1381, %v1385
      %v1387 = vshrl.u32 %v1329, 16
      %v1389 = vor.u32 %v1387, %v1385
      %v1391 = vshll.u32 %v1330, 16
      %v1393 = vrot.slane %v1391, 1
      %v1394 = vsel %vm1350, %v1389, %v1393
      %v1395 = vshrl.u32 %v1330, 16
      %v1397 = vor.u32 %v1395, %v1393
      %v1399 = vshll.u32 %v1331, 16
      %v1401 = vrot.slane %v1399, 1
      %v1402 = vsel %vm1350, %v1397, %v1401
      %v1403 = vshrl.u32 %v1331, 16
      %v1405 = vor.u32 %v1403, %v1401
      %v1407 = vshll.u32 %v1332, 16
      %v1409 = vrot.slane %v1407, 1
      %v1410 = vsel %vm1350, %v1405, %v1409
      %v1411 = vshrl.u32 %v1332, 16
      %v1413 = vor.u32 %v1411, %v1409
      %v1415 = vshll.u32 %v1333, 16
      %v1417 = vrot.slane %v1415, 1
      %v1418 = vsel %vm1350, %v1413, %v1417
      %v1419 = vshrl.u32 %v1333, 16
      %v1421 = vor.u32 %v1419, %v1417
      %v1423 = vshll.u32 %v1334, 16
      %v1425 = vrot.slane %v1423, 1
      %v1426 = vsel %vm1350, %v1421, %v1425
      %v1427 = vshrl.u32 %v1334, 16
      %v1429 = vor.u32 %v1427, %v1425
      %v1431 = vshll.u32 %v1335, 16
      %v1433 = vrot.slane %v1431, 1
      %v1434 = vsel %vm1350, %v1429, %v1433
      %v1435 = vshrl.u32 %v1335, 16
      %v1437 = vor.u32 %v1435, %v1433
      %v1439 = vshll.u32 %v1336, 16
      %v1441 = vrot.slane %v1439, 1
      %v1442 = vsel %vm1350, %v1437, %v1441
      %v1443 = vshrl.u32 %v1336, 16
      %v1445 = vor.u32 %v1443, %v1441
      %v1447 = vshll.u32 %v1337, 16
      %v1449 = vrot.slane %v1447, 1
      %v1450 = vsel %vm1350, %v1445, %v1449
      %v1451 = vshrl.u32 %v1337, 16
      %v1453 = vor.u32 %v1451, %v1449
      %v1455 = vshll.u32 %v1338, 16
      %v1457 = vrot.slane %v1455, 1
      %v1458 = vsel %vm1350, %v1453, %v1457
      %v1459 = vshrl.u32 %v1338, 16
      %v1461 = vor.u32 %v1459, %v1457
      %v1463 = vshll.u32 %v1339, 16
      %v1465 = vrot.slane %v1463, 1
      %v1466 = vsel %vm1350, %v1461, %v1465
      %v1467 = vshrl.u32 %v1339, 16
      %v1469 = vor.u32 %v1467, %v1465
      %v1471 = vshll.u32 %v1340, 16
      %v1473 = vrot.slane %v1471, 1
      %v1474 = vsel %vm1350, %v1469, %v1473
      %v1475 = vshrl.u32 %v1340, 16
      %v1477 = vor.u32 %v1475, %v1473
      %v1479 = vshll.u32 %v1341, 16
      %v1481 = vrot.slane %v1479, 1
      %v1482 = vsel %vm1350, %v1477, %v1481
      %v1483 = vshrl.u32 %v1341, 16
      %v1485 = vor.u32 %v1483, %v1481
      %v1487 = vshll.u32 %v1342, 16
      %v1489 = vrot.slane %v1487, 1
      %v1490 = vsel %vm1350, %v1485, %v1489
      %v1491 = vshrl.u32 %v1342, 16
      %v1493 = vor.u32 %v1491, %v1489
      %v1495 = vshll.u32 %v1343, 16
      %v1497 = vrot.slane %v1495, 1
      %v1498 = vsel %vm1350, %v1493, %v1497
      %v1499 = vshrl.u32 %v1343, 16
      %v1501 = vor.u32 %v1499, %v1497
      %v1503 = vshll.u32 %v1344, 16
      %v1505 = vrot.slane %v1503, 1
      %v1506 = vsel %vm1350, %v1501, %v1505
      %v1507 = vshrl.u32 %v1344, 16
      %v1509 = vor.u32 %v1507, %v1505
      %v1511 = vshll.u32 %v1345, 16
      %v1513 = vrot.slane %v1511, 1
      %v1514 = vsel %vm1350, %v1509, %v1513
      %v1515 = vshrl.u32 %v1345, 16
      %v1517 = vor.u32 %v1515, %v1513
      %v1519 = vshll.u32 %v1346, 16
      %v1521 = vrot.slane %v1519, 1
      %v1522 = vsel %vm1350, %v1517, %v1521
      %v1523 = vshrl.u32 %v1346, 16
      %v1525 = vor.u32 %v1523, %v1521
      %v1527 = vshll.u32 %v1347, 16
      %v1529 = vrot.slane %v1527, 1
      %v1530 = vsel %vm1350, %v1525, %v1529
      %v1531 = vshrl.u32 %v1347, 16
      %v1533 = vor.u32 %v1531, %v1529
      %v1535 = vshll.u32 %v1348, 16
      %v1537 = vrot.slane %v1535, 1
      %v1538 = vsel %vm1350, %v1533, %v1537
      %v1539 = vshrl.u32 %v1348, 16
      %v1541 = vor.u32 %v1539, %v1537
      %v1543 = vshll.u32 %v1349, 16
      %v1545 = vrot.slane %v1543, 1
      %v1546 = vsel %vm1350, %v1541, %v1545
      %v1548 = vsel %vm922, %v1362, 0
      %v1551 = vsel %vm922, %v1370, 0
      %v1554 = vsel %vm922, %v1378, 0
      %v1557 = vsel %vm922, %v1386, 0
      %v1560 = vsel %vm922, %v1394, 0
      %v1563 = vsel %vm922, %v1402, 0
      %v1566 = vsel %vm922, %v1410, 0
      %v1569 = vsel %vm922, %v1418, 0
      %v1572 = vsel %vm922, %v1426, 0
      %v1575 = vsel %vm922, %v1434, 0
      %v1578 = vsel %vm922, %v1442, 0
      %v1581 = vsel %vm922, %v1450, 0
      %v1584 = vsel %vm922, %v1458, 0
      %v1587 = vsel %vm922, %v1466, 0
      %v1590 = vsel %vm922, %v1474, 0
      %v1593 = vsel %vm922, %v1482, 0
      %v1596 = vsel %vm922, %v1490, 0
      %v1599 = vsel %vm922, %v1498, 0
      %v1602 = vsel %vm922, %v1506, 0
      %v1605 = vsel %vm922, %v1514, 0
      %v1608 = vsel %vm922, %v1522, 0
      %v1611 = vsel %vm922, %v1530, 0
      %v1614 = vsel %vm922, %v1538, 0
      %v1617 = vsel %vm922, %v1546, 0
      %v1620 = vsel %vm995, %v1226, 0
      %1622 = vmatpush.bf16.msra.mxu0 0
      %1623 = vmatpush.bf16.msra.mxu0 0
      %1624 = vmatpush.bf16.msra.mxu0 0
      %1625 = vmatpush.bf16.msra.mxu0 0
      %1626 = vmatpush.bf16.msra.mxu0 0
      %1627 = vmatpush.bf16.msra.mxu0 0
      %1628 = vmatpush.bf16.msra.mxu0 0
      %1629 = vmatpush.bf16.msra.mxu0 %v1620
      %1630 = vmatmul.bf16.gmra.mxu0 %v1548
      %v1631 = vpop.f32.mrf.mxu0
      %v1632 = vadd.f32 0.0, %v1631
      %v1633 = vpop.f32.mrf.mxu0
      %v1634 = vadd.f32 0.0, %v1633
      %1635 = vmatmul.bf16.gmra.mxu0 %v1551
      %v1636 = vpop.f32.mrf.mxu0
      %v1637 = vadd.f32 0.0, %v1636
      %v1638 = vpop.f32.mrf.mxu0
      %v1639 = vadd.f32 0.0, %v1638
      %1640 = vmatmul.bf16.gmra.mxu0 %v1554
      %v1641 = vpop.f32.mrf.mxu0
      %v1642 = vadd.f32 0.0, %v1641
      %v1643 = vpop.f32.mrf.mxu0
      %v1644 = vadd.f32 0.0, %v1643
      %1645 = vmatmul.bf16.gmra.mxu0 %v1557
      %v1646 = vpop.f32.mrf.mxu0
      %v1647 = vadd.f32 0.0, %v1646
      %v1648 = vpop.f32.mrf.mxu0
      %v1649 = vadd.f32 0.0, %v1648
      %1650 = vmatmul.bf16.gmra.mxu0 %v1560
      %v1651 = vpop.f32.mrf.mxu0
      %v1652 = vadd.f32 0.0, %v1651
      %v1653 = vpop.f32.mrf.mxu0
      %v1654 = vadd.f32 0.0, %v1653
      %1655 = vmatmul.bf16.gmra.mxu0 %v1563
      %v1656 = vpop.f32.mrf.mxu0
      %v1657 = vadd.f32 0.0, %v1656
      %v1658 = vpop.f32.mrf.mxu0
      %v1659 = vadd.f32 0.0, %v1658
      %1660 = vmatmul.bf16.gmra.mxu0 %v1566
      %v1661 = vpop.f32.mrf.mxu0
      %v1662 = vadd.f32 0.0, %v1661
      %v1663 = vpop.f32.mrf.mxu0
      %v1664 = vadd.f32 0.0, %v1663
      %1665 = vmatmul.bf16.gmra.mxu0 %v1569
      %v1666 = vpop.f32.mrf.mxu0
      %v1667 = vadd.f32 0.0, %v1666
      %v1668 = vpop.f32.mrf.mxu0
      %v1669 = vadd.f32 0.0, %v1668
      %1670 = vmatmul.bf16.gmra.mxu0 %v1572
      %v1671 = vpop.f32.mrf.mxu0
      %v1672 = vadd.f32 0.0, %v1671
      %v1673 = vpop.f32.mrf.mxu0
      %v1674 = vadd.f32 0.0, %v1673
      %1675 = vmatmul.bf16.gmra.mxu0 %v1575
      %v1676 = vpop.f32.mrf.mxu0
      %v1677 = vadd.f32 0.0, %v1676
      %v1678 = vpop.f32.mrf.mxu0
      %v1679 = vadd.f32 0.0, %v1678
      %1680 = vmatmul.bf16.gmra.mxu0 %v1578
      %v1681 = vpop.f32.mrf.mxu0
      %v1682 = vadd.f32 0.0, %v1681
      %v1683 = vpop.f32.mrf.mxu0
      %v1684 = vadd.f32 0.0, %v1683
      %1685 = vmatmul.bf16.gmra.mxu0 %v1581
      %v1686 = vpop.f32.mrf.mxu0
      %v1687 = vadd.f32 0.0, %v1686
      %v1688 = vpop.f32.mrf.mxu0
      %v1689 = vadd.f32 0.0, %v1688
      %1690 = vmatmul.bf16.gmra.mxu0 %v1584
      %v1691 = vpop.f32.mrf.mxu0
      %v1692 = vadd.f32 0.0, %v1691
      %v1693 = vpop.f32.mrf.mxu0
      %v1694 = vadd.f32 0.0, %v1693
      %1695 = vmatmul.bf16.gmra.mxu0 %v1587
      %v1696 = vpop.f32.mrf.mxu0
      %v1697 = vadd.f32 0.0, %v1696
      %v1698 = vpop.f32.mrf.mxu0
      %v1699 = vadd.f32 0.0, %v1698
      %1700 = vmatmul.bf16.gmra.mxu0 %v1590
      %v1701 = vpop.f32.mrf.mxu0
      %v1702 = vadd.f32 0.0, %v1701
      %v1703 = vpop.f32.mrf.mxu0
      %v1704 = vadd.f32 0.0, %v1703
      %1705 = vmatmul.bf16.gmra.mxu0 %v1593
      %v1706 = vpop.f32.mrf.mxu0
      %v1707 = vadd.f32 0.0, %v1706
      %v1708 = vpop.f32.mrf.mxu0
      %v1709 = vadd.f32 0.0, %v1708
      %1710 = vmatmul.bf16.gmra.mxu0 %v1596
      %v1711 = vpop.f32.mrf.mxu0
      %v1712 = vadd.f32 0.0, %v1711
      %v1713 = vpop.f32.mrf.mxu0
      %v1714 = vadd.f32 0.0, %v1713
      %1715 = vmatmul.bf16.gmra.mxu0 %v1599
      %v1716 = vpop.f32.mrf.mxu0
      %v1717 = vadd.f32 0.0, %v1716
      %v1718 = vpop.f32.mrf.mxu0
      %v1719 = vadd.f32 0.0, %v1718
      %1720 = vmatmul.bf16.gmra.mxu0 %v1602
      %v1721 = vpop.f32.mrf.mxu0
      %v1722 = vadd.f32 0.0, %v1721
      %v1723 = vpop.f32.mrf.mxu0
      %v1724 = vadd.f32 0.0, %v1723
      %1725 = vmatmul.bf16.gmra.mxu0 %v1605
      %v1726 = vpop.f32.mrf.mxu0
      %v1727 = vadd.f32 0.0, %v1726
      %v1728 = vpop.f32.mrf.mxu0
      %v1729 = vadd.f32 0.0, %v1728
      %1730 = vmatmul.bf16.gmra.mxu0 %v1608
      %v1731 = vpop.f32.mrf.mxu0
      %v1732 = vadd.f32 0.0, %v1731
      %v1733 = vpop.f32.mrf.mxu0
      %v1734 = vadd.f32 0.0, %v1733
      %1735 = vmatmul.bf16.gmra.mxu0 %v1611
      %v1736 = vpop.f32.mrf.mxu0
      %v1737 = vadd.f32 0.0, %v1736
      %v1738 = vpop.f32.mrf.mxu0
      %v1739 = vadd.f32 0.0, %v1738
      %1740 = vmatmul.bf16.gmra.mxu0 %v1614
      %v1741 = vpop.f32.mrf.mxu0
      %v1742 = vadd.f32 0.0, %v1741
      %v1743 = vpop.f32.mrf.mxu0
      %v1744 = vadd.f32 0.0, %v1743
      %1745 = vmatmul.bf16.gmra.mxu0 %v1617
      %v1746 = vpop.f32.mrf.mxu0
      %v1747 = vadd.f32 0.0, %v1746
      %v1748 = vpop.f32.mrf.mxu0
      %v1749 = vadd.f32 0.0, %v1748
      %1750 = vdwg.mxu0
      %v1751 = vld [vmem:[#allocation3] sm:$0xff]
      %v1752 = vld [vmem:[#allocation3 + $0x8] sm:$0xff]
      %v1753 = vld [vmem:[#allocation3 + $0x10] sm:$0xff]
      %v1754 = vld [vmem:[#allocation3 + $0x18] sm:$0xff]
      %v1755 = vld [vmem:[#allocation3 + $0x20] sm:$0xff]
      %v1756 = vld [vmem:[#allocation3 + $0x28] sm:$0xff]
      %v1757 = vld [vmem:[#allocation3 + $0x30] sm:$0xff]
      %v1758 = vld [vmem:[#allocation3 + $0x38] sm:$0xff]
      %v1759 = vld [vmem:[#allocation3 + $0x40] sm:$0xff]
      %v1760 = vld [vmem:[#allocation3 + $0x48] sm:$0xff]
      %v1761 = vld [vmem:[#allocation3 + $0x50] sm:$0xff]
      %v1762 = vld [vmem:[#allocation3 + $0x58] sm:$0xff]
      %v1763 = vld [vmem:[#allocation3 + $0x60] sm:$0xff]
      %v1764 = vld [vmem:[#allocation3 + $0x68] sm:$0xff]
      %v1765 = vld [vmem:[#allocation3 + $0x70] sm:$0xff]
      %v1766 = vld [vmem:[#allocation3 + $0x78] sm:$0xff]
      %v1767 = vld [vmem:[#allocation3 + $0x80] sm:$0xff]
      %v1768 = vld [vmem:[#allocation3 + $0x88] sm:$0xff]
      %v1769 = vld [vmem:[#allocation3 + $0x90] sm:$0xff]
      %v1770 = vld [vmem:[#allocation3 + $0x98] sm:$0xff]
      %v1771 = vld [vmem:[#allocation3 + $0xa0] sm:$0xff]
      %v1772 = vld [vmem:[#allocation3 + $0xa8] sm:$0xff]
      %v1773 = vld [vmem:[#allocation3 + $0xb0] sm:$0xff]
      %v1774 = vld [vmem:[#allocation3 + $0xb8] sm:$0xff]
      %v1775 = vld [vmem:[#allocation3 + $0xc0] sm:$0xff]
      %v1776 = vld [vmem:[#allocation3 + $0xc8] sm:$0xff]
      %v1777 = vld [vmem:[#allocation3 + $0xd0] sm:$0xff]
      %v1778 = vld [vmem:[#allocation3 + $0xd8] sm:$0xff]
      %v1779 = vld [vmem:[#allocation3 + $0xe0] sm:$0xff]
      %v1780 = vld [vmem:[#allocation3 + $0xe8] sm:$0xff]
      %v1781 = vld [vmem:[#allocation3 + $0xf0] sm:$0xff]
      %v1782 = vld [vmem:[#allocation3 + $0xf8] sm:$0xff]
      %v1783 = vld [vmem:[#allocation3 + $0x100] sm:$0xff]
      %v1784 = vld [vmem:[#allocation3 + $0x108] sm:$0xff]
      %v1785 = vld [vmem:[#allocation3 + $0x110] sm:$0xff]
      %v1786 = vld [vmem:[#allocation3 + $0x118] sm:$0xff]
      %v1787 = vld [vmem:[#allocation3 + $0x120] sm:$0xff]
      %v1788 = vld [vmem:[#allocation3 + $0x128] sm:$0xff]
      %v1789 = vld [vmem:[#allocation3 + $0x130] sm:$0xff]
      %v1790 = vld [vmem:[#allocation3 + $0x138] sm:$0xff]
      %v1791 = vld [vmem:[#allocation3 + $0x140] sm:$0xff]
      %v1792 = vld [vmem:[#allocation3 + $0x148] sm:$0xff]
      %v1793 = vld [vmem:[#allocation3 + $0x150] sm:$0xff]
      %v1794 = vld [vmem:[#allocation3 + $0x158] sm:$0xff]
      %v1795 = vld [vmem:[#allocation3 + $0x160] sm:$0xff]
      %v1796 = vld [vmem:[#allocation3 + $0x168] sm:$0xff]
      %v1797 = vld [vmem:[#allocation3 + $0x170] sm:$0xff]
      %v1798 = vld [vmem:[#allocation3 + $0x178] sm:$0xff]
      %v1799 = vadd.f32 %v1751, %v1632
      %v1800 = vadd.f32 %v1752, %v1634
      %v1801 = vadd.f32 %v1753, %v1637
      %v1802 = vadd.f32 %v1754, %v1639
      %v1803 = vadd.f32 %v1755, %v1642
      %v1804 = vadd.f32 %v1756, %v1644
      %v1805 = vadd.f32 %v1757, %v1647
      %v1806 = vadd.f32 %v1758, %v1649
      %v1807 = vadd.f32 %v1759, %v1652
      %v1808 = vadd.f32 %v1760, %v1654
      %v1809 = vadd.f32 %v1761, %v1657
      %v1810 = vadd.f32 %v1762, %v1659
      %v1811 = vadd.f32 %v1763, %v1662
      %v1812 = vadd.f32 %v1764, %v1664
      %v1813 = vadd.f32 %v1765, %v1667
      %v1814 = vadd.f32 %v1766, %v1669
      %v1815 = vadd.f32 %v1767, %v1672
      %v1816 = vadd.f32 %v1768, %v1674
      %v1817 = vadd.f32 %v1769, %v1677
      %v1818 = vadd.f32 %v1770, %v1679
      %v1819 = vadd.f32 %v1771, %v1682
      %v1820 = vadd.f32 %v1772, %v1684
      %v1821 = vadd.f32 %v1773, %v1687
      %v1822 = vadd.f32 %v1774, %v1689
      %v1823 = vadd.f32 %v1775, %v1692
      %v1824 = vadd.f32 %v1776, %v1694
      %v1825 = vadd.f32 %v1777, %v1697
      %v1826 = vadd.f32 %v1778, %v1699
      %v1827 = vadd.f32 %v1779, %v1702
      %v1828 = vadd.f32 %v1780, %v1704
      %v1829 = vadd.f32 %v1781, %v1707
      %v1830 = vadd.f32 %v1782, %v1709
      %v1831 = vadd.f32 %v1783, %v1712
      %v1832 = vadd.f32 %v1784, %v1714
      %v1833 = vadd.f32 %v1785, %v1717
      %v1834 = vadd.f32 %v1786, %v1719
      %v1835 = vadd.f32 %v1787, %v1722
      %v1836 = vadd.f32 %v1788, %v1724
      %v1837 = vadd.f32 %v1789, %v1727
      %v1838 = vadd.f32 %v1790, %v1729
      %v1839 = vadd.f32 %v1791, %v1732
      %v1840 = vadd.f32 %v1792, %v1734
      %v1841 = vadd.f32 %v1793, %v1737
      %v1842 = vadd.f32 %v1794, %v1739
      %v1843 = vadd.f32 %v1795, %v1742
      %v1844 = vadd.f32 %v1796, %v1744
      %v1845 = vadd.f32 %v1797, %v1747
      %v1846 = vadd.f32 %v1798, %v1749
      %1847 = vst.msk [vmem:[#allocation3] sm:$0xff] %vm922, %v1799
      %1848 = vst.msk [vmem:[#allocation3 + $0x8] sm:$0xff] %vm922, %v1800
      %1849 = vst.msk [vmem:[#allocation3 + $0x10] sm:$0xff] %vm922, %v1801
      %1850 = vst.msk [vmem:[#allocation3 + $0x18] sm:$0xff] %vm922, %v1802
      %1851 = vst.msk [vmem:[#allocation3 + $0x20] sm:$0xff] %vm922, %v1803
      %1852 = vst.msk [vmem:[#allocation3 + $0x28] sm:$0xff] %vm922, %v1804
      %1853 = vst.msk [vmem:[#allocation3 + $0x30] sm:$0xff] %vm922, %v1805
      %1854 = vst.msk [vmem:[#allocation3 + $0x38] sm:$0xff] %vm922, %v1806
      %1855 = vst.msk [vmem:[#allocation3 + $0x40] sm:$0xff] %vm922, %v1807
      %1856 = vst.msk [vmem:[#allocation3 + $0x48] sm:$0xff] %vm922, %v1808
      %1857 = vst.msk [vmem:[#allocation3 + $0x50] sm:$0xff] %vm922, %v1809
      %1858 = vst.msk [vmem:[#allocation3 + $0x58] sm:$0xff] %vm922, %v1810
      %1859 = vst.msk [vmem:[#allocation3 + $0x60] sm:$0xff] %vm922, %v1811
      %1860 = vst.msk [vmem:[#allocation3 + $0x68] sm:$0xff] %vm922, %v1812
      %1861 = vst.msk [vmem:[#allocation3 + $0x70] sm:$0xff] %vm922, %v1813
      %1862 = vst.msk [vmem:[#allocation3 + $0x78] sm:$0xff] %vm922, %v1814
      %1863 = vst.msk [vmem:[#allocation3 + $0x80] sm:$0xff] %vm922, %v1815
      %1864 = vst.msk [vmem:[#allocation3 + $0x88] sm:$0xff] %vm922, %v1816
      %1865 = vst.msk [vmem:[#allocation3 + $0x90] sm:$0xff] %vm922, %v1817
      %1866 = vst.msk [vmem:[#allocation3 + $0x98] sm:$0xff] %vm922, %v1818
      %1867 = vst.msk [vmem:[#allocation3 + $0xa0] sm:$0xff] %vm922, %v1819
      %1868 = vst.msk [vmem:[#allocation3 + $0xa8] sm:$0xff] %vm922, %v1820
      %1869 = vst.msk [vmem:[#allocation3 + $0xb0] sm:$0xff] %vm922, %v1821
      %1870 = vst.msk [vmem:[#allocation3 + $0xb8] sm:$0xff] %vm922, %v1822
      %1871 = vst.msk [vmem:[#allocation3 + $0xc0] sm:$0xff] %vm922, %v1823
      %1872 = vst.msk [vmem:[#allocation3 + $0xc8] sm:$0xff] %vm922, %v1824
      %1873 = vst.msk [vmem:[#allocation3 + $0xd0] sm:$0xff] %vm922, %v1825
      %1874 = vst.msk [vmem:[#allocation3 + $0xd8] sm:$0xff] %vm922, %v1826
      %1875 = vst.msk [vmem:[#allocation3 + $0xe0] sm:$0xff] %vm922, %v1827
      %1876 = vst.msk [vmem:[#allocation3 + $0xe8] sm:$0xff] %vm922, %v1828
      %1877 = vst.msk [vmem:[#allocation3 + $0xf0] sm:$0xff] %vm922, %v1829
      %1878 = vst.msk [vmem:[#allocation3 + $0xf8] sm:$0xff] %vm922, %v1830
      %1879 = vst.msk [vmem:[#allocation3 + $0x100] sm:$0xff] %vm922, %v1831
      %1880 = vst.msk [vmem:[#allocation3 + $0x108] sm:$0xff] %vm922, %v1832
      %1881 = vst.msk [vmem:[#allocation3 + $0x110] sm:$0xff] %vm922, %v1833
      %1882 = vst.msk [vmem:[#allocation3 + $0x118] sm:$0xff] %vm922, %v1834
      %1883 = vst.msk [vmem:[#allocation3 + $0x120] sm:$0xff] %vm922, %v1835
      %1884 = vst.msk [vmem:[#allocation3 + $0x128] sm:$0xff] %vm922, %v1836
      %1885 = vst.msk [vmem:[#allocation3 + $0x130] sm:$0xff] %vm922, %v1837
      %1886 = vst.msk [vmem:[#allocation3 + $0x138] sm:$0xff] %vm922, %v1838
      %1887 = vst.msk [vmem:[#allocation3 + $0x140] sm:$0xff] %vm922, %v1839
      %1888 = vst.msk [vmem:[#allocation3 + $0x148] sm:$0xff] %vm922, %v1840
      %1889 = vst.msk [vmem:[#allocation3 + $0x150] sm:$0xff] %vm922, %v1841
      %1890 = vst.msk [vmem:[#allocation3 + $0x158] sm:$0xff] %vm922, %v1842
      %1891 = vst.msk [vmem:[#allocation3 + $0x160] sm:$0xff] %vm922, %v1843
      %1892 = vst.msk [vmem:[#allocation3 + $0x168] sm:$0xff] %vm922, %v1844
      %1893 = vst.msk [vmem:[#allocation3 + $0x170] sm:$0xff] %vm922, %v1845
      %1894 = vst.msk [vmem:[#allocation3 + $0x178] sm:$0xff] %vm922, %v1846
      %v1895 = vld [vmem:[#allocation2] sm:$0xe]
      %v1896 = vld [vmem:[#allocation2 + $0x4] sm:$0xf]
      %v1897 = vld [vmem:[#allocation2 + $0x8] sm:$0xf]
      %v1898 = vld [vmem:[#allocation2 + $0xc] sm:$0xf]
      %v1899 = vld [vmem:[#allocation2 + $0x10] sm:$0xf]
      %v1900 = vld [vmem:[#allocation2 + $0x14] sm:$0xf]
      %v1901 = vld [vmem:[#allocation2 + $0x18] sm:$0xf]
      %v1902 = vld [vmem:[#allocation2 + $0x1c] sm:$0xf]
      %v1903 = vld [vmem:[#allocation2 + $0x20] sm:$0xf]
      %v1904 = vld [vmem:[#allocation2 + $0x24] sm:$0xf]
      %v1905 = vld [vmem:[#allocation2 + $0x28] sm:$0xf]
      %v1906 = vld [vmem:[#allocation2 + $0x2c] sm:$0xf]
      %v1907 = vld [vmem:[#allocation2 + $0x30] sm:$0xf]
      %v1908 = vld [vmem:[#allocation2 + $0x34] sm:$0xf]
      %v1909 = vld [vmem:[#allocation2 + $0x38] sm:$0xf]
      %v1910 = vld [vmem:[#allocation2 + $0x3c] sm:$0xf]
      %v1911 = vld [vmem:[#allocation2 + $0x40] sm:$0xf]
      %v1912 = vld [vmem:[#allocation2 + $0x44] sm:$0xf]
      %v1913 = vld [vmem:[#allocation2 + $0x48] sm:$0xf]
      %v1914 = vld [vmem:[#allocation2 + $0x4c] sm:$0xf]
      %v1915 = vld [vmem:[#allocation2 + $0x50] sm:$0xf]
      %v1916 = vld [vmem:[#allocation2 + $0x54] sm:$0xf]
      %v1917 = vld [vmem:[#allocation2 + $0x58] sm:$0xf]
      %v1918 = vld [vmem:[#allocation2 + $0x5c] sm:$0xf]
      %v1919 = vld [vmem:[#allocation2 + $0x60] sm:$0xf]
      %v1920 = vld [vmem:[#allocation2 + $0x64] sm:$0xf]
      %v1921 = vld [vmem:[#allocation2 + $0x68] sm:$0xf]
      %v1922 = vld [vmem:[#allocation2 + $0x6c] sm:$0xf]
      %v1923 = vld [vmem:[#allocation2 + $0x70] sm:$0xf]
      %v1924 = vld [vmem:[#allocation2 + $0x74] sm:$0xf]
      %v1925 = vld [vmem:[#allocation2 + $0x78] sm:$0xf]
      %v1926 = vld [vmem:[#allocation2 + $0x7c] sm:$0xf]
      %v1927 = vld [vmem:[#allocation2 + $0x80] sm:$0xf]
      %v1928 = vld [vmem:[#allocation2 + $0x84] sm:$0xf]
      %v1929 = vld [vmem:[#allocation2 + $0x88] sm:$0xf]
      %v1930 = vld [vmem:[#allocation2 + $0x8c] sm:$0xf]
      %v1931 = vld [vmem:[#allocation2 + $0x90] sm:$0xf]
      %v1932 = vld [vmem:[#allocation2 + $0x94] sm:$0xf]
      %v1933 = vld [vmem:[#allocation2 + $0x98] sm:$0xf]
      %v1934 = vld [vmem:[#allocation2 + $0x9c] sm:$0xf]
      %v1935 = vld [vmem:[#allocation2 + $0xa0] sm:$0xf]
      %v1936 = vld [vmem:[#allocation2 + $0xa4] sm:$0xf]
      %v1937 = vld [vmem:[#allocation2 + $0xa8] sm:$0xf]
      %v1938 = vld [vmem:[#allocation2 + $0xac] sm:$0xf]
      %v1939 = vld [vmem:[#allocation2 + $0xb0] sm:$0xf]
      %v1940 = vld [vmem:[#allocation2 + $0xb4] sm:$0xf]
      %v1941 = vld [vmem:[#allocation2 + $0xb8] sm:$0xf]
      %v1942 = vld [vmem:[#allocation2 + $0xbc] sm:$0xf]
      %v1943 = vld [vmem:[#allocation2 + $0xc0] sm:$0x1]
      %s1944 = scalar_lea.vmem %s1, 4
      %v1945 = vld [vmem:[%s1944] sm:$0x3]
      %v1995 = vunpack.c.l.b16 %v1895
      %v1996 = vunpack.c.l.b16 %v1896
      %v1997 = vunpack.c.l.b16 %v1897
      %v1998 = vunpack.c.l.b16 %v1898
      %v1999 = vunpack.c.l.b16 %v1899
      %v2000 = vunpack.c.l.b16 %v1900
      %v2001 = vunpack.c.l.b16 %v1901
      %v2002 = vunpack.c.l.b16 %v1902
      %v2003 = vunpack.c.l.b16 %v1903
      %v2004 = vunpack.c.l.b16 %v1904
      %v2005 = vunpack.c.l.b16 %v1905
      %v2006 = vunpack.c.l.b16 %v1906
      %v2007 = vunpack.c.l.b16 %v1907
      %v2008 = vunpack.c.l.b16 %v1908
      %v2009 = vunpack.c.l.b16 %v1909
      %v2010 = vunpack.c.l.b16 %v1910
      %v2011 = vunpack.c.l.b16 %v1911
      %v2012 = vunpack.c.l.b16 %v1912
      %v2013 = vunpack.c.l.b16 %v1913
      %v2014 = vunpack.c.l.b16 %v1914
      %v2015 = vunpack.c.l.b16 %v1915
      %v2016 = vunpack.c.l.b16 %v1916
      %v2017 = vunpack.c.l.b16 %v1917
      %v2018 = vunpack.c.l.b16 %v1918
      %v2019 = vunpack.c.l.b16 %v1919
      %v2020 = vunpack.c.l.b16 %v1920
      %v2021 = vunpack.c.l.b16 %v1921
      %v2022 = vunpack.c.l.b16 %v1922
      %v2023 = vunpack.c.l.b16 %v1923
      %v2024 = vunpack.c.l.b16 %v1924
      %v2025 = vunpack.c.l.b16 %v1925
      %v2026 = vunpack.c.l.b16 %v1926
      %v2027 = vunpack.c.l.b16 %v1927
      %v2028 = vunpack.c.l.b16 %v1928
      %v2029 = vunpack.c.l.b16 %v1929
      %v2030 = vunpack.c.l.b16 %v1930
      %v2031 = vunpack.c.l.b16 %v1931
      %v2032 = vunpack.c.l.b16 %v1932
      %v2033 = vunpack.c.l.b16 %v1933
      %v2034 = vunpack.c.l.b16 %v1934
      %v2035 = vunpack.c.l.b16 %v1935
      %v2036 = vunpack.c.l.b16 %v1936
      %v2037 = vunpack.c.l.b16 %v1937
      %v2038 = vunpack.c.l.b16 %v1938
      %v2039 = vunpack.c.l.b16 %v1939
      %v2040 = vunpack.c.l.b16 %v1940
      %v2041 = vunpack.c.l.b16 %v1941
      %v2042 = vunpack.c.l.b16 %v1942
      %v2043 = vunpack.c.l.b16 %v1943
      %v2044 = vpack.c.b16 %v1996, %v1995
      %v2045 = vpack.c.b16 %v1998, %v1997
      %v2046 = vpack.c.b16 %v2000, %v1999
      %v2047 = vpack.c.b16 %v2002, %v2001
      %v2048 = vpack.c.b16 %v2004, %v2003
      %v2049 = vpack.c.b16 %v2006, %v2005
      %v2050 = vpack.c.b16 %v2008, %v2007
      %v2051 = vpack.c.b16 %v2010, %v2009
      %v2052 = vpack.c.b16 %v2012, %v2011
      %v2053 = vpack.c.b16 %v2014, %v2013
      %v2054 = vpack.c.b16 %v2016, %v2015
      %v2055 = vpack.c.b16 %v2018, %v2017
      %v2056 = vpack.c.b16 %v2020, %v2019
      %v2057 = vpack.c.b16 %v2022, %v2021
      %v2058 = vpack.c.b16 %v2024, %v2023
      %v2059 = vpack.c.b16 %v2026, %v2025
      %v2060 = vpack.c.b16 %v2028, %v2027
      %v2061 = vpack.c.b16 %v2030, %v2029
      %v2062 = vpack.c.b16 %v2032, %v2031
      %v2063 = vpack.c.b16 %v2034, %v2033
      %v2064 = vpack.c.b16 %v2036, %v2035
      %v2065 = vpack.c.b16 %v2038, %v2037
      %v2066 = vpack.c.b16 %v2040, %v2039
      %v2067 = vpack.c.b16 %v2042, %v2041
      %v2068 = vpack.c.b16 %v2043, %v2043
      %vm2069 = vcmask 1046528
      %v2070 = vrot.slane %v2044, 1
      %v2071 = vrot.slane %v2045, 1
      %v2072 = vsel %vm2069, %v2070, %v2071
      %v2073 = vrot.slane %v2046, 1
      %v2074 = vsel %vm2069, %v2071, %v2073
      %v2075 = vrot.slane %v2047, 1
      %v2076 = vsel %vm2069, %v2073, %v2075
      %v2077 = vrot.slane %v2048, 1
      %v2078 = vsel %vm2069, %v2075, %v2077
      %v2079 = vrot.slane %v2049, 1
      %v2080 = vsel %vm2069, %v2077, %v2079
      %v2081 = vrot.slane %v2050, 1
      %v2082 = vsel %vm2069, %v2079, %v2081
      %v2083 = vrot.slane %v2051, 1
      %v2084 = vsel %vm2069, %v2081, %v2083
      %v2085 = vrot.slane %v2052, 1
      %v2086 = vsel %vm2069, %v2083, %v2085
      %v2087 = vrot.slane %v2053, 1
      %v2088 = vsel %vm2069, %v2085, %v2087
      %v2089 = vrot.slane %v2054, 1
      %v2090 = vsel %vm2069, %v2087, %v2089
      %v2091 = vrot.slane %v2055, 1
      %v2092 = vsel %vm2069, %v2089, %v2091
      %v2093 = vrot.slane %v2056, 1
      %v2094 = vsel %vm2069, %v2091, %v2093
      %v2095 = vrot.slane %v2057, 1
      %v2096 = vsel %vm2069, %v2093, %v2095
      %v2097 = vrot.slane %v2058, 1
      %v2098 = vsel %vm2069, %v2095, %v2097
      %v2099 = vrot.slane %v2059, 1
      %v2100 = vsel %vm2069, %v2097, %v2099
      %v2101 = vrot.slane %v2060, 1
      %v2102 = vsel %vm2069, %v2099, %v2101
      %v2103 = vrot.slane %v2061, 1
      %v2104 = vsel %vm2069, %v2101, %v2103
      %v2105 = vrot.slane %v2062, 1
      %v2106 = vsel %vm2069, %v2103, %v2105
      %v2107 = vrot.slane %v2063, 1
      %v2108 = vsel %vm2069, %v2105, %v2107
      %v2109 = vrot.slane %v2064, 1
      %v2110 = vsel %vm2069, %v2107, %v2109
      %v2111 = vrot.slane %v2065, 1
      %v2112 = vsel %vm2069, %v2109, %v2111
      %v2113 = vrot.slane %v2066, 1
      %v2114 = vsel %vm2069, %v2111, %v2113
      %v2115 = vrot.slane %v2067, 1
      %v2116 = vsel %vm2069, %v2113, %v2115
      %v2117 = vrot.slane %v2068, 1
      %v2118 = vsel %vm2069, %v2115, %v2117
      %v2120 = vsel %vm922, %v2072, 0
      %v2123 = vsel %vm922, %v2074, 0
      %v2126 = vsel %vm922, %v2076, 0
      %v2129 = vsel %vm922, %v2078, 0
      %v2132 = vsel %vm922, %v2080, 0
      %v2135 = vsel %vm922, %v2082, 0
      %v2138 = vsel %vm922, %v2084, 0
      %v2141 = vsel %vm922, %v2086, 0
      %v2144 = vsel %vm922, %v2088, 0
      %v2147 = vsel %vm922, %v2090, 0
      %v2150 = vsel %vm922, %v2092, 0
      %v2153 = vsel %vm922, %v2094, 0
      %v2156 = vsel %vm922, %v2096, 0
      %v2159 = vsel %vm922, %v2098, 0
      %v2162 = vsel %vm922, %v2100, 0
      %v2165 = vsel %vm922, %v2102, 0
      %v2168 = vsel %vm922, %v2104, 0
      %v2171 = vsel %vm922, %v2106, 0
      %v2174 = vsel %vm922, %v2108, 0
      %v2177 = vsel %vm922, %v2110, 0
      %v2180 = vsel %vm922, %v2112, 0
      %v2183 = vsel %vm922, %v2114, 0
      %v2186 = vsel %vm922, %v2116, 0
      %v2189 = vsel %vm922, %v2118, 0
      %v2192 = vsel %vm995, %v1945, 0
      %2194 = vmatpush.bf16.msra.mxu0 0
      %2195 = vmatpush.bf16.msra.mxu0 0
      %2196 = vmatpush.bf16.msra.mxu0 0
      %2197 = vmatpush.bf16.msra.mxu0 0
      %2198 = vmatpush.bf16.msra.mxu0 0
      %2199 = vmatpush.bf16.msra.mxu0 0
      %2200 = vmatpush.bf16.msra.mxu0 0
      %2201 = vmatpush.bf16.msra.mxu0 %v2192
      %2202 = vmatmul.bf16.gmra.mxu0 %v2120
      %v2203 = vpop.f32.mrf.mxu0
      %v2204 = vadd.f32 0.0, %v2203
      %v2205 = vpop.f32.mrf.mxu0
      %v2206 = vadd.f32 0.0, %v2205
      %2207 = vmatmul.bf16.gmra.mxu0 %v2123
      %v2208 = vpop.f32.mrf.mxu0
      %v2209 = vadd.f32 0.0, %v2208
      %v2210 = vpop.f32.mrf.mxu0
      %v2211 = vadd.f32 0.0, %v2210
      %2212 = vmatmul.bf16.gmra.mxu0 %v2126
      %v2213 = vpop.f32.mrf.mxu0
      %v2214 = vadd.f32 0.0, %v2213
      %v2215 = vpop.f32.mrf.mxu0
      %v2216 = vadd.f32 0.0, %v2215
      %2217 = vmatmul.bf16.gmra.mxu0 %v2129
      %v2218 = vpop.f32.mrf.mxu0
      %v2219 = vadd.f32 0.0, %v2218
      %v2220 = vpop.f32.mrf.mxu0
      %v2221 = vadd.f32 0.0, %v2220
      %2222 = vmatmul.bf16.gmra.mxu0 %v2132
      %v2223 = vpop.f32.mrf.mxu0
      %v2224 = vadd.f32 0.0, %v2223
      %v2225 = vpop.f32.mrf.mxu0
      %v2226 = vadd.f32 0.0, %v2225
      %2227 = vmatmul.bf16.gmra.mxu0 %v2135
      %v2228 = vpop.f32.mrf.mxu0
      %v2229 = vadd.f32 0.0, %v2228
      %v2230 = vpop.f32.mrf.mxu0
      %v2231 = vadd.f32 0.0, %v2230
      %2232 = vmatmul.bf16.gmra.mxu0 %v2138
      %v2233 = vpop.f32.mrf.mxu0
      %v2234 = vadd.f32 0.0, %v2233
      %v2235 = vpop.f32.mrf.mxu0
      %v2236 = vadd.f32 0.0, %v2235
      %2237 = vmatmul.bf16.gmra.mxu0 %v2141
      %v2238 = vpop.f32.mrf.mxu0
      %v2239 = vadd.f32 0.0, %v2238
      %v2240 = vpop.f32.mrf.mxu0
      %v2241 = vadd.f32 0.0, %v2240
      %2242 = vmatmul.bf16.gmra.mxu0 %v2144
      %v2243 = vpop.f32.mrf.mxu0
      %v2244 = vadd.f32 0.0, %v2243
      %v2245 = vpop.f32.mrf.mxu0
      %v2246 = vadd.f32 0.0, %v2245
      %2247 = vmatmul.bf16.gmra.mxu0 %v2147
      %v2248 = vpop.f32.mrf.mxu0
      %v2249 = vadd.f32 0.0, %v2248
      %v2250 = vpop.f32.mrf.mxu0
      %v2251 = vadd.f32 0.0, %v2250
      %2252 = vmatmul.bf16.gmra.mxu0 %v2150
      %v2253 = vpop.f32.mrf.mxu0
      %v2254 = vadd.f32 0.0, %v2253
      %v2255 = vpop.f32.mrf.mxu0
      %v2256 = vadd.f32 0.0, %v2255
      %2257 = vmatmul.bf16.gmra.mxu0 %v2153
      %v2258 = vpop.f32.mrf.mxu0
      %v2259 = vadd.f32 0.0, %v2258
      %v2260 = vpop.f32.mrf.mxu0
      %v2261 = vadd.f32 0.0, %v2260
      %2262 = vmatmul.bf16.gmra.mxu0 %v2156
      %v2263 = vpop.f32.mrf.mxu0
      %v2264 = vadd.f32 0.0, %v2263
      %v2265 = vpop.f32.mrf.mxu0
      %v2266 = vadd.f32 0.0, %v2265
      %2267 = vmatmul.bf16.gmra.mxu0 %v2159
      %v2268 = vpop.f32.mrf.mxu0
      %v2269 = vadd.f32 0.0, %v2268
      %v2270 = vpop.f32.mrf.mxu0
      %v2271 = vadd.f32 0.0, %v2270
      %2272 = vmatmul.bf16.gmra.mxu0 %v2162
      %v2273 = vpop.f32.mrf.mxu0
      %v2274 = vadd.f32 0.0, %v2273
      %v2275 = vpop.f32.mrf.mxu0
      %v2276 = vadd.f32 0.0, %v2275
      %2277 = vmatmul.bf16.gmra.mxu0 %v2165
      %v2278 = vpop.f32.mrf.mxu0
      %v2279 = vadd.f32 0.0, %v2278
      %v2280 = vpop.f32.mrf.mxu0
      %v2281 = vadd.f32 0.0, %v2280
      %2282 = vmatmul.bf16.gmra.mxu0 %v2168
      %v2283 = vpop.f32.mrf.mxu0
      %v2284 = vadd.f32 0.0, %v2283
      %v2285 = vpop.f32.mrf.mxu0
      %v2286 = vadd.f32 0.0, %v2285
      %2287 = vmatmul.bf16.gmra.mxu0 %v2171
      %v2288 = vpop.f32.mrf.mxu0
      %v2289 = vadd.f32 0.0, %v2288
      %v2290 = vpop.f32.mrf.mxu0
      %v2291 = vadd.f32 0.0, %v2290
      %2292 = vmatmul.bf16.gmra.mxu0 %v2174
      %v2293 = vpop.f32.mrf.mxu0
      %v2294 = vadd.f32 0.0, %v2293
      %v2295 = vpop.f32.mrf.mxu0
      %v2296 = vadd.f32 0.0, %v2295
      %2297 = vmatmul.bf16.gmra.mxu0 %v2177
      %v2298 = vpop.f32.mrf.mxu0
      %v2299 = vadd.f32 0.0, %v2298
      %v2300 = vpop.f32.mrf.mxu0
      %v2301 = vadd.f32 0.0, %v2300
      %2302 = vmatmul.bf16.gmra.mxu0 %v2180
      %v2303 = vpop.f32.mrf.mxu0
      %v2304 = vadd.f32 0.0, %v2303
      %v2305 = vpop.f32.mrf.mxu0
      %v2306 = vadd.f32 0.0, %v2305
      %2307 = vmatmul.bf16.gmra.mxu0 %v2183
      %v2308 = vpop.f32.mrf.mxu0
      %v2309 = vadd.f32 0.0, %v2308
      %v2310 = vpop.f32.mrf.mxu0
      %v2311 = vadd.f32 0.0, %v2310
      %2312 = vmatmul.bf16.gmra.mxu0 %v2186
      %v2313 = vpop.f32.mrf.mxu0
      %v2314 = vadd.f32 0.0, %v2313
      %v2315 = vpop.f32.mrf.mxu0
      %v2316 = vadd.f32 0.0, %v2315
      %2317 = vmatmul.bf16.gmra.mxu0 %v2189
      %v2318 = vpop.f32.mrf.mxu0
      %v2319 = vadd.f32 0.0, %v2318
      %v2320 = vpop.f32.mrf.mxu0
      %v2321 = vadd.f32 0.0, %v2320
      %2322 = vdwg.mxu0
      %v2323 = vld [vmem:[#allocation3] sm:$0xff]
      %v2324 = vld [vmem:[#allocation3 + $0x8] sm:$0xff]
      %v2325 = vld [vmem:[#allocation3 + $0x10] sm:$0xff]
      %v2326 = vld [vmem:[#allocation3 + $0x18] sm:$0xff]
      %v2327 = vld [vmem:[#allocation3 + $0x20] sm:$0xff]
      %v2328 = vld [vmem:[#allocation3 + $0x28] sm:$0xff]
      %v2329 = vld [vmem:[#allocation3 + $0x30] sm:$0xff]
      %v2330 = vld [vmem:[#allocation3 + $0x38] sm:$0xff]
      %v2331 = vld [vmem:[#allocation3 + $0x40] sm:$0xff]
      %v2332 = vld [vmem:[#allocation3 + $0x48] sm:$0xff]
      %v2333 = vld [vmem:[#allocation3 + $0x50] sm:$0xff]
      %v2334 = vld [vmem:[#allocation3 + $0x58] sm:$0xff]
      %v2335 = vld [vmem:[#allocation3 + $0x60] sm:$0xff]
      %v2336 = vld [vmem:[#allocation3 + $0x68] sm:$0xff]
      %v2337 = vld [vmem:[#allocation3 + $0x70] sm:$0xff]
      %v2338 = vld [vmem:[#allocation3 + $0x78] sm:$0xff]
      %v2339 = vld [vmem:[#allocation3 + $0x80] sm:$0xff]
      %v2340 = vld [vmem:[#allocation3 + $0x88] sm:$0xff]
      %v2341 = vld [vmem:[#allocation3 + $0x90] sm:$0xff]
      %v2342 = vld [vmem:[#allocation3 + $0x98] sm:$0xff]
      %v2343 = vld [vmem:[#allocation3 + $0xa0] sm:$0xff]
      %v2344 = vld [vmem:[#allocation3 + $0xa8] sm:$0xff]
      %v2345 = vld [vmem:[#allocation3 + $0xb0] sm:$0xff]
      %v2346 = vld [vmem:[#allocation3 + $0xb8] sm:$0xff]
      %v2347 = vld [vmem:[#allocation3 + $0xc0] sm:$0xff]
      %v2348 = vld [vmem:[#allocation3 + $0xc8] sm:$0xff]
      %v2349 = vld [vmem:[#allocation3 + $0xd0] sm:$0xff]
      %v2350 = vld [vmem:[#allocation3 + $0xd8] sm:$0xff]
      %v2351 = vld [vmem:[#allocation3 + $0xe0] sm:$0xff]
      %v2352 = vld [vmem:[#allocation3 + $0xe8] sm:$0xff]
      %v2353 = vld [vmem:[#allocation3 + $0xf0] sm:$0xff]
      %v2354 = vld [vmem:[#allocation3 + $0xf8] sm:$0xff]
      %v2355 = vld [vmem:[#allocation3 + $0x100] sm:$0xff]
      %v2356 = vld [vmem:[#allocation3 + $0x108] sm:$0xff]
      %v2357 = vld [vmem:[#allocation3 + $0x110] sm:$0xff]
      %v2358 = vld [vmem:[#allocation3 + $0x118] sm:$0xff]
      %v2359 = vld [vmem:[#allocation3 + $0x120] sm:$0xff]
      %v2360 = vld [vmem:[#allocation3 + $0x128] sm:$0xff]
      %v2361 = vld [vmem:[#allocation3 + $0x130] sm:$0xff]
      %v2362 = vld [vmem:[#allocation3 + $0x138] sm:$0xff]
      %v2363 = vld [vmem:[#allocation3 + $0x140] sm:$0xff]
      %v2364 = vld [vmem:[#allocation3 + $0x148] sm:$0xff]
      %v2365 = vld [vmem:[#allocation3 + $0x150] sm:$0xff]
      %v2366 = vld [vmem:[#allocation3 + $0x158] sm:$0xff]
      %v2367 = vld [vmem:[#allocation3 + $0x160] sm:$0xff]
      %v2368 = vld [vmem:[#allocation3 + $0x168] sm:$0xff]
      %v2369 = vld [vmem:[#allocation3 + $0x170] sm:$0xff]
      %v2370 = vld [vmem:[#allocation3 + $0x178] sm:$0xff]
      %v2371 = vadd.f32 %v2323, %v2204
      %v2372 = vadd.f32 %v2324, %v2206
      %v2373 = vadd.f32 %v2325, %v2209
      %v2374 = vadd.f32 %v2326, %v2211
      %v2375 = vadd.f32 %v2327, %v2214
      %v2376 = vadd.f32 %v2328, %v2216
      %v2377 = vadd.f32 %v2329, %v2219
      %v2378 = vadd.f32 %v2330, %v2221
      %v2379 = vadd.f32 %v2331, %v2224
      %v2380 = vadd.f32 %v2332, %v2226
      %v2381 = vadd.f32 %v2333, %v2229
      %v2382 = vadd.f32 %v2334, %v2231
      %v2383 = vadd.f32 %v2335, %v2234
      %v2384 = vadd.f32 %v2336, %v2236
      %v2385 = vadd.f32 %v2337, %v2239
      %v2386 = vadd.f32 %v2338, %v2241
      %v2387 = vadd.f32 %v2339, %v2244
      %v2388 = vadd.f32 %v2340, %v2246
      %v2389 = vadd.f32 %v2341, %v2249
      %v2390 = vadd.f32 %v2342, %v2251
      %v2391 = vadd.f32 %v2343, %v2254
      %v2392 = vadd.f32 %v2344, %v2256
      %v2393 = vadd.f32 %v2345, %v2259
      %v2394 = vadd.f32 %v2346, %v2261
      %v2395 = vadd.f32 %v2347, %v2264
      %v2396 = vadd.f32 %v2348, %v2266
      %v2397 = vadd.f32 %v2349, %v2269
      %v2398 = vadd.f32 %v2350, %v2271
      %v2399 = vadd.f32 %v2351, %v2274
      %v2400 = vadd.f32 %v2352, %v2276
      %v2401 = vadd.f32 %v2353, %v2279
      %v2402 = vadd.f32 %v2354, %v2281
      %v2403 = vadd.f32 %v2355, %v2284
      %v2404 = vadd.f32 %v2356, %v2286
      %v2405 = vadd.f32 %v2357, %v2289
      %v2406 = vadd.f32 %v2358, %v2291
      %v2407 = vadd.f32 %v2359, %v2294
      %v2408 = vadd.f32 %v2360, %v2296
      %v2409 = vadd.f32 %v2361, %v2299
      %v2410 = vadd.f32 %v2362, %v2301
      %v2411 = vadd.f32 %v2363, %v2304
      %v2412 = vadd.f32 %v2364, %v2306
      %v2413 = vadd.f32 %v2365, %v2309
      %v2414 = vadd.f32 %v2366, %v2311
      %v2415 = vadd.f32 %v2367, %v2314
      %v2416 = vadd.f32 %v2368, %v2316
      %v2417 = vadd.f32 %v2369, %v2319
      %v2418 = vadd.f32 %v2370, %v2321
      %2419 = vst.msk [vmem:[#allocation3] sm:$0xff] %vm922, %v2371
      %2420 = vst.msk [vmem:[#allocation3 + $0x8] sm:$0xff] %vm922, %v2372
      %2421 = vst.msk [vmem:[#allocation3 + $0x10] sm:$0xff] %vm922, %v2373
      %2422 = vst.msk [vmem:[#allocation3 + $0x18] sm:$0xff] %vm922, %v2374
      %2423 = vst.msk [vmem:[#allocation3 + $0x20] sm:$0xff] %vm922, %v2375
      %2424 = vst.msk [vmem:[#allocation3 + $0x28] sm:$0xff] %vm922, %v2376
      %2425 = vst.msk [vmem:[#allocation3 + $0x30] sm:$0xff] %vm922, %v2377
      %2426 = vst.msk [vmem:[#allocation3 + $0x38] sm:$0xff] %vm922, %v2378
      %2427 = vst.msk [vmem:[#allocation3 + $0x40] sm:$0xff] %vm922, %v2379
      %2428 = vst.msk [vmem:[#allocation3 + $0x48] sm:$0xff] %vm922, %v2380
      %2429 = vst.msk [vmem:[#allocation3 + $0x50] sm:$0xff] %vm922, %v2381
      %2430 = vst.msk [vmem:[#allocation3 + $0x58] sm:$0xff] %vm922, %v2382
      %2431 = vst.msk [vmem:[#allocation3 + $0x60] sm:$0xff] %vm922, %v2383
      %2432 = vst.msk [vmem:[#allocation3 + $0x68] sm:$0xff] %vm922, %v2384
      %2433 = vst.msk [vmem:[#allocation3 + $0x70] sm:$0xff] %vm922, %v2385
      %2434 = vst.msk [vmem:[#allocation3 + $0x78] sm:$0xff] %vm922, %v2386
      %2435 = vst.msk [vmem:[#allocation3 + $0x80] sm:$0xff] %vm922, %v2387
      %2436 = vst.msk [vmem:[#allocation3 + $0x88] sm:$0xff] %vm922, %v2388
      %2437 = vst.msk [vmem:[#allocation3 + $0x90] sm:$0xff] %vm922, %v2389
      %2438 = vst.msk [vmem:[#allocation3 + $0x98] sm:$0xff] %vm922, %v2390
      %2439 = vst.msk [vmem:[#allocation3 + $0xa0] sm:$0xff] %vm922, %v2391
      %2440 = vst.msk [vmem:[#allocation3 + $0xa8] sm:$0xff] %vm922, %v2392
      %2441 = vst.msk [vmem:[#allocation3 + $0xb0] sm:$0xff] %vm922, %v2393
      %2442 = vst.msk [vmem:[#allocation3 + $0xb8] sm:$0xff] %vm922, %v2394
      %2443 = vst.msk [vmem:[#allocation3 + $0xc0] sm:$0xff] %vm922, %v2395
      %2444 = vst.msk [vmem:[#allocation3 + $0xc8] sm:$0xff] %vm922, %v2396
      %2445 = vst.msk [vmem:[#allocation3 + $0xd0] sm:$0xff] %vm922, %v2397
      %2446 = vst.msk [vmem:[#allocation3 + $0xd8] sm:$0xff] %vm922, %v2398
      %2447 = vst.msk [vmem:[#allocation3 + $0xe0] sm:$0xff] %vm922, %v2399
      %2448 = vst.msk [vmem:[#allocation3 + $0xe8] sm:$0xff] %vm922, %v2400
      %2449 = vst.msk [vmem:[#allocation3 + $0xf0] sm:$0xff] %vm922, %v2401
      %2450 = vst.msk [vmem:[#allocation3 + $0xf8] sm:$0xff] %vm922, %v2402
      %2451 = vst.msk [vmem:[#allocation3 + $0x100] sm:$0xff] %vm922, %v2403
      %2452 = vst.msk [vmem:[#allocation3 + $0x108] sm:$0xff] %vm922, %v2404
      %2453 = vst.msk [vmem:[#allocation3 + $0x110] sm:$0xff] %vm922, %v2405
      %2454 = vst.msk [vmem:[#allocation3 + $0x118] sm:$0xff] %vm922, %v2406
      %2455 = vst.msk [vmem:[#allocation3 + $0x120] sm:$0xff] %vm922, %v2407
      %2456 = vst.msk [vmem:[#allocation3 + $0x128] sm:$0xff] %vm922, %v2408
      %2457 = vst.msk [vmem:[#allocation3 + $0x130] sm:$0xff] %vm922, %v2409
      %2458 = vst.msk [vmem:[#allocation3 + $0x138] sm:$0xff] %vm922, %v2410
      %2459 = vst.msk [vmem:[#allocation3 + $0x140] sm:$0xff] %vm922, %v2411
      %2460 = vst.msk [vmem:[#allocation3 + $0x148] sm:$0xff] %vm922, %v2412
      %2461 = vst.msk [vmem:[#allocation3 + $0x150] sm:$0xff] %vm922, %v2413
      %2462 = vst.msk [vmem:[#allocation3 + $0x158] sm:$0xff] %vm922, %v2414
      %2463 = vst.msk [vmem:[#allocation3 + $0x160] sm:$0xff] %vm922, %v2415
      %2464 = vst.msk [vmem:[#allocation3 + $0x168] sm:$0xff] %vm922, %v2416
      %2465 = vst.msk [vmem:[#allocation3 + $0x170] sm:$0xff] %vm922, %v2417
      %2466 = vst.msk [vmem:[#allocation3 + $0x178] sm:$0xff] %vm922, %v2418
      %v2467 = vld [vmem:[#allocation2 + $0xc] sm:$0xf]
      %v2468 = vld [vmem:[#allocation2 + $0x10] sm:$0xf]
      %v2469 = vld [vmem:[#allocation2 + $0x14] sm:$0xf]
      %v2470 = vld [vmem:[#allocation2 + $0x18] sm:$0xf]
      %v2471 = vld [vmem:[#allocation2 + $0x1c] sm:$0xf]
      %v2472 = vld [vmem:[#allocation2 + $0x20] sm:$0xf]
      %v2473 = vld [vmem:[#allocation2 + $0x24] sm:$0xf]
      %v2474 = vld [vmem:[#allocation2 + $0x28] sm:$0xf]
      %v2475 = vld [vmem:[#allocation2 + $0x2c] sm:$0xf]
      %v2476 = vld [vmem:[#allocation2 + $0x30] sm:$0xf]
      %v2477 = vld [vmem:[#allocation2 + $0x34] sm:$0xf]
      %v2478 = vld [vmem:[#allocation2 + $0x38] sm:$0xf]
      %v2479 = vld [vmem:[#allocation2 + $0x3c] sm:$0xf]
      %v2480 = vld [vmem:[#allocation2 + $0x40] sm:$0xf]
      %v2481 = vld [vmem:[#allocation2 + $0x44] sm:$0xf]
      %v2482 = vld [vmem:[#allocation2 + $0x48] sm:$0xf]
      %v2483 = vld [vmem:[#allocation2 + $0x4c] sm:$0xf]
      %v2484 = vld [vmem:[#allocation2 + $0x50] sm:$0xf]
      %v2485 = vld [vmem:[#allocation2 + $0x54] sm:$0xf]
      %v2486 = vld [vmem:[#allocation2 + $0x58] sm:$0xf]
      %v2487 = vld [vmem:[#allocation2 + $0x5c] sm:$0xf]
      %v2488 = vld [vmem:[#allocation2 + $0x60] sm:$0xf]
      %v2489 = vld [vmem:[#allocation2 + $0x64] sm:$0xf]
      %v2490 = vld [vmem:[#allocation2 + $0x68] sm:$0xf]
      %v2491 = vld [vmem:[#allocation2 + $0x6c] sm:$0xf]
      %v2492 = vld [vmem:[#allocation2 + $0x70] sm:$0xf]
      %v2493 = vld [vmem:[#allocation2 + $0x74] sm:$0xf]
      %v2494 = vld [vmem:[#allocation2 + $0x78] sm:$0xf]
      %v2495 = vld [vmem:[#allocation2 + $0x7c] sm:$0xf]
      %v2496 = vld [vmem:[#allocation2 + $0x80] sm:$0xf]
      %v2497 = vld [vmem:[#allocation2 + $0x84] sm:$0xf]
      %v2498 = vld [vmem:[#allocation2 + $0x88] sm:$0xf]
      %v2499 = vld [vmem:[#allocation2 + $0x8c] sm:$0xf]
      %v2500 = vld [vmem:[#allocation2 + $0x90] sm:$0xf]
      %v2501 = vld [vmem:[#allocation2 + $0x94] sm:$0xf]
      %v2502 = vld [vmem:[#allocation2 + $0x98] sm:$0xf]
      %v2503 = vld [vmem:[#allocation2 + $0x9c] sm:$0xf]
      %v2504 = vld [vmem:[#allocation2 + $0xa0] sm:$0xf]
      %v2505 = vld [vmem:[#allocation2 + $0xa4] sm:$0xf]
      %v2506 = vld [vmem:[#allocation2 + $0xa8] sm:$0xf]
      %v2507 = vld [vmem:[#allocation2 + $0xac] sm:$0xf]
      %v2508 = vld [vmem:[#allocation2 + $0xb0] sm:$0xf]
      %v2509 = vld [vmem:[#allocation2 + $0xb4] sm:$0xf]
      %v2510 = vld [vmem:[#allocation2 + $0xb8] sm:$0xf]
      %v2511 = vld [vmem:[#allocation2 + $0xbc] sm:$0xf]
      %v2512 = vld [vmem:[#allocation2 + $0xc0] sm:$0xf]
      %v2513 = vld [vmem:[#allocation2 + $0xc4] sm:$0xf]
      %v2514 = vld [vmem:[#allocation2 + $0xc8] sm:$0xf]
      %s2515 = scalar_lea.vmem %s1, 6
      %v2516 = vld [vmem:[%s2515] sm:$0x3]
      %v2565 = vunpack.c.l.b16 %v2467
      %v2566 = vunpack.c.l.b16 %v2468
      %v2567 = vunpack.c.l.b16 %v2469
      %v2568 = vunpack.c.l.b16 %v2470
      %v2569 = vunpack.c.l.b16 %v2471
      %v2570 = vunpack.c.l.b16 %v2472
      %v2571 = vunpack.c.l.b16 %v2473
      %v2572 = vunpack.c.l.b16 %v2474
      %v2573 = vunpack.c.l.b16 %v2475
      %v2574 = vunpack.c.l.b16 %v2476
      %v2575 = vunpack.c.l.b16 %v2477
      %v2576 = vunpack.c.l.b16 %v2478
      %v2577 = vunpack.c.l.b16 %v2479
      %v2578 = vunpack.c.l.b16 %v2480
      %v2579 = vunpack.c.l.b16 %v2481
      %v2580 = vunpack.c.l.b16 %v2482
      %v2581 = vunpack.c.l.b16 %v2483
      %v2582 = vunpack.c.l.b16 %v2484
      %v2583 = vunpack.c.l.b16 %v2485
      %v2584 = vunpack.c.l.b16 %v2486
      %v2585 = vunpack.c.l.b16 %v2487
      %v2586 = vunpack.c.l.b16 %v2488
      %v2587 = vunpack.c.l.b16 %v2489
      %v2588 = vunpack.c.l.b16 %v2490
      %v2589 = vunpack.c.l.b16 %v2491
      %v2590 = vunpack.c.l.b16 %v2492
      %v2591 = vunpack.c.l.b16 %v2493
      %v2592 = vunpack.c.l.b16 %v2494
      %v2593 = vunpack.c.l.b16 %v2495
      %v2594 = vunpack.c.l.b16 %v2496
      %v2595 = vunpack.c.l.b16 %v2497
      %v2596 = vunpack.c.l.b16 %v2498
      %v2597 = vunpack.c.l.b16 %v2499
      %v2598 = vunpack.c.l.b16 %v2500
      %v2599 = vunpack.c.l.b16 %v2501
      %v2600 = vunpack.c.l.b16 %v2502
      %v2601 = vunpack.c.l.b16 %v2503
      %v2602 = vunpack.c.l.b16 %v2504
      %v2603 = vunpack.c.l.b16 %v2505
      %v2604 = vunpack.c.l.b16 %v2506
      %v2605 = vunpack.c.l.b16 %v2507
      %v2606 = vunpack.c.l.b16 %v2508
      %v2607 = vunpack.c.l.b16 %v2509
      %v2608 = vunpack.c.l.b16 %v2510
      %v2609 = vunpack.c.l.b16 %v2511
      %v2610 = vunpack.c.l.b16 %v2512
      %v2611 = vunpack.c.l.b16 %v2513
      %v2612 = vunpack.c.l.b16 %v2514
      %v2613 = vpack.c.b16 %v2566, %v2565
      %v2614 = vpack.c.b16 %v2568, %v2567
      %v2615 = vpack.c.b16 %v2570, %v2569
      %v2616 = vpack.c.b16 %v2572, %v2571
      %v2617 = vpack.c.b16 %v2574, %v2573
      %v2618 = vpack.c.b16 %v2576, %v2575
      %v2619 = vpack.c.b16 %v2578, %v2577
      %v2620 = vpack.c.b16 %v2580, %v2579
      %v2621 = vpack.c.b16 %v2582, %v2581
      %v2622 = vpack.c.b16 %v2584, %v2583
      %v2623 = vpack.c.b16 %v2586, %v2585
      %v2624 = vpack.c.b16 %v2588, %v2587
      %v2625 = vpack.c.b16 %v2590, %v2589
      %v2626 = vpack.c.b16 %v2592, %v2591
      %v2627 = vpack.c.b16 %v2594, %v2593
      %v2628 = vpack.c.b16 %v2596, %v2595
      %v2629 = vpack.c.b16 %v2598, %v2597
      %v2630 = vpack.c.b16 %v2600, %v2599
      %v2631 = vpack.c.b16 %v2602, %v2601
      %v2632 = vpack.c.b16 %v2604, %v2603
      %v2633 = vpack.c.b16 %v2606, %v2605
      %v2634 = vpack.c.b16 %v2608, %v2607
      %v2635 = vpack.c.b16 %v2610, %v2609
      %v2636 = vpack.c.b16 %v2612, %v2611
      %v2638 = vsel %vm922, %v2613, 0
      %v2641 = vsel %vm922, %v2614, 0
      %v2644 = vsel %vm922, %v2615, 0
      %v2647 = vsel %vm922, %v2616, 0
      %v2650 = vsel %vm922, %v2617, 0
      %v2653 = vsel %vm922, %v2618, 0
      %v2656 = vsel %vm922, %v2619, 0
      %v2659 = vsel %vm922, %v2620, 0
      %v2662 = vsel %vm922, %v2621, 0
      %v2665 = vsel %vm922, %v2622, 0
      %v2668 = vsel %vm922, %v2623, 0
      %v2671 = vsel %vm922, %v2624, 0
      %v2674 = vsel %vm922, %v2625, 0
      %v2677 = vsel %vm922, %v2626, 0
      %v2680 = vsel %vm922, %v2627, 0
      %v2683 = vsel %vm922, %v2628, 0
      %v2686 = vsel %vm922, %v2629, 0
      %v2689 = vsel %vm922, %v2630, 0
      %v2692 = vsel %vm922, %v2631, 0
      %v2695 = vsel %vm922, %v2632, 0
      %v2698 = vsel %vm922, %v2633, 0
      %v2701 = vsel %vm922, %v2634, 0
      %v2704 = vsel %vm922, %v2635, 0
      %v2707 = vsel %vm922, %v2636, 0
      %v2710 = vsel %vm995, %v2516, 0
      %2712 = vmatpush.bf16.msra.mxu0 0
      %2713 = vmatpush.bf16.msra.mxu0 0
      %2714 = vmatpush.bf16.msra.mxu0 0
      %2715 = vmatpush.bf16.msra.mxu0 0
      %2716 = vmatpush.bf16.msra.mxu0 0
      %2717 = vmatpush.bf16.msra.mxu0 0
      %2718 = vmatpush.bf16.msra.mxu0 0
      %2719 = vmatpush.bf16.msra.mxu0 %v2710
      %2720 = vmatmul.bf16.gmra.mxu0 %v2638
      %v2721 = vpop.f32.mrf.mxu0
      %v2722 = vadd.f32 0.0, %v2721
      %v2723 = vpop.f32.mrf.mxu0
      %v2724 = vadd.f32 0.0, %v2723
      %2725 = vmatmul.bf16.gmra.mxu0 %v2641
      %v2726 = vpop.f32.mrf.mxu0
      %v2727 = vadd.f32 0.0, %v2726
      %v2728 = vpop.f32.mrf.mxu0
      %v2729 = vadd.f32 0.0, %v2728
      %2730 = vmatmul.bf16.gmra.mxu0 %v2644
      %v2731 = vpop.f32.mrf.mxu0
      %v2732 = vadd.f32 0.0, %v2731
      %v2733 = vpop.f32.mrf.mxu0
      %v2734 = vadd.f32 0.0, %v2733
      %2735 = vmatmul.bf16.gmra.mxu0 %v2647
      %v2736 = vpop.f32.mrf.mxu0
      %v2737 = vadd.f32 0.0, %v2736
      %v2738 = vpop.f32.mrf.mxu0
      %v2739 = vadd.f32 0.0, %v2738
      %2740 = vmatmul.bf16.gmra.mxu0 %v2650
      %v2741 = vpop.f32.mrf.mxu0
      %v2742 = vadd.f32 0.0, %v2741
      %v2743 = vpop.f32.mrf.mxu0
      %v2744 = vadd.f32 0.0, %v2743
      %2745 = vmatmul.bf16.gmra.mxu0 %v2653
      %v2746 = vpop.f32.mrf.mxu0
      %v2747 = vadd.f32 0.0, %v2746
      %v2748 = vpop.f32.mrf.mxu0
      %v2749 = vadd.f32 0.0, %v2748
      %2750 = vmatmul.bf16.gmra.mxu0 %v2656
      %v2751 = vpop.f32.mrf.mxu0
      %v2752 = vadd.f32 0.0, %v2751
      %v2753 = vpop.f32.mrf.mxu0
      %v2754 = vadd.f32 0.0, %v2753
      %2755 = vmatmul.bf16.gmra.mxu0 %v2659
      %v2756 = vpop.f32.mrf.mxu0
      %v2757 = vadd.f32 0.0, %v2756
      %v2758 = vpop.f32.mrf.mxu0
      %v2759 = vadd.f32 0.0, %v2758
      %2760 = vmatmul.bf16.gmra.mxu0 %v2662
      %v2761 = vpop.f32.mrf.mxu0
      %v2762 = vadd.f32 0.0, %v2761
      %v2763 = vpop.f32.mrf.mxu0
      %v2764 = vadd.f32 0.0, %v2763
      %2765 = vmatmul.bf16.gmra.mxu0 %v2665
      %v2766 = vpop.f32.mrf.mxu0
      %v2767 = vadd.f32 0.0, %v2766
      %v2768 = vpop.f32.mrf.mxu0
      %v2769 = vadd.f32 0.0, %v2768
      %2770 = vmatmul.bf16.gmra.mxu0 %v2668
      %v2771 = vpop.f32.mrf.mxu0
      %v2772 = vadd.f32 0.0, %v2771
      %v2773 = vpop.f32.mrf.mxu0
      %v2774 = vadd.f32 0.0, %v2773
      %2775 = vmatmul.bf16.gmra.mxu0 %v2671
      %v2776 = vpop.f32.mrf.mxu0
      %v2777 = vadd.f32 0.0, %v2776
      %v2778 = vpop.f32.mrf.mxu0
      %v2779 = vadd.f32 0.0, %v2778
      %2780 = vmatmul.bf16.gmra.mxu0 %v2674
      %v2781 = vpop.f32.mrf.mxu0
      %v2782 = vadd.f32 0.0, %v2781
      %v2783 = vpop.f32.mrf.mxu0
      %v2784 = vadd.f32 0.0, %v2783
      %2785 = vmatmul.bf16.gmra.mxu0 %v2677
      %v2786 = vpop.f32.mrf.mxu0
      %v2787 = vadd.f32 0.0, %v2786
      %v2788 = vpop.f32.mrf.mxu0
      %v2789 = vadd.f32 0.0, %v2788
      %2790 = vmatmul.bf16.gmra.mxu0 %v2680
      %v2791 = vpop.f32.mrf.mxu0
      %v2792 = vadd.f32 0.0, %v2791
      %v2793 = vpop.f32.mrf.mxu0
      %v2794 = vadd.f32 0.0, %v2793
      %2795 = vmatmul.bf16.gmra.mxu0 %v2683
      %v2796 = vpop.f32.mrf.mxu0
      %v2797 = vadd.f32 0.0, %v2796
      %v2798 = vpop.f32.mrf.mxu0
      %v2799 = vadd.f32 0.0, %v2798
      %2800 = vmatmul.bf16.gmra.mxu0 %v2686
      %v2801 = vpop.f32.mrf.mxu0
      %v2802 = vadd.f32 0.0, %v2801
      %v2803 = vpop.f32.mrf.mxu0
      %v2804 = vadd.f32 0.0, %v2803
      %2805 = vmatmul.bf16.gmra.mxu0 %v2689
      %v2806 = vpop.f32.mrf.mxu0
      %v2807 = vadd.f32 0.0, %v2806
      %v2808 = vpop.f32.mrf.mxu0
      %v2809 = vadd.f32 0.0, %v2808
      %2810 = vmatmul.bf16.gmra.mxu0 %v2692
      %v2811 = vpop.f32.mrf.mxu0
      %v2812 = vadd.f32 0.0, %v2811
      %v2813 = vpop.f32.mrf.mxu0
      %v2814 = vadd.f32 0.0, %v2813
      %2815 = vmatmul.bf16.gmra.mxu0 %v2695
      %v2816 = vpop.f32.mrf.mxu0
      %v2817 = vadd.f32 0.0, %v2816
      %v2818 = vpop.f32.mrf.mxu0
      %v2819 = vadd.f32 0.0, %v2818
      %2820 = vmatmul.bf16.gmra.mxu0 %v2698
      %v2821 = vpop.f32.mrf.mxu0
      %v2822 = vadd.f32 0.0, %v2821
      %v2823 = vpop.f32.mrf.mxu0
      %v2824 = vadd.f32 0.0, %v2823
      %2825 = vmatmul.bf16.gmra.mxu0 %v2701
      %v2826 = vpop.f32.mrf.mxu0
      %v2827 = vadd.f32 0.0, %v2826
      %v2828 = vpop.f32.mrf.mxu0
      %v2829 = vadd.f32 0.0, %v2828
      %2830 = vmatmul.bf16.gmra.mxu0 %v2704
      %v2831 = vpop.f32.mrf.mxu0
      %v2832 = vadd.f32 0.0, %v2831
      %v2833 = vpop.f32.mrf.mxu0
      %v2834 = vadd.f32 0.0, %v2833
      %2835 = vmatmul.bf16.gmra.mxu0 %v2707
      %v2836 = vpop.f32.mrf.mxu0
      %v2837 = vadd.f32 0.0, %v2836
      %v2838 = vpop.f32.mrf.mxu0
      %v2839 = vadd.f32 0.0, %v2838
      %2840 = vdwg.mxu0
      %v2841 = vld [vmem:[#allocation3] sm:$0xff]
      %v2842 = vld [vmem:[#allocation3 + $0x8] sm:$0xff]
      %v2843 = vld [vmem:[#allocation3 + $0x10] sm:$0xff]
      %v2844 = vld [vmem:[#allocation3 + $0x18] sm:$0xff]
      %v2845 = vld [vmem:[#allocation3 + $0x20] sm:$0xff]
      %v2846 = vld [vmem:[#allocation3 + $0x28] sm:$0xff]
      %v2847 = vld [vmem:[#allocation3 + $0x30] sm:$0xff]
      %v2848 = vld [vmem:[#allocation3 + $0x38] sm:$0xff]
      %v2849 = vld [vmem:[#allocation3 + $0x40] sm:$0xff]
      %v2850 = vld [vmem:[#allocation3 + $0x48] sm:$0xff]
      %v2851 = vld [vmem:[#allocation3 + $0x50] sm:$0xff]
      %v2852 = vld [vmem:[#allocation3 + $0x58] sm:$0xff]
      %v2853 = vld [vmem:[#allocation3 + $0x60] sm:$0xff]
      %v2854 = vld [vmem:[#allocation3 + $0x68] sm:$0xff]
      %v2855 = vld [vmem:[#allocation3 + $0x70] sm:$0xff]
      %v2856 = vld [vmem:[#allocation3 + $0x78] sm:$0xff]
      %v2857 = vld [vmem:[#allocation3 + $0x80] sm:$0xff]
      %v2858 = vld [vmem:[#allocation3 + $0x88] sm:$0xff]
      %v2859 = vld [vmem:[#allocation3 + $0x90] sm:$0xff]
      %v2860 = vld [vmem:[#allocation3 + $0x98] sm:$0xff]
      %v2861 = vld [vmem:[#allocation3 + $0xa0] sm:$0xff]
      %v2862 = vld [vmem:[#allocation3 + $0xa8] sm:$0xff]
      %v2863 = vld [vmem:[#allocation3 + $0xb0] sm:$0xff]
      %v2864 = vld [vmem:[#allocation3 + $0xb8] sm:$0xff]
      %v2865 = vld [vmem:[#allocation3 + $0xc0] sm:$0xff]
      %v2866 = vld [vmem:[#allocation3 + $0xc8] sm:$0xff]
      %v2867 = vld [vmem:[#allocation3 + $0xd0] sm:$0xff]
      %v2868 = vld [vmem:[#allocation3 + $0xd8] sm:$0xff]
      %v2869 = vld [vmem:[#allocation3 + $0xe0] sm:$0xff]
      %v2870 = vld [vmem:[#allocation3 + $0xe8] sm:$0xff]
      %v2871 = vld [vmem:[#allocation3 + $0xf0] sm:$0xff]
      %v2872 = vld [vmem:[#allocation3 + $0xf8] sm:$0xff]
      %v2873 = vld [vmem:[#allocation3 + $0x100] sm:$0xff]
      %v2874 = vld [vmem:[#allocation3 + $0x108] sm:$0xff]
      %v2875 = vld [vmem:[#allocation3 + $0x110] sm:$0xff]
      %v2876 = vld [vmem:[#allocation3 + $0x118] sm:$0xff]
      %v2877 = vld [vmem:[#allocation3 + $0x120] sm:$0xff]
      %v2878 = vld [vmem:[#allocation3 + $0x128] sm:$0xff]
      %v2879 = vld [vmem:[#allocation3 + $0x130] sm:$0xff]
      %v2880 = vld [vmem:[#allocation3 + $0x138] sm:$0xff]
      %v2881 = vld [vmem:[#allocation3 + $0x140] sm:$0xff]
      %v2882 = vld [vmem:[#allocation3 + $0x148] sm:$0xff]
      %v2883 = vld [vmem:[#allocation3 + $0x150] sm:$0xff]
      %v2884 = vld [vmem:[#allocation3 + $0x158] sm:$0xff]
      %v2885 = vld [vmem:[#allocation3 + $0x160] sm:$0xff]
      %v2886 = vld [vmem:[#allocation3 + $0x168] sm:$0xff]
      %v2887 = vld [vmem:[#allocation3 + $0x170] sm:$0xff]
      %v2888 = vld [vmem:[#allocation3 + $0x178] sm:$0xff]
      %v2889 = vadd.f32 %v2841, %v2722
      %v2890 = vadd.f32 %v2842, %v2724
      %v2891 = vadd.f32 %v2843, %v2727
      %v2892 = vadd.f32 %v2844, %v2729
      %v2893 = vadd.f32 %v2845, %v2732
      %v2894 = vadd.f32 %v2846, %v2734
      %v2895 = vadd.f32 %v2847, %v2737
      %v2896 = vadd.f32 %v2848, %v2739
      %v2897 = vadd.f32 %v2849, %v2742
      %v2898 = vadd.f32 %v2850, %v2744
      %v2899 = vadd.f32 %v2851, %v2747
      %v2900 = vadd.f32 %v2852, %v2749
      %v2901 = vadd.f32 %v2853, %v2752
      %v2902 = vadd.f32 %v2854, %v2754
      %v2903 = vadd.f32 %v2855, %v2757
      %v2904 = vadd.f32 %v2856, %v2759
      %v2905 = vadd.f32 %v2857, %v2762
      %v2906 = vadd.f32 %v2858, %v2764
      %v2907 = vadd.f32 %v2859, %v2767
      %v2908 = vadd.f32 %v2860, %v2769
      %v2909 = vadd.f32 %v2861, %v2772
      %v2910 = vadd.f32 %v2862, %v2774
      %v2911 = vadd.f32 %v2863, %v2777
      %v2912 = vadd.f32 %v2864, %v2779
      %v2913 = vadd.f32 %v2865, %v2782
      %v2914 = vadd.f32 %v2866, %v2784
      %v2915 = vadd.f32 %v2867, %v2787
      %v2916 = vadd.f32 %v2868, %v2789
      %v2917 = vadd.f32 %v2869, %v2792
      %v2918 = vadd.f32 %v2870, %v2794
      %v2919 = vadd.f32 %v2871, %v2797
      %v2920 = vadd.f32 %v2872, %v2799
      %v2921 = vadd.f32 %v2873, %v2802
      %v2922 = vadd.f32 %v2874, %v2804
      %v2923 = vadd.f32 %v2875, %v2807
      %v2924 = vadd.f32 %v2876, %v2809
      %v2925 = vadd.f32 %v2877, %v2812
      %v2926 = vadd.f32 %v2878, %v2814
      %v2927 = vadd.f32 %v2879, %v2817
      %v2928 = vadd.f32 %v2880, %v2819
      %v2929 = vadd.f32 %v2881, %v2822
      %v2930 = vadd.f32 %v2882, %v2824
      %v2931 = vadd.f32 %v2883, %v2827
      %v2932 = vadd.f32 %v2884, %v2829
      %v2933 = vadd.f32 %v2885, %v2832
      %v2934 = vadd.f32 %v2886, %v2834
      %v2935 = vadd.f32 %v2887, %v2837
      %v2936 = vadd.f32 %v2888, %v2839
      %2937 = vst.msk [vmem:[#allocation3] sm:$0xff] %vm922, %v2889
      %2938 = vst.msk [vmem:[#allocation3 + $0x8] sm:$0xff] %vm922, %v2890
      %2939 = vst.msk [vmem:[#allocation3 + $0x10] sm:$0xff] %vm922, %v2891
      %2940 = vst.msk [vmem:[#allocation3 + $0x18] sm:$0xff] %vm922, %v2892
      %2941 = vst.msk [vmem:[#allocation3 + $0x20] sm:$0xff] %vm922, %v2893
      %2942 = vst.msk [vmem:[#allocation3 + $0x28] sm:$0xff] %vm922, %v2894
      %2943 = vst.msk [vmem:[#allocation3 + $0x30] sm:$0xff] %vm922, %v2895
      %2944 = vst.msk [vmem:[#allocation3 + $0x38] sm:$0xff] %vm922, %v2896
      %2945 = vst.msk [vmem:[#allocation3 + $0x40] sm:$0xff] %vm922, %v2897
      %2946 = vst.msk [vmem:[#allocation3 + $0x48] sm:$0xff] %vm922, %v2898
      %2947 = vst.msk [vmem:[#allocation3 + $0x50] sm:$0xff] %vm922, %v2899
      %2948 = vst.msk [vmem:[#allocation3 + $0x58] sm:$0xff] %vm922, %v2900
      %2949 = vst.msk [vmem:[#allocation3 + $0x60] sm:$0xff] %vm922, %v2901
      %2950 = vst.msk [vmem:[#allocation3 + $0x68] sm:$0xff] %vm922, %v2902
      %2951 = vst.msk [vmem:[#allocation3 + $0x70] sm:$0xff] %vm922, %v2903
      %2952 = vst.msk [vmem:[#allocation3 + $0x78] sm:$0xff] %vm922, %v2904
      %2953 = vst.msk [vmem:[#allocation3 + $0x80] sm:$0xff] %vm922, %v2905
      %2954 = vst.msk [vmem:[#allocation3 + $0x88] sm:$0xff] %vm922, %v2906
      %2955 = vst.msk [vmem:[#allocation3 + $0x90] sm:$0xff] %vm922, %v2907
      %2956 = vst.msk [vmem:[#allocation3 + $0x98] sm:$0xff] %vm922, %v2908
      %2957 = vst.msk [vmem:[#allocation3 + $0xa0] sm:$0xff] %vm922, %v2909
      %2958 = vst.msk [vmem:[#allocation3 + $0xa8] sm:$0xff] %vm922, %v2910
      %2959 = vst.msk [vmem:[#allocation3 + $0xb0] sm:$0xff] %vm922, %v2911
      %2960 = vst.msk [vmem:[#allocation3 + $0xb8] sm:$0xff] %vm922, %v2912
      %2961 = vst.msk [vmem:[#allocation3 + $0xc0] sm:$0xff] %vm922, %v2913
      %2962 = vst.msk [vmem:[#allocation3 + $0xc8] sm:$0xff] %vm922, %v2914
      %2963 = vst.msk [vmem:[#allocation3 + $0xd0] sm:$0xff] %vm922, %v2915
      %2964 = vst.msk [vmem:[#allocation3 + $0xd8] sm:$0xff] %vm922, %v2916
      %2965 = vst.msk [vmem:[#allocation3 + $0xe0] sm:$0xff] %vm922, %v2917
      %2966 = vst.msk [vmem:[#allocation3 + $0xe8] sm:$0xff] %vm922, %v2918
      %2967 = vst.msk [vmem:[#allocation3 + $0xf0] sm:$0xff] %vm922, %v2919
      %2968 = vst.msk [vmem:[#allocation3 + $0xf8] sm:$0xff] %vm922, %v2920
      %2969 = vst.msk [vmem:[#allocation3 + $0x100] sm:$0xff] %vm922, %v2921
      %2970 = vst.msk [vmem:[#allocation3 + $0x108] sm:$0xff] %vm922, %v2922
      %2971 = vst.msk [vmem:[#allocation3 + $0x110] sm:$0xff] %vm922, %v2923
      %2972 = vst.msk [vmem:[#allocation3 + $0x118] sm:$0xff] %vm922, %v2924
      %2973 = vst.msk [vmem:[#allocation3 + $0x120] sm:$0xff] %vm922, %v2925
      %2974 = vst.msk [vmem:[#allocation3 + $0x128] sm:$0xff] %vm922, %v2926
      %2975 = vst.msk [vmem:[#allocation3 + $0x130] sm:$0xff] %vm922, %v2927
      %2976 = vst.msk [vmem:[#allocation3 + $0x138] sm:$0xff] %vm922, %v2928
      %2977 = vst.msk [vmem:[#allocation3 + $0x140] sm:$0xff] %vm922, %v2929
      %2978 = vst.msk [vmem:[#allocation3 + $0x148] sm:$0xff] %vm922, %v2930
      %2979 = vst.msk [vmem:[#allocation3 + $0x150] sm:$0xff] %vm922, %v2931
      %2980 = vst.msk [vmem:[#allocation3 + $0x158] sm:$0xff] %vm922, %v2932
      %2981 = vst.msk [vmem:[#allocation3 + $0x160] sm:$0xff] %vm922, %v2933
      %2982 = vst.msk [vmem:[#allocation3 + $0x168] sm:$0xff] %vm922, %v2934
      %2983 = vst.msk [vmem:[#allocation3 + $0x170] sm:$0xff] %vm922, %v2935
      %2984 = vst.msk [vmem:[#allocation3 + $0x178] sm:$0xff] %vm922, %v2936
      %v2985 = vld [vmem:[#allocation2 + $0xc] sm:$0xf]
      %v2986 = vld [vmem:[#allocation2 + $0x10] sm:$0xf]
      %v2987 = vld [vmem:[#allocation2 + $0x14] sm:$0xf]
      %v2988 = vld [vmem:[#allocation2 + $0x18] sm:$0xf]
      %v2989 = vld [vmem:[#allocation2 + $0x1c] sm:$0xf]
      %v2990 = vld [vmem:[#allocation2 + $0x20] sm:$0xf]
      %v2991 = vld [vmem:[#allocation2 + $0x24] sm:$0xf]
      %v2992 = vld [vmem:[#allocation2 + $0x28] sm:$0xf]
      %v2993 = vld [vmem:[#allocation2 + $0x2c] sm:$0xf]
      %v2994 = vld [vmem:[#allocation2 + $0x30] sm:$0xf]
      %v2995 = vld [vmem:[#allocation2 + $0x34] sm:$0xf]
      %v2996 = vld [vmem:[#allocation2 + $0x38] sm:$0xf]
      %v2997 = vld [vmem:[#allocation2 + $0x3c] sm:$0xf]
      %v2998 = vld [vmem:[#allocation2 + $0x40] sm:$0xf]
      %v2999 = vld [vmem:[#allocation2 + $0x44] sm:$0xf]
      %v3000 = vld [vmem:[#allocation2 + $0x48] sm:$0xf]
      %v3001 = vld [vmem:[#allocation2 + $0x4c] sm:$0xf]
      %v3002 = vld [vmem:[#allocation2 + $0x50] sm:$0xf]
      %v3003 = vld [vmem:[#allocation2 + $0x54] sm:$0xf]
      %v3004 = vld [vmem:[#allocation2 + $0x58] sm:$0xf]
      %v3005 = vld [vmem:[#allocation2 + $0x5c] sm:$0xf]
      %v3006 = vld [vmem:[#allocation2 + $0x60] sm:$0xf]
      %v3007 = vld [vmem:[#allocation2 + $0x64] sm:$0xf]
      %v3008 = vld [vmem:[#allocation2 + $0x68] sm:$0xf]
      %v3009 = vld [vmem:[#allocation2 + $0x6c] sm:$0xf]
      %v3010 = vld [vmem:[#allocation2 + $0x70] sm:$0xf]
      %v3011 = vld [vmem:[#allocation2 + $0x74] sm:$0xf]
      %v3012 = vld [vmem:[#allocation2 + $0x78] sm:$0xf]
      %v3013 = vld [vmem:[#allocation2 + $0x7c] sm:$0xf]
      %v3014 = vld [vmem:[#allocation2 + $0x80] sm:$0xf]
      %v3015 = vld [vmem:[#allocation2 + $0x84] sm:$0xf]
      %v3016 = vld [vmem:[#allocation2 + $0x88] sm:$0xf]
      %v3017 = vld [vmem:[#allocation2 + $0x8c] sm:$0xf]
      %v3018 = vld [vmem:[#allocation2 + $0x90] sm:$0xf]
      %v3019 = vld [vmem:[#allocation2 + $0x94] sm:$0xf]
      %v3020 = vld [vmem:[#allocation2 + $0x98] sm:$0xf]
      %v3021 = vld [vmem:[#allocation2 + $0x9c] sm:$0xf]
      %v3022 = vld [vmem:[#allocation2 + $0xa0] sm:$0xf]
      %v3023 = vld [vmem:[#allocation2 + $0xa4] sm:$0xf]
      %v3024 = vld [vmem:[#allocation2 + $0xa8] sm:$0xf]
      %v3025 = vld [vmem:[#allocation2 + $0xac] sm:$0xf]
      %v3026 = vld [vmem:[#allocation2 + $0xb0] sm:$0xf]
      %v3027 = vld [vmem:[#allocation2 + $0xb4] sm:$0xf]
      %v3028 = vld [vmem:[#allocation2 + $0xb8] sm:$0xf]
      %v3029 = vld [vmem:[#allocation2 + $0xbc] sm:$0xf]
      %v3030 = vld [vmem:[#allocation2 + $0xc0] sm:$0xf]
      %v3031 = vld [vmem:[#allocation2 + $0xc4] sm:$0xf]
      %v3032 = vld [vmem:[#allocation2 + $0xc8] sm:$0xf]
      %v3033 = vld [vmem:[#allocation2 + $0xcc] sm:$0x1]
      %s3034 = scalar_lea.vmem %s1, 8
      %v3035 = vld [vmem:[%s3034] sm:$0x3]
      %v3085 = vunpack.c.l.b16 %v2985
      %v3086 = vunpack.c.l.b16 %v2986
      %v3087 = vunpack.c.l.b16 %v2987
      %v3088 = vunpack.c.l.b16 %v2988
      %v3089 = vunpack.c.l.b16 %v2989
      %v3090 = vunpack.c.l.b16 %v2990
      %v3091 = vunpack.c.l.b16 %v2991
      %v3092 = vunpack.c.l.b16 %v2992
      %v3093 = vunpack.c.l.b16 %v2993
      %v3094 = vunpack.c.l.b16 %v2994
      %v3095 = vunpack.c.l.b16 %v2995
      %v3096 = vunpack.c.l.b16 %v2996
      %v3097 = vunpack.c.l.b16 %v2997
      %v3098 = vunpack.c.l.b16 %v2998
      %v3099 = vunpack.c.l.b16 %v2999
      %v3100 = vunpack.c.l.b16 %v3000
      %v3101 = vunpack.c.l.b16 %v3001
      %v3102 = vunpack.c.l.b16 %v3002
      %v3103 = vunpack.c.l.b16 %v3003
      %v3104 = vunpack.c.l.b16 %v3004
      %v3105 = vunpack.c.l.b16 %v3005
      %v3106 = vunpack.c.l.b16 %v3006
      %v3107 = vunpack.c.l.b16 %v3007
      %v3108 = vunpack.c.l.b16 %v3008
      %v3109 = vunpack.c.l.b16 %v3009
      %v3110 = vunpack.c.l.b16 %v3010
      %v3111 = vunpack.c.l.b16 %v3011
      %v3112 = vunpack.c.l.b16 %v3012
      %v3113 = vunpack.c.l.b16 %v3013
      %v3114 = vunpack.c.l.b16 %v3014
      %v3115 = vunpack.c.l.b16 %v3015
      %v3116 = vunpack.c.l.b16 %v3016
      %v3117 = vunpack.c.l.b16 %v3017
      %v3118 = vunpack.c.l.b16 %v3018
      %v3119 = vunpack.c.l.b16 %v3019
      %v3120 = vunpack.c.l.b16 %v3020
      %v3121 = vunpack.c.l.b16 %v3021
      %v3122 = vunpack.c.l.b16 %v3022
      %v3123 = vunpack.c.l.b16 %v3023
      %v3124 = vunpack.c.l.b16 %v3024
      %v3125 = vunpack.c.l.b16 %v3025
      %v3126 = vunpack.c.l.b16 %v3026
      %v3127 = vunpack.c.l.b16 %v3027
      %v3128 = vunpack.c.l.b16 %v3028
      %v3129 = vunpack.c.l.b16 %v3029
      %v3130 = vunpack.c.l.b16 %v3030
      %v3131 = vunpack.c.l.b16 %v3031
      %v3132 = vunpack.c.l.b16 %v3032
      %v3133 = vunpack.c.l.b16 %v3033
      %v3134 = vpack.c.b16 %v3086, %v3085
      %v3135 = vpack.c.b16 %v3088, %v3087
      %v3136 = vpack.c.b16 %v3090, %v3089
      %v3137 = vpack.c.b16 %v3092, %v3091
      %v3138 = vpack.c.b16 %v3094, %v3093
      %v3139 = vpack.c.b16 %v3096, %v3095
      %v3140 = vpack.c.b16 %v3098, %v3097
      %v3141 = vpack.c.b16 %v3100, %v3099
      %v3142 = vpack.c.b16 %v3102, %v3101
      %v3143 = vpack.c.b16 %v3104, %v3103
      %v3144 = vpack.c.b16 %v3106, %v3105
      %v3145 = vpack.c.b16 %v3108, %v3107
      %v3146 = vpack.c.b16 %v3110, %v3109
      %v3147 = vpack.c.b16 %v3112, %v3111
      %v3148 = vpack.c.b16 %v3114, %v3113
      %v3149 = vpack.c.b16 %v3116, %v3115
      %v3150 = vpack.c.b16 %v3118, %v3117
      %v3151 = vpack.c.b16 %v3120, %v3119
      %v3152 = vpack.c.b16 %v3122, %v3121
      %v3153 = vpack.c.b16 %v3124, %v3123
      %v3154 = vpack.c.b16 %v3126, %v3125
      %v3155 = vpack.c.b16 %v3128, %v3127
      %v3156 = vpack.c.b16 %v3130, %v3129
      %v3157 = vpack.c.b16 %v3132, %v3131
      %v3158 = vpack.c.b16 %v3133, %v3133
      %v3160 = vshrl.u32 %v3134, 16
      %v3162 = vshll.u32 %v3134, 16
      %v3164 = vrot.slane %v3162, 1
      %v3165 = vor.u32 %v3160, %v3164
      %v3167 = vshll.u32 %v3135, 16
      %v3169 = vrot.slane %v3167, 1
      %v3170 = vsel %vm1350, %v3165, %v3169
      %v3171 = vshrl.u32 %v3135, 16
      %v3173 = vor.u32 %v3171, %v3169
      %v3175 = vshll.u32 %v3136, 16
      %v3177 = vrot.slane %v3175, 1
      %v3178 = vsel %vm1350, %v3173, %v3177
      %v3179 = vshrl.u32 %v3136, 16
      %v3181 = vor.u32 %v3179, %v3177
      %v3183 = vshll.u32 %v3137, 16
      %v3185 = vrot.slane %v3183, 1
      %v3186 = vsel %vm1350, %v3181, %v3185
      %v3187 = vshrl.u32 %v3137, 16
      %v3189 = vor.u32 %v3187, %v3185
      %v3191 = vshll.u32 %v3138, 16
      %v3193 = vrot.slane %v3191, 1
      %v3194 = vsel %vm1350, %v3189, %v3193
      %v3195 = vshrl.u32 %v3138, 16
      %v3197 = vor.u32 %v3195, %v3193
      %v3199 = vshll.u32 %v3139, 16
      %v3201 = vrot.slane %v3199, 1
      %v3202 = vsel %vm1350, %v3197, %v3201
      %v3203 = vshrl.u32 %v3139, 16
      %v3205 = vor.u32 %v3203, %v3201
      %v3207 = vshll.u32 %v3140, 16
      %v3209 = vrot.slane %v3207, 1
      %v3210 = vsel %vm1350, %v3205, %v3209
      %v3211 = vshrl.u32 %v3140, 16
      %v3213 = vor.u32 %v3211, %v3209
      %v3215 = vshll.u32 %v3141, 16
      %v3217 = vrot.slane %v3215, 1
      %v3218 = vsel %vm1350, %v3213, %v3217
      %v3219 = vshrl.u32 %v3141, 16
      %v3221 = vor.u32 %v3219, %v3217
      %v3223 = vshll.u32 %v3142, 16
      %v3225 = vrot.slane %v3223, 1
      %v3226 = vsel %vm1350, %v3221, %v3225
      %v3227 = vshrl.u32 %v3142, 16
      %v3229 = vor.u32 %v3227, %v3225
      %v3231 = vshll.u32 %v3143, 16
      %v3233 = vrot.slane %v3231, 1
      %v3234 = vsel %vm1350, %v3229, %v3233
      %v3235 = vshrl.u32 %v3143, 16
      %v3237 = vor.u32 %v3235, %v3233
      %v3239 = vshll.u32 %v3144, 16
      %v3241 = vrot.slane %v3239, 1
      %v3242 = vsel %vm1350, %v3237, %v3241
      %v3243 = vshrl.u32 %v3144, 16
      %v3245 = vor.u32 %v3243, %v3241
      %v3247 = vshll.u32 %v3145, 16
      %v3249 = vrot.slane %v3247, 1
      %v3250 = vsel %vm1350, %v3245, %v3249
      %v3251 = vshrl.u32 %v3145, 16
      %v3253 = vor.u32 %v3251, %v3249
      %v3255 = vshll.u32 %v3146, 16
      %v3257 = vrot.slane %v3255, 1
      %v3258 = vsel %vm1350, %v3253, %v3257
      %v3259 = vshrl.u32 %v3146, 16
      %v3261 = vor.u32 %v3259, %v3257
      %v3263 = vshll.u32 %v3147, 16
      %v3265 = vrot.slane %v3263, 1
      %v3266 = vsel %vm1350, %v3261, %v3265
      %v3267 = vshrl.u32 %v3147, 16
      %v3269 = vor.u32 %v3267, %v3265
      %v3271 = vshll.u32 %v3148, 16
      %v3273 = vrot.slane %v3271, 1
      %v3274 = vsel %vm1350, %v3269, %v3273
      %v3275 = vshrl.u32 %v3148, 16
      %v3277 = vor.u32 %v3275, %v3273
      %v3279 = vshll.u32 %v3149, 16
      %v3281 = vrot.slane %v3279, 1
      %v3282 = vsel %vm1350, %v3277, %v3281
      %v3283 = vshrl.u32 %v3149, 16
      %v3285 = vor.u32 %v3283, %v3281
      %v3287 = vshll.u32 %v3150, 16
      %v3289 = vrot.slane %v3287, 1
      %v3290 = vsel %vm1350, %v3285, %v3289
      %v3291 = vshrl.u32 %v3150, 16
      %v3293 = vor.u32 %v3291, %v3289
      %v3295 = vshll.u32 %v3151, 16
      %v3297 = vrot.slane %v3295, 1
      %v3298 = vsel %vm1350, %v3293, %v3297
      %v3299 = vshrl.u32 %v3151, 16
      %v3301 = vor.u32 %v3299, %v3297
      %v3303 = vshll.u32 %v3152, 16
      %v3305 = vrot.slane %v3303, 1
      %v3306 = vsel %vm1350, %v3301, %v3305
      %v3307 = vshrl.u32 %v3152, 16
      %v3309 = vor.u32 %v3307, %v3305
      %v3311 = vshll.u32 %v3153, 16
      %v3313 = vrot.slane %v3311, 1
      %v3314 = vsel %vm1350, %v3309, %v3313
      %v3315 = vshrl.u32 %v3153, 16
      %v3317 = vor.u32 %v3315, %v3313
      %v3319 = vshll.u32 %v3154, 16
      %v3321 = vrot.slane %v3319, 1
      %v3322 = vsel %vm1350, %v3317, %v3321
      %v3323 = vshrl.u32 %v3154, 16
      %v3325 = vor.u32 %v3323, %v3321
      %v3327 = vshll.u32 %v3155, 16
      %v3329 = vrot.slane %v3327, 1
      %v3330 = vsel %vm1350, %v3325, %v3329
      %v3331 = vshrl.u32 %v3155, 16
      %v3333 = vor.u32 %v3331, %v3329
      %v3335 = vshll.u32 %v3156, 16
      %v3337 = vrot.slane %v3335, 1
      %v3338 = vsel %vm1350, %v3333, %v3337
      %v3339 = vshrl.u32 %v3156, 16
      %v3341 = vor.u32 %v3339, %v3337
      %v3343 = vshll.u32 %v3157, 16
      %v3345 = vrot.slane %v3343, 1
      %v3346 = vsel %vm1350, %v3341, %v3345
      %v3347 = vshrl.u32 %v3157, 16
      %v3349 = vor.u32 %v3347, %v3345
      %v3351 = vshll.u32 %v3158, 16
      %v3353 = vrot.slane %v3351, 1
      %v3354 = vsel %vm1350, %v3349, %v3353
      %v3356 = vsel %vm922, %v3170, 0
      %v3359 = vsel %vm922, %v3178, 0
      %v3362 = vsel %vm922, %v3186, 0
      %v3365 = vsel %vm922, %v3194, 0
      %v3368 = vsel %vm922, %v3202, 0
      %v3371 = vsel %vm922, %v3210, 0
      %v3374 = vsel %vm922, %v3218, 0
      %v3377 = vsel %vm922, %v3226, 0
      %v3380 = vsel %vm922, %v3234, 0
      %v3383 = vsel %vm922, %v3242, 0
      %v3386 = vsel %vm922, %v3250, 0
      %v3389 = vsel %vm922, %v3258, 0
      %v3392 = vsel %vm922, %v3266, 0
      %v3395 = vsel %vm922, %v3274, 0
      %v3398 = vsel %vm922, %v3282, 0
      %v3401 = vsel %vm922, %v3290, 0
      %v3404 = vsel %vm922, %v3298, 0
      %v3407 = vsel %vm922, %v3306, 0
      %v3410 = vsel %vm922, %v3314, 0
      %v3413 = vsel %vm922, %v3322, 0
      %v3416 = vsel %vm922, %v3330, 0
      %v3419 = vsel %vm922, %v3338, 0
      %v3422 = vsel %vm922, %v3346, 0
      %v3425 = vsel %vm922, %v3354, 0
      %v3428 = vsel %vm995, %v3035, 0
      %3430 = vmatpush.bf16.msra.mxu0 0
      %3431 = vmatpush.bf16.msra.mxu0 0
      %3432 = vmatpush.bf16.msra.mxu0 0
      %3433 = vmatpush.bf16.msra.mxu0 0
      %3434 = vmatpush.bf16.msra.mxu0 0
      %3435 = vmatpush.bf16.msra.mxu0 0
      %3436 = vmatpush.bf16.msra.mxu0 0
      %3437 = vmatpush.bf16.msra.mxu0 %v3428
      %3438 = vmatmul.bf16.gmra.mxu0 %v3356
      %v3439 = vpop.f32.mrf.mxu0
      %v3440 = vadd.f32 0.0, %v3439
      %v3441 = vpop.f32.mrf.mxu0
      %v3442 = vadd.f32 0.0, %v3441
      %3443 = vmatmul.bf16.gmra.mxu0 %v3359
      %v3444 = vpop.f32.mrf.mxu0
      %v3445 = vadd.f32 0.0, %v3444
      %v3446 = vpop.f32.mrf.mxu0
      %v3447 = vadd.f32 0.0, %v3446
      %3448 = vmatmul.bf16.gmra.mxu0 %v3362
      %v3449 = vpop.f32.mrf.mxu0
      %v3450 = vadd.f32 0.0, %v3449
      %v3451 = vpop.f32.mrf.mxu0
      %v3452 = vadd.f32 0.0, %v3451
      %3453 = vmatmul.bf16.gmra.mxu0 %v3365
      %v3454 = vpop.f32.mrf.mxu0
      %v3455 = vadd.f32 0.0, %v3454
      %v3456 = vpop.f32.mrf.mxu0
      %v3457 = vadd.f32 0.0, %v3456
      %3458 = vmatmul.bf16.gmra.mxu0 %v3368
      %v3459 = vpop.f32.mrf.mxu0
      %v3460 = vadd.f32 0.0, %v3459
      %v3461 = vpop.f32.mrf.mxu0
      %v3462 = vadd.f32 0.0, %v3461
      %3463 = vmatmul.bf16.gmra.mxu0 %v3371
      %v3464 = vpop.f32.mrf.mxu0
      %v3465 = vadd.f32 0.0, %v3464
      %v3466 = vpop.f32.mrf.mxu0
      %v3467 = vadd.f32 0.0, %v3466
      %3468 = vmatmul.bf16.gmra.mxu0 %v3374
      %v3469 = vpop.f32.mrf.mxu0
      %v3470 = vadd.f32 0.0, %v3469
      %v3471 = vpop.f32.mrf.mxu0
      %v3472 = vadd.f32 0.0, %v3471
      %3473 = vmatmul.bf16.gmra.mxu0 %v3377
      %v3474 = vpop.f32.mrf.mxu0
      %v3475 = vadd.f32 0.0, %v3474
      %v3476 = vpop.f32.mrf.mxu0
      %v3477 = vadd.f32 0.0, %v3476
      %3478 = vmatmul.bf16.gmra.mxu0 %v3380
      %v3479 = vpop.f32.mrf.mxu0
      %v3480 = vadd.f32 0.0, %v3479
      %v3481 = vpop.f32.mrf.mxu0
      %v3482 = vadd.f32 0.0, %v3481
      %3483 = vmatmul.bf16.gmra.mxu0 %v3383
      %v3484 = vpop.f32.mrf.mxu0
      %v3485 = vadd.f32 0.0, %v3484
      %v3486 = vpop.f32.mrf.mxu0
      %v3487 = vadd.f32 0.0, %v3486
      %3488 = vmatmul.bf16.gmra.mxu0 %v3386
      %v3489 = vpop.f32.mrf.mxu0
      %v3490 = vadd.f32 0.0, %v3489
      %v3491 = vpop.f32.mrf.mxu0
      %v3492 = vadd.f32 0.0, %v3491
      %3493 = vmatmul.bf16.gmra.mxu0 %v3389
      %v3494 = vpop.f32.mrf.mxu0
      %v3495 = vadd.f32 0.0, %v3494
      %v3496 = vpop.f32.mrf.mxu0
      %v3497 = vadd.f32 0.0, %v3496
      %3498 = vmatmul.bf16.gmra.mxu0 %v3392
      %v3499 = vpop.f32.mrf.mxu0
      %v3500 = vadd.f32 0.0, %v3499
      %v3501 = vpop.f32.mrf.mxu0
      %v3502 = vadd.f32 0.0, %v3501
      %3503 = vmatmul.bf16.gmra.mxu0 %v3395
      %v3504 = vpop.f32.mrf.mxu0
      %v3505 = vadd.f32 0.0, %v3504
      %v3506 = vpop.f32.mrf.mxu0
      %v3507 = vadd.f32 0.0, %v3506
      %3508 = vmatmul.bf16.gmra.mxu0 %v3398
      %v3509 = vpop.f32.mrf.mxu0
      %v3510 = vadd.f32 0.0, %v3509
      %v3511 = vpop.f32.mrf.mxu0
      %v3512 = vadd.f32 0.0, %v3511
      %3513 = vmatmul.bf16.gmra.mxu0 %v3401
      %v3514 = vpop.f32.mrf.mxu0
      %v3515 = vadd.f32 0.0, %v3514
      %v3516 = vpop.f32.mrf.mxu0
      %v3517 = vadd.f32 0.0, %v3516
      %3518 = vmatmul.bf16.gmra.mxu0 %v3404
      %v3519 = vpop.f32.mrf.mxu0
      %v3520 = vadd.f32 0.0, %v3519
      %v3521 = vpop.f32.mrf.mxu0
      %v3522 = vadd.f32 0.0, %v3521
      %3523 = vmatmul.bf16.gmra.mxu0 %v3407
      %v3524 = vpop.f32.mrf.mxu0
      %v3525 = vadd.f32 0.0, %v3524
      %v3526 = vpop.f32.mrf.mxu0
      %v3527 = vadd.f32 0.0, %v3526
      %3528 = vmatmul.bf16.gmra.mxu0 %v3410
      %v3529 = vpop.f32.mrf.mxu0
      %v3530 = vadd.f32 0.0, %v3529
      %v3531 = vpop.f32.mrf.mxu0
      %v3532 = vadd.f32 0.0, %v3531
      %3533 = vmatmul.bf16.gmra.mxu0 %v3413
      %v3534 = vpop.f32.mrf.mxu0
      %v3535 = vadd.f32 0.0, %v3534
      %v3536 = vpop.f32.mrf.mxu0
      %v3537 = vadd.f32 0.0, %v3536
      %3538 = vmatmul.bf16.gmra.mxu0 %v3416
      %v3539 = vpop.f32.mrf.mxu0
      %v3540 = vadd.f32 0.0, %v3539
      %v3541 = vpop.f32.mrf.mxu0
      %v3542 = vadd.f32 0.0, %v3541
      %3543 = vmatmul.bf16.gmra.mxu0 %v3419
      %v3544 = vpop.f32.mrf.mxu0
      %v3545 = vadd.f32 0.0, %v3544
      %v3546 = vpop.f32.mrf.mxu0
      %v3547 = vadd.f32 0.0, %v3546
      %3548 = vmatmul.bf16.gmra.mxu0 %v3422
      %v3549 = vpop.f32.mrf.mxu0
      %v3550 = vadd.f32 0.0, %v3549
      %v3551 = vpop.f32.mrf.mxu0
      %v3552 = vadd.f32 0.0, %v3551
      %3553 = vmatmul.bf16.gmra.mxu0 %v3425
      %v3554 = vpop.f32.mrf.mxu0
      %v3555 = vadd.f32 0.0, %v3554
      %v3556 = vpop.f32.mrf.mxu0
      %v3557 = vadd.f32 0.0, %v3556
      %3558 = vdwg.mxu0
      %v3559 = vld [vmem:[#allocation3] sm:$0xff]
      %v3560 = vld [vmem:[#allocation3 + $0x8] sm:$0xff]
      %v3561 = vld [vmem:[#allocation3 + $0x10] sm:$0xff]
      %v3562 = vld [vmem:[#allocation3 + $0x18] sm:$0xff]
      %v3563 = vld [vmem:[#allocation3 + $0x20] sm:$0xff]
      %v3564 = vld [vmem:[#allocation3 + $0x28] sm:$0xff]
      %v3565 = vld [vmem:[#allocation3 + $0x30] sm:$0xff]
      %v3566 = vld [vmem:[#allocation3 + $0x38] sm:$0xff]
      %v3567 = vld [vmem:[#allocation3 + $0x40] sm:$0xff]
      %v3568 = vld [vmem:[#allocation3 + $0x48] sm:$0xff]
      %v3569 = vld [vmem:[#allocation3 + $0x50] sm:$0xff]
      %v3570 = vld [vmem:[#allocation3 + $0x58] sm:$0xff]
      %v3571 = vld [vmem:[#allocation3 + $0x60] sm:$0xff]
      %v3572 = vld [vmem:[#allocation3 + $0x68] sm:$0xff]
      %v3573 = vld [vmem:[#allocation3 + $0x70] sm:$0xff]
      %v3574 = vld [vmem:[#allocation3 + $0x78] sm:$0xff]
      %v3575 = vld [vmem:[#allocation3 + $0x80] sm:$0xff]
      %v3576 = vld [vmem:[#allocation3 + $0x88] sm:$0xff]
      %v3577 = vld [vmem:[#allocation3 + $0x90] sm:$0xff]
      %v3578 = vld [vmem:[#allocation3 + $0x98] sm:$0xff]
      %v3579 = vld [vmem:[#allocation3 + $0xa0] sm:$0xff]
      %v3580 = vld [vmem:[#allocation3 + $0xa8] sm:$0xff]
      %v3581 = vld [vmem:[#allocation3 + $0xb0] sm:$0xff]
      %v3582 = vld [vmem:[#allocation3 + $0xb8] sm:$0xff]
      %v3583 = vld [vmem:[#allocation3 + $0xc0] sm:$0xff]
      %v3584 = vld [vmem:[#allocation3 + $0xc8] sm:$0xff]
      %v3585 = vld [vmem:[#allocation3 + $0xd0] sm:$0xff]
      %v3586 = vld [vmem:[#allocation3 + $0xd8] sm:$0xff]
      %v3587 = vld [vmem:[#allocation3 + $0xe0] sm:$0xff]
      %v3588 = vld [vmem:[#allocation3 + $0xe8] sm:$0xff]
      %v3589 = vld [vmem:[#allocation3 + $0xf0] sm:$0xff]
      %v3590 = vld [vmem:[#allocation3 + $0xf8] sm:$0xff]
      %v3591 = vld [vmem:[#allocation3 + $0x100] sm:$0xff]
      %v3592 = vld [vmem:[#allocation3 + $0x108] sm:$0xff]
      %v3593 = vld [vmem:[#allocation3 + $0x110] sm:$0xff]
      %v3594 = vld [vmem:[#allocation3 + $0x118] sm:$0xff]
      %v3595 = vld [vmem:[#allocation3 + $0x120] sm:$0xff]
      %v3596 = vld [vmem:[#allocation3 + $0x128] sm:$0xff]
      %v3597 = vld [vmem:[#allocation3 + $0x130] sm:$0xff]
      %v3598 = vld [vmem:[#allocation3 + $0x138] sm:$0xff]
      %v3599 = vld [vmem:[#allocation3 + $0x140] sm:$0xff]
      %v3600 = vld [vmem:[#allocation3 + $0x148] sm:$0xff]
      %v3601 = vld [vmem:[#allocation3 + $0x150] sm:$0xff]
      %v3602 = vld [vmem:[#allocation3 + $0x158] sm:$0xff]
      %v3603 = vld [vmem:[#allocation3 + $0x160] sm:$0xff]
      %v3604 = vld [vmem:[#allocation3 + $0x168] sm:$0xff]
      %v3605 = vld [vmem:[#allocation3 + $0x170] sm:$0xff]
      %v3606 = vld [vmem:[#allocation3 + $0x178] sm:$0xff]
      %v3607 = vadd.f32 %v3559, %v3440
      %v3608 = vadd.f32 %v3560, %v3442
      %v3609 = vadd.f32 %v3561, %v3445
      %v3610 = vadd.f32 %v3562, %v3447
      %v3611 = vadd.f32 %v3563, %v3450
      %v3612 = vadd.f32 %v3564, %v3452
      %v3613 = vadd.f32 %v3565, %v3455
      %v3614 = vadd.f32 %v3566, %v3457
      %v3615 = vadd.f32 %v3567, %v3460
      %v3616 = vadd.f32 %v3568, %v3462
      %v3617 = vadd.f32 %v3569, %v3465
      %v3618 = vadd.f32 %v3570, %v3467
      %v3619 = vadd.f32 %v3571, %v3470
      %v3620 = vadd.f32 %v3572, %v3472
      %v3621 = vadd.f32 %v3573, %v3475
      %v3622 = vadd.f32 %v3574, %v3477
      %v3623 = vadd.f32 %v3575, %v3480
      %v3624 = vadd.f32 %v3576, %v3482
      %v3625 = vadd.f32 %v3577, %v3485
      %v3626 = vadd.f32 %v3578, %v3487
      %v3627 = vadd.f32 %v3579, %v3490
      %v3628 = vadd.f32 %v3580, %v3492
      %v3629 = vadd.f32 %v3581, %v3495
      %v3630 = vadd.f32 %v3582, %v3497
      %v3631 = vadd.f32 %v3583, %v3500
      %v3632 = vadd.f32 %v3584, %v3502
      %v3633 = vadd.f32 %v3585, %v3505
      %v3634 = vadd.f32 %v3586, %v3507
      %v3635 = vadd.f32 %v3587, %v3510
      %v3636 = vadd.f32 %v3588, %v3512
      %v3637 = vadd.f32 %v3589, %v3515
      %v3638 = vadd.f32 %v3590, %v3517
      %v3639 = vadd.f32 %v3591, %v3520
      %v3640 = vadd.f32 %v3592, %v3522
      %v3641 = vadd.f32 %v3593, %v3525
      %v3642 = vadd.f32 %v3594, %v3527
      %v3643 = vadd.f32 %v3595, %v3530
      %v3644 = vadd.f32 %v3596, %v3532
      %v3645 = vadd.f32 %v3597, %v3535
      %v3646 = vadd.f32 %v3598, %v3537
      %v3647 = vadd.f32 %v3599, %v3540
      %v3648 = vadd.f32 %v3600, %v3542
      %v3649 = vadd.f32 %v3601, %v3545
      %v3650 = vadd.f32 %v3602, %v3547
      %v3651 = vadd.f32 %v3603, %v3550
      %v3652 = vadd.f32 %v3604, %v3552
      %v3653 = vadd.f32 %v3605, %v3555
      %v3654 = vadd.f32 %v3606, %v3557
      %3655 = vst.msk [vmem:[#allocation3] sm:$0xff] %vm922, %v3607
      %3656 = vst.msk [vmem:[#allocation3 + $0x8] sm:$0xff] %vm922, %v3608
      %3657 = vst.msk [vmem:[#allocation3 + $0x10] sm:$0xff] %vm922, %v3609
      %3658 = vst.msk [vmem:[#allocation3 + $0x18] sm:$0xff] %vm922, %v3610
      %3659 = vst.msk [vmem:[#allocation3 + $0x20] sm:$0xff] %vm922, %v3611
      %3660 = vst.msk [vmem:[#allocation3 + $0x28] sm:$0xff] %vm922, %v3612
      %3661 = vst.msk [vmem:[#allocation3 + $0x30] sm:$0xff] %vm922, %v3613
      %3662 = vst.msk [vmem:[#allocation3 + $0x38] sm:$0xff] %vm922, %v3614
      %3663 = vst.msk [vmem:[#allocation3 + $0x40] sm:$0xff] %vm922, %v3615
      %3664 = vst.msk [vmem:[#allocation3 + $0x48] sm:$0xff] %vm922, %v3616
      %3665 = vst.msk [vmem:[#allocation3 + $0x50] sm:$0xff] %vm922, %v3617
      %3666 = vst.msk [vmem:[#allocation3 + $0x58] sm:$0xff] %vm922, %v3618
      %3667 = vst.msk [vmem:[#allocation3 + $0x60] sm:$0xff] %vm922, %v3619
      %3668 = vst.msk [vmem:[#allocation3 + $0x68] sm:$0xff] %vm922, %v3620
      %3669 = vst.msk [vmem:[#allocation3 + $0x70] sm:$0xff] %vm922, %v3621
      %3670 = vst.msk [vmem:[#allocation3 + $0x78] sm:$0xff] %vm922, %v3622
      %3671 = vst.msk [vmem:[#allocation3 + $0x80] sm:$0xff] %vm922, %v3623
      %3672 = vst.msk [vmem:[#allocation3 + $0x88] sm:$0xff] %vm922, %v3624
      %3673 = vst.msk [vmem:[#allocation3 + $0x90] sm:$0xff] %vm922, %v3625
      %3674 = vst.msk [vmem:[#allocation3 + $0x98] sm:$0xff] %vm922, %v3626
      %3675 = vst.msk [vmem:[#allocation3 + $0xa0] sm:$0xff] %vm922, %v3627
      %3676 = vst.msk [vmem:[#allocation3 + $0xa8] sm:$0xff] %vm922, %v3628
      %3677 = vst.msk [vmem:[#allocation3 + $0xb0] sm:$0xff] %vm922, %v3629
      %3678 = vst.msk [vmem:[#allocation3 + $0xb8] sm:$0xff] %vm922, %v3630
      %3679 = vst.msk [vmem:[#allocation3 + $0xc0] sm:$0xff] %vm922, %v3631
      %3680 = vst.msk [vmem:[#allocation3 + $0xc8] sm:$0xff] %vm922, %v3632
      %3681 = vst.msk [vmem:[#allocation3 + $0xd0] sm:$0xff] %vm922, %v3633
      %3682 = vst.msk [vmem:[#allocation3 + $0xd8] sm:$0xff] %vm922, %v3634
      %3683 = vst.msk [vmem:[#allocation3 + $0xe0] sm:$0xff] %vm922, %v3635
      %3684 = vst.msk [vmem:[#allocation3 + $0xe8] sm:$0xff] %vm922, %v3636
      %3685 = vst.msk [vmem:[#allocation3 + $0xf0] sm:$0xff] %vm922, %v3637
      %3686 = vst.msk [vmem:[#allocation3 + $0xf8] sm:$0xff] %vm922, %v3638
      %3687 = vst.msk [vmem:[#allocation3 + $0x100] sm:$0xff] %vm922, %v3639
      %3688 = vst.msk [vmem:[#allocation3 + $0x108] sm:$0xff] %vm922, %v3640
      %3689 = vst.msk [vmem:[#allocation3 + $0x110] sm:$0xff] %vm922, %v3641
      %3690 = vst.msk [vmem:[#allocation3 + $0x118] sm:$0xff] %vm922, %v3642
      %3691 = vst.msk [vmem:[#allocation3 + $0x120] sm:$0xff] %vm922, %v3643
      %3692 = vst.msk [vmem:[#allocation3 + $0x128] sm:$0xff] %vm922, %v3644
      %3693 = vst.msk [vmem:[#allocation3 + $0x130] sm:$0xff] %vm922, %v3645
      %3694 = vst.msk [vmem:[#allocation3 + $0x138] sm:$0xff] %vm922, %v3646
      %3695 = vst.msk [vmem:[#allocation3 + $0x140] sm:$0xff] %vm922, %v3647
      %3696 = vst.msk [vmem:[#allocation3 + $0x148] sm:$0xff] %vm922, %v3648
      %3697 = vst.msk [vmem:[#allocation3 + $0x150] sm:$0xff] %vm922, %v3649
      %3698 = vst.msk [vmem:[#allocation3 + $0x158] sm:$0xff] %vm922, %v3650
      %3699 = vst.msk [vmem:[#allocation3 + $0x160] sm:$0xff] %vm922, %v3651
      %3700 = vst.msk [vmem:[#allocation3 + $0x168] sm:$0xff] %vm922, %v3652
      %3701 = vst.msk [vmem:[#allocation3 + $0x170] sm:$0xff] %vm922, %v3653
      %3702 = vst.msk [vmem:[#allocation3 + $0x178] sm:$0xff] %vm922, %v3654
      %v3703 = vld [vmem:[#allocation2 + $0xc] sm:$0xe]
      %v3704 = vld [vmem:[#allocation2 + $0x10] sm:$0xf]
      %v3705 = vld [vmem:[#allocation2 + $0x14] sm:$0xf]
      %v3706 = vld [vmem:[#allocation2 + $0x18] sm:$0xf]
      %v3707 = vld [vmem:[#allocation2 + $0x1c] sm:$0xf]
      %v3708 = vld [vmem:[#allocation2 + $0x20] sm:$0xf]
      %v3709 = vld [vmem:[#allocation2 + $0x24] sm:$0xf]
      %v3710 = vld [vmem:[#allocation2 + $0x28] sm:$0xf]
      %v3711 = vld [vmem:[#allocation2 + $0x2c] sm:$0xf]
      %v3712 = vld [vmem:[#allocation2 + $0x30] sm:$0xf]
      %v3713 = vld [vmem:[#allocation2 + $0x34] sm:$0xf]
      %v3714 = vld [vmem:[#allocation2 + $0x38] sm:$0xf]
      %v3715 = vld [vmem:[#allocation2 + $0x3c] sm:$0xf]
      %v3716 = vld [vmem:[#allocation2 + $0x40] sm:$0xf]
      %v3717 = vld [vmem:[#allocation2 + $0x44] sm:$0xf]
      %v3718 = vld [vmem:[#allocation2 + $0x48] sm:$0xf]
      %v3719 = vld [vmem:[#allocation2 + $0x4c] sm:$0xf]
      %v3720 = vld [vmem:[#allocation2 + $0x50] sm:$0xf]
      %v3721 = vld [vmem:[#allocation2 + $0x54] sm:$0xf]
      %v3722 = vld [vmem:[#allocation2 + $0x58] sm:$0xf]
      %v3723 = vld [vmem:[#allocation2 + $0x5c] sm:$0xf]
      %v3724 = vld [vmem:[#allocation2 + $0x60] sm:$0xf]
      %v3725 = vld [vmem:[#allocation2 + $0x64] sm:$0xf]
      %v3726 = vld [vmem:[#allocation2 + $0x68] sm:$0xf]
      %v3727 = vld [vmem:[#allocation2 + $0x6c] sm:$0xf]
      %v3728 = vld [vmem:[#allocation2 + $0x70] sm:$0xf]
      %v3729 = vld [vmem:[#allocation2 + $0x74] sm:$0xf]
      %v3730 = vld [vmem:[#allocation2 + $0x78] sm:$0xf]
      %v3731 = vld [vmem:[#allocation2 + $0x7c] sm:$0xf]
      %v3732 = vld [vmem:[#allocation2 + $0x80] sm:$0xf]
      %v3733 = vld [vmem:[#allocation2 + $0x84] sm:$0xf]
      %v3734 = vld [vmem:[#allocation2 + $0x88] sm:$0xf]
      %v3735 = vld [vmem:[#allocation2 + $0x8c] sm:$0xf]
      %v3736 = vld [vmem:[#allocation2 + $0x90] sm:$0xf]
      %v3737 = vld [vmem:[#allocation2 + $0x94] sm:$0xf]
      %v3738 = vld [vmem:[#allocation2 + $0x98] sm:$0xf]
      %v3739 = vld [vmem:[#allocation2 + $0x9c] sm:$0xf]
      %v3740 = vld [vmem:[#allocation2 + $0xa0] sm:$0xf]
      %v3741 = vld [vmem:[#allocation2 + $0xa4] sm:$0xf]
      %v3742 = vld [vmem:[#allocation2 + $0xa8] sm:$0xf]
      %v3743 = vld [vmem:[#allocation2 + $0xac] sm:$0xf]
      %v3744 = vld [vmem:[#allocation2 + $0xb0] sm:$0xf]
      %v3745 = vld [vmem:[#allocation2 + $0xb4] sm:$0xf]
      %v3746 = vld [vmem:[#allocation2 + $0xb8] sm:$0xf]
      %v3747 = vld [vmem:[#allocation2 + $0xbc] sm:$0xf]
      %v3748 = vld [vmem:[#allocation2 + $0xc0] sm:$0xf]
      %v3749 = vld [vmem:[#allocation2 + $0xc4] sm:$0xf]
      %v3750 = vld [vmem:[#allocation2 + $0xc8] sm:$0xf]
      %v3751 = vld [vmem:[#allocation2 + $0xcc] sm:$0x1]
      %s3752 = scalar_lea.vmem %s1, 10
      %v3753 = vld [vmem:[%s3752] sm:$0x3]
      %v3803 = vunpack.c.l.b16 %v3703
      %v3804 = vunpack.c.l.b16 %v3704
      %v3805 = vunpack.c.l.b16 %v3705
      %v3806 = vunpack.c.l.b16 %v3706
      %v3807 = vunpack.c.l.b16 %v3707
      %v3808 = vunpack.c.l.b16 %v3708
      %v3809 = vunpack.c.l.b16 %v3709
      %v3810 = vunpack.c.l.b16 %v3710
      %v3811 = vunpack.c.l.b16 %v3711
      %v3812 = vunpack.c.l.b16 %v3712
      %v3813 = vunpack.c.l.b16 %v3713
      %v3814 = vunpack.c.l.b16 %v3714
      %v3815 = vunpack.c.l.b16 %v3715
      %v3816 = vunpack.c.l.b16 %v3716
      %v3817 = vunpack.c.l.b16 %v3717
      %v3818 = vunpack.c.l.b16 %v3718
      %v3819 = vunpack.c.l.b16 %v3719
      %v3820 = vunpack.c.l.b16 %v3720
      %v3821 = vunpack.c.l.b16 %v3721
      %v3822 = vunpack.c.l.b16 %v3722
      %v3823 = vunpack.c.l.b16 %v3723
      %v3824 = vunpack.c.l.b16 %v3724
      %v3825 = vunpack.c.l.b16 %v3725
      %v3826 = vunpack.c.l.b16 %v3726
      %v3827 = vunpack.c.l.b16 %v3727
      %v3828 = vunpack.c.l.b16 %v3728
      %v3829 = vunpack.c.l.b16 %v3729
      %v3830 = vunpack.c.l.b16 %v3730
      %v3831 = vunpack.c.l.b16 %v3731
      %v3832 = vunpack.c.l.b16 %v3732
      %v3833 = vunpack.c.l.b16 %v3733
      %v3834 = vunpack.c.l.b16 %v3734
      %v3835 = vunpack.c.l.b16 %v3735
      %v3836 = vunpack.c.l.b16 %v3736
      %v3837 = vunpack.c.l.b16 %v3737
      %v3838 = vunpack.c.l.b16 %v3738
      %v3839 = vunpack.c.l.b16 %v3739
      %v3840 = vunpack.c.l.b16 %v3740
      %v3841 = vunpack.c.l.b16 %v3741
      %v3842 = vunpack.c.l.b16 %v3742
      %v3843 = vunpack.c.l.b16 %v3743
      %v3844 = vunpack.c.l.b16 %v3744
      %v3845 = vunpack.c.l.b16 %v3745
      %v3846 = vunpack.c.l.b16 %v3746
      %v3847 = vunpack.c.l.b16 %v3747
      %v3848 = vunpack.c.l.b16 %v3748
      %v3849 = vunpack.c.l.b16 %v3749
      %v3850 = vunpack.c.l.b16 %v3750
      %v3851 = vunpack.c.l.b16 %v3751
      %v3852 = vpack.c.b16 %v3804, %v3803
      %v3853 = vpack.c.b16 %v3806, %v3805
      %v3854 = vpack.c.b16 %v3808, %v3807
      %v3855 = vpack.c.b16 %v3810, %v3809
      %v3856 = vpack.c.b16 %v3812, %v3811
      %v3857 = vpack.c.b16 %v3814, %v3813
      %v3858 = vpack.c.b16 %v3816, %v3815
      %v3859 = vpack.c.b16 %v3818, %v3817
      %v3860 = vpack.c.b16 %v3820, %v3819
      %v3861 = vpack.c.b16 %v3822, %v3821
      %v3862 = vpack.c.b16 %v3824, %v3823
      %v3863 = vpack.c.b16 %v3826, %v3825
      %v3864 = vpack.c.b16 %v3828, %v3827
      %v3865 = vpack.c.b16 %v3830, %v3829
      %v3866 = vpack.c.b16 %v3832, %v3831
      %v3867 = vpack.c.b16 %v3834, %v3833
      %v3868 = vpack.c.b16 %v3836, %v3835
      %v3869 = vpack.c.b16 %v3838, %v3837
      %v3870 = vpack.c.b16 %v3840, %v3839
      %v3871 = vpack.c.b16 %v3842, %v3841
      %v3872 = vpack.c.b16 %v3844, %v3843
      %v3873 = vpack.c.b16 %v3846, %v3845
      %v3874 = vpack.c.b16 %v3848, %v3847
      %v3875 = vpack.c.b16 %v3850, %v3849
      %v3876 = vpack.c.b16 %v3851, %v3851
      %v3877 = vrot.slane %v3852, 1
      %v3878 = vrot.slane %v3853, 1
      %v3879 = vsel %vm2069, %v3877, %v3878
      %v3880 = vrot.slane %v3854, 1
      %v3881 = vsel %vm2069, %v3878, %v3880
      %v3882 = vrot.slane %v3855, 1
      %v3883 = vsel %vm2069, %v3880, %v3882
      %v3884 = vrot.slane %v3856, 1
      %v3885 = vsel %vm2069, %v3882, %v3884
      %v3886 = vrot.slane %v3857, 1
      %v3887 = vsel %vm2069, %v3884, %v3886
      %v3888 = vrot.slane %v3858, 1
      %v3889 = vsel %vm2069, %v3886, %v3888
      %v3890 = vrot.slane %v3859, 1
      %v3891 = vsel %vm2069, %v3888, %v3890
      %v3892 = vrot.slane %v3860, 1
      %v3893 = vsel %vm2069, %v3890, %v3892
      %v3894 = vrot.slane %v3861, 1
      %v3895 = vsel %vm2069, %v3892, %v3894
      %v3896 = vrot.slane %v3862, 1
      %v3897 = vsel %vm2069, %v3894, %v3896
      %v3898 = vrot.slane %v3863, 1
      %v3899 = vsel %vm2069, %v3896, %v3898
      %v3900 = vrot.slane %v3864, 1
      %v3901 = vsel %vm2069, %v3898, %v3900
      %v3902 = vrot.slane %v3865, 1
      %v3903 = vsel %vm2069, %v3900, %v3902
      %v3904 = vrot.slane %v3866, 1
      %v3905 = vsel %vm2069, %v3902, %v3904
      %v3906 = vrot.slane %v3867, 1
      %v3907 = vsel %vm2069, %v3904, %v3906
      %v3908 = vrot.slane %v3868, 1
      %v3909 = vsel %vm2069, %v3906, %v3908
      %v3910 = vrot.slane %v3869, 1
      %v3911 = vsel %vm2069, %v3908, %v3910
      %v3912 = vrot.slane %v3870, 1
      %v3913 = vsel %vm2069, %v3910, %v3912
      %v3914 = vrot.slane %v3871, 1
      %v3915 = vsel %vm2069, %v3912, %v3914
      %v3916 = vrot.slane %v3872, 1
      %v3917 = vsel %vm2069, %v3914, %v3916
      %v3918 = vrot.slane %v3873, 1
      %v3919 = vsel %vm2069, %v3916, %v3918
      %v3920 = vrot.slane %v3874, 1
      %v3921 = vsel %vm2069, %v3918, %v3920
      %v3922 = vrot.slane %v3875, 1
      %v3923 = vsel %vm2069, %v3920, %v3922
      %v3924 = vrot.slane %v3876, 1
      %v3925 = vsel %vm2069, %v3922, %v3924
      %v3927 = vsel %vm922, %v3879, 0
      %v3930 = vsel %vm922, %v3881, 0
      %v3933 = vsel %vm922, %v3883, 0
      %v3936 = vsel %vm922, %v3885, 0
      %v3939 = vsel %vm922, %v3887, 0
      %v3942 = vsel %vm922, %v3889, 0
      %v3945 = vsel %vm922, %v3891, 0
      %v3948 = vsel %vm922, %v3893, 0
      %v3951 = vsel %vm922, %v3895, 0
      %v3954 = vsel %vm922, %v3897, 0
      %v3957 = vsel %vm922, %v3899, 0
      %v3960 = vsel %vm922, %v3901, 0
      %v3963 = vsel %vm922, %v3903, 0
      %v3966 = vsel %vm922, %v3905, 0
      %v3969 = vsel %vm922, %v3907, 0
      %v3972 = vsel %vm922, %v3909, 0
      %v3975 = vsel %vm922, %v3911, 0
      %v3978 = vsel %vm922, %v3913, 0
      %v3981 = vsel %vm922, %v3915, 0
      %v3984 = vsel %vm922, %v3917, 0
      %v3987 = vsel %vm922, %v3919, 0
      %v3990 = vsel %vm922, %v3921, 0
      %v3993 = vsel %vm922, %v3923, 0
      %v3996 = vsel %vm922, %v3925, 0
      %v3999 = vsel %vm995, %v3753, 0
      %4001 = vmatpush.bf16.msra.mxu0 0
      %4002 = vmatpush.bf16.msra.mxu0 0
      %4003 = vmatpush.bf16.msra.mxu0 0
      %4004 = vmatpush.bf16.msra.mxu0 0
      %4005 = vmatpush.bf16.msra.mxu0 0
      %4006 = vmatpush.bf16.msra.mxu0 0
      %4007 = vmatpush.bf16.msra.mxu0 0
      %4008 = vmatpush.bf16.msra.mxu0 %v3999
      %4009 = vmatmul.bf16.gmra.mxu0 %v3927
      %v4010 = vpop.f32.mrf.mxu0
      %v4011 = vadd.f32 0.0, %v4010
      %v4012 = vpop.f32.mrf.mxu0
      %v4013 = vadd.f32 0.0, %v4012
      %4014 = vmatmul.bf16.gmra.mxu0 %v3930
      %v4015 = vpop.f32.mrf.mxu0
      %v4016 = vadd.f32 0.0, %v4015
      %v4017 = vpop.f32.mrf.mxu0
      %v4018 = vadd.f32 0.0, %v4017
      %4019 = vmatmul.bf16.gmra.mxu0 %v3933
      %v4020 = vpop.f32.mrf.mxu0
      %v4021 = vadd.f32 0.0, %v4020
      %v4022 = vpop.f32.mrf.mxu0
      %v4023 = vadd.f32 0.0, %v4022
      %4024 = vmatmul.bf16.gmra.mxu0 %v3936
      %v4025 = vpop.f32.mrf.mxu0
      %v4026 = vadd.f32 0.0, %v4025
      %v4027 = vpop.f32.mrf.mxu0
      %v4028 = vadd.f32 0.0, %v4027
      %4029 = vmatmul.bf16.gmra.mxu0 %v3939
      %v4030 = vpop.f32.mrf.mxu0
      %v4031 = vadd.f32 0.0, %v4030
      %v4032 = vpop.f32.mrf.mxu0
      %v4033 = vadd.f32 0.0, %v4032
      %4034 = vmatmul.bf16.gmra.mxu0 %v3942
      %v4035 = vpop.f32.mrf.mxu0
      %v4036 = vadd.f32 0.0, %v4035
      %v4037 = vpop.f32.mrf.mxu0
      %v4038 = vadd.f32 0.0, %v4037
      %4039 = vmatmul.bf16.gmra.mxu0 %v3945
      %v4040 = vpop.f32.mrf.mxu0
      %v4041 = vadd.f32 0.0, %v4040
      %v4042 = vpop.f32.mrf.mxu0
      %v4043 = vadd.f32 0.0, %v4042
      %4044 = vmatmul.bf16.gmra.mxu0 %v3948
      %v4045 = vpop.f32.mrf.mxu0
      %v4046 = vadd.f32 0.0, %v4045
      %v4047 = vpop.f32.mrf.mxu0
      %v4048 = vadd.f32 0.0, %v4047
      %4049 = vmatmul.bf16.gmra.mxu0 %v3951
      %v4050 = vpop.f32.mrf.mxu0
      %v4051 = vadd.f32 0.0, %v4050
      %v4052 = vpop.f32.mrf.mxu0
      %v4053 = vadd.f32 0.0, %v4052
      %4054 = vmatmul.bf16.gmra.mxu0 %v3954
      %v4055 = vpop.f32.mrf.mxu0
      %v4056 = vadd.f32 0.0, %v4055
      %v4057 = vpop.f32.mrf.mxu0
      %v4058 = vadd.f32 0.0, %v4057
      %4059 = vmatmul.bf16.gmra.mxu0 %v3957
      %v4060 = vpop.f32.mrf.mxu0
      %v4061 = vadd.f32 0.0, %v4060
      %v4062 = vpop.f32.mrf.mxu0
      %v4063 = vadd.f32 0.0, %v4062
      %4064 = vmatmul.bf16.gmra.mxu0 %v3960
      %v4065 = vpop.f32.mrf.mxu0
      %v4066 = vadd.f32 0.0, %v4065
      %v4067 = vpop.f32.mrf.mxu0
      %v4068 = vadd.f32 0.0, %v4067
      %4069 = vmatmul.bf16.gmra.mxu0 %v3963
      %v4070 = vpop.f32.mrf.mxu0
      %v4071 = vadd.f32 0.0, %v4070
      %v4072 = vpop.f32.mrf.mxu0
      %v4073 = vadd.f32 0.0, %v4072
      %4074 = vmatmul.bf16.gmra.mxu0 %v3966
      %v4075 = vpop.f32.mrf.mxu0
      %v4076 = vadd.f32 0.0, %v4075
      %v4077 = vpop.f32.mrf.mxu0
      %v4078 = vadd.f32 0.0, %v4077
      %4079 = vmatmul.bf16.gmra.mxu0 %v3969
      %v4080 = vpop.f32.mrf.mxu0
      %v4081 = vadd.f32 0.0, %v4080
      %v4082 = vpop.f32.mrf.mxu0
      %v4083 = vadd.f32 0.0, %v4082
      %4084 = vmatmul.bf16.gmra.mxu0 %v3972
      %v4085 = vpop.f32.mrf.mxu0
      %v4086 = vadd.f32 0.0, %v4085
      %v4087 = vpop.f32.mrf.mxu0
      %v4088 = vadd.f32 0.0, %v4087
      %4089 = vmatmul.bf16.gmra.mxu0 %v3975
      %v4090 = vpop.f32.mrf.mxu0
      %v4091 = vadd.f32 0.0, %v4090
      %v4092 = vpop.f32.mrf.mxu0
      %v4093 = vadd.f32 0.0, %v4092
      %4094 = vmatmul.bf16.gmra.mxu0 %v3978
      %v4095 = vpop.f32.mrf.mxu0
      %v4096 = vadd.f32 0.0, %v4095
      %v4097 = vpop.f32.mrf.mxu0
      %v4098 = vadd.f32 0.0, %v4097
      %4099 = vmatmul.bf16.gmra.mxu0 %v3981
      %v4100 = vpop.f32.mrf.mxu0
      %v4101 = vadd.f32 0.0, %v4100
      %v4102 = vpop.f32.mrf.mxu0
      %v4103 = vadd.f32 0.0, %v4102
      %4104 = vmatmul.bf16.gmra.mxu0 %v3984
      %v4105 = vpop.f32.mrf.mxu0
      %v4106 = vadd.f32 0.0, %v4105
      %v4107 = vpop.f32.mrf.mxu0
      %v4108 = vadd.f32 0.0, %v4107
      %4109 = vmatmul.bf16.gmra.mxu0 %v3987
      %v4110 = vpop.f32.mrf.mxu0
      %v4111 = vadd.f32 0.0, %v4110
      %v4112 = vpop.f32.mrf.mxu0
      %v4113 = vadd.f32 0.0, %v4112
      %4114 = vmatmul.bf16.gmra.mxu0 %v3990
      %v4115 = vpop.f32.mrf.mxu0
      %v4116 = vadd.f32 0.0, %v4115
      %v4117 = vpop.f32.mrf.mxu0
      %v4118 = vadd.f32 0.0, %v4117
      %4119 = vmatmul.bf16.gmra.mxu0 %v3993
      %v4120 = vpop.f32.mrf.mxu0
      %v4121 = vadd.f32 0.0, %v4120
      %v4122 = vpop.f32.mrf.mxu0
      %v4123 = vadd.f32 0.0, %v4122
      %4124 = vmatmul.bf16.gmra.mxu0 %v3996
      %v4125 = vpop.f32.mrf.mxu0
      %v4126 = vadd.f32 0.0, %v4125
      %v4127 = vpop.f32.mrf.mxu0
      %v4128 = vadd.f32 0.0, %v4127
      %4129 = vdwg.mxu0
      %v4130 = vld [vmem:[#allocation3] sm:$0xff]
      %v4131 = vld [vmem:[#allocation3 + $0x8] sm:$0xff]
      %v4132 = vld [vmem:[#allocation3 + $0x10] sm:$0xff]
      %v4133 = vld [vmem:[#allocation3 + $0x18] sm:$0xff]
      %v4134 = vld [vmem:[#allocation3 + $0x20] sm:$0xff]
      %v4135 = vld [vmem:[#allocation3 + $0x28] sm:$0xff]
      %v4136 = vld [vmem:[#allocation3 + $0x30] sm:$0xff]
      %v4137 = vld [vmem:[#allocation3 + $0x38] sm:$0xff]
      %v4138 = vld [vmem:[#allocation3 + $0x40] sm:$0xff]
      %v4139 = vld [vmem:[#allocation3 + $0x48] sm:$0xff]
      %v4140 = vld [vmem:[#allocation3 + $0x50] sm:$0xff]
      %v4141 = vld [vmem:[#allocation3 + $0x58] sm:$0xff]
      %v4142 = vld [vmem:[#allocation3 + $0x60] sm:$0xff]
      %v4143 = vld [vmem:[#allocation3 + $0x68] sm:$0xff]
      %v4144 = vld [vmem:[#allocation3 + $0x70] sm:$0xff]
      %v4145 = vld [vmem:[#allocation3 + $0x78] sm:$0xff]
      %v4146 = vld [vmem:[#allocation3 + $0x80] sm:$0xff]
      %v4147 = vld [vmem:[#allocation3 + $0x88] sm:$0xff]
      %v4148 = vld [vmem:[#allocation3 + $0x90] sm:$0xff]
      %v4149 = vld [vmem:[#allocation3 + $0x98] sm:$0xff]
      %v4150 = vld [vmem:[#allocation3 + $0xa0] sm:$0xff]
      %v4151 = vld [vmem:[#allocation3 + $0xa8] sm:$0xff]
      %v4152 = vld [vmem:[#allocation3 + $0xb0] sm:$0xff]
      %v4153 = vld [vmem:[#allocation3 + $0xb8] sm:$0xff]
      %v4154 = vld [vmem:[#allocation3 + $0xc0] sm:$0xff]
      %v4155 = vld [vmem:[#allocation3 + $0xc8] sm:$0xff]
      %v4156 = vld [vmem:[#allocation3 + $0xd0] sm:$0xff]
      %v4157 = vld [vmem:[#allocation3 + $0xd8] sm:$0xff]
      %v4158 = vld [vmem:[#allocation3 + $0xe0] sm:$0xff]
      %v4159 = vld [vmem:[#allocation3 + $0xe8] sm:$0xff]
      %v4160 = vld [vmem:[#allocation3 + $0xf0] sm:$0xff]
      %v4161 = vld [vmem:[#allocation3 + $0xf8] sm:$0xff]
      %v4162 = vld [vmem:[#allocation3 + $0x100] sm:$0xff]
      %v4163 = vld [vmem:[#allocation3 + $0x108] sm:$0xff]
      %v4164 = vld [vmem:[#allocation3 + $0x110] sm:$0xff]
      %v4165 = vld [vmem:[#allocation3 + $0x118] sm:$0xff]
      %v4166 = vld [vmem:[#allocation3 + $0x120] sm:$0xff]
      %v4167 = vld [vmem:[#allocation3 + $0x128] sm:$0xff]
      %v4168 = vld [vmem:[#allocation3 + $0x130] sm:$0xff]
      %v4169 = vld [vmem:[#allocation3 + $0x138] sm:$0xff]
      %v4170 = vld [vmem:[#allocation3 + $0x140] sm:$0xff]
      %v4171 = vld [vmem:[#allocation3 + $0x148] sm:$0xff]
      %v4172 = vld [vmem:[#allocation3 + $0x150] sm:$0xff]
      %v4173 = vld [vmem:[#allocation3 + $0x158] sm:$0xff]
      %v4174 = vld [vmem:[#allocation3 + $0x160] sm:$0xff]
      %v4175 = vld [vmem:[#allocation3 + $0x168] sm:$0xff]
      %v4176 = vld [vmem:[#allocation3 + $0x170] sm:$0xff]
      %v4177 = vld [vmem:[#allocation3 + $0x178] sm:$0xff]
      %v4178 = vadd.f32 %v4130, %v4011
      %v4179 = vadd.f32 %v4131, %v4013
      %v4180 = vadd.f32 %v4132, %v4016
      %v4181 = vadd.f32 %v4133, %v4018
      %v4182 = vadd.f32 %v4134, %v4021
      %v4183 = vadd.f32 %v4135, %v4023
      %v4184 = vadd.f32 %v4136, %v4026
      %v4185 = vadd.f32 %v4137, %v4028
      %v4186 = vadd.f32 %v4138, %v4031
      %v4187 = vadd.f32 %v4139, %v4033
      %v4188 = vadd.f32 %v4140, %v4036
      %v4189 = vadd.f32 %v4141, %v4038
      %v4190 = vadd.f32 %v4142, %v4041
      %v4191 = vadd.f32 %v4143, %v4043
      %v4192 = vadd.f32 %v4144, %v4046
      %v4193 = vadd.f32 %v4145, %v4048
      %v4194 = vadd.f32 %v4146, %v4051
      %v4195 = vadd.f32 %v4147, %v4053
      %v4196 = vadd.f32 %v4148, %v4056
      %v4197 = vadd.f32 %v4149, %v4058
      %v4198 = vadd.f32 %v4150, %v4061
      %v4199 = vadd.f32 %v4151, %v4063
      %v4200 = vadd.f32 %v4152, %v4066
      %v4201 = vadd.f32 %v4153, %v4068
      %v4202 = vadd.f32 %v4154, %v4071
      %v4203 = vadd.f32 %v4155, %v4073
      %v4204 = vadd.f32 %v4156, %v4076
      %v4205 = vadd.f32 %v4157, %v4078
      %v4206 = vadd.f32 %v4158, %v4081
      %v4207 = vadd.f32 %v4159, %v4083
      %v4208 = vadd.f32 %v4160, %v4086
      %v4209 = vadd.f32 %v4161, %v4088
      %v4210 = vadd.f32 %v4162, %v4091
      %v4211 = vadd.f32 %v4163, %v4093
      %v4212 = vadd.f32 %v4164, %v4096
      %v4213 = vadd.f32 %v4165, %v4098
      %v4214 = vadd.f32 %v4166, %v4101
      %v4215 = vadd.f32 %v4167, %v4103
      %v4216 = vadd.f32 %v4168, %v4106
      %v4217 = vadd.f32 %v4169, %v4108
      %v4218 = vadd.f32 %v4170, %v4111
      %v4219 = vadd.f32 %v4171, %v4113
      %v4220 = vadd.f32 %v4172, %v4116
      %v4221 = vadd.f32 %v4173, %v4118
      %v4222 = vadd.f32 %v4174, %v4121
      %v4223 = vadd.f32 %v4175, %v4123
      %v4224 = vadd.f32 %v4176, %v4126
      %v4225 = vadd.f32 %v4177, %v4128
      %4226 = vst.msk [vmem:[#allocation3] sm:$0xff] %vm922, %v4178
      %4227 = vst.msk [vmem:[#allocation3 + $0x8] sm:$0xff] %vm922, %v4179
      %4228 = vst.msk [vmem:[#allocation3 + $0x10] sm:$0xff] %vm922, %v4180
      %4229 = vst.msk [vmem:[#allocation3 + $0x18] sm:$0xff] %vm922, %v4181
      %4230 = vst.msk [vmem:[#allocation3 + $0x20] sm:$0xff] %vm922, %v4182
      %4231 = vst.msk [vmem:[#allocation3 + $0x28] sm:$0xff] %vm922, %v4183
      %4232 = vst.msk [vmem:[#allocation3 + $0x30] sm:$0xff] %vm922, %v4184
      %4233 = vst.msk [vmem:[#allocation3 + $0x38] sm:$0xff] %vm922, %v4185
      %4234 = vst.msk [vmem:[#allocation3 + $0x40] sm:$0xff] %vm922, %v4186
      %4235 = vst.msk [vmem:[#allocation3 + $0x48] sm:$0xff] %vm922, %v4187
      %4236 = vst.msk [vmem:[#allocation3 + $0x50] sm:$0xff] %vm922, %v4188
      %4237 = vst.msk [vmem:[#allocation3 + $0x58] sm:$0xff] %vm922, %v4189
      %4238 = vst.msk [vmem:[#allocation3 + $0x60] sm:$0xff] %vm922, %v4190
      %4239 = vst.msk [vmem:[#allocation3 + $0x68] sm:$0xff] %vm922, %v4191
      %4240 = vst.msk [vmem:[#allocation3 + $0x70] sm:$0xff] %vm922, %v4192
      %4241 = vst.msk [vmem:[#allocation3 + $0x78] sm:$0xff] %vm922, %v4193
      %4242 = vst.msk [vmem:[#allocation3 + $0x80] sm:$0xff] %vm922, %v4194
      %4243 = vst.msk [vmem:[#allocation3 + $0x88] sm:$0xff] %vm922, %v4195
      %4244 = vst.msk [vmem:[#allocation3 + $0x90] sm:$0xff] %vm922, %v4196
      %4245 = vst.msk [vmem:[#allocation3 + $0x98] sm:$0xff] %vm922, %v4197
      %4246 = vst.msk [vmem:[#allocation3 + $0xa0] sm:$0xff] %vm922, %v4198
      %4247 = vst.msk [vmem:[#allocation3 + $0xa8] sm:$0xff] %vm922, %v4199
      %4248 = vst.msk [vmem:[#allocation3 + $0xb0] sm:$0xff] %vm922, %v4200
      %4249 = vst.msk [vmem:[#allocation3 + $0xb8] sm:$0xff] %vm922, %v4201
      %4250 = vst.msk [vmem:[#allocation3 + $0xc0] sm:$0xff] %vm922, %v4202
      %4251 = vst.msk [vmem:[#allocation3 + $0xc8] sm:$0xff] %vm922, %v4203
      %4252 = vst.msk [vmem:[#allocation3 + $0xd0] sm:$0xff] %vm922, %v4204
      %4253 = vst.msk [vmem:[#allocation3 + $0xd8] sm:$0xff] %vm922, %v4205
      %4254 = vst.msk [vmem:[#allocation3 + $0xe0] sm:$0xff] %vm922, %v4206
      %4255 = vst.msk [vmem:[#allocation3 + $0xe8] sm:$0xff] %vm922, %v4207
      %4256 = vst.msk [vmem:[#allocation3 + $0xf0] sm:$0xff] %vm922, %v4208
      %4257 = vst.msk [vmem:[#allocation3 + $0xf8] sm:$0xff] %vm922, %v4209
      %4258 = vst.msk [vmem:[#allocation3 + $0x100] sm:$0xff] %vm922, %v4210
      %4259 = vst.msk [vmem:[#allocation3 + $0x108] sm:$0xff] %vm922, %v4211
      %4260 = vst.msk [vmem:[#allocation3 + $0x110] sm:$0xff] %vm922, %v4212
      %4261 = vst.msk [vmem:[#allocation3 + $0x118] sm:$0xff] %vm922, %v4213
      %4262 = vst.msk [vmem:[#allocation3 + $0x120] sm:$0xff] %vm922, %v4214
      %4263 = vst.msk [vmem:[#allocation3 + $0x128] sm:$0xff] %vm922, %v4215
      %4264 = vst.msk [vmem:[#allocation3 + $0x130] sm:$0xff] %vm922, %v4216
      %4265 = vst.msk [vmem:[#allocation3 + $0x138] sm:$0xff] %vm922, %v4217
      %4266 = vst.msk [vmem:[#allocation3 + $0x140] sm:$0xff] %vm922, %v4218
      %4267 = vst.msk [vmem:[#allocation3 + $0x148] sm:$0xff] %vm922, %v4219
      %4268 = vst.msk [vmem:[#allocation3 + $0x150] sm:$0xff] %vm922, %v4220
      %4269 = vst.msk [vmem:[#allocation3 + $0x158] sm:$0xff] %vm922, %v4221
      %4270 = vst.msk [vmem:[#allocation3 + $0x160] sm:$0xff] %vm922, %v4222
      %4271 = vst.msk [vmem:[#allocation3 + $0x168] sm:$0xff] %vm922, %v4223
      %4272 = vst.msk [vmem:[#allocation3 + $0x170] sm:$0xff] %vm922, %v4224
      %4273 = vst.msk [vmem:[#allocation3 + $0x178] sm:$0xff] %vm922, %v4225
      %v4274 = vld [vmem:[#allocation2 + $0x18] sm:$0xf]
      %v4275 = vld [vmem:[#allocation2 + $0x1c] sm:$0xf]
      %v4276 = vld [vmem:[#allocation2 + $0x20] sm:$0xf]
      %v4277 = vld [vmem:[#allocation2 + $0x24] sm:$0xf]
      %v4278 = vld [vmem:[#allocation2 + $0x28] sm:$0xf]
      %v4279 = vld [vmem:[#allocation2 + $0x2c] sm:$0xf]
      %v4280 = vld [vmem:[#allocation2 + $0x30] sm:$0xf]
      %v4281 = vld [vmem:[#allocation2 + $0x34] sm:$0xf]
      %v4282 = vld [vmem:[#allocation2 + $0x38] sm:$0xf]
      %v4283 = vld [vmem:[#allocation2 + $0x3c] sm:$0xf]
      %v4284 = vld [vmem:[#allocation2 + $0x40] sm:$0xf]
      %v4285 = vld [vmem:[#allocation2 + $0x44] sm:$0xf]
      %v4286 = vld [vmem:[#allocation2 + $0x48] sm:$0xf]
      %v4287 = vld [vmem:[#allocation2 + $0x4c] sm:$0xf]
      %v4288 = vld [vmem:[#allocation2 + $0x50] sm:$0xf]
      %v4289 = vld [vmem:[#allocation2 + $0x54] sm:$0xf]
      %v4290 = vld [vmem:[#allocation2 + $0x58] sm:$0xf]
      %v4291 = vld [vmem:[#allocation2 + $0x5c] sm:$0xf]
      %v4292 = vld [vmem:[#allocation2 + $0x60] sm:$0xf]
      %v4293 = vld [vmem:[#allocation2 + $0x64] sm:$0xf]
      %v4294 = vld [vmem:[#allocation2 + $0x68] sm:$0xf]
      %v4295 = vld [vmem:[#allocation2 + $0x6c] sm:$0xf]
      %v4296 = vld [vmem:[#allocation2 + $0x70] sm:$0xf]
      %v4297 = vld [vmem:[#allocation2 + $0x74] sm:$0xf]
      %v4298 = vld [vmem:[#allocation2 + $0x78] sm:$0xf]
      %v4299 = vld [vmem:[#allocation2 + $0x7c] sm:$0xf]
      %v4300 = vld [vmem:[#allocation2 + $0x80] sm:$0xf]
      %v4301 = vld [vmem:[#allocation2 + $0x84] sm:$0xf]
      %v4302 = vld [vmem:[#allocation2 + $0x88] sm:$0xf]
      %v4303 = vld [vmem:[#allocation2 + $0x8c] sm:$0xf]
      %v4304 = vld [vmem:[#allocation2 + $0x90] sm:$0xf]
      %v4305 = vld [vmem:[#allocation2 + $0x94] sm:$0xf]
      %v4306 = vld [vmem:[#allocation2 + $0x98] sm:$0xf]
      %v4307 = vld [vmem:[#allocation2 + $0x9c] sm:$0xf]
      %v4308 = vld [vmem:[#allocation2 + $0xa0] sm:$0xf]
      %v4309 = vld [vmem:[#allocation2 + $0xa4] sm:$0xf]
      %v4310 = vld [vmem:[#allocation2 + $0xa8] sm:$0xf]
      %v4311 = vld [vmem:[#allocation2 + $0xac] sm:$0xf]
      %v4312 = vld [vmem:[#allocation2 + $0xb0] sm:$0xf]
      %v4313 = vld [vmem:[#allocation2 + $0xb4] sm:$0xf]
      %v4314 = vld [vmem:[#allocation2 + $0xb8] sm:$0xf]
      %v4315 = vld [vmem:[#allocation2 + $0xbc] sm:$0xf]
      %v4316 = vld [vmem:[#allocation2 + $0xc0] sm:$0xf]
      %v4317 = vld [vmem:[#allocation2 + $0xc4] sm:$0xf]
      %v4318 = vld [vmem:[#allocation2 + $0xc8] sm:$0xf]
      %v4319 = vld [vmem:[#allocation2 + $0xcc] sm:$0xf]
      %v4320 = vld [vmem:[#allocation2 + $0xd0] sm:$0xf]
      %v4321 = vld [vmem:[#allocation2 + $0xd4] sm:$0xf]
      %s4322 = scalar_lea.vmem %s1, 12
      %v4323 = vld [vmem:[%s4322] sm:$0x3]
      %v4372 = vunpack.c.l.b16 %v4274
      %v4373 = vunpack.c.l.b16 %v4275
      %v4374 = vunpack.c.l.b16 %v4276
      %v4375 = vunpack.c.l.b16 %v4277
      %v4376 = vunpack.c.l.b16 %v4278
      %v4377 = vunpack.c.l.b16 %v4279
      %v4378 = vunpack.c.l.b16 %v4280
      %v4379 = vunpack.c.l.b16 %v4281
      %v4380 = vunpack.c.l.b16 %v4282
      %v4381 = vunpack.c.l.b16 %v4283
      %v4382 = vunpack.c.l.b16 %v4284
      %v4383 = vunpack.c.l.b16 %v4285
      %v4384 = vunpack.c.l.b16 %v4286
      %v4385 = vunpack.c.l.b16 %v4287
      %v4386 = vunpack.c.l.b16 %v4288
      %v4387 = vunpack.c.l.b16 %v4289
      %v4388 = vunpack.c.l.b16 %v4290
      %v4389 = vunpack.c.l.b16 %v4291
      %v4390 = vunpack.c.l.b16 %v4292
      %v4391 = vunpack.c.l.b16 %v4293
      %v4392 = vunpack.c.l.b16 %v4294
      %v4393 = vunpack.c.l.b16 %v4295
      %v4394 = vunpack.c.l.b16 %v4296
      %v4395 = vunpack.c.l.b16 %v4297
      %v4396 = vunpack.c.l.b16 %v4298
      %v4397 = vunpack.c.l.b16 %v4299
      %v4398 = vunpack.c.l.b16 %v4300
      %v4399 = vunpack.c.l.b16 %v4301
      %v4400 = vunpack.c.l.b16 %v4302
      %v4401 = vunpack.c.l.b16 %v4303
      %v4402 = vunpack.c.l.b16 %v4304
      %v4403 = vunpack.c.l.b16 %v4305
      %v4404 = vunpack.c.l.b16 %v4306
      %v4405 = vunpack.c.l.b16 %v4307
      %v4406 = vunpack.c.l.b16 %v4308
      %v4407 = vunpack.c.l.b16 %v4309
      %v4408 = vunpack.c.l.b16 %v4310
      %v4409 = vunpack.c.l.b16 %v4311
      %v4410 = vunpack.c.l.b16 %v4312
      %v4411 = vunpack.c.l.b16 %v4313
      %v4412 = vunpack.c.l.b16 %v4314
      %v4413 = vunpack.c.l.b16 %v4315
      %v4414 = vunpack.c.l.b16 %v4316
      %v4415 = vunpack.c.l.b16 %v4317
      %v4416 = vunpack.c.l.b16 %v4318
      %v4417 = vunpack.c.l.b16 %v4319
      %v4418 = vunpack.c.l.b16 %v4320
      %v4419 = vunpack.c.l.b16 %v4321
      %v4420 = vpack.c.b16 %v4373, %v4372
      %v4421 = vpack.c.b16 %v4375, %v4374
      %v4422 = vpack.c.b16 %v4377, %v4376
      %v4423 = vpack.c.b16 %v4379, %v4378
      %v4424 = vpack.c.b16 %v4381, %v4380
      %v4425 = vpack.c.b16 %v4383, %v4382
      %v4426 = vpack.c.b16 %v4385, %v4384
      %v4427 = vpack.c.b16 %v4387, %v4386
      %v4428 = vpack.c.b16 %v4389, %v4388
      %v4429 = vpack.c.b16 %v4391, %v4390
      %v4430 = vpack.c.b16 %v4393, %v4392
      %v4431 = vpack.c.b16 %v4395, %v4394
      %v4432 = vpack.c.b16 %v4397, %v4396
      %v4433 = vpack.c.b16 %v4399, %v4398
      %v4434 = vpack.c.b16 %v4401, %v4400
      %v4435 = vpack.c.b16 %v4403, %v4402
      %v4436 = vpack.c.b16 %v4405, %v4404
      %v4437 = vpack.c.b16 %v4407, %v4406
      %v4438 = vpack.c.b16 %v4409, %v4408
      %v4439 = vpack.c.b16 %v4411, %v4410
      %v4440 = vpack.c.b16 %v4413, %v4412
      %v4441 = vpack.c.b16 %v4415, %v4414
      %v4442 = vpack.c.b16 %v4417, %v4416
      %v4443 = vpack.c.b16 %v4419, %v4418
      %v4445 = vsel %vm922, %v4420, 0
      %v4448 = vsel %vm922, %v4421, 0
      %v4451 = vsel %vm922, %v4422, 0
      %v4454 = vsel %vm922, %v4423, 0
      %v4457 = vsel %vm922, %v4424, 0
      %v4460 = vsel %vm922, %v4425, 0
      %v4463 = vsel %vm922, %v4426, 0
      %v4466 = vsel %vm922, %v4427, 0
      %v4469 = vsel %vm922, %v4428, 0
      %v4472 = vsel %vm922, %v4429, 0
      %v4475 = vsel %vm922, %v4430, 0
      %v4478 = vsel %vm922, %v4431, 0
      %v4481 = vsel %vm922, %v4432, 0
      %v4484 = vsel %vm922, %v4433, 0
      %v4487 = vsel %vm922, %v4434, 0
      %v4490 = vsel %vm922, %v4435, 0
      %v4493 = vsel %vm922, %v4436, 0
      %v4496 = vsel %vm922, %v4437, 0
      %v4499 = vsel %vm922, %v4438, 0
      %v4502 = vsel %vm922, %v4439, 0
      %v4505 = vsel %vm922, %v4440, 0
      %v4508 = vsel %vm922, %v4441, 0
      %v4511 = vsel %vm922, %v4442, 0
      %v4514 = vsel %vm922, %v4443, 0
      %v4517 = vsel %vm995, %v4323, 0
      %4519 = vmatpush.bf16.msra.mxu0 0
      %4520 = vmatpush.bf16.msra.mxu0 0
      %4521 = vmatpush.bf16.msra.mxu0 0
      %4522 = vmatpush.bf16.msra.mxu0 0
      %4523 = vmatpush.bf16.msra.mxu0 0
      %4524 = vmatpush.bf16.msra.mxu0 0
      %4525 = vmatpush.bf16.msra.mxu0 0
      %4526 = vmatpush.bf16.msra.mxu0 %v4517
      %4527 = vmatmul.bf16.gmra.mxu0 %v4445
      %v4528 = vpop.f32.mrf.mxu0
      %v4529 = vadd.f32 0.0, %v4528
      %v4530 = vpop.f32.mrf.mxu0
      %v4531 = vadd.f32 0.0, %v4530
      %4532 = vmatmul.bf16.gmra.mxu0 %v4448
      %v4533 = vpop.f32.mrf.mxu0
      %v4534 = vadd.f32 0.0, %v4533
      %v4535 = vpop.f32.mrf.mxu0
      %v4536 = vadd.f32 0.0, %v4535
      %4537 = vmatmul.bf16.gmra.mxu0 %v4451
      %v4538 = vpop.f32.mrf.mxu0
      %v4539 = vadd.f32 0.0, %v4538
      %v4540 = vpop.f32.mrf.mxu0
      %v4541 = vadd.f32 0.0, %v4540
      %4542 = vmatmul.bf16.gmra.mxu0 %v4454
      %v4543 = vpop.f32.mrf.mxu0
      %v4544 = vadd.f32 0.0, %v4543
      %v4545 = vpop.f32.mrf.mxu0
      %v4546 = vadd.f32 0.0, %v4545
      %4547 = vmatmul.bf16.gmra.mxu0 %v4457
      %v4548 = vpop.f32.mrf.mxu0
      %v4549 = vadd.f32 0.0, %v4548
      %v4550 = vpop.f32.mrf.mxu0
      %v4551 = vadd.f32 0.0, %v4550
      %4552 = vmatmul.bf16.gmra.mxu0 %v4460
      %v4553 = vpop.f32.mrf.mxu0
      %v4554 = vadd.f32 0.0, %v4553
      %v4555 = vpop.f32.mrf.mxu0
      %v4556 = vadd.f32 0.0, %v4555
      %4557 = vmatmul.bf16.gmra.mxu0 %v4463
      %v4558 = vpop.f32.mrf.mxu0
      %v4559 = vadd.f32 0.0, %v4558
      %v4560 = vpop.f32.mrf.mxu0
      %v4561 = vadd.f32 0.0, %v4560
      %4562 = vmatmul.bf16.gmra.mxu0 %v4466
      %v4563 = vpop.f32.mrf.mxu0
      %v4564 = vadd.f32 0.0, %v4563
      %v4565 = vpop.f32.mrf.mxu0
      %v4566 = vadd.f32 0.0, %v4565
      %4567 = vmatmul.bf16.gmra.mxu0 %v4469
      %v4568 = vpop.f32.mrf.mxu0
      %v4569 = vadd.f32 0.0, %v4568
      %v4570 = vpop.f32.mrf.mxu0
      %v4571 = vadd.f32 0.0, %v4570
      %4572 = vmatmul.bf16.gmra.mxu0 %v4472
      %v4573 = vpop.f32.mrf.mxu0
      %v4574 = vadd.f32 0.0, %v4573
      %v4575 = vpop.f32.mrf.mxu0
      %v4576 = vadd.f32 0.0, %v4575
      %4577 = vmatmul.bf16.gmra.mxu0 %v4475
      %v4578 = vpop.f32.mrf.mxu0
      %v4579 = vadd.f32 0.0, %v4578
      %v4580 = vpop.f32.mrf.mxu0
      %v4581 = vadd.f32 0.0, %v4580
      %4582 = vmatmul.bf16.gmra.mxu0 %v4478
      %v4583 = vpop.f32.mrf.mxu0
      %v4584 = vadd.f32 0.0, %v4583
      %v4585 = vpop.f32.mrf.mxu0
      %v4586 = vadd.f32 0.0, %v4585
      %4587 = vmatmul.bf16.gmra.mxu0 %v4481
      %v4588 = vpop.f32.mrf.mxu0
      %v4589 = vadd.f32 0.0, %v4588
      %v4590 = vpop.f32.mrf.mxu0
      %v4591 = vadd.f32 0.0, %v4590
      %4592 = vmatmul.bf16.gmra.mxu0 %v4484
      %v4593 = vpop.f32.mrf.mxu0
      %v4594 = vadd.f32 0.0, %v4593
      %v4595 = vpop.f32.mrf.mxu0
      %v4596 = vadd.f32 0.0, %v4595
      %4597 = vmatmul.bf16.gmra.mxu0 %v4487
      %v4598 = vpop.f32.mrf.mxu0
      %v4599 = vadd.f32 0.0, %v4598
      %v4600 = vpop.f32.mrf.mxu0
      %v4601 = vadd.f32 0.0, %v4600
      %4602 = vmatmul.bf16.gmra.mxu0 %v4490
      %v4603 = vpop.f32.mrf.mxu0
      %v4604 = vadd.f32 0.0, %v4603
      %v4605 = vpop.f32.mrf.mxu0
      %v4606 = vadd.f32 0.0, %v4605
      %4607 = vmatmul.bf16.gmra.mxu0 %v4493
      %v4608 = vpop.f32.mrf.mxu0
      %v4609 = vadd.f32 0.0, %v4608
      %v4610 = vpop.f32.mrf.mxu0
      %v4611 = vadd.f32 0.0, %v4610
      %4612 = vmatmul.bf16.gmra.mxu0 %v4496
      %v4613 = vpop.f32.mrf.mxu0
      %v4614 = vadd.f32 0.0, %v4613
      %v4615 = vpop.f32.mrf.mxu0
      %v4616 = vadd.f32 0.0, %v4615
      %4617 = vmatmul.bf16.gmra.mxu0 %v4499
      %v4618 = vpop.f32.mrf.mxu0
      %v4619 = vadd.f32 0.0, %v4618
      %v4620 = vpop.f32.mrf.mxu0
      %v4621 = vadd.f32 0.0, %v4620
      %4622 = vmatmul.bf16.gmra.mxu0 %v4502
      %v4623 = vpop.f32.mrf.mxu0
      %v4624 = vadd.f32 0.0, %v4623
      %v4625 = vpop.f32.mrf.mxu0
      %v4626 = vadd.f32 0.0, %v4625
      %4627 = vmatmul.bf16.gmra.mxu0 %v4505
      %v4628 = vpop.f32.mrf.mxu0
      %v4629 = vadd.f32 0.0, %v4628
      %v4630 = vpop.f32.mrf.mxu0
      %v4631 = vadd.f32 0.0, %v4630
      %4632 = vmatmul.bf16.gmra.mxu0 %v4508
      %v4633 = vpop.f32.mrf.mxu0
      %v4634 = vadd.f32 0.0, %v4633
      %v4635 = vpop.f32.mrf.mxu0
      %v4636 = vadd.f32 0.0, %v4635
      %4637 = vmatmul.bf16.gmra.mxu0 %v4511
      %v4638 = vpop.f32.mrf.mxu0
      %v4639 = vadd.f32 0.0, %v4638
      %v4640 = vpop.f32.mrf.mxu0
      %v4641 = vadd.f32 0.0, %v4640
      %4642 = vmatmul.bf16.gmra.mxu0 %v4514
      %v4643 = vpop.f32.mrf.mxu0
      %v4644 = vadd.f32 0.0, %v4643
      %v4645 = vpop.f32.mrf.mxu0
      %v4646 = vadd.f32 0.0, %v4645
      %4647 = vdwg.mxu0
      %v4648 = vld [vmem:[#allocation3] sm:$0xff]
      %v4649 = vld [vmem:[#allocation3 + $0x8] sm:$0xff]
      %v4650 = vld [vmem:[#allocation3 + $0x10] sm:$0xff]
      %v4651 = vld [vmem:[#allocation3 + $0x18] sm:$0xff]
      %v4652 = vld [vmem:[#allocation3 + $0x20] sm:$0xff]
      %v4653 = vld [vmem:[#allocation3 + $0x28] sm:$0xff]
      %v4654 = vld [vmem:[#allocation3 + $0x30] sm:$0xff]
      %v4655 = vld [vmem:[#allocation3 + $0x38] sm:$0xff]
      %v4656 = vld [vmem:[#allocation3 + $0x40] sm:$0xff]
      %v4657 = vld [vmem:[#allocation3 + $0x48] sm:$0xff]
      %v4658 = vld [vmem:[#allocation3 + $0x50] sm:$0xff]
      %v4659 = vld [vmem:[#allocation3 + $0x58] sm:$0xff]
      %v4660 = vld [vmem:[#allocation3 + $0x60] sm:$0xff]
      %v4661 = vld [vmem:[#allocation3 + $0x68] sm:$0xff]
      %v4662 = vld [vmem:[#allocation3 + $0x70] sm:$0xff]
      %v4663 = vld [vmem:[#allocation3 + $0x78] sm:$0xff]
      %v4664 = vld [vmem:[#allocation3 + $0x80] sm:$0xff]
      %v4665 = vld [vmem:[#allocation3 + $0x88] sm:$0xff]
      %v4666 = vld [vmem:[#allocation3 + $0x90] sm:$0xff]
      %v4667 = vld [vmem:[#allocation3 + $0x98] sm:$0xff]
      %v4668 = vld [vmem:[#allocation3 + $0xa0] sm:$0xff]
      %v4669 = vld [vmem:[#allocation3 + $0xa8] sm:$0xff]
      %v4670 = vld [vmem:[#allocation3 + $0xb0] sm:$0xff]
      %v4671 = vld [vmem:[#allocation3 + $0xb8] sm:$0xff]
      %v4672 = vld [vmem:[#allocation3 + $0xc0] sm:$0xff]
      %v4673 = vld [vmem:[#allocation3 + $0xc8] sm:$0xff]
      %v4674 = vld [vmem:[#allocation3 + $0xd0] sm:$0xff]
      %v4675 = vld [vmem:[#allocation3 + $0xd8] sm:$0xff]
      %v4676 = vld [vmem:[#allocation3 + $0xe0] sm:$0xff]
      %v4677 = vld [vmem:[#allocation3 + $0xe8] sm:$0xff]
      %v4678 = vld [vmem:[#allocation3 + $0xf0] sm:$0xff]
      %v4679 = vld [vmem:[#allocation3 + $0xf8] sm:$0xff]
      %v4680 = vld [vmem:[#allocation3 + $0x100] sm:$0xff]
      %v4681 = vld [vmem:[#allocation3 + $0x108] sm:$0xff]
      %v4682 = vld [vmem:[#allocation3 + $0x110] sm:$0xff]
      %v4683 = vld [vmem:[#allocation3 + $0x118] sm:$0xff]
      %v4684 = vld [vmem:[#allocation3 + $0x120] sm:$0xff]
      %v4685 = vld [vmem:[#allocation3 + $0x128] sm:$0xff]
      %v4686 = vld [vmem:[#allocation3 + $0x130] sm:$0xff]
      %v4687 = vld [vmem:[#allocation3 + $0x138] sm:$0xff]
      %v4688 = vld [vmem:[#allocation3 + $0x140] sm:$0xff]
      %v4689 = vld [vmem:[#allocation3 + $0x148] sm:$0xff]
      %v4690 = vld [vmem:[#allocation3 + $0x150] sm:$0xff]
      %v4691 = vld [vmem:[#allocation3 + $0x158] sm:$0xff]
      %v4692 = vld [vmem:[#allocation3 + $0x160] sm:$0xff]
      %v4693 = vld [vmem:[#allocation3 + $0x168] sm:$0xff]
      %v4694 = vld [vmem:[#allocation3 + $0x170] sm:$0xff]
      %v4695 = vld [vmem:[#allocation3 + $0x178] sm:$0xff]
      %v4696 = vadd.f32 %v4648, %v4529
      %v4697 = vadd.f32 %v4649, %v4531
      %v4698 = vadd.f32 %v4650, %v4534
      %v4699 = vadd.f32 %v4651, %v4536
      %v4700 = vadd.f32 %v4652, %v4539
      %v4701 = vadd.f32 %v4653, %v4541
      %v4702 = vadd.f32 %v4654, %v4544
      %v4703 = vadd.f32 %v4655, %v4546
      %v4704 = vadd.f32 %v4656, %v4549
      %v4705 = vadd.f32 %v4657, %v4551
      %v4706 = vadd.f32 %v4658, %v4554
      %v4707 = vadd.f32 %v4659, %v4556
      %v4708 = vadd.f32 %v4660, %v4559
      %v4709 = vadd.f32 %v4661, %v4561
      %v4710 = vadd.f32 %v4662, %v4564
      %v4711 = vadd.f32 %v4663, %v4566
      %v4712 = vadd.f32 %v4664, %v4569
      %v4713 = vadd.f32 %v4665, %v4571
      %v4714 = vadd.f32 %v4666, %v4574
      %v4715 = vadd.f32 %v4667, %v4576
      %v4716 = vadd.f32 %v4668, %v4579
      %v4717 = vadd.f32 %v4669, %v4581
      %v4718 = vadd.f32 %v4670, %v4584
      %v4719 = vadd.f32 %v4671, %v4586
      %v4720 = vadd.f32 %v4672, %v4589
      %v4721 = vadd.f32 %v4673, %v4591
      %v4722 = vadd.f32 %v4674, %v4594
      %v4723 = vadd.f32 %v4675, %v4596
      %v4724 = vadd.f32 %v4676, %v4599
      %v4725 = vadd.f32 %v4677, %v4601
      %v4726 = vadd.f32 %v4678, %v4604
      %v4727 = vadd.f32 %v4679, %v4606
      %v4728 = vadd.f32 %v4680, %v4609
      %v4729 = vadd.f32 %v4681, %v4611
      %v4730 = vadd.f32 %v4682, %v4614
      %v4731 = vadd.f32 %v4683, %v4616
      %v4732 = vadd.f32 %v4684, %v4619
      %v4733 = vadd.f32 %v4685, %v4621
      %v4734 = vadd.f32 %v4686, %v4624
      %v4735 = vadd.f32 %v4687, %v4626
      %v4736 = vadd.f32 %v4688, %v4629
      %v4737 = vadd.f32 %v4689, %v4631
      %v4738 = vadd.f32 %v4690, %v4634
      %v4739 = vadd.f32 %v4691, %v4636
      %v4740 = vadd.f32 %v4692, %v4639
      %v4741 = vadd.f32 %v4693, %v4641
      %v4742 = vadd.f32 %v4694, %v4644
      %v4743 = vadd.f32 %v4695, %v4646
      %4744 = vst.msk [vmem:[#allocation3] sm:$0xff] %vm922, %v4696
      %4745 = vst.msk [vmem:[#allocation3 + $0x8] sm:$0xff] %vm922, %v4697
      %4746 = vst.msk [vmem:[#allocation3 + $0x10] sm:$0xff] %vm922, %v4698
      %4747 = vst.msk [vmem:[#allocation3 + $0x18] sm:$0xff] %vm922, %v4699
      %4748 = vst.msk [vmem:[#allocation3 + $0x20] sm:$0xff] %vm922, %v4700
      %4749 = vst.msk [vmem:[#allocation3 + $0x28] sm:$0xff] %vm922, %v4701
      %4750 = vst.msk [vmem:[#allocation3 + $0x30] sm:$0xff] %vm922, %v4702
      %4751 = vst.msk [vmem:[#allocation3 + $0x38] sm:$0xff] %vm922, %v4703
      %4752 = vst.msk [vmem:[#allocation3 + $0x40] sm:$0xff] %vm922, %v4704
      %4753 = vst.msk [vmem:[#allocation3 + $0x48] sm:$0xff] %vm922, %v4705
      %4754 = vst.msk [vmem:[#allocation3 + $0x50] sm:$0xff] %vm922, %v4706
      %4755 = vst.msk [vmem:[#allocation3 + $0x58] sm:$0xff] %vm922, %v4707
      %4756 = vst.msk [vmem:[#allocation3 + $0x60] sm:$0xff] %vm922, %v4708
      %4757 = vst.msk [vmem:[#allocation3 + $0x68] sm:$0xff] %vm922, %v4709
      %4758 = vst.msk [vmem:[#allocation3 + $0x70] sm:$0xff] %vm922, %v4710
      %4759 = vst.msk [vmem:[#allocation3 + $0x78] sm:$0xff] %vm922, %v4711
      %4760 = vst.msk [vmem:[#allocation3 + $0x80] sm:$0xff] %vm922, %v4712
      %4761 = vst.msk [vmem:[#allocation3 + $0x88] sm:$0xff] %vm922, %v4713
      %4762 = vst.msk [vmem:[#allocation3 + $0x90] sm:$0xff] %vm922, %v4714
      %4763 = vst.msk [vmem:[#allocation3 + $0x98] sm:$0xff] %vm922, %v4715
      %4764 = vst.msk [vmem:[#allocation3 + $0xa0] sm:$0xff] %vm922, %v4716
      %4765 = vst.msk [vmem:[#allocation3 + $0xa8] sm:$0xff] %vm922, %v4717
      %4766 = vst.msk [vmem:[#allocation3 + $0xb0] sm:$0xff] %vm922, %v4718
      %4767 = vst.msk [vmem:[#allocation3 + $0xb8] sm:$0xff] %vm922, %v4719
      %4768 = vst.msk [vmem:[#allocation3 + $0xc0] sm:$0xff] %vm922, %v4720
      %4769 = vst.msk [vmem:[#allocation3 + $0xc8] sm:$0xff] %vm922, %v4721
      %4770 = vst.msk [vmem:[#allocation3 + $0xd0] sm:$0xff] %vm922, %v4722
      %4771 = vst.msk [vmem:[#allocation3 + $0xd8] sm:$0xff] %vm922, %v4723
      %4772 = vst.msk [vmem:[#allocation3 + $0xe0] sm:$0xff] %vm922, %v4724
      %4773 = vst.msk [vmem:[#allocation3 + $0xe8] sm:$0xff] %vm922, %v4725
      %4774 = vst.msk [vmem:[#allocation3 + $0xf0] sm:$0xff] %vm922, %v4726
      %4775 = vst.msk [vmem:[#allocation3 + $0xf8] sm:$0xff] %vm922, %v4727
      %4776 = vst.msk [vmem:[#allocation3 + $0x100] sm:$0xff] %vm922, %v4728
      %4777 = vst.msk [vmem:[#allocation3 + $0x108] sm:$0xff] %vm922, %v4729
      %4778 = vst.msk [vmem:[#allocation3 + $0x110] sm:$0xff] %vm922, %v4730
      %4779 = vst.msk [vmem:[#allocation3 + $0x118] sm:$0xff] %vm922, %v4731
      %4780 = vst.msk [vmem:[#allocation3 + $0x120] sm:$0xff] %vm922, %v4732
      %4781 = vst.msk [vmem:[#allocation3 + $0x128] sm:$0xff] %vm922, %v4733
      %4782 = vst.msk [vmem:[#allocation3 + $0x130] sm:$0xff] %vm922, %v4734
      %4783 = vst.msk [vmem:[#allocation3 + $0x138] sm:$0xff] %vm922, %v4735
      %4784 = vst.msk [vmem:[#allocation3 + $0x140] sm:$0xff] %vm922, %v4736
      %4785 = vst.msk [vmem:[#allocation3 + $0x148] sm:$0xff] %vm922, %v4737
      %4786 = vst.msk [vmem:[#allocation3 + $0x150] sm:$0xff] %vm922, %v4738
      %4787 = vst.msk [vmem:[#allocation3 + $0x158] sm:$0xff] %vm922, %v4739
      %4788 = vst.msk [vmem:[#allocation3 + $0x160] sm:$0xff] %vm922, %v4740
      %4789 = vst.msk [vmem:[#allocation3 + $0x168] sm:$0xff] %vm922, %v4741
      %4790 = vst.msk [vmem:[#allocation3 + $0x170] sm:$0xff] %vm922, %v4742
      %4791 = vst.msk [vmem:[#allocation3 + $0x178] sm:$0xff] %vm922, %v4743
      %v4792 = vld [vmem:[#allocation2 + $0x18] sm:$0xf]
      %v4793 = vld [vmem:[#allocation2 + $0x1c] sm:$0xf]
      %v4794 = vld [vmem:[#allocation2 + $0x20] sm:$0xf]
      %v4795 = vld [vmem:[#allocation2 + $0x24] sm:$0xf]
      %v4796 = vld [vmem:[#allocation2 + $0x28] sm:$0xf]
      %v4797 = vld [vmem:[#allocation2 + $0x2c] sm:$0xf]
      %v4798 = vld [vmem:[#allocation2 + $0x30] sm:$0xf]
      %v4799 = vld [vmem:[#allocation2 + $0x34] sm:$0xf]
      %v4800 = vld [vmem:[#allocation2 + $0x38] sm:$0xf]
      %v4801 = vld [vmem:[#allocation2 + $0x3c] sm:$0xf]
      %v4802 = vld [vmem:[#allocation2 + $0x40] sm:$0xf]
      %v4803 = vld [vmem:[#allocation2 + $0x44] sm:$0xf]
      %v4804 = vld [vmem:[#allocation2 + $0x48] sm:$0xf]
      %v4805 = vld [vmem:[#allocation2 + $0x4c] sm:$0xf]
      %v4806 = vld [vmem:[#allocation2 + $0x50] sm:$0xf]
      %v4807 = vld [vmem:[#allocation2 + $0x54] sm:$0xf]
      %v4808 = vld [vmem:[#allocation2 + $0x58] sm:$0xf]
      %v4809 = vld [vmem:[#allocation2 + $0x5c] sm:$0xf]
      %v4810 = vld [vmem:[#allocation2 + $0x60] sm:$0xf]
      %v4811 = vld [vmem:[#allocation2 + $0x64] sm:$0xf]
      %v4812 = vld [vmem:[#allocation2 + $0x68] sm:$0xf]
      %v4813 = vld [vmem:[#allocation2 + $0x6c] sm:$0xf]
      %v4814 = vld [vmem:[#allocation2 + $0x70] sm:$0xf]
      %v4815 = vld [vmem:[#allocation2 + $0x74] sm:$0xf]
      %v4816 = vld [vmem:[#allocation2 + $0x78] sm:$0xf]
      %v4817 = vld [vmem:[#allocation2 + $0x7c] sm:$0xf]
      %v4818 = vld [vmem:[#allocation2 + $0x80] sm:$0xf]
      %v4819 = vld [vmem:[#allocation2 + $0x84] sm:$0xf]
      %v4820 = vld [vmem:[#allocation2 + $0x88] sm:$0xf]
      %v4821 = vld [vmem:[#allocation2 + $0x8c] sm:$0xf]
      %v4822 = vld [vmem:[#allocation2 + $0x90] sm:$0xf]
      %v4823 = vld [vmem:[#allocation2 + $0x94] sm:$0xf]
      %v4824 = vld [vmem:[#allocation2 + $0x98] sm:$0xf]
      %v4825 = vld [vmem:[#allocation2 + $0x9c] sm:$0xf]
      %v4826 = vld [vmem:[#allocation2 + $0xa0] sm:$0xf]
      %v4827 = vld [vmem:[#allocation2 + $0xa4] sm:$0xf]
      %v4828 = vld [vmem:[#allocation2 + $0xa8] sm:$0xf]
      %v4829 = vld [vmem:[#allocation2 + $0xac] sm:$0xf]
      %v4830 = vld [vmem:[#allocation2 + $0xb0] sm:$0xf]
      %v4831 = vld [vmem:[#allocation2 + $0xb4] sm:$0xf]
      %v4832 = vld [vmem:[#allocation2 + $0xb8] sm:$0xf]
      %v4833 = vld [vmem:[#allocation2 + $0xbc] sm:$0xf]
      %v4834 = vld [vmem:[#allocation2 + $0xc0] sm:$0xf]
      %v4835 = vld [vmem:[#allocation2 + $0xc4] sm:$0xf]
      %v4836 = vld [vmem:[#allocation2 + $0xc8] sm:$0xf]
      %v4837 = vld [vmem:[#allocation2 + $0xcc] sm:$0xf]
      %v4838 = vld [vmem:[#allocation2 + $0xd0] sm:$0xf]
      %v4839 = vld [vmem:[#allocation2 + $0xd4] sm:$0xf]
      %v4840 = vld [vmem:[#allocation2 + $0xd8] sm:$0x1]
      %s4841 = scalar_lea.vmem %s1, 14
      %v4842 = vld [vmem:[%s4841] sm:$0x3]
      %v4892 = vunpack.c.l.b16 %v4792
      %v4893 = vunpack.c.l.b16 %v4793
      %v4894 = vunpack.c.l.b16 %v4794
      %v4895 = vunpack.c.l.b16 %v4795
      %v4896 = vunpack.c.l.b16 %v4796
      %v4897 = vunpack.c.l.b16 %v4797
      %v4898 = vunpack.c.l.b16 %v4798
      %v4899 = vunpack.c.l.b16 %v4799
      %v4900 = vunpack.c.l.b16 %v4800
      %v4901 = vunpack.c.l.b16 %v4801
      %v4902 = vunpack.c.l.b16 %v4802
      %v4903 = vunpack.c.l.b16 %v4803
      %v4904 = vunpack.c.l.b16 %v4804
      %v4905 = vunpack.c.l.b16 %v4805
      %v4906 = vunpack.c.l.b16 %v4806
      %v4907 = vunpack.c.l.b16 %v4807
      %v4908 = vunpack.c.l.b16 %v4808
      %v4909 = vunpack.c.l.b16 %v4809
      %v4910 = vunpack.c.l.b16 %v4810
      %v4911 = vunpack.c.l.b16 %v4811
      %v4912 = vunpack.c.l.b16 %v4812
      %v4913 = vunpack.c.l.b16 %v4813
      %v4914 = vunpack.c.l.b16 %v4814
      %v4915 = vunpack.c.l.b16 %v4815
      %v4916 = vunpack.c.l.b16 %v4816
      %v4917 = vunpack.c.l.b16 %v4817
      %v4918 = vunpack.c.l.b16 %v4818
      %v4919 = vunpack.c.l.b16 %v4819
      %v4920 = vunpack.c.l.b16 %v4820
      %v4921 = vunpack.c.l.b16 %v4821
      %v4922 = vunpack.c.l.b16 %v4822
      %v4923 = vunpack.c.l.b16 %v4823
      %v4924 = vunpack.c.l.b16 %v4824
      %v4925 = vunpack.c.l.b16 %v4825
      %v4926 = vunpack.c.l.b16 %v4826
      %v4927 = vunpack.c.l.b16 %v4827
      %v4928 = vunpack.c.l.b16 %v4828
      %v4929 = vunpack.c.l.b16 %v4829
      %v4930 = vunpack.c.l.b16 %v4830
      %v4931 = vunpack.c.l.b16 %v4831
      %v4932 = vunpack.c.l.b16 %v4832
      %v4933 = vunpack.c.l.b16 %v4833
      %v4934 = vunpack.c.l.b16 %v4834
      %v4935 = vunpack.c.l.b16 %v4835
      %v4936 = vunpack.c.l.b16 %v4836
      %v4937 = vunpack.c.l.b16 %v4837
      %v4938 = vunpack.c.l.b16 %v4838
      %v4939 = vunpack.c.l.b16 %v4839
      %v4940 = vunpack.c.l.b16 %v4840
      %v4941 = vpack.c.b16 %v4893, %v4892
      %v4942 = vpack.c.b16 %v4895, %v4894
      %v4943 = vpack.c.b16 %v4897, %v4896
      %v4944 = vpack.c.b16 %v4899, %v4898
      %v4945 = vpack.c.b16 %v4901, %v4900
      %v4946 = vpack.c.b16 %v4903, %v4902
      %v4947 = vpack.c.b16 %v4905, %v4904
      %v4948 = vpack.c.b16 %v4907, %v4906
      %v4949 = vpack.c.b16 %v4909, %v4908
      %v4950 = vpack.c.b16 %v4911, %v4910
      %v4951 = vpack.c.b16 %v4913, %v4912
      %v4952 = vpack.c.b16 %v4915, %v4914
      %v4953 = vpack.c.b16 %v4917, %v4916
      %v4954 = vpack.c.b16 %v4919, %v4918
      %v4955 = vpack.c.b16 %v4921, %v4920
      %v4956 = vpack.c.b16 %v4923, %v4922
      %v4957 = vpack.c.b16 %v4925, %v4924
      %v4958 = vpack.c.b16 %v4927, %v4926
      %v4959 = vpack.c.b16 %v4929, %v4928
      %v4960 = vpack.c.b16 %v4931, %v4930
      %v4961 = vpack.c.b16 %v4933, %v4932
      %v4962 = vpack.c.b16 %v4935, %v4934
      %v4963 = vpack.c.b16 %v4937, %v4936
      %v4964 = vpack.c.b16 %v4939, %v4938
      %v4965 = vpack.c.b16 %v4940, %v4940
      %v4967 = vshrl.u32 %v4941, 16
      %v4969 = vshll.u32 %v4941, 16
      %v4971 = vrot.slane %v4969, 1
      %v4972 = vor.u32 %v4967, %v4971
      %v4974 = vshll.u32 %v4942, 16
      %v4976 = vrot.slane %v4974, 1
      %v4977 = vsel %vm1350, %v4972, %v4976
      %v4978 = vshrl.u32 %v4942, 16
      %v4980 = vor.u32 %v4978, %v4976
      %v4982 = vshll.u32 %v4943, 16
      %v4984 = vrot.slane %v4982, 1
      %v4985 = vsel %vm1350, %v4980, %v4984
      %v4986 = vshrl.u32 %v4943, 16
      %v4988 = vor.u32 %v4986, %v4984
      %v4990 = vshll.u32 %v4944, 16
      %v4992 = vrot.slane %v4990, 1
      %v4993 = vsel %vm1350, %v4988, %v4992
      %v4994 = vshrl.u32 %v4944, 16
      %v4996 = vor.u32 %v4994, %v4992
      %v4998 = vshll.u32 %v4945, 16
      %v5000 = vrot.slane %v4998, 1
      %v5001 = vsel %vm1350, %v4996, %v5000
      %v5002 = vshrl.u32 %v4945, 16
      %v5004 = vor.u32 %v5002, %v5000
      %v5006 = vshll.u32 %v4946, 16
      %v5008 = vrot.slane %v5006, 1
      %v5009 = vsel %vm1350, %v5004, %v5008
      %v5010 = vshrl.u32 %v4946, 16
      %v5012 = vor.u32 %v5010, %v5008
      %v5014 = vshll.u32 %v4947, 16
      %v5016 = vrot.slane %v5014, 1
      %v5017 = vsel %vm1350, %v5012, %v5016
      %v5018 = vshrl.u32 %v4947, 16
      %v5020 = vor.u32 %v5018, %v5016
      %v5022 = vshll.u32 %v4948, 16
      %v5024 = vrot.slane %v5022, 1
      %v5025 = vsel %vm1350, %v5020, %v5024
      %v5026 = vshrl.u32 %v4948, 16
      %v5028 = vor.u32 %v5026, %v5024
      %v5030 = vshll.u32 %v4949, 16
      %v5032 = vrot.slane %v5030, 1
      %v5033 = vsel %vm1350, %v5028, %v5032
      %v5034 = vshrl.u32 %v4949, 16
      %v5036 = vor.u32 %v5034, %v5032
      %v5038 = vshll.u32 %v4950, 16
      %v5040 = vrot.slane %v5038, 1
      %v5041 = vsel %vm1350, %v5036, %v5040
      %v5042 = vshrl.u32 %v4950, 16
      %v5044 = vor.u32 %v5042, %v5040
      %v5046 = vshll.u32 %v4951, 16
      %v5048 = vrot.slane %v5046, 1
      %v5049 = vsel %vm1350, %v5044, %v5048
      %v5050 = vshrl.u32 %v4951, 16
      %v5052 = vor.u32 %v5050, %v5048
      %v5054 = vshll.u32 %v4952, 16
      %v5056 = vrot.slane %v5054, 1
      %v5057 = vsel %vm1350, %v5052, %v5056
      %v5058 = vshrl.u32 %v4952, 16
      %v5060 = vor.u32 %v5058, %v5056
      %v5062 = vshll.u32 %v4953, 16
      %v5064 = vrot.slane %v5062, 1
      %v5065 = vsel %vm1350, %v5060, %v5064
      %v5066 = vshrl.u32 %v4953, 16
      %v5068 = vor.u32 %v5066, %v5064
      %v5070 = vshll.u32 %v4954, 16
      %v5072 = vrot.slane %v5070, 1
      %v5073 = vsel %vm1350, %v5068, %v5072
      %v5074 = vshrl.u32 %v4954, 16
      %v5076 = vor.u32 %v5074, %v5072
      %v5078 = vshll.u32 %v4955, 16
      %v5080 = vrot.slane %v5078, 1
      %v5081 = vsel %vm1350, %v5076, %v5080
      %v5082 = vshrl.u32 %v4955, 16
      %v5084 = vor.u32 %v5082, %v5080
      %v5086 = vshll.u32 %v4956, 16
      %v5088 = vrot.slane %v5086, 1
      %v5089 = vsel %vm1350, %v5084, %v5088
      %v5090 = vshrl.u32 %v4956, 16
      %v5092 = vor.u32 %v5090, %v5088
      %v5094 = vshll.u32 %v4957, 16
      %v5096 = vrot.slane %v5094, 1
      %v5097 = vsel %vm1350, %v5092, %v5096
      %v5098 = vshrl.u32 %v4957, 16
      %v5100 = vor.u32 %v5098, %v5096
      %v5102 = vshll.u32 %v4958, 16
      %v5104 = vrot.slane %v5102, 1
      %v5105 = vsel %vm1350, %v5100, %v5104
      %v5106 = vshrl.u32 %v4958, 16
      %v5108 = vor.u32 %v5106, %v5104
      %v5110 = vshll.u32 %v4959, 16
      %v5112 = vrot.slane %v5110, 1
      %v5113 = vsel %vm1350, %v5108, %v5112
      %v5114 = vshrl.u32 %v4959, 16
      %v5116 = vor.u32 %v5114, %v5112
      %v5118 = vshll.u32 %v4960, 16
      %v5120 = vrot.slane %v5118, 1
      %v5121 = vsel %vm1350, %v5116, %v5120
      %v5122 = vshrl.u32 %v4960, 16
      %v5124 = vor.u32 %v5122, %v5120
      %v5126 = vshll.u32 %v4961, 16
      %v5128 = vrot.slane %v5126, 1
      %v5129 = vsel %vm1350, %v5124, %v5128
      %v5130 = vshrl.u32 %v4961, 16
      %v5132 = vor.u32 %v5130, %v5128
      %v5134 = vshll.u32 %v4962, 16
      %v5136 = vrot.slane %v5134, 1
      %v5137 = vsel %vm1350, %v5132, %v5136
      %v5138 = vshrl.u32 %v4962, 16
      %v5140 = vor.u32 %v5138, %v5136
      %v5142 = vshll.u32 %v4963, 16
      %v5144 = vrot.slane %v5142, 1
      %v5145 = vsel %vm1350, %v5140, %v5144
      %v5146 = vshrl.u32 %v4963, 16
      %v5148 = vor.u32 %v5146, %v5144
      %v5150 = vshll.u32 %v4964, 16
      %v5152 = vrot.slane %v5150, 1
      %v5153 = vsel %vm1350, %v5148, %v5152
      %v5154 = vshrl.u32 %v4964, 16
      %v5156 = vor.u32 %v5154, %v5152
      %v5158 = vshll.u32 %v4965, 16
      %v5160 = vrot.slane %v5158, 1
      %v5161 = vsel %vm1350, %v5156, %v5160
      %v5163 = vsel %vm922, %v4977, 0
      %v5166 = vsel %vm922, %v4985, 0
      %v5169 = vsel %vm922, %v4993, 0
      %v5172 = vsel %vm922, %v5001, 0
      %v5175 = vsel %vm922, %v5009, 0
      %v5178 = vsel %vm922, %v5017, 0
      %v5181 = vsel %vm922, %v5025, 0
      %v5184 = vsel %vm922, %v5033, 0
      %v5187 = vsel %vm922, %v5041, 0
      %v5190 = vsel %vm922, %v5049, 0
      %v5193 = vsel %vm922, %v5057, 0
      %v5196 = vsel %vm922, %v5065, 0
      %v5199 = vsel %vm922, %v5073, 0
      %v5202 = vsel %vm922, %v5081, 0
      %v5205 = vsel %vm922, %v5089, 0
      %v5208 = vsel %vm922, %v5097, 0
      %v5211 = vsel %vm922, %v5105, 0
      %v5214 = vsel %vm922, %v5113, 0
      %v5217 = vsel %vm922, %v5121, 0
      %v5220 = vsel %vm922, %v5129, 0
      %v5223 = vsel %vm922, %v5137, 0
      %v5226 = vsel %vm922, %v5145, 0
      %v5229 = vsel %vm922, %v5153, 0
      %v5232 = vsel %vm922, %v5161, 0
      %v5235 = vsel %vm995, %v4842, 0
      %5237 = vmatpush.bf16.msra.mxu0 0
      %5238 = vmatpush.bf16.msra.mxu0 0
      %5239 = vmatpush.bf16.msra.mxu0 0
      %5240 = vmatpush.bf16.msra.mxu0 0
      %5241 = vmatpush.bf16.msra.mxu0 0
      %5242 = vmatpush.bf16.msra.mxu0 0
      %5243 = vmatpush.bf16.msra.mxu0 0
      %5244 = vmatpush.bf16.msra.mxu0 %v5235
      %5245 = vmatmul.bf16.gmra.mxu0 %v5163
      %v5246 = vpop.f32.mrf.mxu0
      %v5247 = vadd.f32 0.0, %v5246
      %v5248 = vpop.f32.mrf.mxu0
      %v5249 = vadd.f32 0.0, %v5248
      %5250 = vmatmul.bf16.gmra.mxu0 %v5166
      %v5251 = vpop.f32.mrf.mxu0
      %v5252 = vadd.f32 0.0, %v5251
      %v5253 = vpop.f32.mrf.mxu0
      %v5254 = vadd.f32 0.0, %v5253
      %5255 = vmatmul.bf16.gmra.mxu0 %v5169
      %v5256 = vpop.f32.mrf.mxu0
      %v5257 = vadd.f32 0.0, %v5256
      %v5258 = vpop.f32.mrf.mxu0
      %v5259 = vadd.f32 0.0, %v5258
      %5260 = vmatmul.bf16.gmra.mxu0 %v5172
      %v5261 = vpop.f32.mrf.mxu0
      %v5262 = vadd.f32 0.0, %v5261
      %v5263 = vpop.f32.mrf.mxu0
      %v5264 = vadd.f32 0.0, %v5263
      %5265 = vmatmul.bf16.gmra.mxu0 %v5175
      %v5266 = vpop.f32.mrf.mxu0
      %v5267 = vadd.f32 0.0, %v5266
      %v5268 = vpop.f32.mrf.mxu0
      %v5269 = vadd.f32 0.0, %v5268
      %5270 = vmatmul.bf16.gmra.mxu0 %v5178
      %v5271 = vpop.f32.mrf.mxu0
      %v5272 = vadd.f32 0.0, %v5271
      %v5273 = vpop.f32.mrf.mxu0
      %v5274 = vadd.f32 0.0, %v5273
      %5275 = vmatmul.bf16.gmra.mxu0 %v5181
      %v5276 = vpop.f32.mrf.mxu0
      %v5277 = vadd.f32 0.0, %v5276
      %v5278 = vpop.f32.mrf.mxu0
      %v5279 = vadd.f32 0.0, %v5278
      %5280 = vmatmul.bf16.gmra.mxu0 %v5184
      %v5281 = vpop.f32.mrf.mxu0
      %v5282 = vadd.f32 0.0, %v5281
      %v5283 = vpop.f32.mrf.mxu0
      %v5284 = vadd.f32 0.0, %v5283
      %5285 = vmatmul.bf16.gmra.mxu0 %v5187
      %v5286 = vpop.f32.mrf.mxu0
      %v5287 = vadd.f32 0.0, %v5286
      %v5288 = vpop.f32.mrf.mxu0
      %v5289 = vadd.f32 0.0, %v5288
      %5290 = vmatmul.bf16.gmra.mxu0 %v5190
      %v5291 = vpop.f32.mrf.mxu0
      %v5292 = vadd.f32 0.0, %v5291
      %v5293 = vpop.f32.mrf.mxu0
      %v5294 = vadd.f32 0.0, %v5293
      %5295 = vmatmul.bf16.gmra.mxu0 %v5193
      %v5296 = vpop.f32.mrf.mxu0
      %v5297 = vadd.f32 0.0, %v5296
      %v5298 = vpop.f32.mrf.mxu0
      %v5299 = vadd.f32 0.0, %v5298
      %5300 = vmatmul.bf16.gmra.mxu0 %v5196
      %v5301 = vpop.f32.mrf.mxu0
      %v5302 = vadd.f32 0.0, %v5301
      %v5303 = vpop.f32.mrf.mxu0
      %v5304 = vadd.f32 0.0, %v5303
      %5305 = vmatmul.bf16.gmra.mxu0 %v5199
      %v5306 = vpop.f32.mrf.mxu0
      %v5307 = vadd.f32 0.0, %v5306
      %v5308 = vpop.f32.mrf.mxu0
      %v5309 = vadd.f32 0.0, %v5308
      %5310 = vmatmul.bf16.gmra.mxu0 %v5202
      %v5311 = vpop.f32.mrf.mxu0
      %v5312 = vadd.f32 0.0, %v5311
      %v5313 = vpop.f32.mrf.mxu0
      %v5314 = vadd.f32 0.0, %v5313
      %5315 = vmatmul.bf16.gmra.mxu0 %v5205
      %v5316 = vpop.f32.mrf.mxu0
      %v5317 = vadd.f32 0.0, %v5316
      %v5318 = vpop.f32.mrf.mxu0
      %v5319 = vadd.f32 0.0, %v5318
      %5320 = vmatmul.bf16.gmra.mxu0 %v5208
      %v5321 = vpop.f32.mrf.mxu0
      %v5322 = vadd.f32 0.0, %v5321
      %v5323 = vpop.f32.mrf.mxu0
      %v5324 = vadd.f32 0.0, %v5323
      %5325 = vmatmul.bf16.gmra.mxu0 %v5211
      %v5326 = vpop.f32.mrf.mxu0
      %v5327 = vadd.f32 0.0, %v5326
      %v5328 = vpop.f32.mrf.mxu0
      %v5329 = vadd.f32 0.0, %v5328
      %5330 = vmatmul.bf16.gmra.mxu0 %v5214
      %v5331 = vpop.f32.mrf.mxu0
      %v5332 = vadd.f32 0.0, %v5331
      %v5333 = vpop.f32.mrf.mxu0
      %v5334 = vadd.f32 0.0, %v5333
      %5335 = vmatmul.bf16.gmra.mxu0 %v5217
      %v5336 = vpop.f32.mrf.mxu0
      %v5337 = vadd.f32 0.0, %v5336
      %v5338 = vpop.f32.mrf.mxu0
      %v5339 = vadd.f32 0.0, %v5338
      %5340 = vmatmul.bf16.gmra.mxu0 %v5220
      %v5341 = vpop.f32.mrf.mxu0
      %v5342 = vadd.f32 0.0, %v5341
      %v5343 = vpop.f32.mrf.mxu0
      %v5344 = vadd.f32 0.0, %v5343
      %5345 = vmatmul.bf16.gmra.mxu0 %v5223
      %v5346 = vpop.f32.mrf.mxu0
      %v5347 = vadd.f32 0.0, %v5346
      %v5348 = vpop.f32.mrf.mxu0
      %v5349 = vadd.f32 0.0, %v5348
      %5350 = vmatmul.bf16.gmra.mxu0 %v5226
      %v5351 = vpop.f32.mrf.mxu0
      %v5352 = vadd.f32 0.0, %v5351
      %v5353 = vpop.f32.mrf.mxu0
      %v5354 = vadd.f32 0.0, %v5353
      %5355 = vmatmul.bf16.gmra.mxu0 %v5229
      %v5356 = vpop.f32.mrf.mxu0
      %v5357 = vadd.f32 0.0, %v5356
      %v5358 = vpop.f32.mrf.mxu0
      %v5359 = vadd.f32 0.0, %v5358
      %5360 = vmatmul.bf16.gmra.mxu0 %v5232
      %v5361 = vpop.f32.mrf.mxu0
      %v5362 = vadd.f32 0.0, %v5361
      %v5363 = vpop.f32.mrf.mxu0
      %v5364 = vadd.f32 0.0, %v5363
      %5365 = vdwg.mxu0
      %v5366 = vld [vmem:[#allocation3] sm:$0xff]
      %v5367 = vld [vmem:[#allocation3 + $0x8] sm:$0xff]
      %v5368 = vld [vmem:[#allocation3 + $0x10] sm:$0xff]
      %v5369 = vld [vmem:[#allocation3 + $0x18] sm:$0xff]
      %v5370 = vld [vmem:[#allocation3 + $0x20] sm:$0xff]
      %v5371 = vld [vmem:[#allocation3 + $0x28] sm:$0xff]
      %v5372 = vld [vmem:[#allocation3 + $0x30] sm:$0xff]
      %v5373 = vld [vmem:[#allocation3 + $0x38] sm:$0xff]
      %v5374 = vld [vmem:[#allocation3 + $0x40] sm:$0xff]
      %v5375 = vld [vmem:[#allocation3 + $0x48] sm:$0xff]
      %v5376 = vld [vmem:[#allocation3 + $0x50] sm:$0xff]
      %v5377 = vld [vmem:[#allocation3 + $0x58] sm:$0xff]
      %v5378 = vld [vmem:[#allocation3 + $0x60] sm:$0xff]
      %v5379 = vld [vmem:[#allocation3 + $0x68] sm:$0xff]
      %v5380 = vld [vmem:[#allocation3 + $0x70] sm:$0xff]
      %v5381 = vld [vmem:[#allocation3 + $0x78] sm:$0xff]
      %v5382 = vld [vmem:[#allocation3 + $0x80] sm:$0xff]
      %v5383 = vld [vmem:[#allocation3 + $0x88] sm:$0xff]
      %v5384 = vld [vmem:[#allocation3 + $0x90] sm:$0xff]
      %v5385 = vld [vmem:[#allocation3 + $0x98] sm:$0xff]
      %v5386 = vld [vmem:[#allocation3 + $0xa0] sm:$0xff]
      %v5387 = vld [vmem:[#allocation3 + $0xa8] sm:$0xff]
      %v5388 = vld [vmem:[#allocation3 + $0xb0] sm:$0xff]
      %v5389 = vld [vmem:[#allocation3 + $0xb8] sm:$0xff]
      %v5390 = vld [vmem:[#allocation3 + $0xc0] sm:$0xff]
      %v5391 = vld [vmem:[#allocation3 + $0xc8] sm:$0xff]
      %v5392 = vld [vmem:[#allocation3 + $0xd0] sm:$0xff]
      %v5393 = vld [vmem:[#allocation3 + $0xd8] sm:$0xff]
      %v5394 = vld [vmem:[#allocation3 + $0xe0] sm:$0xff]
      %v5395 = vld [vmem:[#allocation3 + $0xe8] sm:$0xff]
      %v5396 = vld [vmem:[#allocation3 + $0xf0] sm:$0xff]
      %v5397 = vld [vmem:[#allocation3 + $0xf8] sm:$0xff]
      %v5398 = vld [vmem:[#allocation3 + $0x100] sm:$0xff]
      %v5399 = vld [vmem:[#allocation3 + $0x108] sm:$0xff]
      %v5400 = vld [vmem:[#allocation3 + $0x110] sm:$0xff]
      %v5401 = vld [vmem:[#allocation3 + $0x118] sm:$0xff]
      %v5402 = vld [vmem:[#allocation3 + $0x120] sm:$0xff]
      %v5403 = vld [vmem:[#allocation3 + $0x128] sm:$0xff]
      %v5404 = vld [vmem:[#allocation3 + $0x130] sm:$0xff]
      %v5405 = vld [vmem:[#allocation3 + $0x138] sm:$0xff]
      %v5406 = vld [vmem:[#allocation3 + $0x140] sm:$0xff]
      %v5407 = vld [vmem:[#allocation3 + $0x148] sm:$0xff]
      %v5408 = vld [vmem:[#allocation3 + $0x150] sm:$0xff]
      %v5409 = vld [vmem:[#allocation3 + $0x158] sm:$0xff]
      %v5410 = vld [vmem:[#allocation3 + $0x160] sm:$0xff]
      %v5411 = vld [vmem:[#allocation3 + $0x168] sm:$0xff]
      %v5412 = vld [vmem:[#allocation3 + $0x170] sm:$0xff]
      %v5413 = vld [vmem:[#allocation3 + $0x178] sm:$0xff]
      %v5414 = vadd.f32 %v5366, %v5247
      %v5415 = vadd.f32 %v5367, %v5249
      %v5416 = vadd.f32 %v5368, %v5252
      %v5417 = vadd.f32 %v5369, %v5254
      %v5418 = vadd.f32 %v5370, %v5257
      %v5419 = vadd.f32 %v5371, %v5259
      %v5420 = vadd.f32 %v5372, %v5262
      %v5421 = vadd.f32 %v5373, %v5264
      %v5422 = vadd.f32 %v5374, %v5267
      %v5423 = vadd.f32 %v5375, %v5269
      %v5424 = vadd.f32 %v5376, %v5272
      %v5425 = vadd.f32 %v5377, %v5274
      %v5426 = vadd.f32 %v5378, %v5277
      %v5427 = vadd.f32 %v5379, %v5279
      %v5428 = vadd.f32 %v5380, %v5282
      %v5429 = vadd.f32 %v5381, %v5284
      %v5430 = vadd.f32 %v5382, %v5287
      %v5431 = vadd.f32 %v5383, %v5289
      %v5432 = vadd.f32 %v5384, %v5292
      %v5433 = vadd.f32 %v5385, %v5294
      %v5434 = vadd.f32 %v5386, %v5297
      %v5435 = vadd.f32 %v5387, %v5299
      %v5436 = vadd.f32 %v5388, %v5302
      %v5437 = vadd.f32 %v5389, %v5304
      %v5438 = vadd.f32 %v5390, %v5307
      %v5439 = vadd.f32 %v5391, %v5309
      %v5440 = vadd.f32 %v5392, %v5312
      %v5441 = vadd.f32 %v5393, %v5314
      %v5442 = vadd.f32 %v5394, %v5317
      %v5443 = vadd.f32 %v5395, %v5319
      %v5444 = vadd.f32 %v5396, %v5322
      %v5445 = vadd.f32 %v5397, %v5324
      %v5446 = vadd.f32 %v5398, %v5327
      %v5447 = vadd.f32 %v5399, %v5329
      %v5448 = vadd.f32 %v5400, %v5332
      %v5449 = vadd.f32 %v5401, %v5334
      %v5450 = vadd.f32 %v5402, %v5337
      %v5451 = vadd.f32 %v5403, %v5339
      %v5452 = vadd.f32 %v5404, %v5342
      %v5453 = vadd.f32 %v5405, %v5344
      %v5454 = vadd.f32 %v5406, %v5347
      %v5455 = vadd.f32 %v5407, %v5349
      %v5456 = vadd.f32 %v5408, %v5352
      %v5457 = vadd.f32 %v5409, %v5354
      %v5458 = vadd.f32 %v5410, %v5357
      %v5459 = vadd.f32 %v5411, %v5359
      %v5460 = vadd.f32 %v5412, %v5362
      %v5461 = vadd.f32 %v5413, %v5364
      %5462 = vst.msk [vmem:[#allocation3] sm:$0xff] %vm922, %v5414
      %5463 = vst.msk [vmem:[#allocation3 + $0x8] sm:$0xff] %vm922, %v5415
      %5464 = vst.msk [vmem:[#allocation3 + $0x10] sm:$0xff] %vm922, %v5416
      %5465 = vst.msk [vmem:[#allocation3 + $0x18] sm:$0xff] %vm922, %v5417
      %5466 = vst.msk [vmem:[#allocation3 + $0x20] sm:$0xff] %vm922, %v5418
      %5467 = vst.msk [vmem:[#allocation3 + $0x28] sm:$0xff] %vm922, %v5419
      %5468 = vst.msk [vmem:[#allocation3 + $0x30] sm:$0xff] %vm922, %v5420
      %5469 = vst.msk [vmem:[#allocation3 + $0x38] sm:$0xff] %vm922, %v5421
      %5470 = vst.msk [vmem:[#allocation3 + $0x40] sm:$0xff] %vm922, %v5422
      %5471 = vst.msk [vmem:[#allocation3 + $0x48] sm:$0xff] %vm922, %v5423
      %5472 = vst.msk [vmem:[#allocation3 + $0x50] sm:$0xff] %vm922, %v5424
      %5473 = vst.msk [vmem:[#allocation3 + $0x58] sm:$0xff] %vm922, %v5425
      %5474 = vst.msk [vmem:[#allocation3 + $0x60] sm:$0xff] %vm922, %v5426
      %5475 = vst.msk [vmem:[#allocation3 + $0x68] sm:$0xff] %vm922, %v5427
      %5476 = vst.msk [vmem:[#allocation3 + $0x70] sm:$0xff] %vm922, %v5428
      %5477 = vst.msk [vmem:[#allocation3 + $0x78] sm:$0xff] %vm922, %v5429
      %5478 = vst.msk [vmem:[#allocation3 + $0x80] sm:$0xff] %vm922, %v5430
      %5479 = vst.msk [vmem:[#allocation3 + $0x88] sm:$0xff] %vm922, %v5431
      %5480 = vst.msk [vmem:[#allocation3 + $0x90] sm:$0xff] %vm922, %v5432
      %5481 = vst.msk [vmem:[#allocation3 + $0x98] sm:$0xff] %vm922, %v5433
      %5482 = vst.msk [vmem:[#allocation3 + $0xa0] sm:$0xff] %vm922, %v5434
      %5483 = vst.msk [vmem:[#allocation3 + $0xa8] sm:$0xff] %vm922, %v5435
      %5484 = vst.msk [vmem:[#allocation3 + $0xb0] sm:$0xff] %vm922, %v5436
      %5485 = vst.msk [vmem:[#allocation3 + $0xb8] sm:$0xff] %vm922, %v5437
      %5486 = vst.msk [vmem:[#allocation3 + $0xc0] sm:$0xff] %vm922, %v5438
      %5487 = vst.msk [vmem:[#allocation3 + $0xc8] sm:$0xff] %vm922, %v5439
      %5488 = vst.msk [vmem:[#allocation3 + $0xd0] sm:$0xff] %vm922, %v5440
      %5489 = vst.msk [vmem:[#allocation3 + $0xd8] sm:$0xff] %vm922, %v5441
      %5490 = vst.msk [vmem:[#allocation3 + $0xe0] sm:$0xff] %vm922, %v5442
      %5491 = vst.msk [vmem:[#allocation3 + $0xe8] sm:$0xff] %vm922, %v5443
      %5492 = vst.msk [vmem:[#allocation3 + $0xf0] sm:$0xff] %vm922, %v5444
      %5493 = vst.msk [vmem:[#allocation3 + $0xf8] sm:$0xff] %vm922, %v5445
      %5494 = vst.msk [vmem:[#allocation3 + $0x100] sm:$0xff] %vm922, %v5446
      %5495 = vst.msk [vmem:[#allocation3 + $0x108] sm:$0xff] %vm922, %v5447
      %5496 = vst.msk [vmem:[#allocation3 + $0x110] sm:$0xff] %vm922, %v5448
      %5497 = vst.msk [vmem:[#allocation3 + $0x118] sm:$0xff] %vm922, %v5449
      %5498 = vst.msk [vmem:[#allocation3 + $0x120] sm:$0xff] %vm922, %v5450
      %5499 = vst.msk [vmem:[#allocation3 + $0x128] sm:$0xff] %vm922, %v5451
      %5500 = vst.msk [vmem:[#allocation3 + $0x130] sm:$0xff] %vm922, %v5452
      %5501 = vst.msk [vmem:[#allocation3 + $0x138] sm:$0xff] %vm922, %v5453
      %5502 = vst.msk [vmem:[#allocation3 + $0x140] sm:$0xff] %vm922, %v5454
      %5503 = vst.msk [vmem:[#allocation3 + $0x148] sm:$0xff] %vm922, %v5455
      %5504 = vst.msk [vmem:[#allocation3 + $0x150] sm:$0xff] %vm922, %v5456
      %5505 = vst.msk [vmem:[#allocation3 + $0x158] sm:$0xff] %vm922, %v5457
      %5506 = vst.msk [vmem:[#allocation3 + $0x160] sm:$0xff] %vm922, %v5458
      %5507 = vst.msk [vmem:[#allocation3 + $0x168] sm:$0xff] %vm922, %v5459
      %5508 = vst.msk [vmem:[#allocation3 + $0x170] sm:$0xff] %vm922, %v5460
      %5509 = vst.msk [vmem:[#allocation3 + $0x178] sm:$0xff] %vm922, %v5461
      %v5510 = vld [vmem:[#allocation2 + $0x18] sm:$0xe]
      %v5511 = vld [vmem:[#allocation2 + $0x1c] sm:$0xf]
      %v5512 = vld [vmem:[#allocation2 + $0x20] sm:$0xf]
      %v5513 = vld [vmem:[#allocation2 + $0x24] sm:$0xf]
      %v5514 = vld [vmem:[#allocation2 + $0x28] sm:$0xf]
      %v5515 = vld [vmem:[#allocation2 + $0x2c] sm:$0xf]
      %v5516 = vld [vmem:[#allocation2 + $0x30] sm:$0xf]
      %v5517 = vld [vmem:[#allocation2 + $0x34] sm:$0xf]
      %v5518 = vld [vmem:[#allocation2 + $0x38] sm:$0xf]
      %v5519 = vld [vmem:[#allocation2 + $0x3c] sm:$0xf]
      %v5520 = vld [vmem:[#allocation2 + $0x40] sm:$0xf]
      %v5521 = vld [vmem:[#allocation2 + $0x44] sm:$0xf]
      %v5522 = vld [vmem:[#allocation2 + $0x48] sm:$0xf]
      %v5523 = vld [vmem:[#allocation2 + $0x4c] sm:$0xf]
      %v5524 = vld [vmem:[#allocation2 + $0x50] sm:$0xf]
      %v5525 = vld [vmem:[#allocation2 + $0x54] sm:$0xf]
      %v5526 = vld [vmem:[#allocation2 + $0x58] sm:$0xf]
      %v5527 = vld [vmem:[#allocation2 + $0x5c] sm:$0xf]
      %v5528 = vld [vmem:[#allocation2 + $0x60] sm:$0xf]
      %v5529 = vld [vmem:[#allocation2 + $0x64] sm:$0xf]
      %v5530 = vld [vmem:[#allocation2 + $0x68] sm:$0xf]
      %v5531 = vld [vmem:[#allocation2 + $0x6c] sm:$0xf]
      %v5532 = vld [vmem:[#allocation2 + $0x70] sm:$0xf]
      %v5533 = vld [vmem:[#allocation2 + $0x74] sm:$0xf]
      %v5534 = vld [vmem:[#allocation2 + $0x78] sm:$0xf]
      %v5535 = vld [vmem:[#allocation2 + $0x7c] sm:$0xf]
      %v5536 = vld [vmem:[#allocation2 + $0x80] sm:$0xf]
      %v5537 = vld [vmem:[#allocation2 + $0x84] sm:$0xf]
      %v5538 = vld [vmem:[#allocation2 + $0x88] sm:$0xf]
      %v5539 = vld [vmem:[#allocation2 + $0x8c] sm:$0xf]
      %v5540 = vld [vmem:[#allocation2 + $0x90] sm:$0xf]
      %v5541 = vld [vmem:[#allocation2 + $0x94] sm:$0xf]
      %v5542 = vld [vmem:[#allocation2 + $0x98] sm:$0xf]
      %v5543 = vld [vmem:[#allocation2 + $0x9c] sm:$0xf]
      %v5544 = vld [vmem:[#allocation2 + $0xa0] sm:$0xf]
      %v5545 = vld [vmem:[#allocation2 + $0xa4] sm:$0xf]
      %v5546 = vld [vmem:[#allocation2 + $0xa8] sm:$0xf]
      %v5547 = vld [vmem:[#allocation2 + $0xac] sm:$0xf]
      %v5548 = vld [vmem:[#allocation2 + $0xb0] sm:$0xf]
      %v5549 = vld [vmem:[#allocation2 + $0xb4] sm:$0xf]
      %v5550 = vld [vmem:[#allocation2 + $0xb8] sm:$0xf]
      %v5551 = vld [vmem:[#allocation2 + $0xbc] sm:$0xf]
      %v5552 = vld [vmem:[#allocation2 + $0xc0] sm:$0xf]
      %v5553 = vld [vmem:[#allocation2 + $0xc4] sm:$0xf]
      %v5554 = vld [vmem:[#allocation2 + $0xc8] sm:$0xf]
      %v5555 = vld [vmem:[#allocation2 + $0xcc] sm:$0xf]
      %v5556 = vld [vmem:[#allocation2 + $0xd0] sm:$0xf]
      %v5557 = vld [vmem:[#allocation2 + $0xd4] sm:$0xf]
      %v5558 = vld [vmem:[#allocation2 + $0xd8] sm:$0x1]
      %s5559 = scalar_lea.vmem %s1, 16
      %v5560 = vld [vmem:[%s5559] sm:$0x3]
      %v5610 = vunpack.c.l.b16 %v5510
      %v5611 = vunpack.c.l.b16 %v5511
      %v5612 = vunpack.c.l.b16 %v5512
      %v5613 = vunpack.c.l.b16 %v5513
      %v5614 = vunpack.c.l.b16 %v5514
      %v5615 = vunpack.c.l.b16 %v5515
      %v5616 = vunpack.c.l.b16 %v5516
      %v5617 = vunpack.c.l.b16 %v5517
      %v5618 = vunpack.c.l.b16 %v5518
      %v5619 = vunpack.c.l.b16 %v5519
      %v5620 = vunpack.c.l.b16 %v5520
      %v5621 = vunpack.c.l.b16 %v5521
      %v5622 = vunpack.c.l.b16 %v5522
      %v5623 = vunpack.c.l.b16 %v5523
      %v5624 = vunpack.c.l.b16 %v5524
      %v5625 = vunpack.c.l.b16 %v5525
      %v5626 = vunpack.c.l.b16 %v5526
      %v5627 = vunpack.c.l.b16 %v5527
      %v5628 = vunpack.c.l.b16 %v5528
      %v5629 = vunpack.c.l.b16 %v5529
      %v5630 = vunpack.c.l.b16 %v5530
      %v5631 = vunpack.c.l.b16 %v5531
      %v5632 = vunpack.c.l.b16 %v5532
      %v5633 = vunpack.c.l.b16 %v5533
      %v5634 = vunpack.c.l.b16 %v5534
      %v5635 = vunpack.c.l.b16 %v5535
      %v5636 = vunpack.c.l.b16 %v5536
      %v5637 = vunpack.c.l.b16 %v5537
      %v5638 = vunpack.c.l.b16 %v5538
      %v5639 = vunpack.c.l.b16 %v5539
      %v5640 = vunpack.c.l.b16 %v5540
      %v5641 = vunpack.c.l.b16 %v5541
      %v5642 = vunpack.c.l.b16 %v5542
      %v5643 = vunpack.c.l.b16 %v5543
      %v5644 = vunpack.c.l.b16 %v5544
      %v5645 = vunpack.c.l.b16 %v5545
      %v5646 = vunpack.c.l.b16 %v5546
      %v5647 = vunpack.c.l.b16 %v5547
      %v5648 = vunpack.c.l.b16 %v5548
      %v5649 = vunpack.c.l.b16 %v5549
      %v5650 = vunpack.c.l.b16 %v5550
      %v5651 = vunpack.c.l.b16 %v5551
      %v5652 = vunpack.c.l.b16 %v5552
      %v5653 = vunpack.c.l.b16 %v5553
      %v5654 = vunpack.c.l.b16 %v5554
      %v5655 = vunpack.c.l.b16 %v5555
      %v5656 = vunpack.c.l.b16 %v5556
      %v5657 = vunpack.c.l.b16 %v5557
      %v5658 = vunpack.c.l.b16 %v5558
      %v5659 = vpack.c.b16 %v5611, %v5610
      %v5660 = vpack.c.b16 %v5613, %v5612
      %v5661 = vpack.c.b16 %v5615, %v5614
      %v5662 = vpack.c.b16 %v5617, %v5616
      %v5663 = vpack.c.b16 %v5619, %v5618
      %v5664 = vpack.c.b16 %v5621, %v5620
      %v5665 = vpack.c.b16 %v5623, %v5622
      %v5666 = vpack.c.b16 %v5625, %v5624
      %v5667 = vpack.c.b16 %v5627, %v5626
      %v5668 = vpack.c.b16 %v5629, %v5628
      %v5669 = vpack.c.b16 %v5631, %v5630
      %v5670 = vpack.c.b16 %v5633, %v5632
      %v5671 = vpack.c.b16 %v5635, %v5634
      %v5672 = vpack.c.b16 %v5637, %v5636
      %v5673 = vpack.c.b16 %v5639, %v5638
      %v5674 = vpack.c.b16 %v5641, %v5640
      %v5675 = vpack.c.b16 %v5643, %v5642
      %v5676 = vpack.c.b16 %v5645, %v5644
      %v5677 = vpack.c.b16 %v5647, %v5646
      %v5678 = vpack.c.b16 %v5649, %v5648
      %v5679 = vpack.c.b16 %v5651, %v5650
      %v5680 = vpack.c.b16 %v5653, %v5652
      %v5681 = vpack.c.b16 %v5655, %v5654
      %v5682 = vpack.c.b16 %v5657, %v5656
      %v5683 = vpack.c.b16 %v5658, %v5658
      %v5684 = vrot.slane %v5659, 1
      %v5685 = vrot.slane %v5660, 1
      %v5686 = vsel %vm2069, %v5684, %v5685
      %v5687 = vrot.slane %v5661, 1
      %v5688 = vsel %vm2069, %v5685, %v5687
      %v5689 = vrot.slane %v5662, 1
      %v5690 = vsel %vm2069, %v5687, %v5689
      %v5691 = vrot.slane %v5663, 1
      %v5692 = vsel %vm2069, %v5689, %v5691
      %v5693 = vrot.slane %v5664, 1
      %v5694 = vsel %vm2069, %v5691, %v5693
      %v5695 = vrot.slane %v5665, 1
      %v5696 = vsel %vm2069, %v5693, %v5695
      %v5697 = vrot.slane %v5666, 1
      %v5698 = vsel %vm2069, %v5695, %v5697
      %v5699 = vrot.slane %v5667, 1
      %v5700 = vsel %vm2069, %v5697, %v5699
      %v5701 = vrot.slane %v5668, 1
      %v5702 = vsel %vm2069, %v5699, %v5701
      %v5703 = vrot.slane %v5669, 1
      %v5704 = vsel %vm2069, %v5701, %v5703
      %v5705 = vrot.slane %v5670, 1
      %v5706 = vsel %vm2069, %v5703, %v5705
      %v5707 = vrot.slane %v5671, 1
      %v5708 = vsel %vm2069, %v5705, %v5707
      %v5709 = vrot.slane %v5672, 1
      %v5710 = vsel %vm2069, %v5707, %v5709
      %v5711 = vrot.slane %v5673, 1
      %v5712 = vsel %vm2069, %v5709, %v5711
      %v5713 = vrot.slane %v5674, 1
      %v5714 = vsel %vm2069, %v5711, %v5713
      %v5715 = vrot.slane %v5675, 1
      %v5716 = vsel %vm2069, %v5713, %v5715
      %v5717 = vrot.slane %v5676, 1
      %v5718 = vsel %vm2069, %v5715, %v5717
      %v5719 = vrot.slane %v5677, 1
      %v5720 = vsel %vm2069, %v5717, %v5719
      %v5721 = vrot.slane %v5678, 1
      %v5722 = vsel %vm2069, %v5719, %v5721
      %v5723 = vrot.slane %v5679, 1
      %v5724 = vsel %vm2069, %v5721, %v5723
      %v5725 = vrot.slane %v5680, 1
      %v5726 = vsel %vm2069, %v5723, %v5725
      %v5727 = vrot.slane %v5681, 1
      %v5728 = vsel %vm2069, %v5725, %v5727
      %v5729 = vrot.slane %v5682, 1
      %v5730 = vsel %vm2069, %v5727, %v5729
      %v5731 = vrot.slane %v5683, 1
      %v5732 = vsel %vm2069, %v5729, %v5731
      %v5734 = vsel %vm922, %v5686, 0
      %v5737 = vsel %vm922, %v5688, 0
      %v5740 = vsel %vm922, %v5690, 0
      %v5743 = vsel %vm922, %v5692, 0
      %v5746 = vsel %vm922, %v5694, 0
      %v5749 = vsel %vm922, %v5696, 0
      %v5752 = vsel %vm922, %v5698, 0
      %v5755 = vsel %vm922, %v5700, 0
      %v5758 = vsel %vm922, %v5702, 0
      %v5761 = vsel %vm922, %v5704, 0
      %v5764 = vsel %vm922, %v5706, 0
      %v5767 = vsel %vm922, %v5708, 0
      %v5770 = vsel %vm922, %v5710, 0
      %v5773 = vsel %vm922, %v5712, 0
      %v5776 = vsel %vm922, %v5714, 0
      %v5779 = vsel %vm922, %v5716, 0
      %v5782 = vsel %vm922, %v5718, 0
      %v5785 = vsel %vm922, %v5720, 0
      %v5788 = vsel %vm922, %v5722, 0
      %v5791 = vsel %vm922, %v5724, 0
      %v5794 = vsel %vm922, %v5726, 0
      %v5797 = vsel %vm922, %v5728, 0
      %v5800 = vsel %vm922, %v5730, 0
      %v5803 = vsel %vm922, %v5732, 0
      %v5806 = vsel %vm995, %v5560, 0
      %5808 = vmatpush.bf16.msra.mxu0 0
      %5809 = vmatpush.bf16.msra.mxu0 0
      %5810 = vmatpush.bf16.msra.mxu0 0
      %5811 = vmatpush.bf16.msra.mxu0 0
      %5812 = vmatpush.bf16.msra.mxu0 0
      %5813 = vmatpush.bf16.msra.mxu0 0
      %5814 = vmatpush.bf16.msra.mxu0 0
      %5815 = vmatpush.bf16.msra.mxu0 %v5806
      %5816 = vmatmul.bf16.gmra.mxu0 %v5734
      %v5817 = vpop.f32.mrf.mxu0
      %v5818 = vadd.f32 0.0, %v5817
      %v5819 = vpop.f32.mrf.mxu0
      %v5820 = vadd.f32 0.0, %v5819
      %5821 = vmatmul.bf16.gmra.mxu0 %v5737
      %v5822 = vpop.f32.mrf.mxu0
      %v5823 = vadd.f32 0.0, %v5822
      %v5824 = vpop.f32.mrf.mxu0
      %v5825 = vadd.f32 0.0, %v5824
      %5826 = vmatmul.bf16.gmra.mxu0 %v5740
      %v5827 = vpop.f32.mrf.mxu0
      %v5828 = vadd.f32 0.0, %v5827
      %v5829 = vpop.f32.mrf.mxu0
      %v5830 = vadd.f32 0.0, %v5829
      %5831 = vmatmul.bf16.gmra.mxu0 %v5743
      %v5832 = vpop.f32.mrf.mxu0
      %v5833 = vadd.f32 0.0, %v5832
      %v5834 = vpop.f32.mrf.mxu0
      %v5835 = vadd.f32 0.0, %v5834
      %5836 = vmatmul.bf16.gmra.mxu0 %v5746
      %v5837 = vpop.f32.mrf.mxu0
      %v5838 = vadd.f32 0.0, %v5837
      %v5839 = vpop.f32.mrf.mxu0
      %v5840 = vadd.f32 0.0, %v5839
      %5841 = vmatmul.bf16.gmra.mxu0 %v5749
      %v5842 = vpop.f32.mrf.mxu0
      %v5843 = vadd.f32 0.0, %v5842
      %v5844 = vpop.f32.mrf.mxu0
      %v5845 = vadd.f32 0.0, %v5844
      %5846 = vmatmul.bf16.gmra.mxu0 %v5752
      %v5847 = vpop.f32.mrf.mxu0
      %v5848 = vadd.f32 0.0, %v5847
      %v5849 = vpop.f32.mrf.mxu0
      %v5850 = vadd.f32 0.0, %v5849
      %5851 = vmatmul.bf16.gmra.mxu0 %v5755
      %v5852 = vpop.f32.mrf.mxu0
      %v5853 = vadd.f32 0.0, %v5852
      %v5854 = vpop.f32.mrf.mxu0
      %v5855 = vadd.f32 0.0, %v5854
      %5856 = vmatmul.bf16.gmra.mxu0 %v5758
      %v5857 = vpop.f32.mrf.mxu0
      %v5858 = vadd.f32 0.0, %v5857
      %v5859 = vpop.f32.mrf.mxu0
      %v5860 = vadd.f32 0.0, %v5859
      %5861 = vmatmul.bf16.gmra.mxu0 %v5761
      %v5862 = vpop.f32.mrf.mxu0
      %v5863 = vadd.f32 0.0, %v5862
      %v5864 = vpop.f32.mrf.mxu0
      %v5865 = vadd.f32 0.0, %v5864
      %5866 = vmatmul.bf16.gmra.mxu0 %v5764
      %v5867 = vpop.f32.mrf.mxu0
      %v5868 = vadd.f32 0.0, %v5867
      %v5869 = vpop.f32.mrf.mxu0
      %v5870 = vadd.f32 0.0, %v5869
      %5871 = vmatmul.bf16.gmra.mxu0 %v5767
      %v5872 = vpop.f32.mrf.mxu0
      %v5873 = vadd.f32 0.0, %v5872
      %v5874 = vpop.f32.mrf.mxu0
      %v5875 = vadd.f32 0.0, %v5874
      %5876 = vmatmul.bf16.gmra.mxu0 %v5770
      %v5877 = vpop.f32.mrf.mxu0
      %v5878 = vadd.f32 0.0, %v5877
      %v5879 = vpop.f32.mrf.mxu0
      %v5880 = vadd.f32 0.0, %v5879
      %5881 = vmatmul.bf16.gmra.mxu0 %v5773
      %v5882 = vpop.f32.mrf.mxu0
      %v5883 = vadd.f32 0.0, %v5882
      %v5884 = vpop.f32.mrf.mxu0
      %v5885 = vadd.f32 0.0, %v5884
      %5886 = vmatmul.bf16.gmra.mxu0 %v5776
      %v5887 = vpop.f32.mrf.mxu0
      %v5888 = vadd.f32 0.0, %v5887
      %v5889 = vpop.f32.mrf.mxu0
      %v5890 = vadd.f32 0.0, %v5889
      %5891 = vmatmul.bf16.gmra.mxu0 %v5779
      %v5892 = vpop.f32.mrf.mxu0
      %v5893 = vadd.f32 0.0, %v5892
      %v5894 = vpop.f32.mrf.mxu0
      %v5895 = vadd.f32 0.0, %v5894
      %5896 = vmatmul.bf16.gmra.mxu0 %v5782
      %v5897 = vpop.f32.mrf.mxu0
      %v5898 = vadd.f32 0.0, %v5897
      %v5899 = vpop.f32.mrf.mxu0
      %v5900 = vadd.f32 0.0, %v5899
      %5901 = vmatmul.bf16.gmra.mxu0 %v5785
      %v5902 = vpop.f32.mrf.mxu0
      %v5903 = vadd.f32 0.0, %v5902
      %v5904 = vpop.f32.mrf.mxu0
      %v5905 = vadd.f32 0.0, %v5904
      %5906 = vmatmul.bf16.gmra.mxu0 %v5788
      %v5907 = vpop.f32.mrf.mxu0
      %v5908 = vadd.f32 0.0, %v5907
      %v5909 = vpop.f32.mrf.mxu0
      %v5910 = vadd.f32 0.0, %v5909
      %5911 = vmatmul.bf16.gmra.mxu0 %v5791
      %v5912 = vpop.f32.mrf.mxu0
      %v5913 = vadd.f32 0.0, %v5912
      %v5914 = vpop.f32.mrf.mxu0
      %v5915 = vadd.f32 0.0, %v5914
      %5916 = vmatmul.bf16.gmra.mxu0 %v5794
      %v5917 = vpop.f32.mrf.mxu0
      %v5918 = vadd.f32 0.0, %v5917
      %v5919 = vpop.f32.mrf.mxu0
      %v5920 = vadd.f32 0.0, %v5919
      %5921 = vmatmul.bf16.gmra.mxu0 %v5797
      %v5922 = vpop.f32.mrf.mxu0
      %v5923 = vadd.f32 0.0, %v5922
      %v5924 = vpop.f32.mrf.mxu0
      %v5925 = vadd.f32 0.0, %v5924
      %5926 = vmatmul.bf16.gmra.mxu0 %v5800
      %v5927 = vpop.f32.mrf.mxu0
      %v5928 = vadd.f32 0.0, %v5927
      %v5929 = vpop.f32.mrf.mxu0
      %v5930 = vadd.f32 0.0, %v5929
      %5931 = vmatmul.bf16.gmra.mxu0 %v5803
      %v5932 = vpop.f32.mrf.mxu0
      %v5933 = vadd.f32 0.0, %v5932
      %v5934 = vpop.f32.mrf.mxu0
      %v5935 = vadd.f32 0.0, %v5934
      %5936 = vdwg.mxu0
      %v5937 = vld [vmem:[#allocation3] sm:$0xff]
      %v5938 = vld [vmem:[#allocation3 + $0x8] sm:$0xff]
      %v5939 = vld [vmem:[#allocation3 + $0x10] sm:$0xff]
      %v5940 = vld [vmem:[#allocation3 + $0x18] sm:$0xff]
      %v5941 = vld [vmem:[#allocation3 + $0x20] sm:$0xff]
      %v5942 = vld [vmem:[#allocation3 + $0x28] sm:$0xff]
      %v5943 = vld [vmem:[#allocation3 + $0x30] sm:$0xff]
      %v5944 = vld [vmem:[#allocation3 + $0x38] sm:$0xff]
      %v5945 = vld [vmem:[#allocation3 + $0x40] sm:$0xff]
      %v5946 = vld [vmem:[#allocation3 + $0x48] sm:$0xff]
      %v5947 = vld [vmem:[#allocation3 + $0x50] sm:$0xff]
      %v5948 = vld [vmem:[#allocation3 + $0x58] sm:$0xff]
      %v5949 = vld [vmem:[#allocation3 + $0x60] sm:$0xff]
      %v5950 = vld [vmem:[#allocation3 + $0x68] sm:$0xff]
      %v5951 = vld [vmem:[#allocation3 + $0x70] sm:$0xff]
      %v5952 = vld [vmem:[#allocation3 + $0x78] sm:$0xff]
      %v5953 = vld [vmem:[#allocation3 + $0x80] sm:$0xff]
      %v5954 = vld [vmem:[#allocation3 + $0x88] sm:$0xff]
      %v5955 = vld [vmem:[#allocation3 + $0x90] sm:$0xff]
      %v5956 = vld [vmem:[#allocation3 + $0x98] sm:$0xff]
      %v5957 = vld [vmem:[#allocation3 + $0xa0] sm:$0xff]
      %v5958 = vld [vmem:[#allocation3 + $0xa8] sm:$0xff]
      %v5959 = vld [vmem:[#allocation3 + $0xb0] sm:$0xff]
      %v5960 = vld [vmem:[#allocation3 + $0xb8] sm:$0xff]
      %v5961 = vld [vmem:[#allocation3 + $0xc0] sm:$0xff]
      %v5962 = vld [vmem:[#allocation3 + $0xc8] sm:$0xff]
      %v5963 = vld [vmem:[#allocation3 + $0xd0] sm:$0xff]
      %v5964 = vld [vmem:[#allocation3 + $0xd8] sm:$0xff]
      %v5965 = vld [vmem:[#allocation3 + $0xe0] sm:$0xff]
      %v5966 = vld [vmem:[#allocation3 + $0xe8] sm:$0xff]
      %v5967 = vld [vmem:[#allocation3 + $0xf0] sm:$0xff]
      %v5968 = vld [vmem:[#allocation3 + $0xf8] sm:$0xff]
      %v5969 = vld [vmem:[#allocation3 + $0x100] sm:$0xff]
      %v5970 = vld [vmem:[#allocation3 + $0x108] sm:$0xff]
      %v5971 = vld [vmem:[#allocation3 + $0x110] sm:$0xff]
      %v5972 = vld [vmem:[#allocation3 + $0x118] sm:$0xff]
      %v5973 = vld [vmem:[#allocation3 + $0x120] sm:$0xff]
      %v5974 = vld [vmem:[#allocation3 + $0x128] sm:$0xff]
      %v5975 = vld [vmem:[#allocation3 + $0x130] sm:$0xff]
      %v5976 = vld [vmem:[#allocation3 + $0x138] sm:$0xff]
      %v5977 = vld [vmem:[#allocation3 + $0x140] sm:$0xff]
      %v5978 = vld [vmem:[#allocation3 + $0x148] sm:$0xff]
      %v5979 = vld [vmem:[#allocation3 + $0x150] sm:$0xff]
      %v5980 = vld [vmem:[#allocation3 + $0x158] sm:$0xff]
      %v5981 = vld [vmem:[#allocation3 + $0x160] sm:$0xff]
      %v5982 = vld [vmem:[#allocation3 + $0x168] sm:$0xff]
      %v5983 = vld [vmem:[#allocation3 + $0x170] sm:$0xff]
      %v5984 = vld [vmem:[#allocation3 + $0x178] sm:$0xff]
      %v5985 = vadd.f32 %v5937, %v5818
      %v5986 = vadd.f32 %v5938, %v5820
      %v5987 = vadd.f32 %v5939, %v5823
      %v5988 = vadd.f32 %v5940, %v5825
      %v5989 = vadd.f32 %v5941, %v5828
      %v5990 = vadd.f32 %v5942, %v5830
      %v5991 = vadd.f32 %v5943, %v5833
      %v5992 = vadd.f32 %v5944, %v5835
      %v5993 = vadd.f32 %v5945, %v5838
      %v5994 = vadd.f32 %v5946, %v5840
      %v5995 = vadd.f32 %v5947, %v5843
      %v5996 = vadd.f32 %v5948, %v5845
      %v5997 = vadd.f32 %v5949, %v5848
      %v5998 = vadd.f32 %v5950, %v5850
      %v5999 = vadd.f32 %v5951, %v5853
      %v6000 = vadd.f32 %v5952, %v5855
      %v6001 = vadd.f32 %v5953, %v5858
      %v6002 = vadd.f32 %v5954, %v5860
      %v6003 = vadd.f32 %v5955, %v5863
      %v6004 = vadd.f32 %v5956, %v5865
      %v6005 = vadd.f32 %v5957, %v5868
      %v6006 = vadd.f32 %v5958, %v5870
      %v6007 = vadd.f32 %v5959, %v5873
      %v6008 = vadd.f32 %v5960, %v5875
      %v6009 = vadd.f32 %v5961, %v5878
      %v6010 = vadd.f32 %v5962, %v5880
      %v6011 = vadd.f32 %v5963, %v5883
      %v6012 = vadd.f32 %v5964, %v5885
      %v6013 = vadd.f32 %v5965, %v5888
      %v6014 = vadd.f32 %v5966, %v5890
      %v6015 = vadd.f32 %v5967, %v5893
      %v6016 = vadd.f32 %v5968, %v5895
      %v6017 = vadd.f32 %v5969, %v5898
      %v6018 = vadd.f32 %v5970, %v5900
      %v6019 = vadd.f32 %v5971, %v5903
      %v6020 = vadd.f32 %v5972, %v5905
      %v6021 = vadd.f32 %v5973, %v5908
      %v6022 = vadd.f32 %v5974, %v5910
      %v6023 = vadd.f32 %v5975, %v5913
      %v6024 = vadd.f32 %v5976, %v5915
      %v6025 = vadd.f32 %v5977, %v5918
      %v6026 = vadd.f32 %v5978, %v5920
      %v6027 = vadd.f32 %v5979, %v5923
      %v6028 = vadd.f32 %v5980, %v5925
      %v6029 = vadd.f32 %v5981, %v5928
      %v6030 = vadd.f32 %v5982, %v5930
      %v6031 = vadd.f32 %v5983, %v5933
      %v6032 = vadd.f32 %v5984, %v5935
      %6033 = vst.msk [vmem:[#allocation3] sm:$0xff] %vm922, %v5985
      %6034 = vst.msk [vmem:[#allocation3 + $0x8] sm:$0xff] %vm922, %v5986
      %6035 = vst.msk [vmem:[#allocation3 + $0x10] sm:$0xff] %vm922, %v5987
      %6036 = vst.msk [vmem:[#allocation3 + $0x18] sm:$0xff] %vm922, %v5988
      %6037 = vst.msk [vmem:[#allocation3 + $0x20] sm:$0xff] %vm922, %v5989
      %6038 = vst.msk [vmem:[#allocation3 + $0x28] sm:$0xff] %vm922, %v5990
      %6039 = vst.msk [vmem:[#allocation3 + $0x30] sm:$0xff] %vm922, %v5991
      %6040 = vst.msk [vmem:[#allocation3 + $0x38] sm:$0xff] %vm922, %v5992
      %6041 = vst.msk [vmem:[#allocation3 + $0x40] sm:$0xff] %vm922, %v5993
      %6042 = vst.msk [vmem:[#allocation3 + $0x48] sm:$0xff] %vm922, %v5994
      %6043 = vst.msk [vmem:[#allocation3 + $0x50] sm:$0xff] %vm922, %v5995
      %6044 = vst.msk [vmem:[#allocation3 + $0x58] sm:$0xff] %vm922, %v5996
      %6045 = vst.msk [vmem:[#allocation3 + $0x60] sm:$0xff] %vm922, %v5997
      %6046 = vst.msk [vmem:[#allocation3 + $0x68] sm:$0xff] %vm922, %v5998
      %6047 = vst.msk [vmem:[#allocation3 + $0x70] sm:$0xff] %vm922, %v5999
      %6048 = vst.msk [vmem:[#allocation3 + $0x78] sm:$0xff] %vm922, %v6000
      %6049 = vst.msk [vmem:[#allocation3 + $0x80] sm:$0xff] %vm922, %v6001
      %6050 = vst.msk [vmem:[#allocation3 + $0x88] sm:$0xff] %vm922, %v6002
      %6051 = vst.msk [vmem:[#allocation3 + $0x90] sm:$0xff] %vm922, %v6003
      %6052 = vst.msk [vmem:[#allocation3 + $0x98] sm:$0xff] %vm922, %v6004
      %6053 = vst.msk [vmem:[#allocation3 + $0xa0] sm:$0xff] %vm922, %v6005
      %6054 = vst.msk [vmem:[#allocation3 + $0xa8] sm:$0xff] %vm922, %v6006
      %6055 = vst.msk [vmem:[#allocation3 + $0xb0] sm:$0xff] %vm922, %v6007
      %6056 = vst.msk [vmem:[#allocation3 + $0xb8] sm:$0xff] %vm922, %v6008
      %6057 = vst.msk [vmem:[#allocation3 + $0xc0] sm:$0xff] %vm922, %v6009
      %6058 = vst.msk [vmem:[#allocation3 + $0xc8] sm:$0xff] %vm922, %v6010
      %6059 = vst.msk [vmem:[#allocation3 + $0xd0] sm:$0xff] %vm922, %v6011
      %6060 = vst.msk [vmem:[#allocation3 + $0xd8] sm:$0xff] %vm922, %v6012
      %6061 = vst.msk [vmem:[#allocation3 + $0xe0] sm:$0xff] %vm922, %v6013
      %6062 = vst.msk [vmem:[#allocation3 + $0xe8] sm:$0xff] %vm922, %v6014
      %6063 = vst.msk [vmem:[#allocation3 + $0xf0] sm:$0xff] %vm922, %v6015
      %6064 = vst.msk [vmem:[#allocation3 + $0xf8] sm:$0xff] %vm922, %v6016
      %6065 = vst.msk [vmem:[#allocation3 + $0x100] sm:$0xff] %vm922, %v6017
      %6066 = vst.msk [vmem:[#allocation3 + $0x108] sm:$0xff] %vm922, %v6018
      %6067 = vst.msk [vmem:[#allocation3 + $0x110] sm:$0xff] %vm922, %v6019
      %6068 = vst.msk [vmem:[#allocation3 + $0x118] sm:$0xff] %vm922, %v6020
      %6069 = vst.msk [vmem:[#allocation3 + $0x120] sm:$0xff] %vm922, %v6021
      %6070 = vst.msk [vmem:[#allocation3 + $0x128] sm:$0xff] %vm922, %v6022
      %6071 = vst.msk [vmem:[#allocation3 + $0x130] sm:$0xff] %vm922, %v6023
      %6072 = vst.msk [vmem:[#allocation3 + $0x138] sm:$0xff] %vm922, %v6024
      %6073 = vst.msk [vmem:[#allocation3 + $0x140] sm:$0xff] %vm922, %v6025
      %6074 = vst.msk [vmem:[#allocation3 + $0x148] sm:$0xff] %vm922, %v6026
      %6075 = vst.msk [vmem:[#allocation3 + $0x150] sm:$0xff] %vm922, %v6027
      %6076 = vst.msk [vmem:[#allocation3 + $0x158] sm:$0xff] %vm922, %v6028
      %6077 = vst.msk [vmem:[#allocation3 + $0x160] sm:$0xff] %vm922, %v6029
      %6078 = vst.msk [vmem:[#allocation3 + $0x168] sm:$0xff] %vm922, %v6030
      %6079 = vst.msk [vmem:[#allocation3 + $0x170] sm:$0xff] %vm922, %v6031
      %6080 = vst.msk [vmem:[#allocation3 + $0x178] sm:$0xff] %vm922, %v6032
      %v6081 = vld [vmem:[#allocation3] sm:$0xff]
      %v6082 = vld [vmem:[#allocation3 + $0x8] sm:$0xff]
      %v6083 = vld [vmem:[#allocation3 + $0x18] sm:$0xff]
      %v6084 = vld [vmem:[#allocation3 + $0x20] sm:$0xff]
      %v6085 = vld [vmem:[#allocation3 + $0x30] sm:$0xff]
      %v6086 = vld [vmem:[#allocation3 + $0x38] sm:$0xff]
      %v6087 = vld [vmem:[#allocation3 + $0x48] sm:$0xff]
      %v6088 = vld [vmem:[#allocation3 + $0x50] sm:$0xff]
      %v6089 = vld [vmem:[#allocation3 + $0x60] sm:$0xff]
      %v6090 = vld [vmem:[#allocation3 + $0x68] sm:$0xff]
      %v6091 = vld [vmem:[#allocation3 + $0x78] sm:$0xff]
      %v6092 = vld [vmem:[#allocation3 + $0x80] sm:$0xff]
      %v6093 = vld [vmem:[#allocation3 + $0x90] sm:$0xff]
      %v6094 = vld [vmem:[#allocation3 + $0x98] sm:$0xff]
      %v6095 = vld [vmem:[#allocation3 + $0xa8] sm:$0xff]
      %v6096 = vld [vmem:[#allocation3 + $0xb0] sm:$0xff]
      %v6097 = vld [vmem:[#allocation3 + $0xc0] sm:$0xff]
      %v6098 = vld [vmem:[#allocation3 + $0xc8] sm:$0xff]
      %v6099 = vld [vmem:[#allocation3 + $0xd8] sm:$0xff]
      %v6100 = vld [vmem:[#allocation3 + $0xe0] sm:$0xff]
      %v6101 = vld [vmem:[#allocation3 + $0xf0] sm:$0xff]
      %v6102 = vld [vmem:[#allocation3 + $0xf8] sm:$0xff]
      %v6103 = vld [vmem:[#allocation3 + $0x108] sm:$0xff]
      %v6104 = vld [vmem:[#allocation3 + $0x110] sm:$0xff]
      %v6105 = vld [vmem:[#allocation3 + $0x120] sm:$0xff]
      %v6106 = vld [vmem:[#allocation3 + $0x128] sm:$0xff]
      %v6107 = vld [vmem:[#allocation3 + $0x138] sm:$0xff]
      %v6108 = vld [vmem:[#allocation3 + $0x140] sm:$0xff]
      %v6109 = vld [vmem:[#allocation3 + $0x150] sm:$0xff]
      %v6110 = vld [vmem:[#allocation3 + $0x158] sm:$0xff]
      %v6111 = vld [vmem:[#allocation3 + $0x168] sm:$0xff]
      %v6112 = vld [vmem:[#allocation3 + $0x170] sm:$0xff]
      %v6113 = vpack.c.bf16 %v6081, %v6081
      %v6114 = vpack.c.bf16 %v6082, %v6082
      %v6115 = vpack.c.bf16 %v6083, %v6083
      %v6116 = vpack.c.bf16 %v6084, %v6084
      %v6117 = vpack.c.bf16 %v6085, %v6085
      %v6118 = vpack.c.bf16 %v6086, %v6086
      %v6119 = vpack.c.bf16 %v6087, %v6087
      %v6120 = vpack.c.bf16 %v6088, %v6088
      %v6121 = vpack.c.bf16 %v6089, %v6089
      %v6122 = vpack.c.bf16 %v6090, %v6090
      %v6123 = vpack.c.bf16 %v6091, %v6091
      %v6124 = vpack.c.bf16 %v6092, %v6092
      %v6125 = vpack.c.bf16 %v6093, %v6093
      %v6126 = vpack.c.bf16 %v6094, %v6094
      %v6127 = vpack.c.bf16 %v6095, %v6095
      %v6128 = vpack.c.bf16 %v6096, %v6096
      %v6129 = vpack.c.bf16 %v6097, %v6097
      %v6130 = vpack.c.bf16 %v6098, %v6098
      %v6131 = vpack.c.bf16 %v6099, %v6099
      %v6132 = vpack.c.bf16 %v6100, %v6100
      %v6133 = vpack.c.bf16 %v6101, %v6101
      %v6134 = vpack.c.bf16 %v6102, %v6102
      %v6135 = vpack.c.bf16 %v6103, %v6103
      %v6136 = vpack.c.bf16 %v6104, %v6104
      %v6137 = vpack.c.bf16 %v6105, %v6105
      %v6138 = vpack.c.bf16 %v6106, %v6106
      %v6139 = vpack.c.bf16 %v6107, %v6107
      %v6140 = vpack.c.bf16 %v6108, %v6108
      %v6141 = vpack.c.bf16 %v6109, %v6109
      %v6142 = vpack.c.bf16 %v6110, %v6110
      %v6143 = vpack.c.bf16 %v6111, %v6111
      %v6144 = vpack.c.bf16 %v6112, %v6112
      %6145 = vst.msk [vmem:[%s177] sm:$0xf] %vm183, %v6113
      %6146 = vst.msk [vmem:[%s177 + $0x4] sm:$0xf] %vm183, %v6114
      %6147 = vst.msk [vmem:[%s177 + $0x8] sm:$0xf] %vm183, %v6115
      %6148 = vst.msk [vmem:[%s177 + $0xc] sm:$0xf] %vm183, %v6116
      %6149 = vst.msk [vmem:[%s177 + $0x10] sm:$0xf] %vm183, %v6117
      %6150 = vst.msk [vmem:[%s177 + $0x14] sm:$0xf] %vm183, %v6118
      %6151 = vst.msk [vmem:[%s177 + $0x18] sm:$0xf] %vm183, %v6119
      %6152 = vst.msk [vmem:[%s177 + $0x1c] sm:$0xf] %vm183, %v6120
      %6153 = vst.msk [vmem:[%s177 + $0x20] sm:$0xf] %vm183, %v6121
      %6154 = vst.msk [vmem:[%s177 + $0x24] sm:$0xf] %vm183, %v6122
      %6155 = vst.msk [vmem:[%s177 + $0x28] sm:$0xf] %vm183, %v6123
      %6156 = vst.msk [vmem:[%s177 + $0x2c] sm:$0xf] %vm183, %v6124
      %6157 = vst.msk [vmem:[%s177 + $0x30] sm:$0xf] %vm183, %v6125
      %6158 = vst.msk [vmem:[%s177 + $0x34] sm:$0xf] %vm183, %v6126
      %6159 = vst.msk [vmem:[%s177 + $0x38] sm:$0xf] %vm183, %v6127
      %6160 = vst.msk [vmem:[%s177 + $0x3c] sm:$0xf] %vm183, %v6128
      %6161 = vst.msk [vmem:[%s177 + $0x40] sm:$0xf] %vm183, %v6129
      %6162 = vst.msk [vmem:[%s177 + $0x44] sm:$0xf] %vm183, %v6130
      %6163 = vst.msk [vmem:[%s177 + $0x48] sm:$0xf] %vm183, %v6131
      %6164 = vst.msk [vmem:[%s177 + $0x4c] sm:$0xf] %vm183, %v6132
      %6165 = vst.msk [vmem:[%s177 + $0x50] sm:$0xf] %vm183, %v6133
      %6166 = vst.msk [vmem:[%s177 + $0x54] sm:$0xf] %vm183, %v6134
      %6167 = vst.msk [vmem:[%s177 + $0x58] sm:$0xf] %vm183, %v6135
      %6168 = vst.msk [vmem:[%s177 + $0x5c] sm:$0xf] %vm183, %v6136
      %6169 = vst.msk [vmem:[%s177 + $0x60] sm:$0xf] %vm183, %v6137
      %6170 = vst.msk [vmem:[%s177 + $0x64] sm:$0xf] %vm183, %v6138
      %6171 = vst.msk [vmem:[%s177 + $0x68] sm:$0xf] %vm183, %v6139
      %6172 = vst.msk [vmem:[%s177 + $0x6c] sm:$0xf] %vm183, %v6140
      %6173 = vst.msk [vmem:[%s177 + $0x70] sm:$0xf] %vm183, %v6141
      %6174 = vst.msk [vmem:[%s177 + $0x74] sm:$0xf] %vm183, %v6142
      %6175 = vst.msk [vmem:[%s177 + $0x78] sm:$0xf] %vm183, %v6143
      %6176 = vst.msk [vmem:[%s177 + $0x7c] sm:$0xf] %vm183, %v6144
      %v6177 = vunpack.c.l.bf16 %v6113
      %v6178 = vunpack.c.l.bf16 %v6114
      %v6179 = vunpack.c.l.bf16 %v6115
      %v6180 = vunpack.c.l.bf16 %v6116
      %v6181 = vunpack.c.l.bf16 %v6117
      %v6182 = vunpack.c.l.bf16 %v6118
      %v6183 = vunpack.c.l.bf16 %v6119
      %v6184 = vunpack.c.l.bf16 %v6120
      %v6185 = vunpack.c.l.bf16 %v6121
      %v6186 = vunpack.c.l.bf16 %v6122
      %v6187 = vunpack.c.l.bf16 %v6123
      %v6188 = vunpack.c.l.bf16 %v6124
      %v6189 = vunpack.c.l.bf16 %v6125
      %v6190 = vunpack.c.l.bf16 %v6126
      %v6191 = vunpack.c.l.bf16 %v6127
      %v6192 = vunpack.c.l.bf16 %v6128
      %v6193 = vunpack.c.l.bf16 %v6129
      %v6194 = vunpack.c.l.bf16 %v6130
      %v6195 = vunpack.c.l.bf16 %v6131
      %v6196 = vunpack.c.l.bf16 %v6132
      %v6197 = vunpack.c.l.bf16 %v6133
      %v6198 = vunpack.c.l.bf16 %v6134
      %v6199 = vunpack.c.l.bf16 %v6135
      %v6200 = vunpack.c.l.bf16 %v6136
      %v6201 = vunpack.c.l.bf16 %v6137
      %v6202 = vunpack.c.l.bf16 %v6138
      %v6203 = vunpack.c.l.bf16 %v6139
      %v6204 = vunpack.c.l.bf16 %v6140
      %v6205 = vunpack.c.l.bf16 %v6141
      %v6206 = vunpack.c.l.bf16 %v6142
      %v6207 = vunpack.c.l.bf16 %v6143
      %v6208 = vunpack.c.l.bf16 %v6144
      %v6209 = vsel %vm922, %v6177, 0.0
      %v6210 = vsel %vm922, %v6178, 0.0
      %v6211 = vadd.f32 %v6209, %v6210
      %v6212 = vsel %vm922, %v6179, 0.0
      %v6213 = vadd.f32 %v6211, %v6212
      %v6214 = vsel %vm922, %v6180, 0.0
      %v6215 = vadd.f32 %v6213, %v6214
      %v6216 = vsel %vm922, %v6181, 0.0
      %v6217 = vadd.f32 %v6215, %v6216
      %v6218 = vsel %vm922, %v6182, 0.0
      %v6219 = vadd.f32 %v6217, %v6218
      %v6220 = vsel %vm922, %v6183, 0.0
      %v6221 = vadd.f32 %v6219, %v6220
      %v6222 = vsel %vm922, %v6184, 0.0
      %v6223 = vadd.f32 %v6221, %v6222
      %v6224 = vsel %vm922, %v6185, 0.0
      %v6225 = vadd.f32 %v6223, %v6224
      %v6226 = vsel %vm922, %v6186, 0.0
      %v6227 = vadd.f32 %v6225, %v6226
      %v6228 = vsel %vm922, %v6187, 0.0
      %v6229 = vadd.f32 %v6227, %v6228
      %v6230 = vsel %vm922, %v6188, 0.0
      %v6231 = vadd.f32 %v6229, %v6230
      %v6232 = vsel %vm922, %v6189, 0.0
      %v6233 = vadd.f32 %v6231, %v6232
      %v6234 = vsel %vm922, %v6190, 0.0
      %v6235 = vadd.f32 %v6233, %v6234
      %v6236 = vsel %vm922, %v6191, 0.0
      %v6237 = vadd.f32 %v6235, %v6236
      %v6238 = vsel %vm922, %v6192, 0.0
      %v6239 = vadd.f32 %v6237, %v6238
      %v6240 = vsel %vm922, %v6193, 0.0
      %v6241 = vadd.f32 %v6239, %v6240
      %v6242 = vsel %vm922, %v6194, 0.0
      %v6243 = vadd.f32 %v6241, %v6242
      %v6244 = vsel %vm922, %v6195, 0.0
      %v6245 = vadd.f32 %v6243, %v6244
      %v6246 = vsel %vm922, %v6196, 0.0
      %v6247 = vadd.f32 %v6245, %v6246
      %v6248 = vsel %vm922, %v6197, 0.0
      %v6249 = vadd.f32 %v6247, %v6248
      %v6250 = vsel %vm922, %v6198, 0.0
      %v6251 = vadd.f32 %v6249, %v6250
      %v6252 = vsel %vm922, %v6199, 0.0
      %v6253 = vadd.f32 %v6251, %v6252
      %v6254 = vsel %vm922, %v6200, 0.0
      %v6255 = vadd.f32 %v6253, %v6254
      %v6256 = vsel %vm922, %v6201, 0.0
      %v6257 = vadd.f32 %v6255, %v6256
      %v6258 = vsel %vm922, %v6202, 0.0
      %v6259 = vadd.f32 %v6257, %v6258
      %v6260 = vsel %vm922, %v6203, 0.0
      %v6261 = vadd.f32 %v6259, %v6260
      %v6262 = vsel %vm922, %v6204, 0.0
      %v6263 = vadd.f32 %v6261, %v6262
      %v6264 = vsel %vm922, %v6205, 0.0
      %v6265 = vadd.f32 %v6263, %v6264
      %v6266 = vsel %vm922, %v6206, 0.0
      %v6267 = vadd.f32 %v6265, %v6266
      %v6268 = vsel %vm922, %v6207, 0.0
      %v6269 = vadd.f32 %v6267, %v6268
      %v6270 = vsel %vm922, %v6208, 0.0
      %v6271 = vadd.f32 %v6269, %v6270
      %v6272 = vrot.slane %v6271, 4
      %v6273 = vadd.f32 %v6271, %v6272
      %v6274 = vrot.slane %v6273, 2
      %v6275 = vadd.f32 %v6273, %v6274
      %v6276 = vrot.slane %v6275, 1
      %v6277 = vadd.f32 %v6275, %v6276
      %6278 = vst.msk [vmem:[%s181] sm:$0x1] %vm226, %v6277
      %v6279 = vmul.f32 %v6177, %v6177
      %v6280 = vmul.f32 %v6178, %v6178
      %v6281 = vmul.f32 %v6179, %v6179
      %v6282 = vmul.f32 %v6180, %v6180
      %v6283 = vmul.f32 %v6181, %v6181
      %v6284 = vmul.f32 %v6182, %v6182
      %v6285 = vmul.f32 %v6183, %v6183
      %v6286 = vmul.f32 %v6184, %v6184
      %v6287 = vmul.f32 %v6185, %v6185
      %v6288 = vmul.f32 %v6186, %v6186
      %v6289 = vmul.f32 %v6187, %v6187
      %v6290 = vmul.f32 %v6188, %v6188
      %v6291 = vmul.f32 %v6189, %v6189
      %v6292 = vmul.f32 %v6190, %v6190
      %v6293 = vmul.f32 %v6191, %v6191
      %v6294 = vmul.f32 %v6192, %v6192
      %v6295 = vmul.f32 %v6193, %v6193
      %v6296 = vmul.f32 %v6194, %v6194
      %v6297 = vmul.f32 %v6195, %v6195
      %v6298 = vmul.f32 %v6196, %v6196
      %v6299 = vmul.f32 %v6197, %v6197
      %v6300 = vmul.f32 %v6198, %v6198
      %v6301 = vmul.f32 %v6199, %v6199
      %v6302 = vmul.f32 %v6200, %v6200
      %v6303 = vmul.f32 %v6201, %v6201
      %v6304 = vmul.f32 %v6202, %v6202
      %v6305 = vmul.f32 %v6203, %v6203
      %v6306 = vmul.f32 %v6204, %v6204
      %v6307 = vmul.f32 %v6205, %v6205
      %v6308 = vmul.f32 %v6206, %v6206
      %v6309 = vmul.f32 %v6207, %v6207
      %v6310 = vmul.f32 %v6208, %v6208
      %v6311 = vsel %vm922, %v6279, 0.0
      %v6312 = vsel %vm922, %v6280, 0.0
      %v6313 = vadd.f32 %v6311, %v6312
      %v6314 = vsel %vm922, %v6281, 0.0
      %v6315 = vadd.f32 %v6313, %v6314
      %v6316 = vsel %vm922, %v6282, 0.0
      %v6317 = vadd.f32 %v6315, %v6316
      %v6318 = vsel %vm922, %v6283, 0.0
      %v6319 = vadd.f32 %v6317, %v6318
      %v6320 = vsel %vm922, %v6284, 0.0
      %v6321 = vadd.f32 %v6319, %v6320
      %v6322 = vsel %vm922, %v6285, 0.0
      %v6323 = vadd.f32 %v6321, %v6322
      %v6324 = vsel %vm922, %v6286, 0.0
      %v6325 = vadd.f32 %v6323, %v6324
      %v6326 = vsel %vm922, %v6287, 0.0
      %v6327 = vadd.f32 %v6325, %v6326
      %v6328 = vsel %vm922, %v6288, 0.0
      %v6329 = vadd.f32 %v6327, %v6328
      %v6330 = vsel %vm922, %v6289, 0.0
      %v6331 = vadd.f32 %v6329, %v6330
      %v6332 = vsel %vm922, %v6290, 0.0
      %v6333 = vadd.f32 %v6331, %v6332
      %v6334 = vsel %vm922, %v6291, 0.0
      %v6335 = vadd.f32 %v6333, %v6334
      %v6336 = vsel %vm922, %v6292, 0.0
      %v6337 = vadd.f32 %v6335, %v6336
      %v6338 = vsel %vm922, %v6293, 0.0
      %v6339 = vadd.f32 %v6337, %v6338
      %v6340 = vsel %vm922, %v6294, 0.0
      %v6341 = vadd.f32 %v6339, %v6340
      %v6342 = vsel %vm922, %v6295, 0.0
      %v6343 = vadd.f32 %v6341, %v6342
      %v6344 = vsel %vm922, %v6296, 0.0
      %v6345 = vadd.f32 %v6343, %v6344
      %v6346 = vsel %vm922, %v6297, 0.0
      %v6347 = vadd.f32 %v6345, %v6346
      %v6348 = vsel %vm922, %v6298, 0.0
      %v6349 = vadd.f32 %v6347, %v6348
      %v6350 = vsel %vm922, %v6299, 0.0
      %v6351 = vadd.f32 %v6349, %v6350
      %v6352 = vsel %vm922, %v6300, 0.0
      %v6353 = vadd.f32 %v6351, %v6352
      %v6354 = vsel %vm922, %v6301, 0.0
      %v6355 = vadd.f32 %v6353, %v6354
      %v6356 = vsel %vm922, %v6302, 0.0
      %v6357 = vadd.f32 %v6355, %v6356
      %v6358 = vsel %vm922, %v6303, 0.0
      %v6359 = vadd.f32 %v6357, %v6358
      %v6360 = vsel %vm922, %v6304, 0.0
      %v6361 = vadd.f32 %v6359, %v6360
      %v6362 = vsel %vm922, %v6305, 0.0
      %v6363 = vadd.f32 %v6361, %v6362
      %v6364 = vsel %vm922, %v6306, 0.0
      %v6365 = vadd.f32 %v6363, %v6364
      %v6366 = vsel %vm922, %v6307, 0.0
      %v6367 = vadd.f32 %v6365, %v6366
      %v6368 = vsel %vm922, %v6308, 0.0
      %v6369 = vadd.f32 %v6367, %v6368
      %v6370 = vsel %vm922, %v6309, 0.0
      %v6371 = vadd.f32 %v6369, %v6370
      %v6372 = vsel %vm922, %v6310, 0.0
      %v6373 = vadd.f32 %v6371, %v6372
      %v6374 = vrot.slane %v6373, 4
      %v6375 = vadd.f32 %v6373, %v6374
      %v6376 = vrot.slane %v6375, 2
      %v6377 = vadd.f32 %v6375, %v6376
      %v6378 = vrot.slane %v6377, 1
      %v6379 = vadd.f32 %v6377, %v6378
      %6380 = vst.msk [vmem:[%s181 + $0x1] sm:$0x1] %vm226, %v6379
      %p6381 = scmp.lt.s32.totalorder %s15, 1
      %s6382 = scalar_select %p6381, %s15, 1
      %s6383 = smul.addr %s6382, 32
      %s6384 = smul.addr %s6383, 4
      %s6385 = scalar_lea.vmem %s2, %s6384
      %p6386 = scmp.lt.s32.totalorder %s15, 1
      %s6387 = scalar_select %p6386, %s15, 1
      %s6388 = smul.addr %s6387, 2
      %s6389 = scalar_lea.vmem %s3, %s6388
      // Predicated region
      $region29: #{residual_layer_nhwc.3} parent=27 // pred_check
        %p6390 = pneg %p80
      $region30: #{residual_layer_nhwc.3} parent=27 // pred_check_branch
        %6392 = sbr.rel (%p6390) target = $region32
      $region31: #{residual_layer_nhwc.3} parent=27 // pred_region
        _
      $region32: #{residual_layer_nhwc.3} parent=27 // pred_fallthru
        _
      // Predicated region
      $region33: #{residual_layer_nhwc.3} parent=27 // pred_check
        %p6393 = pneg %p106
      $region34: #{residual_layer_nhwc.3} parent=27 // pred_check_branch
        %6395 = sbr.rel (%p6393) target = $region36
      $region35: #{residual_layer_nhwc.3} parent=27 // pred_region
        _
      $region36: #{residual_layer_nhwc.3} parent=27 // pred_fallthru
        _
    $region28: #{residual_layer_nhwc.3} parent=5 // pred_fallthru
      _
    %p6396 = scmp.le.s32.totalorder 2, %s10
    // Predicated region
    $region37: #{residual_layer_nhwc.3} parent=5 // pred_check
      %p6397 = pneg %p6396
    $region38: #{residual_layer_nhwc.3} parent=5 // pred_check_branch
      %6399 = sbr.rel (%p6397) target = $region40
    $region39: #{residual_layer_nhwc.3} parent=5 // pred_region
      %s6400 = ssub.s32 %s10, 2
      // Predicated region
      $region41: #{residual_layer_nhwc.3} parent=39 // pred_check
        %p6401 = pneg %p86
      $region42: #{residual_layer_nhwc.3} parent=39 // pred_check_branch
        %6403 = sbr.rel (%p6401) target = $region44
      $region43: #{residual_layer_nhwc.3} parent=39 // pred_region
        %p6404 = scmp.lt.s32.totalorder %s16, 1
        %s6405 = scalar_select %p6404, %s16, 1
        %s6406 = smul.addr %s6405, 32
        %s6407 = smul.addr %s6406, 4
        %s6408 = scalar_lea.vmem %s2, %s6407
      $region44: #{residual_layer_nhwc.3} parent=39 // pred_fallthru
        _
      // Predicated region
      $region45: #{residual_layer_nhwc.3} parent=39 // pred_check
        %p6409 = pneg %p112
      $region46: #{residual_layer_nhwc.3} parent=39 // pred_check_branch
        %6411 = sbr.rel (%p6409) target = $region48
      $region47: #{residual_layer_nhwc.3} parent=39 // pred_region
        %p6412 = scmp.lt.s32.totalorder %s16, 1
        %s6413 = scalar_select %p6412, %s16, 1
        %s6414 = smul.addr %s6413, 2
        %s6415 = scalar_lea.vmem %s3, %s6414
      $region48: #{residual_layer_nhwc.3} parent=39 // pred_fallthru
        _
    $region40: #{residual_layer_nhwc.3} parent=5 // pred_fallthru
      _
  $region6: #{residual_layer_nhwc.3} parent=0 // loop_footer
    %s14 = sadd.s32 1, %s10
  $region7: #{residual_layer_nhwc.3} parent=0 // loop_footer_branch
    %9 = sbr.rel target = $region3
  $region8: #{residual_layer_nhwc.3} parent=0 // loop_exit
    _

</llo_original>
